<compile_context>
chip_gen: v7x
topology: tpu7x:2x2x1
jax: 0.10.0
libtpu: 0.0.40
codegen_flags: <defaults>
</compile_context>

<pallas_src>
import math
import functools

import jax
import jax.numpy as jnp
from jax import lax
from jax.experimental import pallas as pl
from jax.experimental.pallas import tpu as pltpu

_EPS = 1e-5
_NEG = -1e9


# ----------------------------------------------------------------------------
# In-kernel helpers (operate on VMEM-resident values)
# ----------------------------------------------------------------------------

def _add_ln(x, y, g, b, eps):
    """LayerNorm(x + y) over the last dim.  g, b: (1, D)."""
    z = x + y
    mu = jnp.mean(z, axis=-1, keepdims=True)
    var = jnp.mean((z - mu) ** 2, axis=-1, keepdims=True)
    return (z - mu) * lax.rsqrt(var + eps) * g + b


def _mha(xq, xkv, wqkv, bqkv, wo, bo, kp_add, *, num_heads, causal):
    """Multi-head attention on one batch element.

    xq: (Sq, D), xkv: (Sk, D), wqkv: (D, 3D) (pre-transposed in_proj_weight),
    bqkv: (1, 3D), wo: (D, D) (pre-transposed out_proj weight), bo: (1, D),
    kp_add: (1, Sk) additive key-padding bias.
    """
    D = xq.shape[-1]
    Dh = D // num_heads
    scale = 1.0 / math.sqrt(Dh)
    Sq = xq.shape[0]
    Sk = xkv.shape[0]

    if xq is xkv:
        # self-attention: single merged QKV matmul
        qkv = jnp.dot(xq, wqkv, preferred_element_type=jnp.float32) + bqkv
        q, k, v = qkv[:, :D], qkv[:, D:2 * D], qkv[:, 2 * D:]
    else:
        # cross-attention: Q from xq, merged KV from xkv
        q = jnp.dot(xq, wqkv[:, :D], preferred_element_type=jnp.float32) + bqkv[:, :D]
        kv = jnp.dot(xkv, wqkv[:, D:], preferred_element_type=jnp.float32) + bqkv[:, D:]
        k, v = kv[:, :D], kv[:, D:]

    if causal:
        row = lax.broadcasted_iota(jnp.int32, (Sq, Sk), 0)
        col = lax.broadcasted_iota(jnp.int32, (Sq, Sk), 1)
        bias = jnp.where(row >= col, 0.0, _NEG).astype(jnp.float32) + kp_add
    else:
        bias = kp_add  # broadcasts over the query rows

    out = jnp.zeros((Sq, wo.shape[1]), jnp.float32)
    for h in range(num_heads):                      # static unroll over heads
        sl = slice(h * Dh, (h + 1) * Dh)
        s = lax.dot_general(q[:, sl] * scale, k[:, sl],
                            (((1,), (1,)), ((), ())),
                            preferred_element_type=jnp.float32)   # (Sq, Sk)
        s = s + bias
        m = jnp.max(s, axis=-1, keepdims=True)
        p = jnp.exp(s - m)
        denom = jnp.sum(p, axis=-1, keepdims=True)
        p = p * pl.reciprocal(denom, approx=True)
        ctx_h = jnp.dot(p, v[:, sl], preferred_element_type=jnp.float32)
        # merge heads by summing per-head slices of the output projection
        out = out + jnp.dot(ctx_h, wo[sl, :], preferred_element_type=jnp.float32)
    return out + bo


# ----------------------------------------------------------------------------
# Fused per-layer kernels (one pallas_call per transformer layer)
# ----------------------------------------------------------------------------

def _encoder_layer_kernel(x_ref, kp_ref,
                          wqkv_ref, bqkv_ref, wo_ref, bo_ref,
                          w1_ref, b1_ref, w2_ref, b2_ref,
                          n1w_ref, n1b_ref, n2w_ref, n2b_ref,
                          o_ref, *, num_heads, eps):
    x = x_ref[0]                                    # (S, D)
    kp = kp_ref[0]                                  # (1, S)
    sa = _mha(x, x, wqkv_ref[...], bqkv_ref[...], wo_ref[...], bo_ref[...],
              kp, num_heads=num_heads, causal=False)
    x = _add_ln(x, sa, n1w_ref[...], n1b_ref[...], eps)
    h = jnp.maximum(jnp.dot(x, w1_ref[...], preferred_element_type=jnp.float32)
                    + b1_ref[...], 0.0)
    ff = jnp.dot(h, w2_ref[...], preferred_element_type=jnp.float32) + b2_ref[...]
    x = _add_ln(x, ff, n2w_ref[...], n2b_ref[...], eps)
    o_ref[0] = x


def _decoder_layer_kernel(x_ref, mem_ref, tkp_ref, mkp_ref,
                          sa_wqkv_ref, sa_bqkv_ref, sa_wo_ref, sa_bo_ref,
                          ca_wqkv_ref, ca_bqkv_ref, ca_wo_ref, ca_bo_ref,
                          w1_ref, b1_ref, w2_ref, b2_ref,
                          n1w_ref, n1b_ref, n2w_ref, n2b_ref, n3w_ref, n3b_ref,
                          o_ref, *, num_heads, eps):
    x = x_ref[0]                                    # (S_tgt, D)
    mem = mem_ref[0]                                # (S_mem, D)
    sa = _mha(x, x, sa_wqkv_ref[...], sa_bqkv_ref[...], sa_wo_ref[...],
              sa_bo_ref[...], tkp_ref[0], num_heads=num_heads, causal=True)
    x = _add_ln(x, sa, n1w_ref[...], n1b_ref[...], eps)
    ca = _mha(x, mem, ca_wqkv_ref[...], ca_bqkv_ref[...], ca_wo_ref[...],
              ca_bo_ref[...], mkp_ref[0], num_heads=num_heads, causal=False)
    x = _add_ln(x, ca, n2w_ref[...], n2b_ref[...], eps)
    h = jnp.maximum(jnp.dot(x, w1_ref[...], preferred_element_type=jnp.float32)
                    + b1_ref[...], 0.0)
    ff = jnp.dot(h, w2_ref[...], preferred_element_type=jnp.float32) + b2_ref[...]
    x = _add_ln(x, ff, n3w_ref[...], n3b_ref[...], eps)
    o_ref[0] = x


def _wspec(shape):
    # Full-array (weight) block, same block at every grid step.
    return pl.BlockSpec(shape, lambda b: (0,) * len(shape))


def encoder_layer(x, kp_add, p, num_heads):
    """x: (B, S, D), kp_add: (B, 1, S) additive key-padding bias."""
    B, S, D = x.shape
    F = p["w1"].shape[1]
    return pl.pallas_call(
        functools.partial(_encoder_layer_kernel, num_heads=num_heads, eps=_EPS),
        out_shape=jax.ShapeDtypeStruct((B, S, D), jnp.float32),
        grid=(B,),
        in_specs=[
            pl.BlockSpec((1, S, D), lambda b: (b, 0, 0)),
            pl.BlockSpec((1, 1, S), lambda b: (b, 0, 0)),
            _wspec((D, 3 * D)), _wspec((1, 3 * D)), _wspec((D, D)), _wspec((1, D)),
            _wspec((D, F)), _wspec((1, F)), _wspec((F, D)), _wspec((1, D)),
            _wspec((1, D)), _wspec((1, D)), _wspec((1, D)), _wspec((1, D)),
        ],
        out_specs=pl.BlockSpec((1, S, D), lambda b: (b, 0, 0)),
        compiler_params=pltpu.CompilerParams(dimension_semantics=("parallel",)),
    )(x, kp_add,
      p["sa"]["wqkv"], p["sa"]["bqkv"], p["sa"]["wo"], p["sa"]["bo"],
      p["w1"], p["b1"], p["w2"], p["b2"],
      p["n1w"], p["n1b"], p["n2w"], p["n2b"])


def decoder_layer(x, memory, tgt_kp, mem_kp, p, num_heads):
    """x: (B, S_tgt, D), memory: (B, S_mem, D); kp masks: (B, 1, S*)."""
    B, St, D = x.shape
    Sm = memory.shape[1]
    F = p["w1"].shape[1]
    return pl.pallas_call(
        functools.partial(_decoder_layer_kernel, num_heads=num_heads, eps=_EPS),
        out_shape=jax.ShapeDtypeStruct((B, St, D), jnp.float32),
        grid=(B,),
        in_specs=[
            pl.BlockSpec((1, St, D), lambda b: (b, 0, 0)),
            pl.BlockSpec((1, Sm, D), lambda b: (b, 0, 0)),
            pl.BlockSpec((1, 1, St), lambda b: (b, 0, 0)),
            pl.BlockSpec((1, 1, Sm), lambda b: (b, 0, 0)),
            _wspec((D, 3 * D)), _wspec((1, 3 * D)), _wspec((D, D)), _wspec((1, D)),
            _wspec((D, 3 * D)), _wspec((1, 3 * D)), _wspec((D, D)), _wspec((1, D)),
            _wspec((D, F)), _wspec((1, F)), _wspec((F, D)), _wspec((1, D)),
            _wspec((1, D)), _wspec((1, D)), _wspec((1, D)), _wspec((1, D)),
            _wspec((1, D)), _wspec((1, D)),
        ],
        out_specs=pl.BlockSpec((1, St, D), lambda b: (b, 0, 0)),
        compiler_params=pltpu.CompilerParams(dimension_semantics=("parallel",)),
    )(x, memory, tgt_kp, mem_kp,
      p["sa"]["wqkv"], p["sa"]["bqkv"], p["sa"]["wo"], p["sa"]["bo"],
      p["ca"]["wqkv"], p["ca"]["bqkv"], p["ca"]["wo"], p["ca"]["bo"],
      p["w1"], p["b1"], p["w2"], p["b2"],
      p["n1w"], p["n1b"], p["n2w"], p["n2b"], p["n3w"], p["n3b"])


# ----------------------------------------------------------------------------
# Standalone LayerNorm and Linear kernels (final norms, generator) — tiled M
# ----------------------------------------------------------------------------

def _pick_tile(m):
    for t in (512, 256, 128, 64, 32, 16, 8):
        if t <= m and m % t == 0:
            return t
    return m


def _ln_kernel(x_ref, g_ref, b_ref, o_ref, *, eps):
    z = x_ref[...]
    mu = jnp.mean(z, axis=-1, keepdims=True)
    var = jnp.mean((z - mu) ** 2, axis=-1, keepdims=True)
    o_ref[...] = (z - mu) * lax.rsqrt(var + eps) * g_ref[...] + b_ref[...]


def layernorm(x2d, g, b, eps=_EPS):
    """LayerNorm over last dim.  x2d: (M, D); g, b: (1, D)."""
    M, D = x2d.shape
    TM = _pick_tile(M)
    return pl.pallas_call(
        functools.partial(_ln_kernel, eps=eps),
        out_shape=jax.ShapeDtypeStruct((M, D), jnp.float32),
        grid=(M // TM,),
        in_specs=[pl.BlockSpec((TM, D), lambda i: (i, 0)),
                  pl.BlockSpec((1, D), lambda i: (0, 0)),
                  pl.BlockSpec((1, D), lambda i: (0, 0))],
        out_specs=pl.BlockSpec((TM, D), lambda i: (i, 0)),
        compiler_params=pltpu.CompilerParams(dimension_semantics=("parallel",)),
    )(x2d, g, b)


def _linear_kernel(x_ref, w_ref, b_ref, o_ref):
    o_ref[...] = (jnp.dot(x_ref[...], w_ref[...],
                          preferred_element_type=jnp.float32) + b_ref[...])


def linear(x2d, w, b):
    """x2d: (M, K), w: (K, N) pre-transposed, b: (1, N)."""
    M, K = x2d.shape
    N = w.shape[1]
    TM = _pick_tile(M)
    return pl.pallas_call(
        _linear_kernel,
        out_shape=jax.ShapeDtypeStruct((M, N), jnp.float32),
        grid=(M // TM,),
        in_specs=[pl.BlockSpec((TM, K), lambda i: (i, 0)),
                  pl.BlockSpec((K, N), lambda i: (0, 0)),
                  pl.BlockSpec((1, N), lambda i: (0, 0))],
        out_specs=pl.BlockSpec((TM, N), lambda i: (i, 0)),
        compiler_params=pltpu.CompilerParams(dimension_semantics=("parallel",)),
    )(x2d, w, b)


# ----------------------------------------------------------------------------
# Full MyTf forward (embeddings / masks / layer stacks / generator)
# ----------------------------------------------------------------------------

def my_tf_forward(src_tokens, tgt_tokens, params, *, num_heads, pad_idx):
    """src_tokens: (S_src, B) int32; tgt_tokens: (S_tgt, B) int32."""
    d_model = params["src_emb"].shape[1]
    S_src, B = src_tokens.shape
    S_tgt = tgt_tokens.shape[0]

    # token embedding * sqrt(D) + sinusoidal positional encoding
    # (gather + broadcast add: tiny, done in plain JAX, not a Pallas hot path)
    src_emb = jnp.take(params["src_emb"], src_tokens, axis=0) * math.sqrt(d_model)
    tgt_emb = jnp.take(params["tgt_emb"], tgt_tokens, axis=0) * math.sqrt(d_model)
    src_emb = src_emb + params["pos_emb"][:S_src]
    tgt_emb = tgt_emb + params["pos_emb"][:S_tgt]

    # additive key-padding biases (B, 1, S): -1e9 at pad positions
    src_kp = jnp.where(src_tokens.T == pad_idx, _NEG, 0.0).astype(jnp.float32)[:, None, :]
    tgt_kp = jnp.where(tgt_tokens.T == pad_idx, _NEG, 0.0).astype(jnp.float32)[:, None, :]

    # batch-major (B, S, D) layout for the fused per-layer kernels
    x = jnp.transpose(src_emb, (1, 0, 2))
    for p in params["enc_layers"]:
        x = encoder_layer(x, src_kp, p, num_heads)
    memory = layernorm(x.reshape(B * S_src, d_model),
                       params["enc_norm_w"], params["enc_norm_b"]
                       ).reshape(B, S_src, d_model)

    y = jnp.transpose(tgt_emb, (1, 0, 2))
    for p in params["dec_layers"]:
        y = decoder_layer(y, memory, tgt_kp, src_kp, p, num_heads)
    y = layernorm(y.reshape(B * S_tgt, d_model),
                  params["dec_norm_w"], params["dec_norm_b"]
                  ).reshape(B, S_tgt, d_model)

    # back to sequence-first, then generator linear
    y = jnp.transpose(y, (1, 0, 2)).reshape(S_tgt * B, d_model)
    logits = linear(y, params["gen_w"], params["gen_b"])
    return logits.reshape(S_tgt, B, -1)


# ----------------------------------------------------------------------------
# Deterministic parameter construction (weights stored pre-transposed)
# ----------------------------------------------------------------------------

def init_params(key, *, num_enc_layers, num_dec_layers, d_model, d_ff,
                src_vocab, tgt_vocab, maxlen=64):
    # TODO(synk): init is a deterministic placeholder (0.02 * normal), not
    # xavier_uniform as in MyTf.param_init; forward semantics are unaffected.
    scale = 0.02

    def nrm(k, shape):
        return scale * jax.random.normal(k, shape, jnp.float32)

    def zeros(shape):
        return jnp.zeros(shape, jnp.float32)

    def ones(shape):
        return jnp.ones(shape, jnp.float32)

    def mha_params(k):
        k0, k1 = jax.random.split(k)
        return dict(wqkv=nrm(k0, (d_model, 3 * d_model)),   # in_proj_weight.T
                    bqkv=zeros((1, 3 * d_model)),
                    wo=nrm(k1, (d_model, d_model)),          # out_proj.weight.T
                    bo=zeros((1, d_model)))

    def enc_layer(k):
        ks = jax.random.split(k, 3)
        return dict(sa=mha_params(ks[0]),
                    w1=nrm(ks[1], (d_model, d_ff)), b1=zeros((1, d_ff)),
                    w2=nrm(ks[2], (d_ff, d_model)), b2=zeros((1, d_model)),
                    n1w=ones((1, d_model)), n1b=zeros((1, d_model)),
                    n2w=ones((1, d_model)), n2b=zeros((1, d_model)))

    def dec_layer(k):
        ks = jax.random.split(k, 4)
        return dict(sa=mha_params(ks[0]), ca=mha_params(ks[1]),
                    w1=nrm(ks[2], (d_model, d_ff)), b1=zeros((1, d_ff)),
                    w2=nrm(ks[3], (d_ff, d_model)), b2=zeros((1, d_model)),
                    n1w=ones((1, d_model)), n1b=zeros((1, d_model)),
                    n2w=ones((1, d_model)), n2b=zeros((1, d_model)),
                    n3w=ones((1, d_model)), n3b=zeros((1, d_model)))

    ks = jax.random.split(key, num_enc_layers + num_dec_layers + 3)
    enc_layers = [enc_layer(ks[i]) for i in range(num_enc_layers)]
    dec_layers = [dec_layer(ks[num_enc_layers + i]) for i in range(num_dec_layers)]
    src_emb = nrm(ks[-3], (src_vocab, d_model))
    tgt_emb = nrm(ks[-2], (tgt_vocab, d_model))
    gen_w = nrm(ks[-1], (d_model, tgt_vocab))   # generator weight, pre-transposed
    gen_b = zeros((1, tgt_vocab))

    # sinusoidal positional table, matches PositionalEncoding: (maxlen, 1, D)
    pos = jnp.arange(maxlen, dtype=jnp.float32)[:, None]
    den = jnp.exp(-jnp.arange(0, d_model, 2, dtype=jnp.float32)
                  * math.log(10000.0) / d_model)
    pe = jnp.zeros((maxlen, d_model), jnp.float32)
    pe = pe.at[:, 0::2].set(jnp.sin(pos * den))
    pe = pe.at[:, 1::2].set(jnp.cos(pos * den))
    pos_emb = pe[:, None, :]

    return dict(enc_layers=enc_layers, dec_layers=dec_layers,
                enc_norm_w=ones((1, d_model)), enc_norm_b=zeros((1, d_model)),
                dec_norm_w=ones((1, d_model)), dec_norm_b=zeros((1, d_model)),
                src_emb=src_emb, tgt_emb=tgt_emb,
                gen_w=gen_w, gen_b=gen_b, pos_emb=pos_emb)


# ----------------------------------------------------------------------------

if __name__ == "__main__":
    S_SRC, S_TGT, B = 8, 8, 2
    D_MODEL, N_HEADS, D_FF = 32, 4, 64
    N_ENC, N_DEC = 2, 2
    SRC_VOCAB, TGT_VOCAB, PAD_IDX = 40, 48, 0

    key = jax.random.PRNGKey(0)
    k_src, k_tgt, k_par = jax.random.split(key, 3)

    src = jax.random.randint(k_src, (S_SRC, B), 1, SRC_VOCAB, dtype=jnp.int32)
    tgt = jax.random.randint(k_tgt, (S_TGT, B), 1, TGT_VOCAB, dtype=jnp.int32)
    src = src.at[-1, 0].set(PAD_IDX)      # exercise src key-padding mask
    tgt = tgt.at[-2:, 1].set(PAD_IDX)     # exercise tgt key-padding mask

    params = init_params(k_par, num_enc_layers=N_ENC, num_dec_layers=N_DEC,
                         d_model=D_MODEL, d_ff=D_FF,
                         src_vocab=SRC_VOCAB, tgt_vocab=TGT_VOCAB)

    fwd = jax.jit(functools.partial(my_tf_forward,
                                    num_heads=N_HEADS, pad_idx=PAD_IDX))
    out = jax.block_until_ready(fwd(src, tgt, params))

    assert out.shape == (S_TGT, B, TGT_VOCAB)
    assert bool(jnp.all(jnp.isfinite(out)))
    print("KERNEL_OK")
</pallas_src>

<mosaic_0001>
module attributes {stable_mosaic.version = 11 : i64} {
  func.func @_ln_kernel(%arg0: i32, %arg1: memref<16x32xf32, #tpu.memory_space<vmem>>, %arg2: memref<1x32xf32, #tpu.memory_space<vmem>>, %arg3: memref<1x32xf32, #tpu.memory_space<vmem>>, %arg4: memref<16x32xf32, #tpu.memory_space<vmem>>) attributes {dimension_semantics = [#tpu.dimension_semantics<parallel>], iteration_bounds = array<i64: 1>, scalar_prefetch = 0 : i64, scratch_operands = 0 : i64, tpu.core_type = #tpu.core_type<tc>, window_params = [{transform_indices = @transform_0, window_bounds = array<i64: 16, 32>}, {pipeline_mode = #tpu.pipeline_mode<synchronous>, transform_indices = @transform_1, window_bounds = array<i64: 1, 32>}, {pipeline_mode = #tpu.pipeline_mode<synchronous>, transform_indices = @transform_2, window_bounds = array<i64: 1, 32>}, {transform_indices = @transform_3, window_bounds = array<i64: 16, 32>}]} {
    %c0 = arith.constant 0 : index
    %c0_0 = arith.constant 0 : index
    %0 = vector.load %arg1[%c0, %c0_0] : memref<16x32xf32, #tpu.memory_space<vmem>>, vector<16x32xf32>
    %cst = arith.constant dense<0.000000e+00> : vector<16xf32>
    %1 = vector.multi_reduction <add>, %0, %cst [1] : vector<16x32xf32> to vector<16xf32>
    %2 = vector.shape_cast %1 : vector<16xf32> to vector<16x1xf32>
    %cst_1 = arith.constant 3.200000e+01 : f32
    %3 = vector.broadcast %cst_1 : f32 to vector<16x1xf32>
    %4 = arith.divf %2, %3 : vector<16x1xf32>
    %5 = vector.broadcast %4 : vector<16x1xf32> to vector<16x32xf32>
    %6 = arith.subf %0, %5 : vector<16x32xf32>
    %7 = arith.mulf %6, %6 : vector<16x32xf32>
    %cst_2 = arith.constant dense<0.000000e+00> : vector<16xf32>
    %8 = vector.multi_reduction <add>, %7, %cst_2 [1] : vector<16x32xf32> to vector<16xf32>
    %9 = vector.shape_cast %8 : vector<16xf32> to vector<16x1xf32>
    %cst_3 = arith.constant 3.200000e+01 : f32
    %10 = vector.broadcast %cst_3 : f32 to vector<16x1xf32>
    %11 = arith.divf %9, %10 : vector<16x1xf32>
    %12 = vector.broadcast %4 : vector<16x1xf32> to vector<16x32xf32>
    %13 = arith.subf %0, %12 : vector<16x32xf32>
    %cst_4 = arith.constant 9.99999974E-6 : f32
    %14 = vector.broadcast %cst_4 : f32 to vector<16x1xf32>
    %15 = arith.addf %11, %14 : vector<16x1xf32>
    %16 = math.rsqrt %15 : vector<16x1xf32>
    %17 = vector.broadcast %16 : vector<16x1xf32> to vector<16x32xf32>
    %18 = arith.mulf %13, %17 : vector<16x32xf32>
    %c0_5 = arith.constant 0 : index
    %c0_6 = arith.constant 0 : index
    %19 = vector.load %arg2[%c0_5, %c0_6] : memref<1x32xf32, #tpu.memory_space<vmem>>, vector<1x32xf32>
    %20 = vector.broadcast %19 : vector<1x32xf32> to vector<16x32xf32>
    %21 = arith.mulf %18, %20 : vector<16x32xf32>
    %c0_7 = arith.constant 0 : index
    %c0_8 = arith.constant 0 : index
    %22 = vector.load %arg3[%c0_7, %c0_8] : memref<1x32xf32, #tpu.memory_space<vmem>>, vector<1x32xf32>
    %23 = vector.broadcast %22 : vector<1x32xf32> to vector<16x32xf32>
    %24 = arith.addf %21, %23 : vector<16x32xf32>
    %c0_9 = arith.constant 0 : index
    %c0_10 = arith.constant 0 : index
    %25 = vector.load %arg4[%c0_9, %c0_10] : memref<16x32xf32, #tpu.memory_space<vmem>>, vector<16x32xf32>
    tpu.vector_store %arg4[%c0_9, %c0_10], %24 {strides = array<i32>} : memref<16x32xf32, #tpu.memory_space<vmem>>, vector<16x32xf32>,
    return
  }
  func.func @transform_0(%arg0: i32) -> (i32, i32) {
    %c0_i32 = arith.constant 0 : i32
    %c0_i32_0 = arith.constant 0 : i32
    return %arg0, %c0_i32 : i32, i32
  }
  func.func @transform_1(%arg0: i32) -> (i32, i32) {
    %c0_i32 = arith.constant 0 : i32
    %c0_i32_0 = arith.constant 0 : i32
    %c0_i32_1 = arith.constant 0 : i32
    return %c0_i32, %c0_i32_0 : i32, i32
  }
  func.func @transform_2(%arg0: i32) -> (i32, i32) {
    %c0_i32 = arith.constant 0 : i32
    %c0_i32_0 = arith.constant 0 : i32
    %c0_i32_1 = arith.constant 0 : i32
    return %c0_i32, %c0_i32_0 : i32, i32
  }
  func.func @transform_3(%arg0: i32) -> (i32, i32) {
    %c0_i32 = arith.constant 0 : i32
    %c0_i32_0 = arith.constant 0 : i32
    return %arg0, %c0_i32 : i32, i32
  }
}

module attributes {stable_mosaic.version = 11 : i64} {
  func.func @_linear_kernel(%arg0: i32, %arg1: memref<16x32xf32, #tpu.memory_space<vmem>>, %arg2: memref<32x48xf32, #tpu.memory_space<vmem>>, %arg3: memref<1x48xf32, #tpu.memory_space<vmem>>, %arg4: memref<16x48xf32, #tpu.memory_space<vmem>>) attributes {dimension_semantics = [#tpu.dimension_semantics<parallel>], iteration_bounds = array<i64: 1>, scalar_prefetch = 0 : i64, scratch_operands = 0 : i64, tpu.core_type = #tpu.core_type<tc>, window_params = [{transform_indices = @transform_0, window_bounds = array<i64: 16, 32>}, {pipeline_mode = #tpu.pipeline_mode<synchronous>, transform_indices = @transform_1, window_bounds = array<i64: 32, 48>}, {pipeline_mode = #tpu.pipeline_mode<synchronous>, transform_indices = @transform_2, window_bounds = array<i64: 1, 48>}, {transform_indices = @transform_3, window_bounds = array<i64: 16, 48>}]} {
    %c0 = arith.constant 0 : index
    %c0_0 = arith.constant 0 : index
    %0 = vector.load %arg1[%c0, %c0_0] : memref<16x32xf32, #tpu.memory_space<vmem>>, vector<16x32xf32>
    %c0_1 = arith.constant 0 : index
    %c0_2 = arith.constant 0 : index
    %1 = vector.load %arg2[%c0_1, %c0_2] : memref<32x48xf32, #tpu.memory_space<vmem>>, vector<32x48xf32>
    %cst = arith.constant dense<0.000000e+00> : vector<16x48xf32>
    %2 = tpu.matmul %0, %1, %cst {dimension_numbers = #tpu.dot_dimension_numbers<[1], [0], [0], [1], [0, 0, 1, 1], [], []>} : vector<16x32xf32>, vector<32x48xf32>, vector<16x48xf32> -> vector<16x48xf32>
    %c0_3 = arith.constant 0 : index
    %c0_4 = arith.constant 0 : index
    %3 = vector.load %arg3[%c0_3, %c0_4] : memref<1x48xf32, #tpu.memory_space<vmem>>, vector<1x48xf32>
    %4 = vector.broadcast %3 : vector<1x48xf32> to vector<16x48xf32>
    %5 = arith.addf %2, %4 : vector<16x48xf32>
    %c0_5 = arith.constant 0 : index
    %c0_6 = arith.constant 0 : index
    %6 = vector.load %arg4[%c0_5, %c0_6] : memref<16x48xf32, #tpu.memory_space<vmem>>, vector<16x48xf32>
    tpu.vector_store %arg4[%c0_5, %c0_6], %5 {strides = array<i32>} : memref<16x48xf32, #tpu.memory_space<vmem>>, vector<16x48xf32>,
    return
  }
  func.func @transform_0(%arg0: i32) -> (i32, i32) {
    %c0_i32 = arith.constant 0 : i32
    %c0_i32_0 = arith.constant 0 : i32
    return %arg0, %c0_i32 : i32, i32
  }
  func.func @transform_1(%arg0: i32) -> (i32, i32) {
    %c0_i32 = arith.constant 0 : i32
    %c0_i32_0 = arith.constant 0 : i32
    %c0_i32_1 = arith.constant 0 : i32
    return %c0_i32, %c0_i32_0 : i32, i32
  }
  func.func @transform_2(%arg0: i32) -> (i32, i32) {
    %c0_i32 = arith.constant 0 : i32
    %c0_i32_0 = arith.constant 0 : i32
    %c0_i32_1 = arith.constant 0 : i32
    return %c0_i32, %c0_i32_0 : i32, i32
  }
  func.func @transform_3(%arg0: i32) -> (i32, i32) {
    %c0_i32 = arith.constant 0 : i32
    %c0_i32_0 = arith.constant 0 : i32
    return %arg0, %c0_i32 : i32, i32
  }
}

module attributes {stable_mosaic.version = 11 : i64} {
  func.func @_encoder_layer_kernel(%arg0: i32, %arg1: memref<1x8x32xf32, #tpu.memory_space<vmem>>, %arg2: memref<1x1x8xf32, #tpu.memory_space<vmem>>, %arg3: memref<32x96xf32, #tpu.memory_space<vmem>>, %arg4: memref<1x96xf32, #tpu.memory_space<vmem>>, %arg5: memref<32x32xf32, #tpu.memory_space<vmem>>, %arg6: memref<1x32xf32, #tpu.memory_space<vmem>>, %arg7: memref<32x64xf32, #tpu.memory_space<vmem>>, %arg8: memref<1x64xf32, #tpu.memory_space<vmem>>, %arg9: memref<64x32xf32, #tpu.memory_space<vmem>>, %arg10: memref<1x32xf32, #tpu.memory_space<vmem>>, %arg11: memref<1x32xf32, #tpu.memory_space<vmem>>, %arg12: memref<1x32xf32, #tpu.memory_space<vmem>>, %arg13: memref<1x32xf32, #tpu.memory_space<vmem>>, %arg14: memref<1x32xf32, #tpu.memory_space<vmem>>, %arg15: memref<1x8x32xf32, #tpu.memory_space<vmem>>) attributes {dimension_semantics = [#tpu.dimension_semantics<parallel>], iteration_bounds = array<i64: 2>, scalar_prefetch = 0 : i64, scratch_operands = 0 : i64, tpu.core_type = #tpu.core_type<tc>, window_params = [{transform_indices = @transform_0, window_bounds = array<i64: 1, 8, 32>}, {transform_indices = @transform_1, window_bounds = array<i64: 1, 1, 8>}, {pipeline_mode = #tpu.pipeline_mode<synchronous>, transform_indices = @transform_2, window_bounds = array<i64: 32, 96>}, {pipeline_mode = #tpu.pipeline_mode<synchronous>, transform_indices = @transform_3, window_bounds = array<i64: 1, 96>}, {pipeline_mode = #tpu.pipeline_mode<synchronous>, transform_indices = @transform_4, window_bounds = array<i64: 32, 32>}, {pipeline_mode = #tpu.pipeline_mode<synchronous>, transform_indices = @transform_5, window_bounds = array<i64: 1, 32>}, {pipeline_mode = #tpu.pipeline_mode<synchronous>, transform_indices = @transform_6, window_bounds = array<i64: 32, 64>}, {pipeline_mode = #tpu.pipeline_mode<synchronous>, transform_indices = @transform_7, window_bounds = array<i64: 1, 64>}, {pipeline_mode = #tpu.pipeline_mode<synchronous>, transform_indices = @transform_8, window_bounds = array<i64: 64, 32>}, {pipeline_mode = #tpu.pipeline_mode<synchronous>, transform_indices = @transform_9, window_bounds = array<i64: 1, 32>}, {pipeline_mode = #tpu.pipeline_mode<synchronous>, transform_indices = @transform_10, window_bounds = array<i64: 1, 32>}, {pipeline_mode = #tpu.pipeline_mode<synchronous>, transform_indices = @transform_11, window_bounds = array<i64: 1, 32>}, {pipeline_mode = #tpu.pipeline_mode<synchronous>, transform_indices = @transform_12, window_bounds = array<i64: 1, 32>}, {pipeline_mode = #tpu.pipeline_mode<synchronous>, transform_indices = @transform_13, window_bounds = array<i64: 1, 32>}, {transform_indices = @transform_14, window_bounds = array<i64: 1, 8, 32>}]} {
    %c0 = arith.constant 0 : index
    %c0_0 = arith.constant 0 : index
    %c0_1 = arith.constant 0 : index
    %0 = vector.load %arg1[%c0, %c0_0, %c0_1] : memref<1x8x32xf32, #tpu.memory_space<vmem>>, vector<1x8x32xf32>
    %1 = vector.shape_cast %0 : vector<1x8x32xf32> to vector<8x32xf32>
    %c0_2 = arith.constant 0 : index
    %c0_3 = arith.constant 0 : index
    %c0_4 = arith.constant 0 : index
    %2 = vector.load %arg2[%c0_2, %c0_3, %c0_4] : memref<1x1x8xf32, #tpu.memory_space<vmem>>, vector<1x1x8xf32>
    %3 = vector.shape_cast %2 : vector<1x1x8xf32> to vector<1x8xf32>
    %c0_5 = arith.constant 0 : index
    %c0_6 = arith.constant 0 : index
    %4 = vector.load %arg3[%c0_5, %c0_6] : memref<32x96xf32, #tpu.memory_space<vmem>>, vector<32x96xf32>
    %c0_7 = arith.constant 0 : index
    %c0_8 = arith.constant 0 : index
    %5 = vector.load %arg4[%c0_7, %c0_8] : memref<1x96xf32, #tpu.memory_space<vmem>>, vector<1x96xf32>
    %c0_9 = arith.constant 0 : index
    %c0_10 = arith.constant 0 : index
    %6 = vector.load %arg5[%c0_9, %c0_10] : memref<32x32xf32, #tpu.memory_space<vmem>>, vector<32x32xf32>
    %c0_11 = arith.constant 0 : index
    %c0_12 = arith.constant 0 : index
    %7 = vector.load %arg6[%c0_11, %c0_12] : memref<1x32xf32, #tpu.memory_space<vmem>>, vector<1x32xf32>
    %cst = arith.constant dense<0.000000e+00> : vector<8x96xf32>
    %8 = tpu.matmul %1, %4, %cst {dimension_numbers = #tpu.dot_dimension_numbers<[1], [0], [0], [1], [0, 0, 1, 1], [], []>} : vector<8x32xf32>, vector<32x96xf32>, vector<8x96xf32> -> vector<8x96xf32>
    %9 = vector.broadcast %5 : vector<1x96xf32> to vector<8x96xf32>
    %10 = arith.addf %8, %9 : vector<8x96xf32>
    %11 = vector.extract_strided_slice %10 {offsets = [0, 0], sizes = [8, 32], strides = [1, 1]} : vector<8x96xf32> to vector<8x32xf32>
    %12 = vector.extract_strided_slice %10 {offsets = [0, 32], sizes = [8, 32], strides = [1, 1]} : vector<8x96xf32> to vector<8x32xf32>
    %13 = vector.extract_strided_slice %10 {offsets = [0, 64], sizes = [8, 32], strides = [1, 1]} : vector<8x96xf32> to vector<8x32xf32>
    %cst_13 = arith.constant 0.000000e+00 : f32
    %14 = vector.broadcast %cst_13 : f32 to vector<8x32xf32>
    %15 = vector.extract_strided_slice %11 {offsets = [0, 0], sizes = [8, 8], strides = [1, 1]} : vector<8x32xf32> to vector<8x8xf32>
    %cst_14 = arith.constant 0.353553385 : f32
    %16 = vector.broadcast %cst_14 : f32 to vector<8x8xf32>
    %17 = arith.mulf %15, %16 : vector<8x8xf32>
    %18 = vector.extract_strided_slice %12 {offsets = [0, 0], sizes = [8, 8], strides = [1, 1]} : vector<8x32xf32> to vector<8x8xf32>
    %cst_15 = arith.constant dense<0.000000e+00> : vector<8x8xf32>
    %19 = tpu.matmul %17, %18, %cst_15 {dimension_numbers = #tpu.dot_dimension_numbers<[1], [1], [0], [0], [0, 0, 1, 0], [], []>} : vector<8x8xf32>, vector<8x8xf32>, vector<8x8xf32> -> vector<8x8xf32>
    %20 = vector.broadcast %3 : vector<1x8xf32> to vector<8x8xf32>
    %21 = arith.addf %19, %20 : vector<8x8xf32>
    %cst_16 = arith.constant dense<0xFF800000> : vector<8xf32>
    %22 = vector.multi_reduction <maximumf>, %21, %cst_16 [1] : vector<8x8xf32> to vector<8xf32>
    %23 = vector.shape_cast %22 : vector<8xf32> to vector<8x1xf32>
    %24 = vector.broadcast %23 : vector<8x1xf32> to vector<8x8xf32>
    %25 = arith.subf %21, %24 : vector<8x8xf32>
    %26 = math.exp %25 : vector<8x8xf32>
    %cst_17 = arith.constant dense<0.000000e+00> : vector<8xf32>
    %27 = vector.multi_reduction <add>, %26, %cst_17 [1] : vector<8x8xf32> to vector<8xf32>
    %28 = vector.shape_cast %27 : vector<8xf32> to vector<8x1xf32>
    %29 = tpu.reciprocal %28 {approx = true} : vector<8x1xf32> -> vector<8x1xf32>
    %30 = vector.broadcast %29 : vector<8x1xf32> to vector<8x8xf32>
    %31 = arith.mulf %26, %30 : vector<8x8xf32>
    %32 = vector.extract_strided_slice %13 {offsets = [0, 0], sizes = [8, 8], strides = [1, 1]} : vector<8x32xf32> to vector<8x8xf32>
    %cst_18 = arith.constant dense<0.000000e+00> : vector<8x8xf32>
    %33 = tpu.matmul %31, %32, %cst_18 {dimension_numbers = #tpu.dot_dimension_numbers<[1], [0], [0], [1], [0, 0, 1, 1], [], []>} : vector<8x8xf32>, vector<8x8xf32>, vector<8x8xf32> -> vector<8x8xf32>
    %34 = vector.extract_strided_slice %6 {offsets = [0, 0], sizes = [8, 32], strides = [1, 1]} : vector<32x32xf32> to vector<8x32xf32>
    %cst_19 = arith.constant dense<0.000000e+00> : vector<8x32xf32>
    %35 = tpu.matmul %33, %34, %cst_19 {dimension_numbers = #tpu.dot_dimension_numbers<[1], [0], [0], [1], [0, 0, 1, 1], [], []>} : vector<8x8xf32>, vector<8x32xf32>, vector<8x32xf32> -> vector<8x32xf32>
    %36 = arith.addf %14, %35 : vector<8x32xf32>
    %37 = vector.extract_strided_slice %11 {offsets = [0, 8], sizes = [8, 8], strides = [1, 1]} : vector<8x32xf32> to vector<8x8xf32>
    %cst_20 = arith.constant 0.353553385 : f32
    %38 = vector.broadcast %cst_20 : f32 to vector<8x8xf32>
    %39 = arith.mulf %37, %38 : vector<8x8xf32>
    %40 = vector.extract_strided_slice %12 {offsets = [0, 8], sizes = [8, 8], strides = [1, 1]} : vector<8x32xf32> to vector<8x8xf32>
    %cst_21 = arith.constant dense<0.000000e+00> : vector<8x8xf32>
    %41 = tpu.matmul %39, %40, %cst_21 {dimension_numbers = #tpu.dot_dimension_numbers<[1], [1], [0], [0], [0, 0, 1, 0], [], []>} : vector<8x8xf32>, vector<8x8xf32>, vector<8x8xf32> -> vector<8x8xf32>
    %42 = vector.broadcast %3 : vector<1x8xf32> to vector<8x8xf32>
    %43 = arith.addf %41, %42 : vector<8x8xf32>
    %cst_22 = arith.constant dense<0xFF800000> : vector<8xf32>
    %44 = vector.multi_reduction <maximumf>, %43, %cst_22 [1] : vector<8x8xf32> to vector<8xf32>
    %45 = vector.shape_cast %44 : vector<8xf32> to vector<8x1xf32>
    %46 = vector.broadcast %45 : vector<8x1xf32> to vector<8x8xf32>
    %47 = arith.subf %43, %46 : vector<8x8xf32>
    %48 = math.exp %47 : vector<8x8xf32>
    %cst_23 = arith.constant dense<0.000000e+00> : vector<8xf32>
    %49 = vector.multi_reduction <add>, %48, %cst_23 [1] : vector<8x8xf32> to vector<8xf32>
    %50 = vector.shape_cast %49 : vector<8xf32> to vector<8x1xf32>
    %51 = tpu.reciprocal %50 {approx = true} : vector<8x1xf32> -> vector<8x1xf32>
    %52 = vector.broadcast %51 : vector<8x1xf32> to vector<8x8xf32>
    %53 = arith.mulf %48, %52 : vector<8x8xf32>
    %54 = vector.extract_strided_slice %13 {offsets = [0, 8], sizes = [8, 8], strides = [1, 1]} : vector<8x32xf32> to vector<8x8xf32>
    %cst_24 = arith.constant dense<0.000000e+00> : vector<8x8xf32>
    %55 = tpu.matmul %53, %54, %cst_24 {dimension_numbers = #tpu.dot_dimension_numbers<[1], [0], [0], [1], [0, 0, 1, 1], [], []>} : vector<8x8xf32>, vector<8x8xf32>, vector<8x8xf32> -> vector<8x8xf32>
    %56 = vector.extract_strided_slice %6 {offsets = [8, 0], sizes = [8, 32], strides = [1, 1]} : vector<32x32xf32> to vector<8x32xf32>
    %cst_25 = arith.constant dense<0.000000e+00> : vector<8x32xf32>
    %57 = tpu.matmul %55, %56, %cst_25 {dimension_numbers = #tpu.dot_dimension_numbers<[1], [0], [0], [1], [0, 0, 1, 1], [], []>} : vector<8x8xf32>, vector<8x32xf32>, vector<8x32xf32> -> vector<8x32xf32>
    %58 = arith.addf %36, %57 : vector<8x32xf32>
    %59 = vector.extract_strided_slice %11 {offsets = [0, 16], sizes = [8, 8], strides = [1, 1]} : vector<8x32xf32> to vector<8x8xf32>
    %cst_26 = arith.constant 0.353553385 : f32
    %60 = vector.broadcast %cst_26 : f32 to vector<8x8xf32>
    %61 = arith.mulf %59, %60 : vector<8x8xf32>
    %62 = vector.extract_strided_slice %12 {offsets = [0, 16], sizes = [8, 8], strides = [1, 1]} : vector<8x32xf32> to vector<8x8xf32>
    %cst_27 = arith.constant dense<0.000000e+00> : vector<8x8xf32>
    %63 = tpu.matmul %61, %62, %cst_27 {dimension_numbers = #tpu.dot_dimension_numbers<[1], [1], [0], [0], [0, 0, 1, 0], [], []>} : vector<8x8xf32>, vector<8x8xf32>, vector<8x8xf32> -> vector<8x8xf32>
    %64 = vector.broadcast %3 : vector<1x8xf32> to vector<8x8xf32>
    %65 = arith.addf %63, %64 : vector<8x8xf32>
    %cst_28 = arith.constant dense<0xFF800000> : vector<8xf32>
    %66 = vector.multi_reduction <maximumf>, %65, %cst_28 [1] : vector<8x8xf32> to vector<8xf32>
    %67 = vector.shape_cast %66 : vector<8xf32> to vector<8x1xf32>
    %68 = vector.broadcast %67 : vector<8x1xf32> to vector<8x8xf32>
    %69 = arith.subf %65, %68 : vector<8x8xf32>
    %70 = math.exp %69 : vector<8x8xf32>
    %cst_29 = arith.constant dense<0.000000e+00> : vector<8xf32>
    %71 = vector.multi_reduction <add>, %70, %cst_29 [1] : vector<8x8xf32> to vector<8xf32>
    %72 = vector.shape_cast %71 : vector<8xf32> to vector<8x1xf32>
    %73 = tpu.reciprocal %72 {approx = true} : vector<8x1xf32> -> vector<8x1xf32>
    %74 = vector.broadcast %73 : vector<8x1xf32> to vector<8x8xf32>
    %75 = arith.mulf %70, %74 : vector<8x8xf32>
    %76 = vector.extract_strided_slice %13 {offsets = [0, 16], sizes = [8, 8], strides = [1, 1]} : vector<8x32xf32> to vector<8x8xf32>
    %cst_30 = arith.constant dense<0.000000e+00> : vector<8x8xf32>
    %77 = tpu.matmul %75, %76, %cst_30 {dimension_numbers = #tpu.dot_dimension_numbers<[1], [0], [0], [1], [0, 0, 1, 1], [], []>} : vector<8x8xf32>, vector<8x8xf32>, vector<8x8xf32> -> vector<8x8xf32>
    %78 = vector.extract_strided_slice %6 {offsets = [16, 0], sizes = [8, 32], strides = [1, 1]} : vector<32x32xf32> to vector<8x32xf32>
    %cst_31 = arith.constant dense<0.000000e+00> : vector<8x32xf32>
    %79 = tpu.matmul %77, %78, %cst_31 {dimension_numbers = #tpu.dot_dimension_numbers<[1], [0], [0], [1], [0, 0, 1, 1], [], []>} : vector<8x8xf32>, vector<8x32xf32>, vector<8x32xf32> -> vector<8x32xf32>
    %80 = arith.addf %58, %79 : vector<8x32xf32>
    %81 = vector.extract_strided_slice %11 {offsets = [0, 24], sizes = [8, 8], strides = [1, 1]} : vector<8x32xf32> to vector<8x8xf32>
    %cst_32 = arith.constant 0.353553385 : f32
    %82 = vector.broadcast %cst_32 : f32 to vector<8x8xf32>
    %83 = arith.mulf %81, %82 : vector<8x8xf32>
    %84 = vector.extract_strided_slice %12 {offsets = [0, 24], sizes = [8, 8], strides = [1, 1]} : vector<8x32xf32> to vector<8x8xf32>
    %cst_33 = arith.constant dense<0.000000e+00> : vector<8x8xf32>
    %85 = tpu.matmul %83, %84, %cst_33 {dimension_numbers = #tpu.dot_dimension_numbers<[1], [1], [0], [0], [0, 0, 1, 0], [], []>} : vector<8x8xf32>, vector<8x8xf32>, vector<8x8xf32> -> vector<8x8xf32>
    %86 = vector.broadcast %3 : vector<1x8xf32> to vector<8x8xf32>
    %87 = arith.addf %85, %86 : vector<8x8xf32>
    %cst_34 = arith.constant dense<0xFF800000> : vector<8xf32>
    %88 = vector.multi_reduction <maximumf>, %87, %cst_34 [1] : vector<8x8xf32> to vector<8xf32>
    %89 = vector.shape_cast %88 : vector<8xf32> to vector<8x1xf32>
    %90 = vector.broadcast %89 : vector<8x1xf32> to vector<8x8xf32>
    %91 = arith.subf %87, %90 : vector<8x8xf32>
    %92 = math.exp %91 : vector<8x8xf32>
    %cst_35 = arith.constant dense<0.000000e+00> : vector<8xf32>
    %93 = vector.multi_reduction <add>, %92, %cst_35 [1] : vector<8x8xf32> to vector<8xf32>
    %94 = vector.shape_cast %93 : vector<8xf32> to vector<8x1xf32>
    %95 = tpu.reciprocal %94 {approx = true} : vector<8x1xf32> -> vector<8x1xf32>
    %96 = vector.broadcast %95 : vector<8x1xf32> to vector<8x8xf32>
    %97 = arith.mulf %92, %96 : vector<8x8xf32>
    %98 = vector.extract_strided_slice %13 {offsets = [0, 24], sizes = [8, 8], strides = [1, 1]} : vector<8x32xf32> to vector<8x8xf32>
    %cst_36 = arith.constant dense<0.000000e+00> : vector<8x8xf32>
    %99 = tpu.matmul %97, %98, %cst_36 {dimension_numbers = #tpu.dot_dimension_numbers<[1], [0], [0], [1], [0, 0, 1, 1], [], []>} : vector<8x8xf32>, vector<8x8xf32>, vector<8x8xf32> -> vector<8x8xf32>
    %100 = vector.extract_strided_slice %6 {offsets = [24, 0], sizes = [8, 32], strides = [1, 1]} : vector<32x32xf32> to vector<8x32xf32>
    %cst_37 = arith.constant dense<0.000000e+00> : vector<8x32xf32>
    %101 = tpu.matmul %99, %100, %cst_37 {dimension_numbers = #tpu.dot_dimension_numbers<[1], [0], [0], [1], [0, 0, 1, 1], [], []>} : vector<8x8xf32>, vector<8x32xf32>, vector<8x32xf32> -> vector<8x32xf32>
    %102 = arith.addf %80, %101 : vector<8x32xf32>
    %103 = vector.broadcast %7 : vector<1x32xf32> to vector<8x32xf32>
    %104 = arith.addf %102, %103 : vector<8x32xf32>
    %c0_38 = arith.constant 0 : index
    %c0_39 = arith.constant 0 : index
    %105 = vector.load %arg11[%c0_38, %c0_39] : memref<1x32xf32, #tpu.memory_space<vmem>>, vector<1x32xf32>
    %c0_40 = arith.constant 0 : index
    %c0_41 = arith.constant 0 : index
    %106 = vector.load %arg12[%c0_40, %c0_41] : memref<1x32xf32, #tpu.memory_space<vmem>>, vector<1x32xf32>
    %107 = arith.addf %1, %104 : vector<8x32xf32>
    %cst_42 = arith.constant dense<0.000000e+00> : vector<8xf32>
    %108 = vector.multi_reduction <add>, %107, %cst_42 [1] : vector<8x32xf32> to vector<8xf32>
    %109 = vector.shape_cast %108 : vector<8xf32> to vector<8x1xf32>
    %cst_43 = arith.constant 3.200000e+01 : f32
    %110 = vector.broadcast %cst_43 : f32 to vector<8x1xf32>
    %111 = arith.divf %109, %110 : vector<8x1xf32>
    %112 = vector.broadcast %111 : vector<8x1xf32> to vector<8x32xf32>
    %113 = arith.subf %107, %112 : vector<8x32xf32>
    %114 = arith.mulf %113, %113 : vector<8x32xf32>
    %cst_44 = arith.constant dense<0.000000e+00> : vector<8xf32>
    %115 = vector.multi_reduction <add>, %114, %cst_44 [1] : vector<8x32xf32> to vector<8xf32>
    %116 = vector.shape_cast %115 : vector<8xf32> to vector<8x1xf32>
    %cst_45 = arith.constant 3.200000e+01 : f32
    %117 = vector.broadcast %cst_45 : f32 to vector<8x1xf32>
    %118 = arith.divf %116, %117 : vector<8x1xf32>
    %119 = vector.broadcast %111 : vector<8x1xf32> to vector<8x32xf32>
    %120 = arith.subf %107, %119 : vector<8x32xf32>
    %cst_46 = arith.constant 9.99999974E-6 : f32
    %121 = vector.broadcast %cst_46 : f32 to vector<8x1xf32>
    %122 = arith.addf %118, %121 : vector<8x1xf32>
    %123 = math.rsqrt %122 : vector<8x1xf32>
    %124 = vector.broadcast %123 : vector<8x1xf32> to vector<8x32xf32>
    %125 = arith.mulf %120, %124 : vector<8x32xf32>
    %126 = vector.broadcast %105 : vector<1x32xf32> to vector<8x32xf32>
    %127 = arith.mulf %125, %126 : vector<8x32xf32>
    %128 = vector.broadcast %106 : vector<1x32xf32> to vector<8x32xf32>
    %129 = arith.addf %127, %128 : vector<8x32xf32>
    %c0_47 = arith.constant 0 : index
    %c0_48 = arith.constant 0 : index
    %130 = vector.load %arg7[%c0_47, %c0_48] : memref<32x64xf32, #tpu.memory_space<vmem>>, vector<32x64xf32>
    %cst_49 = arith.constant dense<0.000000e+00> : vector<8x64xf32>
    %131 = tpu.matmul %129, %130, %cst_49 {dimension_numbers = #tpu.dot_dimension_numbers<[1], [0], [0], [1], [0, 0, 1, 1], [], []>} : vector<8x32xf32>, vector<32x64xf32>, vector<8x64xf32> -> vector<8x64xf32>
    %c0_50 = arith.constant 0 : index
    %c0_51 = arith.constant 0 : index
    %132 = vector.load %arg8[%c0_50, %c0_51] : memref<1x64xf32, #tpu.memory_space<vmem>>, vector<1x64xf32>
    %133 = vector.broadcast %132 : vector<1x64xf32> to vector<8x64xf32>
    %134 = arith.addf %131, %133 : vector<8x64xf32>
    %cst_52 = arith.constant 0.000000e+00 : f32
    %135 = vector.broadcast %cst_52 : f32 to vector<8x64xf32>
    %136 = arith.maximumf %134, %135 : vector<8x64xf32>
    %c0_53 = arith.constant 0 : index
    %c0_54 = arith.constant 0 : index
    %137 = vector.load %arg9[%c0_53, %c0_54] : memref<64x32xf32, #tpu.memory_space<vmem>>, vector<64x32xf32>
    %cst_55 = arith.constant dense<0.000000e+00> : vector<8x32xf32>
    %138 = tpu.matmul %136, %137, %cst_55 {dimension_numbers = #tpu.dot_dimension_numbers<[1], [0], [0], [1], [0, 0, 1, 1], [], []>} : vector<8x64xf32>, vector<64x32xf32>, vector<8x32xf32> -> vector<8x32xf32>
    %c0_56 = arith.constant 0 : index
    %c0_57 = arith.constant 0 : index
    %139 = vector.load %arg10[%c0_56, %c0_57] : memref<1x32xf32, #tpu.memory_space<vmem>>, vector<1x32xf32>
    %140 = vector.broadcast %139 : vector<1x32xf32> to vector<8x32xf32>
    %141 = arith.addf %138, %140 : vector<8x32xf32>
    %c0_58 = arith.constant 0 : index
    %c0_59 = arith.constant 0 : index
    %142 = vector.load %arg13[%c0_58, %c0_59] : memref<1x32xf32, #tpu.memory_space<vmem>>, vector<1x32xf32>
    %c0_60 = arith.constant 0 : index
    %c0_61 = arith.constant 0 : index
    %143 = vector.load %arg14[%c0_60, %c0_61] : memref<1x32xf32, #tpu.memory_space<vmem>>, vector<1x32xf32>
    %144 = arith.addf %129, %141 : vector<8x32xf32>
    %cst_62 = arith.constant dense<0.000000e+00> : vector<8xf32>
    %145 = vector.multi_reduction <add>, %144, %cst_62 [1] : vector<8x32xf32> to vector<8xf32>
    %146 = vector.shape_cast %145 : vector<8xf32> to vector<8x1xf32>
    %cst_63 = arith.constant 3.200000e+01 : f32
    %147 = vector.broadcast %cst_63 : f32 to vector<8x1xf32>
    %148 = arith.divf %146, %147 : vector<8x1xf32>
    %149 = vector.broadcast %148 : vector<8x1xf32> to vector<8x32xf32>
    %150 = arith.subf %144, %149 : vector<8x32xf32>
    %151 = arith.mulf %150, %150 : vector<8x32xf32>
    %cst_64 = arith.constant dense<0.000000e+00> : vector<8xf32>
    %152 = vector.multi_reduction <add>, %151, %cst_64 [1] : vector<8x32xf32> to vector<8xf32>
    %153 = vector.shape_cast %152 : vector<8xf32> to vector<8x1xf32>
    %cst_65 = arith.constant 3.200000e+01 : f32
    %154 = vector.broadcast %cst_65 : f32 to vector<8x1xf32>
    %155 = arith.divf %153, %154 : vector<8x1xf32>
    %156 = vector.broadcast %148 : vector<8x1xf32> to vector<8x32xf32>
    %157 = arith.subf %144, %156 : vector<8x32xf32>
    %cst_66 = arith.constant 9.99999974E-6 : f32
    %158 = vector.broadcast %cst_66 : f32 to vector<8x1xf32>
    %159 = arith.addf %155, %158 : vector<8x1xf32>
    %160 = math.rsqrt %159 : vector<8x1xf32>
    %161 = vector.broadcast %160 : vector<8x1xf32> to vector<8x32xf32>
    %162 = arith.mulf %157, %161 : vector<8x32xf32>
    %163 = vector.broadcast %142 : vector<1x32xf32> to vector<8x32xf32>
    %164 = arith.mulf %162, %163 : vector<8x32xf32>
    %165 = vector.broadcast %143 : vector<1x32xf32> to vector<8x32xf32>
    %166 = arith.addf %164, %165 : vector<8x32xf32>
    %c0_67 = arith.constant 0 : index
    %c0_68 = arith.constant 0 : index
    %c0_69 = arith.constant 0 : index
    %167 = vector.load %arg15[%c0_67, %c0_68, %c0_69] : memref<1x8x32xf32, #tpu.memory_space<vmem>>, vector<1x8x32xf32>
    %168 = vector.shape_cast %167 : vector<1x8x32xf32> to vector<8x32xf32>
    %169 = vector.shape_cast %166 : vector<8x32xf32> to vector<1x8x32xf32>
    tpu.vector_store %arg15[%c0_67, %c0_68, %c0_69], %169 {strides = array<i32>} : memref<1x8x32xf32, #tpu.memory_space<vmem>>, vector<1x8x32xf32>,
    return
  }
  func.func @transform_0(%arg0: i32) -> (i32, i32, i32) {
    %c0_i32 = arith.constant 0 : i32
    %c0_i32_0 = arith.constant 0 : i32
    %c0_i32_1 = arith.constant 0 : i32
    return %arg0, %c0_i32, %c0_i32_0 : i32, i32, i32
  }
  func.func @transform_1(%arg0: i32) -> (i32, i32, i32) {
    %c0_i32 = arith.constant 0 : i32
    %c0_i32_0 = arith.constant 0 : i32
    %c0_i32_1 = arith.constant 0 : i32
    return %arg0, %c0_i32, %c0_i32_0 : i32, i32, i32
  }
  func.func @transform_2(%arg0: i32) -> (i32, i32) {
    %c0_i32 = arith.constant 0 : i32
    %c0_i32_0 = arith.constant 0 : i32
    %c0_i32_1 = arith.constant 0 : i32
    return %c0_i32, %c0_i32_0 : i32, i32
  }
  func.func @transform_3(%arg0: i32) -> (i32, i32) {
    %c0_i32 = arith.constant 0 : i32
    %c0_i32_0 = arith.constant 0 : i32
    %c0_i32_1 = arith.constant 0 : i32
    return %c0_i32, %c0_i32_0 : i32, i32
  }
  func.func @transform_4(%arg0: i32) -> (i32, i32) {
    %c0_i32 = arith.constant 0 : i32
    %c0_i32_0 = arith.constant 0 : i32
    %c0_i32_1 = arith.constant 0 : i32
    return %c0_i32, %c0_i32_0 : i32, i32
  }
  func.func @transform_5(%arg0: i32) -> (i32, i32) {
    %c0_i32 = arith.constant 0 : i32
    %c0_i32_0 = arith.constant 0 : i32
    %c0_i32_1 = arith.constant 0 : i32
    return %c0_i32, %c0_i32_0 : i32, i32
  }
  func.func @transform_6(%arg0: i32) -> (i32, i32) {
    %c0_i32 = arith.constant 0 : i32
    %c0_i32_0 = arith.constant 0 : i32
    %c0_i32_1 = arith.constant 0 : i32
    return %c0_i32, %c0_i32_0 : i32, i32
  }
  func.func @transform_7(%arg0: i32) -> (i32, i32) {
    %c0_i32 = arith.constant 0 : i32
    %c0_i32_0 = arith.constant 0 : i32
    %c0_i32_1 = arith.constant 0 : i32
    return %c0_i32, %c0_i32_0 : i32, i32
  }
  func.func @transform_8(%arg0: i32) -> (i32, i32) {
    %c0_i32 = arith.constant 0 : i32
    %c0_i32_0 = arith.constant 0 : i32
    %c0_i32_1 = arith.constant 0 : i32
    return %c0_i32, %c0_i32_0 : i32, i32
  }
  func.func @transform_9(%arg0: i32) -> (i32, i32) {
    %c0_i32 = arith.constant 0 : i32
    %c0_i32_0 = arith.constant 0 : i32
    %c0_i32_1 = arith.constant 0 : i32
    return %c0_i32, %c0_i32_0 : i32, i32
  }
  func.func @transform_10(%arg0: i32) -> (i32, i32) {
    %c0_i32 = arith.constant 0 : i32
    %c0_i32_0 = arith.constant 0 : i32
    %c0_i32_1 = arith.constant 0 : i32
    return %c0_i32, %c0_i32_0 : i32, i32
  }
  func.func @transform_11(%arg0: i32) -> (i32, i32) {
    %c0_i32 = arith.constant 0 : i32
    %c0_i32_0 = arith.constant 0 : i32
    %c0_i32_1 = arith.constant 0 : i32
    return %c0_i32, %c0_i32_0 : i32, i32
  }
  func.func @transform_12(%arg0: i32) -> (i32, i32) {
    %c0_i32 = arith.constant 0 : i32
    %c0_i32_0 = arith.constant 0 : i32
    %c0_i32_1 = arith.constant 0 : i32
    return %c0_i32, %c0_i32_0 : i32, i32
  }
  func.func @transform_13(%arg0: i32) -> (i32, i32) {
    %c0_i32 = arith.constant 0 : i32
    %c0_i32_0 = arith.constant 0 : i32
    %c0_i32_1 = arith.constant 0 : i32
    return %c0_i32, %c0_i32_0 : i32, i32
  }
  func.func @transform_14(%arg0: i32) -> (i32, i32, i32) {
    %c0_i32 = arith.constant 0 : i32
    %c0_i32_0 = arith.constant 0 : i32
    %c0_i32_1 = arith.constant 0 : i32
    return %arg0, %c0_i32, %c0_i32_0 : i32, i32, i32
  }
}

module attributes {stable_mosaic.version = 11 : i64} {
  func.func @_decoder_layer_kernel(%arg0: i32, %arg1: memref<1x8x32xf32, #tpu.memory_space<vmem>>, %arg2: memref<1x8x32xf32, #tpu.memory_space<vmem>>, %arg3: memref<1x1x8xf32, #tpu.memory_space<vmem>>, %arg4: memref<1x1x8xf32, #tpu.memory_space<vmem>>, %arg5: memref<32x96xf32, #tpu.memory_space<vmem>>, %arg6: memref<1x96xf32, #tpu.memory_space<vmem>>, %arg7: memref<32x32xf32, #tpu.memory_space<vmem>>, %arg8: memref<1x32xf32, #tpu.memory_space<vmem>>, %arg9: memref<32x96xf32, #tpu.memory_space<vmem>>, %arg10: memref<1x96xf32, #tpu.memory_space<vmem>>, %arg11: memref<32x32xf32, #tpu.memory_space<vmem>>, %arg12: memref<1x32xf32, #tpu.memory_space<vmem>>, %arg13: memref<32x64xf32, #tpu.memory_space<vmem>>, %arg14: memref<1x64xf32, #tpu.memory_space<vmem>>, %arg15: memref<64x32xf32, #tpu.memory_space<vmem>>, %arg16: memref<1x32xf32, #tpu.memory_space<vmem>>, %arg17: memref<1x32xf32, #tpu.memory_space<vmem>>, %arg18: memref<1x32xf32, #tpu.memory_space<vmem>>, %arg19: memref<1x32xf32, #tpu.memory_space<vmem>>, %arg20: memref<1x32xf32, #tpu.memory_space<vmem>>, %arg21: memref<1x32xf32, #tpu.memory_space<vmem>>, %arg22: memref<1x32xf32, #tpu.memory_space<vmem>>, %arg23: memref<1x8x32xf32, #tpu.memory_space<vmem>>) attributes {dimension_semantics = [#tpu.dimension_semantics<parallel>], iteration_bounds = array<i64: 2>, scalar_prefetch = 0 : i64, scratch_operands = 0 : i64, tpu.core_type = #tpu.core_type<tc>, window_params = [{transform_indices = @transform_0, window_bounds = array<i64: 1, 8, 32>}, {transform_indices = @transform_1, window_bounds = array<i64: 1, 8, 32>}, {transform_indices = @transform_2, window_bounds = array<i64: 1, 1, 8>}, {transform_indices = @transform_3, window_bounds = array<i64: 1, 1, 8>}, {pipeline_mode = #tpu.pipeline_mode<synchronous>, transform_indices = @transform_4, window_bounds = array<i64: 32, 96>}, {pipeline_mode = #tpu.pipeline_mode<synchronous>, transform_indices = @transform_5, window_bounds = array<i64: 1, 96>}, {pipeline_mode = #tpu.pipeline_mode<synchronous>, transform_indices = @transform_6, window_bounds = array<i64: 32, 32>}, {pipeline_mode = #tpu.pipeline_mode<synchronous>, transform_indices = @transform_7, window_bounds = array<i64: 1, 32>}, {pipeline_mode = #tpu.pipeline_mode<synchronous>, transform_indices = @transform_8, window_bounds = array<i64: 32, 96>}, {pipeline_mode = #tpu.pipeline_mode<synchronous>, transform_indices = @transform_9, window_bounds = array<i64: 1, 96>}, {pipeline_mode = #tpu.pipeline_mode<synchronous>, transform_indices = @transform_10, window_bounds = array<i64: 32, 32>}, {pipeline_mode = #tpu.pipeline_mode<synchronous>, transform_indices = @transform_11, window_bounds = array<i64: 1, 32>}, {pipeline_mode = #tpu.pipeline_mode<synchronous>, transform_indices = @transform_12, window_bounds = array<i64: 32, 64>}, {pipeline_mode = #tpu.pipeline_mode<synchronous>, transform_indices = @transform_13, window_bounds = array<i64: 1, 64>}, {pipeline_mode = #tpu.pipeline_mode<synchronous>, transform_indices = @transform_14, window_bounds = array<i64: 64, 32>}, {pipeline_mode = #tpu.pipeline_mode<synchronous>, transform_indices = @transform_15, window_bounds = array<i64: 1, 32>}, {pipeline_mode = #tpu.pipeline_mode<synchronous>, transform_indices = @transform_16, window_bounds = array<i64: 1, 32>}, {pipeline_mode = #tpu.pipeline_mode<synchronous>, transform_indices = @transform_17, window_bounds = array<i64: 1, 32>}, {pipeline_mode = #tpu.pipeline_mode<synchronous>, transform_indices = @transform_18, window_bounds = array<i64: 1, 32>}, {pipeline_mode = #tpu.pipeline_mode<synchronous>, transform_indices = @transform_19, window_bounds = array<i64: 1, 32>}, {pipeline_mode = #tpu.pipeline_mode<synchronous>, transform_indices = @transform_20, window_bounds = array<i64: 1, 32>}, {pipeline_mode = #tpu.pipeline_mode<synchronous>, transform_indices = @transform_21, window_bounds = array<i64: 1, 32>}, {transform_indices = @transform_22, window_bounds = array<i64: 1, 8, 32>}]} {
    %c0 = arith.constant 0 : index
    %c0_0 = arith.constant 0 : index
    %c0_1 = arith.constant 0 : index
    %0 = vector.load %arg1[%c0, %c0_0, %c0_1] : memref<1x8x32xf32, #tpu.memory_space<vmem>>, vector<1x8x32xf32>
    %1 = vector.shape_cast %0 : vector<1x8x32xf32> to vector<8x32xf32>
    %c0_2 = arith.constant 0 : index
    %c0_3 = arith.constant 0 : index
    %c0_4 = arith.constant 0 : index
    %2 = vector.load %arg2[%c0_2, %c0_3, %c0_4] : memref<1x8x32xf32, #tpu.memory_space<vmem>>, vector<1x8x32xf32>
    %3 = vector.shape_cast %2 : vector<1x8x32xf32> to vector<8x32xf32>
    %c0_5 = arith.constant 0 : index
    %c0_6 = arith.constant 0 : index
    %4 = vector.load %arg5[%c0_5, %c0_6] : memref<32x96xf32, #tpu.memory_space<vmem>>, vector<32x96xf32>
    %c0_7 = arith.constant 0 : index
    %c0_8 = arith.constant 0 : index
    %5 = vector.load %arg6[%c0_7, %c0_8] : memref<1x96xf32, #tpu.memory_space<vmem>>, vector<1x96xf32>
    %c0_9 = arith.constant 0 : index
    %c0_10 = arith.constant 0 : index
    %6 = vector.load %arg7[%c0_9, %c0_10] : memref<32x32xf32, #tpu.memory_space<vmem>>, vector<32x32xf32>
    %c0_11 = arith.constant 0 : index
    %c0_12 = arith.constant 0 : index
    %7 = vector.load %arg8[%c0_11, %c0_12] : memref<1x32xf32, #tpu.memory_space<vmem>>, vector<1x32xf32>
    %c0_13 = arith.constant 0 : index
    %c0_14 = arith.constant 0 : index
    %c0_15 = arith.constant 0 : index
    %8 = vector.load %arg3[%c0_13, %c0_14, %c0_15] : memref<1x1x8xf32, #tpu.memory_space<vmem>>, vector<1x1x8xf32>
    %9 = vector.shape_cast %8 : vector<1x1x8xf32> to vector<1x8xf32>
    %cst = arith.constant dense<0.000000e+00> : vector<8x96xf32>
    %10 = tpu.matmul %1, %4, %cst {dimension_numbers = #tpu.dot_dimension_numbers<[1], [0], [0], [1], [0, 0, 1, 1], [], []>} : vector<8x32xf32>, vector<32x96xf32>, vector<8x96xf32> -> vector<8x96xf32>
    %11 = vector.broadcast %5 : vector<1x96xf32> to vector<8x96xf32>
    %12 = arith.addf %10, %11 : vector<8x96xf32>
    %13 = vector.extract_strided_slice %12 {offsets = [0, 0], sizes = [8, 32], strides = [1, 1]} : vector<8x96xf32> to vector<8x32xf32>
    %14 = vector.extract_strided_slice %12 {offsets = [0, 32], sizes = [8, 32], strides = [1, 1]} : vector<8x96xf32> to vector<8x32xf32>
    %15 = vector.extract_strided_slice %12 {offsets = [0, 64], sizes = [8, 32], strides = [1, 1]} : vector<8x96xf32> to vector<8x32xf32>
    %16 = tpu.iota {dimensions = array<i32: 0>} : vector<8x8xi32>
    %17 = tpu.iota {dimensions = array<i32: 1>} : vector<8x8xi32>
    %18 = arith.cmpi sge, %16, %17 : vector<8x8xi32>
    %cst_16 = arith.constant 0.000000e+00 : f32
    %cst_17 = arith.constant -1.000000e+09 : f32
    %19 = vector.broadcast %cst_16 : f32 to vector<8x8xf32>
    %20 = vector.broadcast %cst_17 : f32 to vector<8x8xf32>
    %21 = arith.select %18, %19, %20 : vector<8x8xi1>, vector<8x8xf32>
    %22 = vector.broadcast %9 : vector<1x8xf32> to vector<8x8xf32>
    %23 = arith.addf %21, %22 : vector<8x8xf32>
    %cst_18 = arith.constant 0.000000e+00 : f32
    %24 = vector.broadcast %cst_18 : f32 to vector<8x32xf32>
    %25 = vector.extract_strided_slice %13 {offsets = [0, 0], sizes = [8, 8], strides = [1, 1]} : vector<8x32xf32> to vector<8x8xf32>
    %cst_19 = arith.constant 0.353553385 : f32
    %26 = vector.broadcast %cst_19 : f32 to vector<8x8xf32>
    %27 = arith.mulf %25, %26 : vector<8x8xf32>
    %28 = vector.extract_strided_slice %14 {offsets = [0, 0], sizes = [8, 8], strides = [1, 1]} : vector<8x32xf32> to vector<8x8xf32>
    %cst_20 = arith.constant dense<0.000000e+00> : vector<8x8xf32>
    %29 = tpu.matmul %27, %28, %cst_20 {dimension_numbers = #tpu.dot_dimension_numbers<[1], [1], [0], [0], [0, 0, 1, 0], [], []>} : vector<8x8xf32>, vector<8x8xf32>, vector<8x8xf32> -> vector<8x8xf32>
    %30 = arith.addf %29, %23 : vector<8x8xf32>
    %cst_21 = arith.constant dense<0xFF800000> : vector<8xf32>
    %31 = vector.multi_reduction <maximumf>, %30, %cst_21 [1] : vector<8x8xf32> to vector<8xf32>
    %32 = vector.shape_cast %31 : vector<8xf32> to vector<8x1xf32>
    %33 = vector.broadcast %32 : vector<8x1xf32> to vector<8x8xf32>
    %34 = arith.subf %30, %33 : vector<8x8xf32>
    %35 = math.exp %34 : vector<8x8xf32>
    %cst_22 = arith.constant dense<0.000000e+00> : vector<8xf32>
    %36 = vector.multi_reduction <add>, %35, %cst_22 [1] : vector<8x8xf32> to vector<8xf32>
    %37 = vector.shape_cast %36 : vector<8xf32> to vector<8x1xf32>
    %38 = tpu.reciprocal %37 {approx = true} : vector<8x1xf32> -> vector<8x1xf32>
    %39 = vector.broadcast %38 : vector<8x1xf32> to vector<8x8xf32>
    %40 = arith.mulf %35, %39 : vector<8x8xf32>
    %41 = vector.extract_strided_slice %15 {offsets = [0, 0], sizes = [8, 8], strides = [1, 1]} : vector<8x32xf32> to vector<8x8xf32>
    %cst_23 = arith.constant dense<0.000000e+00> : vector<8x8xf32>
    %42 = tpu.matmul %40, %41, %cst_23 {dimension_numbers = #tpu.dot_dimension_numbers<[1], [0], [0], [1], [0, 0, 1, 1], [], []>} : vector<8x8xf32>, vector<8x8xf32>, vector<8x8xf32> -> vector<8x8xf32>
    %43 = vector.extract_strided_slice %6 {offsets = [0, 0], sizes = [8, 32], strides = [1, 1]} : vector<32x32xf32> to vector<8x32xf32>
    %cst_24 = arith.constant dense<0.000000e+00> : vector<8x32xf32>
    %44 = tpu.matmul %42, %43, %cst_24 {dimension_numbers = #tpu.dot_dimension_numbers<[1], [0], [0], [1], [0, 0, 1, 1], [], []>} : vector<8x8xf32>, vector<8x32xf32>, vector<8x32xf32> -> vector<8x32xf32>
    %45 = arith.addf %24, %44 : vector<8x32xf32>
    %46 = vector.extract_strided_slice %13 {offsets = [0, 8], sizes = [8, 8], strides = [1, 1]} : vector<8x32xf32> to vector<8x8xf32>
    %cst_25 = arith.constant 0.353553385 : f32
    %47 = vector.broadcast %cst_25 : f32 to vector<8x8xf32>
    %48 = arith.mulf %46, %47 : vector<8x8xf32>
    %49 = vector.extract_strided_slice %14 {offsets = [0, 8], sizes = [8, 8], strides = [1, 1]} : vector<8x32xf32> to vector<8x8xf32>
    %cst_26 = arith.constant dense<0.000000e+00> : vector<8x8xf32>
    %50 = tpu.matmul %48, %49, %cst_26 {dimension_numbers = #tpu.dot_dimension_numbers<[1], [1], [0], [0], [0, 0, 1, 0], [], []>} : vector<8x8xf32>, vector<8x8xf32>, vector<8x8xf32> -> vector<8x8xf32>
    %51 = arith.addf %50, %23 : vector<8x8xf32>
    %cst_27 = arith.constant dense<0xFF800000> : vector<8xf32>
    %52 = vector.multi_reduction <maximumf>, %51, %cst_27 [1] : vector<8x8xf32> to vector<8xf32>
    %53 = vector.shape_cast %52 : vector<8xf32> to vector<8x1xf32>
    %54 = vector.broadcast %53 : vector<8x1xf32> to vector<8x8xf32>
    %55 = arith.subf %51, %54 : vector<8x8xf32>
    %56 = math.exp %55 : vector<8x8xf32>
    %cst_28 = arith.constant dense<0.000000e+00> : vector<8xf32>
    %57 = vector.multi_reduction <add>, %56, %cst_28 [1] : vector<8x8xf32> to vector<8xf32>
    %58 = vector.shape_cast %57 : vector<8xf32> to vector<8x1xf32>
    %59 = tpu.reciprocal %58 {approx = true} : vector<8x1xf32> -> vector<8x1xf32>
    %60 = vector.broadcast %59 : vector<8x1xf32> to vector<8x8xf32>
    %61 = arith.mulf %56, %60 : vector<8x8xf32>
    %62 = vector.extract_strided_slice %15 {offsets = [0, 8], sizes = [8, 8], strides = [1, 1]} : vector<8x32xf32> to vector<8x8xf32>
    %cst_29 = arith.constant dense<0.000000e+00> : vector<8x8xf32>
    %63 = tpu.matmul %61, %62, %cst_29 {dimension_numbers = #tpu.dot_dimension_numbers<[1], [0], [0], [1], [0, 0, 1, 1], [], []>} : vector<8x8xf32>, vector<8x8xf32>, vector<8x8xf32> -> vector<8x8xf32>
    %64 = vector.extract_strided_slice %6 {offsets = [8, 0], sizes = [8, 32], strides = [1, 1]} : vector<32x32xf32> to vector<8x32xf32>
    %cst_30 = arith.constant dense<0.000000e+00> : vector<8x32xf32>
    %65 = tpu.matmul %63, %64, %cst_30 {dimension_numbers = #tpu.dot_dimension_numbers<[1], [0], [0], [1], [0, 0, 1, 1], [], []>} : vector<8x8xf32>, vector<8x32xf32>, vector<8x32xf32> -> vector<8x32xf32>
    %66 = arith.addf %45, %65 : vector<8x32xf32>
    %67 = vector.extract_strided_slice %13 {offsets = [0, 16], sizes = [8, 8], strides = [1, 1]} : vector<8x32xf32> to vector<8x8xf32>
    %cst_31 = arith.constant 0.353553385 : f32
    %68 = vector.broadcast %cst_31 : f32 to vector<8x8xf32>
    %69 = arith.mulf %67, %68 : vector<8x8xf32>
    %70 = vector.extract_strided_slice %14 {offsets = [0, 16], sizes = [8, 8], strides = [1, 1]} : vector<8x32xf32> to vector<8x8xf32>
    %cst_32 = arith.constant dense<0.000000e+00> : vector<8x8xf32>
    %71 = tpu.matmul %69, %70, %cst_32 {dimension_numbers = #tpu.dot_dimension_numbers<[1], [1], [0], [0], [0, 0, 1, 0], [], []>} : vector<8x8xf32>, vector<8x8xf32>, vector<8x8xf32> -> vector<8x8xf32>
    %72 = arith.addf %71, %23 : vector<8x8xf32>
    %cst_33 = arith.constant dense<0xFF800000> : vector<8xf32>
    %73 = vector.multi_reduction <maximumf>, %72, %cst_33 [1] : vector<8x8xf32> to vector<8xf32>
    %74 = vector.shape_cast %73 : vector<8xf32> to vector<8x1xf32>
    %75 = vector.broadcast %74 : vector<8x1xf32> to vector<8x8xf32>
    %76 = arith.subf %72, %75 : vector<8x8xf32>
    %77 = math.exp %76 : vector<8x8xf32>
    %cst_34 = arith.constant dense<0.000000e+00> : vector<8xf32>
    %78 = vector.multi_reduction <add>, %77, %cst_34 [1] : vector<8x8xf32> to vector<8xf32>
    %79 = vector.shape_cast %78 : vector<8xf32> to vector<8x1xf32>
    %80 = tpu.reciprocal %79 {approx = true} : vector<8x1xf32> -> vector<8x1xf32>
    %81 = vector.broadcast %80 : vector<8x1xf32> to vector<8x8xf32>
    %82 = arith.mulf %77, %81 : vector<8x8xf32>
    %83 = vector.extract_strided_slice %15 {offsets = [0, 16], sizes = [8, 8], strides = [1, 1]} : vector<8x32xf32> to vector<8x8xf32>
    %cst_35 = arith.constant dense<0.000000e+00> : vector<8x8xf32>
    %84 = tpu.matmul %82, %83, %cst_35 {dimension_numbers = #tpu.dot_dimension_numbers<[1], [0], [0], [1], [0, 0, 1, 1], [], []>} : vector<8x8xf32>, vector<8x8xf32>, vector<8x8xf32> -> vector<8x8xf32>
    %85 = vector.extract_strided_slice %6 {offsets = [16, 0], sizes = [8, 32], strides = [1, 1]} : vector<32x32xf32> to vector<8x32xf32>
    %cst_36 = arith.constant dense<0.000000e+00> : vector<8x32xf32>
    %86 = tpu.matmul %84, %85, %cst_36 {dimension_numbers = #tpu.dot_dimension_numbers<[1], [0], [0], [1], [0, 0, 1, 1], [], []>} : vector<8x8xf32>, vector<8x32xf32>, vector<8x32xf32> -> vector<8x32xf32>
    %87 = arith.addf %66, %86 : vector<8x32xf32>
    %88 = vector.extract_strided_slice %13 {offsets = [0, 24], sizes = [8, 8], strides = [1, 1]} : vector<8x32xf32> to vector<8x8xf32>
    %cst_37 = arith.constant 0.353553385 : f32
    %89 = vector.broadcast %cst_37 : f32 to vector<8x8xf32>
    %90 = arith.mulf %88, %89 : vector<8x8xf32>
    %91 = vector.extract_strided_slice %14 {offsets = [0, 24], sizes = [8, 8], strides = [1, 1]} : vector<8x32xf32> to vector<8x8xf32>
    %cst_38 = arith.constant dense<0.000000e+00> : vector<8x8xf32>
    %92 = tpu.matmul %90, %91, %cst_38 {dimension_numbers = #tpu.dot_dimension_numbers<[1], [1], [0], [0], [0, 0, 1, 0], [], []>} : vector<8x8xf32>, vector<8x8xf32>, vector<8x8xf32> -> vector<8x8xf32>
    %93 = arith.addf %92, %23 : vector<8x8xf32>
    %cst_39 = arith.constant dense<0xFF800000> : vector<8xf32>
    %94 = vector.multi_reduction <maximumf>, %93, %cst_39 [1] : vector<8x8xf32> to vector<8xf32>
    %95 = vector.shape_cast %94 : vector<8xf32> to vector<8x1xf32>
    %96 = vector.broadcast %95 : vector<8x1xf32> to vector<8x8xf32>
    %97 = arith.subf %93, %96 : vector<8x8xf32>
    %98 = math.exp %97 : vector<8x8xf32>
    %cst_40 = arith.constant dense<0.000000e+00> : vector<8xf32>
    %99 = vector.multi_reduction <add>, %98, %cst_40 [1] : vector<8x8xf32> to vector<8xf32>
    %100 = vector.shape_cast %99 : vector<8xf32> to vector<8x1xf32>
    %101 = tpu.reciprocal %100 {approx = true} : vector<8x1xf32> -> vector<8x1xf32>
    %102 = vector.broadcast %101 : vector<8x1xf32> to vector<8x8xf32>
    %103 = arith.mulf %98, %102 : vector<8x8xf32>
    %104 = vector.extract_strided_slice %15 {offsets = [0, 24], sizes = [8, 8], strides = [1, 1]} : vector<8x32xf32> to vector<8x8xf32>
    %cst_41 = arith.constant dense<0.000000e+00> : vector<8x8xf32>
    %105 = tpu.matmul %103, %104, %cst_41 {dimension_numbers = #tpu.dot_dimension_numbers<[1], [0], [0], [1], [0, 0, 1, 1], [], []>} : vector<8x8xf32>, vector<8x8xf32>, vector<8x8xf32> -> vector<8x8xf32>
    %106 = vector.extract_strided_slice %6 {offsets = [24, 0], sizes = [8, 32], strides = [1, 1]} : vector<32x32xf32> to vector<8x32xf32>
    %cst_42 = arith.constant dense<0.000000e+00> : vector<8x32xf32>
    %107 = tpu.matmul %105, %106, %cst_42 {dimension_numbers = #tpu.dot_dimension_numbers<[1], [0], [0], [1], [0, 0, 1, 1], [], []>} : vector<8x8xf32>, vector<8x32xf32>, vector<8x32xf32> -> vector<8x32xf32>
    %108 = arith.addf %87, %107 : vector<8x32xf32>
    %109 = vector.broadcast %7 : vector<1x32xf32> to vector<8x32xf32>
    %110 = arith.addf %108, %109 : vector<8x32xf32>
    %c0_43 = arith.constant 0 : index
    %c0_44 = arith.constant 0 : index
    %111 = vector.load %arg17[%c0_43, %c0_44] : memref<1x32xf32, #tpu.memory_space<vmem>>, vector<1x32xf32>
    %c0_45 = arith.constant 0 : index
    %c0_46 = arith.constant 0 : index
    %112 = vector.load %arg18[%c0_45, %c0_46] : memref<1x32xf32, #tpu.memory_space<vmem>>, vector<1x32xf32>
    %113 = arith.addf %1, %110 : vector<8x32xf32>
    %cst_47 = arith.constant dense<0.000000e+00> : vector<8xf32>
    %114 = vector.multi_reduction <add>, %113, %cst_47 [1] : vector<8x32xf32> to vector<8xf32>
    %115 = vector.shape_cast %114 : vector<8xf32> to vector<8x1xf32>
    %cst_48 = arith.constant 3.200000e+01 : f32
    %116 = vector.broadcast %cst_48 : f32 to vector<8x1xf32>
    %117 = arith.divf %115, %116 : vector<8x1xf32>
    %118 = vector.broadcast %117 : vector<8x1xf32> to vector<8x32xf32>
    %119 = arith.subf %113, %118 : vector<8x32xf32>
    %120 = arith.mulf %119, %119 : vector<8x32xf32>
    %cst_49 = arith.constant dense<0.000000e+00> : vector<8xf32>
    %121 = vector.multi_reduction <add>, %120, %cst_49 [1] : vector<8x32xf32> to vector<8xf32>
    %122 = vector.shape_cast %121 : vector<8xf32> to vector<8x1xf32>
    %cst_50 = arith.constant 3.200000e+01 : f32
    %123 = vector.broadcast %cst_50 : f32 to vector<8x1xf32>
    %124 = arith.divf %122, %123 : vector<8x1xf32>
    %125 = vector.broadcast %117 : vector<8x1xf32> to vector<8x32xf32>
    %126 = arith.subf %113, %125 : vector<8x32xf32>
    %cst_51 = arith.constant 9.99999974E-6 : f32
    %127 = vector.broadcast %cst_51 : f32 to vector<8x1xf32>
    %128 = arith.addf %124, %127 : vector<8x1xf32>
    %129 = math.rsqrt %128 : vector<8x1xf32>
    %130 = vector.broadcast %129 : vector<8x1xf32> to vector<8x32xf32>
    %131 = arith.mulf %126, %130 : vector<8x32xf32>
    %132 = vector.broadcast %111 : vector<1x32xf32> to vector<8x32xf32>
    %133 = arith.mulf %131, %132 : vector<8x32xf32>
    %134 = vector.broadcast %112 : vector<1x32xf32> to vector<8x32xf32>
    %135 = arith.addf %133, %134 : vector<8x32xf32>
    %c0_52 = arith.constant 0 : index
    %c0_53 = arith.constant 0 : index
    %136 = vector.load %arg9[%c0_52, %c0_53] : memref<32x96xf32, #tpu.memory_space<vmem>>, vector<32x96xf32>
    %c0_54 = arith.constant 0 : index
    %c0_55 = arith.constant 0 : index
    %137 = vector.load %arg10[%c0_54, %c0_55] : memref<1x96xf32, #tpu.memory_space<vmem>>, vector<1x96xf32>
    %c0_56 = arith.constant 0 : index
    %c0_57 = arith.constant 0 : index
    %138 = vector.load %arg11[%c0_56, %c0_57] : memref<32x32xf32, #tpu.memory_space<vmem>>, vector<32x32xf32>
    %c0_58 = arith.constant 0 : index
    %c0_59 = arith.constant 0 : index
    %139 = vector.load %arg12[%c0_58, %c0_59] : memref<1x32xf32, #tpu.memory_space<vmem>>, vector<1x32xf32>
    %c0_60 = arith.constant 0 : index
    %c0_61 = arith.constant 0 : index
    %c0_62 = arith.constant 0 : index
    %140 = vector.load %arg4[%c0_60, %c0_61, %c0_62] : memref<1x1x8xf32, #tpu.memory_space<vmem>>, vector<1x1x8xf32>
    %141 = vector.shape_cast %140 : vector<1x1x8xf32> to vector<1x8xf32>
    %142 = vector.extract_strided_slice %136 {offsets = [0, 0], sizes = [32, 32], strides = [1, 1]} : vector<32x96xf32> to vector<32x32xf32>
    %cst_63 = arith.constant dense<0.000000e+00> : vector<8x32xf32>
    %143 = tpu.matmul %135, %142, %cst_63 {dimension_numbers = #tpu.dot_dimension_numbers<[1], [0], [0], [1], [0, 0, 1, 1], [], []>} : vector<8x32xf32>, vector<32x32xf32>, vector<8x32xf32> -> vector<8x32xf32>
    %144 = vector.extract_strided_slice %137 {offsets = [0, 0], sizes = [1, 32], strides = [1, 1]} : vector<1x96xf32> to vector<1x32xf32>
    %145 = vector.broadcast %144 : vector<1x32xf32> to vector<8x32xf32>
    %146 = arith.addf %143, %145 : vector<8x32xf32>
    %147 = vector.extract_strided_slice %136 {offsets = [0, 32], sizes = [32, 64], strides = [1, 1]} : vector<32x96xf32> to vector<32x64xf32>
    %cst_64 = arith.constant dense<0.000000e+00> : vector<8x64xf32>
    %148 = tpu.matmul %3, %147, %cst_64 {dimension_numbers = #tpu.dot_dimension_numbers<[1], [0], [0], [1], [0, 0, 1, 1], [], []>} : vector<8x32xf32>, vector<32x64xf32>, vector<8x64xf32> -> vector<8x64xf32>
    %149 = vector.extract_strided_slice %137 {offsets = [0, 32], sizes = [1, 64], strides = [1, 1]} : vector<1x96xf32> to vector<1x64xf32>
    %150 = vector.broadcast %149 : vector<1x64xf32> to vector<8x64xf32>
    %151 = arith.addf %148, %150 : vector<8x64xf32>
    %152 = vector.extract_strided_slice %151 {offsets = [0, 0], sizes = [8, 32], strides = [1, 1]} : vector<8x64xf32> to vector<8x32xf32>
    %153 = vector.extract_strided_slice %151 {offsets = [0, 32], sizes = [8, 32], strides = [1, 1]} : vector<8x64xf32> to vector<8x32xf32>
    %cst_65 = arith.constant 0.000000e+00 : f32
    %154 = vector.broadcast %cst_65 : f32 to vector<8x32xf32>
    %155 = vector.extract_strided_slice %146 {offsets = [0, 0], sizes = [8, 8], strides = [1, 1]} : vector<8x32xf32> to vector<8x8xf32>
    %cst_66 = arith.constant 0.353553385 : f32
    %156 = vector.broadcast %cst_66 : f32 to vector<8x8xf32>
    %157 = arith.mulf %155, %156 : vector<8x8xf32>
    %158 = vector.extract_strided_slice %152 {offsets = [0, 0], sizes = [8, 8], strides = [1, 1]} : vector<8x32xf32> to vector<8x8xf32>
    %cst_67 = arith.constant dense<0.000000e+00> : vector<8x8xf32>
    %159 = tpu.matmul %157, %158, %cst_67 {dimension_numbers = #tpu.dot_dimension_numbers<[1], [1], [0], [0], [0, 0, 1, 0], [], []>} : vector<8x8xf32>, vector<8x8xf32>, vector<8x8xf32> -> vector<8x8xf32>
    %160 = vector.broadcast %141 : vector<1x8xf32> to vector<8x8xf32>
    %161 = arith.addf %159, %160 : vector<8x8xf32>
    %cst_68 = arith.constant dense<0xFF800000> : vector<8xf32>
    %162 = vector.multi_reduction <maximumf>, %161, %cst_68 [1] : vector<8x8xf32> to vector<8xf32>
    %163 = vector.shape_cast %162 : vector<8xf32> to vector<8x1xf32>
    %164 = vector.broadcast %163 : vector<8x1xf32> to vector<8x8xf32>
    %165 = arith.subf %161, %164 : vector<8x8xf32>
    %166 = math.exp %165 : vector<8x8xf32>
    %cst_69 = arith.constant dense<0.000000e+00> : vector<8xf32>
    %167 = vector.multi_reduction <add>, %166, %cst_69 [1] : vector<8x8xf32> to vector<8xf32>
    %168 = vector.shape_cast %167 : vector<8xf32> to vector<8x1xf32>
    %169 = tpu.reciprocal %168 {approx = true} : vector<8x1xf32> -> vector<8x1xf32>
    %170 = vector.broadcast %169 : vector<8x1xf32> to vector<8x8xf32>
    %171 = arith.mulf %166, %170 : vector<8x8xf32>
    %172 = vector.extract_strided_slice %153 {offsets = [0, 0], sizes = [8, 8], strides = [1, 1]} : vector<8x32xf32> to vector<8x8xf32>
    %cst_70 = arith.constant dense<0.000000e+00> : vector<8x8xf32>
    %173 = tpu.matmul %171, %172, %cst_70 {dimension_numbers = #tpu.dot_dimension_numbers<[1], [0], [0], [1], [0, 0, 1, 1], [], []>} : vector<8x8xf32>, vector<8x8xf32>, vector<8x8xf32> -> vector<8x8xf32>
    %174 = vector.extract_strided_slice %138 {offsets = [0, 0], sizes = [8, 32], strides = [1, 1]} : vector<32x32xf32> to vector<8x32xf32>
    %cst_71 = arith.constant dense<0.000000e+00> : vector<8x32xf32>
    %175 = tpu.matmul %173, %174, %cst_71 {dimension_numbers = #tpu.dot_dimension_numbers<[1], [0], [0], [1], [0, 0, 1, 1], [], []>} : vector<8x8xf32>, vector<8x32xf32>, vector<8x32xf32> -> vector<8x32xf32>
    %176 = arith.addf %154, %175 : vector<8x32xf32>
    %177 = vector.extract_strided_slice %146 {offsets = [0, 8], sizes = [8, 8], strides = [1, 1]} : vector<8x32xf32> to vector<8x8xf32>
    %cst_72 = arith.constant 0.353553385 : f32
    %178 = vector.broadcast %cst_72 : f32 to vector<8x8xf32>
    %179 = arith.mulf %177, %178 : vector<8x8xf32>
    %180 = vector.extract_strided_slice %152 {offsets = [0, 8], sizes = [8, 8], strides = [1, 1]} : vector<8x32xf32> to vector<8x8xf32>
    %cst_73 = arith.constant dense<0.000000e+00> : vector<8x8xf32>
    %181 = tpu.matmul %179, %180, %cst_73 {dimension_numbers = #tpu.dot_dimension_numbers<[1], [1], [0], [0], [0, 0, 1, 0], [], []>} : vector<8x8xf32>, vector<8x8xf32>, vector<8x8xf32> -> vector<8x8xf32>
    %182 = vector.broadcast %141 : vector<1x8xf32> to vector<8x8xf32>
    %183 = arith.addf %181, %182 : vector<8x8xf32>
    %cst_74 = arith.constant dense<0xFF800000> : vector<8xf32>
    %184 = vector.multi_reduction <maximumf>, %183, %cst_74 [1] : vector<8x8xf32> to vector<8xf32>
    %185 = vector.shape_cast %184 : vector<8xf32> to vector<8x1xf32>
    %186 = vector.broadcast %185 : vector<8x1xf32> to vector<8x8xf32>
    %187 = arith.subf %183, %186 : vector<8x8xf32>
    %188 = math.exp %187 : vector<8x8xf32>
    %cst_75 = arith.constant dense<0.000000e+00> : vector<8xf32>
    %189 = vector.multi_reduction <add>, %188, %cst_75 [1] : vector<8x8xf32> to vector<8xf32>
    %190 = vector.shape_cast %189 : vector<8xf32> to vector<8x1xf32>
    %191 = tpu.reciprocal %190 {approx = true} : vector<8x1xf32> -> vector<8x1xf32>
    %192 = vector.broadcast %191 : vector<8x1xf32> to vector<8x8xf32>
    %193 = arith.mulf %188, %192 : vector<8x8xf32>
    %194 = vector.extract_strided_slice %153 {offsets = [0, 8], sizes = [8, 8], strides = [1, 1]} : vector<8x32xf32> to vector<8x8xf32>
    %cst_76 = arith.constant dense<0.000000e+00> : vector<8x8xf32>
    %195 = tpu.matmul %193, %194, %cst_76 {dimension_numbers = #tpu.dot_dimension_numbers<[1], [0], [0], [1], [0, 0, 1, 1], [], []>} : vector<8x8xf32>, vector<8x8xf32>, vector<8x8xf32> -> vector<8x8xf32>
    %196 = vector.extract_strided_slice %138 {offsets = [8, 0], sizes = [8, 32], strides = [1, 1]} : vector<32x32xf32> to vector<8x32xf32>
    %cst_77 = arith.constant dense<0.000000e+00> : vector<8x32xf32>
    %197 = tpu.matmul %195, %196, %cst_77 {dimension_numbers = #tpu.dot_dimension_numbers<[1], [0], [0], [1], [0, 0, 1, 1], [], []>} : vector<8x8xf32>, vector<8x32xf32>, vector<8x32xf32> -> vector<8x32xf32>
    %198 = arith.addf %176, %197 : vector<8x32xf32>
    %199 = vector.extract_strided_slice %146 {offsets = [0, 16], sizes = [8, 8], strides = [1, 1]} : vector<8x32xf32> to vector<8x8xf32>
    %cst_78 = arith.constant 0.353553385 : f32
    %200 = vector.broadcast %cst_78 : f32 to vector<8x8xf32>
    %201 = arith.mulf %199, %200 : vector<8x8xf32>
    %202 = vector.extract_strided_slice %152 {offsets = [0, 16], sizes = [8, 8], strides = [1, 1]} : vector<8x32xf32> to vector<8x8xf32>
    %cst_79 = arith.constant dense<0.000000e+00> : vector<8x8xf32>
    %203 = tpu.matmul %201, %202, %cst_79 {dimension_numbers = #tpu.dot_dimension_numbers<[1], [1], [0], [0], [0, 0, 1, 0], [], []>} : vector<8x8xf32>, vector<8x8xf32>, vector<8x8xf32> -> vector<8x8xf32>
    %204 = vector.broadcast %141 : vector<1x8xf32> to vector<8x8xf32>
    %205 = arith.addf %203, %204 : vector<8x8xf32>
    %cst_80 = arith.constant dense<0xFF800000> : vector<8xf32>
    %206 = vector.multi_reduction <maximumf>, %205, %cst_80 [1] : vector<8x8xf32> to vector<8xf32>
    %207 = vector.shape_cast %206 : vector<8xf32> to vector<8x1xf32>
    %208 = vector.broadcast %207 : vector<8x1xf32> to vector<8x8xf32>
    %209 = arith.subf %205, %208 : vector<8x8xf32>
    %210 = math.exp %209 : vector<8x8xf32>
    %cst_81 = arith.constant dense<0.000000e+00> : vector<8xf32>
    %211 = vector.multi_reduction <add>, %210, %cst_81 [1] : vector<8x8xf32> to vector<8xf32>
    %212 = vector.shape_cast %211 : vector<8xf32> to vector<8x1xf32>
    %213 = tpu.reciprocal %212 {approx = true} : vector<8x1xf32> -> vector<8x1xf32>
    %214 = vector.broadcast %213 : vector<8x1xf32> to vector<8x8xf32>
    %215 = arith.mulf %210, %214 : vector<8x8xf32>
    %216 = vector.extract_strided_slice %153 {offsets = [0, 16], sizes = [8, 8], strides = [1, 1]} : vector<8x32xf32> to vector<8x8xf32>
    %cst_82 = arith.constant dense<0.000000e+00> : vector<8x8xf32>
    %217 = tpu.matmul %215, %216, %cst_82 {dimension_numbers = #tpu.dot_dimension_numbers<[1], [0], [0], [1], [0, 0, 1, 1], [], []>} : vector<8x8xf32>, vector<8x8xf32>, vector<8x8xf32> -> vector<8x8xf32>
    %218 = vector.extract_strided_slice %138 {offsets = [16, 0], sizes = [8, 32], strides = [1, 1]} : vector<32x32xf32> to vector<8x32xf32>
    %cst_83 = arith.constant dense<0.000000e+00> : vector<8x32xf32>
    %219 = tpu.matmul %217, %218, %cst_83 {dimension_numbers = #tpu.dot_dimension_numbers<[1], [0], [0], [1], [0, 0, 1, 1], [], []>} : vector<8x8xf32>, vector<8x32xf32>, vector<8x32xf32> -> vector<8x32xf32>
    %220 = arith.addf %198, %219 : vector<8x32xf32>
    %221 = vector.extract_strided_slice %146 {offsets = [0, 24], sizes = [8, 8], strides = [1, 1]} : vector<8x32xf32> to vector<8x8xf32>
    %cst_84 = arith.constant 0.353553385 : f32
    %222 = vector.broadcast %cst_84 : f32 to vector<8x8xf32>
    %223 = arith.mulf %221, %222 : vector<8x8xf32>
    %224 = vector.extract_strided_slice %152 {offsets = [0, 24], sizes = [8, 8], strides = [1, 1]} : vector<8x32xf32> to vector<8x8xf32>
    %cst_85 = arith.constant dense<0.000000e+00> : vector<8x8xf32>
    %225 = tpu.matmul %223, %224, %cst_85 {dimension_numbers = #tpu.dot_dimension_numbers<[1], [1], [0], [0], [0, 0, 1, 0], [], []>} : vector<8x8xf32>, vector<8x8xf32>, vector<8x8xf32> -> vector<8x8xf32>
    %226 = vector.broadcast %141 : vector<1x8xf32> to vector<8x8xf32>
    %227 = arith.addf %225, %226 : vector<8x8xf32>
    %cst_86 = arith.constant dense<0xFF800000> : vector<8xf32>
    %228 = vector.multi_reduction <maximumf>, %227, %cst_86 [1] : vector<8x8xf32> to vector<8xf32>
    %229 = vector.shape_cast %228 : vector<8xf32> to vector<8x1xf32>
    %230 = vector.broadcast %229 : vector<8x1xf32> to vector<8x8xf32>
    %231 = arith.subf %227, %230 : vector<8x8xf32>
    %232 = math.exp %231 : vector<8x8xf32>
    %cst_87 = arith.constant dense<0.000000e+00> : vector<8xf32>
    %233 = vector.multi_reduction <add>, %232, %cst_87 [1] : vector<8x8xf32> to vector<8xf32>
    %234 = vector.shape_cast %233 : vector<8xf32> to vector<8x1xf32>
    %235 = tpu.reciprocal %234 {approx = true} : vector<8x1xf32> -> vector<8x1xf32>
    %236 = vector.broadcast %235 : vector<8x1xf32> to vector<8x8xf32>
    %237 = arith.mulf %232, %236 : vector<8x8xf32>
    %238 = vector.extract_strided_slice %153 {offsets = [0, 24], sizes = [8, 8], strides = [1, 1]} : vector<8x32xf32> to vector<8x8xf32>
    %cst_88 = arith.constant dense<0.000000e+00> : vector<8x8xf32>
    %239 = tpu.matmul %237, %238, %cst_88 {dimension_numbers = #tpu.dot_dimension_numbers<[1], [0], [0], [1], [0, 0, 1, 1], [], []>} : vector<8x8xf32>, vector<8x8xf32>, vector<8x8xf32> -> vector<8x8xf32>
    %240 = vector.extract_strided_slice %138 {offsets = [24, 0], sizes = [8, 32], strides = [1, 1]} : vector<32x32xf32> to vector<8x32xf32>
    %cst_89 = arith.constant dense<0.000000e+00> : vector<8x32xf32>
    %241 = tpu.matmul %239, %240, %cst_89 {dimension_numbers = #tpu.dot_dimension_numbers<[1], [0], [0], [1], [0, 0, 1, 1], [], []>} : vector<8x8xf32>, vector<8x32xf32>, vector<8x32xf32> -> vector<8x32xf32>
    %242 = arith.addf %220, %241 : vector<8x32xf32>
    %243 = vector.broadcast %139 : vector<1x32xf32> to vector<8x32xf32>
    %244 = arith.addf %242, %243 : vector<8x32xf32>
    %c0_90 = arith.constant 0 : index
    %c0_91 = arith.constant 0 : index
    %245 = vector.load %arg19[%c0_90, %c0_91] : memref<1x32xf32, #tpu.memory_space<vmem>>, vector<1x32xf32>
    %c0_92 = arith.constant 0 : index
    %c0_93 = arith.constant 0 : index
    %246 = vector.load %arg20[%c0_92, %c0_93] : memref<1x32xf32, #tpu.memory_space<vmem>>, vector<1x32xf32>
    %247 = arith.addf %135, %244 : vector<8x32xf32>
    %cst_94 = arith.constant dense<0.000000e+00> : vector<8xf32>
    %248 = vector.multi_reduction <add>, %247, %cst_94 [1] : vector<8x32xf32> to vector<8xf32>
    %249 = vector.shape_cast %248 : vector<8xf32> to vector<8x1xf32>
    %cst_95 = arith.constant 3.200000e+01 : f32
    %250 = vector.broadcast %cst_95 : f32 to vector<8x1xf32>
    %251 = arith.divf %249, %250 : vector<8x1xf32>
    %252 = vector.broadcast %251 : vector<8x1xf32> to vector<8x32xf32>
    %253 = arith.subf %247, %252 : vector<8x32xf32>
    %254 = arith.mulf %253, %253 : vector<8x32xf32>
    %cst_96 = arith.constant dense<0.000000e+00> : vector<8xf32>
    %255 = vector.multi_reduction <add>, %254, %cst_96 [1] : vector<8x32xf32> to vector<8xf32>
    %256 = vector.shape_cast %255 : vector<8xf32> to vector<8x1xf32>
    %cst_97 = arith.constant 3.200000e+01 : f32
    %257 = vector.broadcast %cst_97 : f32 to vector<8x1xf32>
    %258 = arith.divf %256, %257 : vector<8x1xf32>
    %259 = vector.broadcast %251 : vector<8x1xf32> to vector<8x32xf32>
    %260 = arith.subf %247, %259 : vector<8x32xf32>
    %cst_98 = arith.constant 9.99999974E-6 : f32
    %261 = vector.broadcast %cst_98 : f32 to vector<8x1xf32>
    %262 = arith.addf %258, %261 : vector<8x1xf32>
    %263 = math.rsqrt %262 : vector<8x1xf32>
    %264 = vector.broadcast %263 : vector<8x1xf32> to vector<8x32xf32>
    %265 = arith.mulf %260, %264 : vector<8x32xf32>
    %266 = vector.broadcast %245 : vector<1x32xf32> to vector<8x32xf32>
    %267 = arith.mulf %265, %266 : vector<8x32xf32>
    %268 = vector.broadcast %246 : vector<1x32xf32> to vector<8x32xf32>
    %269 = arith.addf %267, %268 : vector<8x32xf32>
    %c0_99 = arith.constant 0 : index
    %c0_100 = arith.constant 0 : index
    %270 = vector.load %arg13[%c0_99, %c0_100] : memref<32x64xf32, #tpu.memory_space<vmem>>, vector<32x64xf32>
    %cst_101 = arith.constant dense<0.000000e+00> : vector<8x64xf32>
    %271 = tpu.matmul %269, %270, %cst_101 {dimension_numbers = #tpu.dot_dimension_numbers<[1], [0], [0], [1], [0, 0, 1, 1], [], []>} : vector<8x32xf32>, vector<32x64xf32>, vector<8x64xf32> -> vector<8x64xf32>
    %c0_102 = arith.constant 0 : index
    %c0_103 = arith.constant 0 : index
    %272 = vector.load %arg14[%c0_102, %c0_103] : memref<1x64xf32, #tpu.memory_space<vmem>>, vector<1x64xf32>
    %273 = vector.broadcast %272 : vector<1x64xf32> to vector<8x64xf32>
    %274 = arith.addf %271, %273 : vector<8x64xf32>
    %cst_104 = arith.constant 0.000000e+00 : f32
    %275 = vector.broadcast %cst_104 : f32 to vector<8x64xf32>
    %276 = arith.maximumf %274, %275 : vector<8x64xf32>
    %c0_105 = arith.constant 0 : index
    %c0_106 = arith.constant 0 : index
    %277 = vector.load %arg15[%c0_105, %c0_106] : memref<64x32xf32, #tpu.memory_space<vmem>>, vector<64x32xf32>
    %cst_107 = arith.constant dense<0.000000e+00> : vector<8x32xf32>
    %278 = tpu.matmul %276, %277, %cst_107 {dimension_numbers = #tpu.dot_dimension_numbers<[1], [0], [0], [1], [0, 0, 1, 1], [], []>} : vector<8x64xf32>, vector<64x32xf32>, vector<8x32xf32> -> vector<8x32xf32>
    %c0_108 = arith.constant 0 : index
    %c0_109 = arith.constant 0 : index
    %279 = vector.load %arg16[%c0_108, %c0_109] : memref<1x32xf32, #tpu.memory_space<vmem>>, vector<1x32xf32>
    %280 = vector.broadcast %279 : vector<1x32xf32> to vector<8x32xf32>
    %281 = arith.addf %278, %280 : vector<8x32xf32>
    %c0_110 = arith.constant 0 : index
    %c0_111 = arith.constant 0 : index
    %282 = vector.load %arg21[%c0_110, %c0_111] : memref<1x32xf32, #tpu.memory_space<vmem>>, vector<1x32xf32>
    %c0_112 = arith.constant 0 : index
    %c0_113 = arith.constant 0 : index
    %283 = vector.load %arg22[%c0_112, %c0_113] : memref<1x32xf32, #tpu.memory_space<vmem>>, vector<1x32xf32>
    %284 = arith.addf %269, %281 : vector<8x32xf32>
    %cst_114 = arith.constant dense<0.000000e+00> : vector<8xf32>
    %285 = vector.multi_reduction <add>, %284, %cst_114 [1] : vector<8x32xf32> to vector<8xf32>
    %286 = vector.shape_cast %285 : vector<8xf32> to vector<8x1xf32>
    %cst_115 = arith.constant 3.200000e+01 : f32
    %287 = vector.broadcast %cst_115 : f32 to vector<8x1xf32>
    %288 = arith.divf %286, %287 : vector<8x1xf32>
    %289 = vector.broadcast %288 : vector<8x1xf32> to vector<8x32xf32>
    %290 = arith.subf %284, %289 : vector<8x32xf32>
    %291 = arith.mulf %290, %290 : vector<8x32xf32>
    %cst_116 = arith.constant dense<0.000000e+00> : vector<8xf32>
    %292 = vector.multi_reduction <add>, %291, %cst_116 [1] : vector<8x32xf32> to vector<8xf32>
    %293 = vector.shape_cast %292 : vector<8xf32> to vector<8x1xf32>
    %cst_117 = arith.constant 3.200000e+01 : f32
    %294 = vector.broadcast %cst_117 : f32 to vector<8x1xf32>
    %295 = arith.divf %293, %294 : vector<8x1xf32>
    %296 = vector.broadcast %288 : vector<8x1xf32> to vector<8x32xf32>
    %297 = arith.subf %284, %296 : vector<8x32xf32>
    %cst_118 = arith.constant 9.99999974E-6 : f32
    %298 = vector.broadcast %cst_118 : f32 to vector<8x1xf32>
    %299 = arith.addf %295, %298 : vector<8x1xf32>
    %300 = math.rsqrt %299 : vector<8x1xf32>
    %301 = vector.broadcast %300 : vector<8x1xf32> to vector<8x32xf32>
    %302 = arith.mulf %297, %301 : vector<8x32xf32>
    %303 = vector.broadcast %282 : vector<1x32xf32> to vector<8x32xf32>
    %304 = arith.mulf %302, %303 : vector<8x32xf32>
    %305 = vector.broadcast %283 : vector<1x32xf32> to vector<8x32xf32>
    %306 = arith.addf %304, %305 : vector<8x32xf32>
    %c0_119 = arith.constant 0 : index
    %c0_120 = arith.constant 0 : index
    %c0_121 = arith.constant 0 : index
    %307 = vector.load %arg23[%c0_119, %c0_120, %c0_121] : memref<1x8x32xf32, #tpu.memory_space<vmem>>, vector<1x8x32xf32>
    %308 = vector.shape_cast %307 : vector<1x8x32xf32> to vector<8x32xf32>
    %309 = vector.shape_cast %306 : vector<8x32xf32> to vector<1x8x32xf32>
    tpu.vector_store %arg23[%c0_119, %c0_120, %c0_121], %309 {strides = array<i32>} : memref<1x8x32xf32, #tpu.memory_space<vmem>>, vector<1x8x32xf32>,
    return
  }
  func.func @transform_0(%arg0: i32) -> (i32, i32, i32) {
    %c0_i32 = arith.constant 0 : i32
    %c0_i32_0 = arith.constant 0 : i32
    %c0_i32_1 = arith.constant 0 : i32
    return %arg0, %c0_i32, %c0_i32_0 : i32, i32, i32
  }
  func.func @transform_1(%arg0: i32) -> (i32, i32, i32) {
    %c0_i32 = arith.constant 0 : i32
    %c0_i32_0 = arith.constant 0 : i32
    %c0_i32_1 = arith.constant 0 : i32
    return %arg0, %c0_i32, %c0_i32_0 : i32, i32, i32
  }
  func.func @transform_2(%arg0: i32) -> (i32, i32, i32) {
    %c0_i32 = arith.constant 0 : i32
    %c0_i32_0 = arith.constant 0 : i32
    %c0_i32_1 = arith.constant 0 : i32
    return %arg0, %c0_i32, %c0_i32_0 : i32, i32, i32
  }
  func.func @transform_3(%arg0: i32) -> (i32, i32, i32) {
    %c0_i32 = arith.constant 0 : i32
    %c0_i32_0 = arith.constant 0 : i32
    %c0_i32_1 = arith.constant 0 : i32
    return %arg0, %c0_i32, %c0_i32_0 : i32, i32, i32
  }
  func.func @transform_4(%arg0: i32) -> (i32, i32) {
    %c0_i32 = arith.constant 0 : i32
    %c0_i32_0 = arith.constant 0 : i32
    %c0_i32_1 = arith.constant 0 : i32
    return %c0_i32, %c0_i32_0 : i32, i32
  }
  func.func @transform_5(%arg0: i32) -> (i32, i32) {
    %c0_i32 = arith.constant 0 : i32
    %c0_i32_0 = arith.constant 0 : i32
    %c0_i32_1 = arith.constant 0 : i32
    return %c0_i32, %c0_i32_0 : i32, i32
  }
  func.func @transform_6(%arg0: i32) -> (i32, i32) {
    %c0_i32 = arith.constant 0 : i32
    %c0_i32_0 = arith.constant 0 : i32
    %c0_i32_1 = arith.constant 0 : i32
    return %c0_i32, %c0_i32_0 : i32, i32
  }
  func.func @transform_7(%arg0: i32) -> (i32, i32) {
    %c0_i32 = arith.constant 0 : i32
    %c0_i32_0 = arith.constant 0 : i32
    %c0_i32_1 = arith.constant 0 : i32
    return %c0_i32, %c0_i32_0 : i32, i32
  }
  func.func @transform_8(%arg0: i32) -> (i32, i32) {
    %c0_i32 = arith.constant 0 : i32
    %c0_i32_0 = arith.constant 0 : i32
    %c0_i32_1 = arith.constant 0 : i32
    return %c0_i32, %c0_i32_0 : i32, i32
  }
  func.func @transform_9(%arg0: i32) -> (i32, i32) {
    %c0_i32 = arith.constant 0 : i32
    %c0_i32_0 = arith.constant 0 : i32
    %c0_i32_1 = arith.constant 0 : i32
    return %c0_i32, %c0_i32_0 : i32, i32
  }
  func.func @transform_10(%arg0: i32) -> (i32, i32) {
    %c0_i32 = arith.constant 0 : i32
    %c0_i32_0 = arith.constant 0 : i32
    %c0_i32_1 = arith.constant 0 : i32
    return %c0_i32, %c0_i32_0 : i32, i32
  }
  func.func @transform_11(%arg0: i32) -> (i32, i32) {
    %c0_i32 = arith.constant 0 : i32
    %c0_i32_0 = arith.constant 0 : i32
    %c0_i32_1 = arith.constant 0 : i32
    return %c0_i32, %c0_i32_0 : i32, i32
  }
  func.func @transform_12(%arg0: i32) -> (i32, i32) {
    %c0_i32 = arith.constant 0 : i32
    %c0_i32_0 = arith.constant 0 : i32
    %c0_i32_1 = arith.constant 0 : i32
    return %c0_i32, %c0_i32_0 : i32, i32
  }
  func.func @transform_13(%arg0: i32) -> (i32, i32) {
    %c0_i32 = arith.constant 0 : i32
    %c0_i32_0 = arith.constant 0 : i32
    %c0_i32_1 = arith.constant 0 : i32
    return %c0_i32, %c0_i32_0 : i32, i32
  }
  func.func @transform_14(%arg0: i32) -> (i32, i32) {
    %c0_i32 = arith.constant 0 : i32
    %c0_i32_0 = arith.constant 0 : i32
    %c0_i32_1 = arith.constant 0 : i32
    return %c0_i32, %c0_i32_0 : i32, i32
  }
  func.func @transform_15(%arg0: i32) -> (i32, i32) {
    %c0_i32 = arith.constant 0 : i32
    %c0_i32_0 = arith.constant 0 : i32
    %c0_i32_1 = arith.constant 0 : i32
    return %c0_i32, %c0_i32_0 : i32, i32
  }
  func.func @transform_16(%arg0: i32) -> (i32, i32) {
    %c0_i32 = arith.constant 0 : i32
    %c0_i32_0 = arith.constant 0 : i32
    %c0_i32_1 = arith.constant 0 : i32
    return %c0_i32, %c0_i32_0 : i32, i32
  }
  func.func @transform_17(%arg0: i32) -> (i32, i32) {
    %c0_i32 = arith.constant 0 : i32
    %c0_i32_0 = arith.constant 0 : i32
    %c0_i32_1 = arith.constant 0 : i32
    return %c0_i32, %c0_i32_0 : i32, i32
  }
  func.func @transform_18(%arg0: i32) -> (i32, i32) {
    %c0_i32 = arith.constant 0 : i32
    %c0_i32_0 = arith.constant 0 : i32
    %c0_i32_1 = arith.constant 0 : i32
    return %c0_i32, %c0_i32_0 : i32, i32
  }
  func.func @transform_19(%arg0: i32) -> (i32, i32) {
    %c0_i32 = arith.constant 0 : i32
    %c0_i32_0 = arith.constant 0 : i32
    %c0_i32_1 = arith.constant 0 : i32
    return %c0_i32, %c0_i32_0 : i32, i32
  }
  func.func @transform_20(%arg0: i32) -> (i32, i32) {
    %c0_i32 = arith.constant 0 : i32
    %c0_i32_0 = arith.constant 0 : i32
    %c0_i32_1 = arith.constant 0 : i32
    return %c0_i32, %c0_i32_0 : i32, i32
  }
  func.func @transform_21(%arg0: i32) -> (i32, i32) {
    %c0_i32 = arith.constant 0 : i32
    %c0_i32_0 = arith.constant 0 : i32
    %c0_i32_1 = arith.constant 0 : i32
    return %c0_i32, %c0_i32_0 : i32, i32
  }
  func.func @transform_22(%arg0: i32) -> (i32, i32, i32) {
    %c0_i32 = arith.constant 0 : i32
    %c0_i32_0 = arith.constant 0 : i32
    %c0_i32_1 = arith.constant 0 : i32
    return %arg0, %c0_i32, %c0_i32_0 : i32, i32, i32
  }
}

</mosaic_0001>

<llo_original>
// kernel: my_tf_forward.9
$region0: #{my_tf_forward.9}
  #allocation0 [shape = 'u32[]', space=smem, size = 0x4, offset = 0x4, fixed_abs, tag = 'smem constant byte address 0x4 - core index']
  #allocation1 [shape = 'u32[144,128]{1,0:T(1,128)}', space=vmem, size = 0x12000, scoped, tag = 'internal scratch']
  %s0 = inlined_call_operand.vmem [shape: f32[16,32], index: 0, kind: input, shape index: {}]
  %s1 = inlined_call_operand.vmem [shape: f32[1,32], index: 1, kind: input, shape index: {}]
  %s2 = inlined_call_operand.vmem [shape: f32[1,32], index: 2, kind: input, shape index: {}]
  %s3 = inlined_call_operand.vmem [shape: f32[16,32], index: 3, kind: output, shape index: {}]
  %s4 = sld [smem:[#allocation0]]
  $region22: #{my_tf_forward.9} parent=0
    _
  %s6 = ssub.s32 1, %s4
  %s7 = scalar_select 0, %s6, %s4
  // Predicated region
  $region2: #{my_tf_forward.9} parent=0 // pred_check
    _
  $region3: #{my_tf_forward.9} parent=0 // pred_check_branch
    %9 = sbr.rel (0) target = $region5
  $region4: #{my_tf_forward.9} parent=0 // pred_region
    _
  $region5: #{my_tf_forward.9} parent=0 // pred_fallthru
    _
  // Predicated region
  $region6: #{my_tf_forward.9} parent=0 // pred_check
    _
  $region7: #{my_tf_forward.9} parent=0 // pred_check_branch
    %11 = sbr.rel (0) target = $region9
  $region8: #{my_tf_forward.9} parent=0 // pred_region
    _
  $region9: #{my_tf_forward.9} parent=0 // pred_fallthru
    _
  // Predicated region
  $region10: #{my_tf_forward.9} parent=0 // pred_check
    _
  $region11: #{my_tf_forward.9} parent=0 // pred_check_branch
    %13 = sbr.rel (0) target = $region13
  $region12: #{my_tf_forward.9} parent=0 // pred_region
    _
  $region13: #{my_tf_forward.9} parent=0 // pred_fallthru
    _
  %v14 = vld [vmem:[%s0] sm:$0xff]
  %v15 = vld [vmem:[%s0 + $0x8] sm:$0xff]
  %vm16 = vcmask 261120
  %v17 = vsel %vm16, %v14, 0.0
  %18 = vadd.xlane.f32.xlu0 %v17
  %v19 = vpop.xlane.xlu0 %18
  %v20 = vsel %vm16, %v15, 0.0
  %21 = vadd.xlane.f32.xlu0 %v20
  %v22 = vpop.xlane.xlu0 %21
  %v23 = vrcp.pop 32.0
  %v24 = vmul.f32 %v19, %v23
  %v25 = vmul.f32 %v22, %v23
  %v26 = vsub.f32 %v14, %v24
  %v27 = vsub.f32 %v15, %v25
  %v28 = vmul.f32 %v26, %v26
  %v29 = vmul.f32 %v27, %v27
  %v30 = vsel %vm16, %v28, 0.0
  %31 = vadd.xlane.f32.xlu0 %v30
  %v32 = vpop.xlane.xlu0 %31
  %v33 = vsel %vm16, %v29, 0.0
  %34 = vadd.xlane.f32.xlu0 %v33
  %v35 = vpop.xlane.xlu0 %34
  %v36 = vmul.f32 %v32, %v23
  %v37 = vmul.f32 %v35, %v23
  %v38 = vadd.f32 %v36, 1e-05
  %v39 = vadd.f32 %v37, 1e-05
  %v40 = vrsqrt.pop %v38
  %v41 = vrsqrt.pop %v39
  %v42 = vmul.f32 %v26, %v40
  %v43 = vmul.f32 %v27, %v41
  %v44 = vld [vmem:[%s1] sm:$0x1]
  %v46 = vlaneseq
  %v47 = vshrl.u32 %v46, 7
  %v48 = vsub.s32 0, %v47
  %v49 = vrot.slane %v44, %v48
  %v51 = vmul.f32 %v42, %v49
  %v52 = vmul.f32 %v43, %v49
  %v53 = vld [vmem:[%s2] sm:$0x1]
  %v55 = vlaneseq
  %v56 = vshrl.u32 %v55, 7
  %v57 = vsub.s32 0, %v56
  %v58 = vrot.slane %v53, %v57
  %v60 = vadd.f32 %v51, %v58
  %v61 = vadd.f32 %v52, %v58
  %62 = vst.msk [vmem:[%s3] sm:$0xff] %vm16, %v60
  %63 = vst.msk [vmem:[%s3 + $0x8] sm:$0xff] %vm16, %v61
  // Predicated region
  $region14: #{my_tf_forward.9} parent=0 // pred_check
    _
  $region15: #{my_tf_forward.9} parent=0 // pred_check_branch
    %65 = sbr.rel (0) target = $region17
  $region16: #{my_tf_forward.9} parent=0 // pred_region
    _
  $region17: #{my_tf_forward.9} parent=0 // pred_fallthru
    _
  // Predicated region
  $region18: #{my_tf_forward.9} parent=0 // pred_check
    _
  $region19: #{my_tf_forward.9} parent=0 // pred_check_branch
    %67 = sbr.rel (0) target = $region21
  $region20: #{my_tf_forward.9} parent=0 // pred_region
    _
  $region21: #{my_tf_forward.9} parent=0 // pred_fallthru
    _

// kernel: my_tf_forward.13
$region0: #{my_tf_forward.13}
  #allocation0 [shape = 'u32[]', space=smem, size = 0x4, offset = 0x4, fixed_abs, tag = 'smem constant byte address 0x4 - core index']
  #allocation1 [shape = 'u32[144,128]{1,0:T(1,128)}', space=vmem, size = 0x12000, scoped, tag = 'internal scratch']
  %s0 = inlined_call_operand.vmem [shape: f32[16,32], index: 0, kind: input, shape index: {}]
  %s1 = inlined_call_operand.vmem [shape: f32[32,48], index: 1, kind: input, shape index: {}]
  %s2 = inlined_call_operand.vmem [shape: f32[1,48], index: 2, kind: input, shape index: {}]
  %s3 = inlined_call_operand.hbm [shape: f32[16,48], index: 3, kind: output, shape index: {}]
  %s4 = sld [smem:[#allocation0]]
  $region22: #{my_tf_forward.13} parent=0
    _
  %s6 = ssub.s32 1, %s4
  %s7 = scalar_select 0, %s6, %s4
  $region1: #{my_tf_forward.13} parent=0
    #allocation2 [shape = 'u8[8192]{0}', space=vmem, size = 0x2000, scoped, tag = 'output window, operand 0, single buffered']
    #allocation3 [shape = 's32[1]{0}', space=sflag, size = 0x4, scoped, tag = 'scoped memory for my_tf_forward.13']
    %8 = vsyncpa [#allocation3], 0
    // Predicated region
    $region2: #{my_tf_forward.13} parent=1 // pred_check
      _
    $region3: #{my_tf_forward.13} parent=1 // pred_check_branch
      %10 = sbr.rel (0) target = $region5
    $region4: #{my_tf_forward.13} parent=1 // pred_region
      _
    $region5: #{my_tf_forward.13} parent=1 // pred_fallthru
      _
    // Predicated region
    $region6: #{my_tf_forward.13} parent=1 // pred_check
      _
    $region7: #{my_tf_forward.13} parent=1 // pred_check_branch
      %12 = sbr.rel (0) target = $region9
    $region8: #{my_tf_forward.13} parent=1 // pred_region
      _
    $region9: #{my_tf_forward.13} parent=1 // pred_fallthru
      _
    // Predicated region
    $region10: #{my_tf_forward.13} parent=1 // pred_check
      _
    $region11: #{my_tf_forward.13} parent=1 // pred_check_branch
      %14 = sbr.rel (0) target = $region13
    $region12: #{my_tf_forward.13} parent=1 // pred_region
      _
    $region13: #{my_tf_forward.13} parent=1 // pred_fallthru
      _
    %v15 = vld [vmem:[%s0] sm:$0xff]
    %v16 = vld [vmem:[%s0 + $0x8] sm:$0xff]
    %v17 = vld [vmem:[%s1] sm:$0xff]
    %v18 = vld [vmem:[%s1 + $0x8] sm:$0xff]
    %v19 = vld [vmem:[%s1 + $0x10] sm:$0xff]
    %v20 = vld [vmem:[%s1 + $0x18] sm:$0xff]
    %v21 = vld [vmem:[%s2] sm:$0x1]
    %v23 = vlaneseq
    %v24 = vshrl.u32 %v23, 7
    %v25 = vsub.s32 0, %v24
    %v26 = vrot.slane %v21, %v25
    %vm28 = vcmask 261120
    %v30 = vsel %vm28, %v15, 0
    %v33 = vsel %vm28, %v16, 0
    %35 = vmatprep.subr.mxu0 0.0
    %36 = vmatpush1.msra.mxu0 %v17
    %37 = vmatprep.subr.mxu0 0.0
    %38 = vmatpush1.msra.mxu0 %v18
    %39 = vmatprep.subr.mxu0 0.0
    %40 = vmatpush1.msra.mxu0 %v19
    %41 = vmatprep.subr.mxu0 0.0
    %42 = vmatpush1.msra.mxu0 %v20
    %43 = vmatprep.subr.mxu0 0.0
    %44 = vmatpush1.msra.mxu0 0.0
    %45 = vmatprep.subr.mxu0 0.0
    %46 = vmatpush1.msra.mxu0 0.0
    %47 = vmatprep.subr.mxu0 0.0
    %48 = vmatpush1.msra.mxu0 0.0
    %49 = vmatprep.subr.mxu0 0.0
    %50 = vmatpush1.msra.mxu0 0.0
    %51 = vmatprep.subr.mxu0 0.0
    %52 = vmatpush1.msra.mxu0 0.0
    %53 = vmatprep.subr.mxu0 0.0
    %54 = vmatpush1.msra.mxu0 0.0
    %55 = vmatprep.subr.mxu0 0.0
    %56 = vmatpush1.msra.mxu0 0.0
    %57 = vmatprep.subr.mxu0 0.0
    %58 = vmatpush1.msra.mxu0 0.0
    %59 = vmatprep.subr.mxu0 0.0
    %60 = vmatpush1.msra.mxu0 0.0
    %61 = vmatprep.subr.mxu0 0.0
    %62 = vmatpush1.msra.mxu0 0.0
    %63 = vmatprep.subr.mxu0 0.0
    %64 = vmatpush1.msra.mxu0 0.0
    %65 = vmatprep.subr.mxu0 0.0
    %66 = vmatpush1.msra.mxu0 0.0
    %67 = vmatprep.subr.mxu0 0.0
    %68 = vmatpush1.msra.mxu0 0.0
    %69 = vmatprep.subr.mxu0 0.0
    %70 = vmatpush1.msra.mxu0 0.0
    %71 = vmatprep.subr.mxu0 0.0
    %72 = vmatpush1.msra.mxu0 0.0
    %73 = vmatprep.subr.mxu0 0.0
    %74 = vmatpush1.msra.mxu0 0.0
    %75 = vmatprep.subr.mxu0 0.0
    %76 = vmatpush1.msra.mxu0 0.0
    %77 = vmatprep.subr.mxu0 0.0
    %78 = vmatpush1.msra.mxu0 0.0
    %79 = vmatprep.subr.mxu0 0.0
    %80 = vmatpush1.msra.mxu0 0.0
    %81 = vmatprep.subr.mxu0 0.0
    %82 = vmatpush1.msra.mxu0 0.0
    %83 = vmatprep.subr.mxu0 0.0
    %84 = vmatpush1.msra.mxu0 0.0
    %85 = vmatprep.subr.mxu0 0.0
    %86 = vmatpush1.msra.mxu0 0.0
    %87 = vmatprep.subr.mxu0 0.0
    %88 = vmatpush1.msra.mxu0 0.0
    %89 = vmatprep.subr.mxu0 0.0
    %90 = vmatpush1.msra.mxu0 0.0
    %91 = vmatprep.subr.mxu0 0.0
    %92 = vmatpush1.msra.mxu0 0.0
    %93 = vmatprep.subr.mxu0 0.0
    %94 = vmatpush1.msra.mxu0 0.0
    %95 = vmatprep.subr.mxu0 0.0
    %96 = vmatpush1.msra.mxu0 0.0
    %97 = vmatprep.subr.mxu0 0.0
    %98 = vmatpush1.msra.mxu0 0.0
    %99 = vmatprep.mubr.f32.mxu0 0.0
    %100 = vmatmul.mubr.f32.gmra.mrb[0].mxu0 %v30
    %v101 = vpop.f32.mrb[0].mxu0
    %v102 = vadd.f32 %v26, %v101
    %v103 = vpop.f32.mrb[0].mxu0
    %104 = vmatprep.mubr.f32.mxu0 0.0
    %105 = vmatmul.mubr.f32.gmra.mrb[0].mxu0 %v33
    %v106 = vpop.f32.mrb[0].mxu0
    %v107 = vadd.f32 %v26, %v106
    %v108 = vpop.f32.mrb[0].mxu0
    %109 = vdwg.mxu0
    %vm110 = vcmask 392192
    %111 = vst.msk [vmem:[#allocation2] sm:$0xff] %vm110, %v102
    %112 = vst.msk [vmem:[#allocation2 + $0x8] sm:$0xff] %vm110, %v107
    // Predicated region
    $region14: #{my_tf_forward.13} parent=1 // pred_check
      _
    $region15: #{my_tf_forward.13} parent=1 // pred_check_branch
      %114 = sbr.rel (0) target = $region17
    $region16: #{my_tf_forward.13} parent=1 // pred_region
      %s116 = ssub.s32 256, 256
      %117 = vsyncadd [#allocation3], %s116
      %s118 = sshll.u32 [#allocation2], 4
      %s119 = int_to_ptr.vmem [resolvable:$true] %s118
      %124 = dma.vmem_to_hbm [thread:$0]  %s119, 256, %s3, [#allocation3], 128, 128, 8
    $region17: #{my_tf_forward.13} parent=1 // pred_fallthru
      _
    // Predicated region
    $region18: #{my_tf_forward.13} parent=1 // pred_check
      _
    $region19: #{my_tf_forward.13} parent=1 // pred_check_branch
      %126 = sbr.rel (0) target = $region21
    $region20: #{my_tf_forward.13} parent=1 // pred_region
      %127 = dma.done [#allocation3], 256
    $region21: #{my_tf_forward.13} parent=1 // pred_fallthru
      _
    %128 = vsyncpa [#allocation3], 1

// kernel: my_tf_forward.7
$region0: #{my_tf_forward.7}
  #allocation0 [shape = 'u32[]', space=smem, size = 0x4, offset = 0x4, fixed_abs, tag = 'smem constant byte address 0x4 - core index']
  #allocation1 [shape = 'u32[144,128]{1,0:T(1,128)}', space=vmem, size = 0x12000, scoped, tag = 'internal scratch']
  %s0 = inlined_call_operand.vmem [shape: f32[2,8,32], index: 0, kind: input, shape index: {}]
  %s1 = inlined_call_operand.vmem [shape: f32[2,1,8], index: 1, kind: input, shape index: {}]
  %s2 = inlined_call_operand.vmem [shape: f32[32,96], index: 2, kind: input, shape index: {}]
  %s3 = inlined_call_operand.vmem [shape: f32[1,96], index: 3, kind: input, shape index: {}]
  %s4 = inlined_call_operand.vmem [shape: f32[32,32], index: 4, kind: input, shape index: {}]
  %s5 = inlined_call_operand.vmem [shape: f32[1,32], index: 5, kind: input, shape index: {}]
  %s6 = inlined_call_operand.vmem [shape: f32[32,64], index: 6, kind: input, shape index: {}]
  %s7 = inlined_call_operand.vmem [shape: f32[1,64], index: 7, kind: input, shape index: {}]
  %s8 = inlined_call_operand.vmem [shape: f32[64,32], index: 8, kind: input, shape index: {}]
  %s9 = inlined_call_operand.vmem [shape: f32[1,32], index: 9, kind: input, shape index: {}]
  %s10 = inlined_call_operand.vmem [shape: f32[1,32], index: 10, kind: input, shape index: {}]
  %s11 = inlined_call_operand.vmem [shape: f32[1,32], index: 11, kind: input, shape index: {}]
  %s12 = inlined_call_operand.vmem [shape: f32[1,32], index: 12, kind: input, shape index: {}]
  %s13 = inlined_call_operand.vmem [shape: f32[1,32], index: 13, kind: input, shape index: {}]
  %s14 = inlined_call_operand.vmem [shape: f32[2,8,32], index: 14, kind: output, shape index: {}]
  %s15 = sld [smem:[#allocation0]]
  $region89: #{my_tf_forward.7} parent=0
    _
  %s17 = ssub.s32 1, %s15
  %s18 = scalar_select 0, %s17, %s15
  loop: start=0, step=1, limit=4
  $region2: #{my_tf_forward.7} parent=0 // loop_pre_header
    _
  $region3: #{my_tf_forward.7} parent=0 // loop_header
    %s20 = sphi 0, %s24
    %p21 = scmp.ge.s32.totalorder %s20, 4
    %s30 = sphi 0, %s32
    %s33 = sphi 0, %s30
    %s34 = sphi 0, %s33
    %s50 = sphi 0, %s34
    %s56 = sphi 0, %s58
    %s59 = sphi 0, %s56
    %s60 = sphi 0, %s59
    %s76 = sphi 0, %s60
    %s80 = sphi 0, %s80
    %s82 = sphi 0, %s80
    %s83 = sphi 0, %s82
    %s97 = sphi 0, %s83
    %s101 = sphi 0, %s101
    %s103 = sphi 0, %s101
    %s104 = sphi 0, %s103
    %s118 = sphi 0, %s104
    %s122 = sphi 0, %s122
    %s124 = sphi 0, %s122
    %s125 = sphi 0, %s124
    %s139 = sphi 0, %s125
    %s143 = sphi 0, %s143
    %s145 = sphi 0, %s143
    %s146 = sphi 0, %s145
    %s160 = sphi 0, %s146
    %s164 = sphi 0, %s164
    %s166 = sphi 0, %s164
    %s167 = sphi 0, %s166
    %s181 = sphi 0, %s167
    %s185 = sphi 0, %s185
    %s187 = sphi 0, %s185
    %s188 = sphi 0, %s187
    %s202 = sphi 0, %s188
    %s206 = sphi 0, %s206
    %s208 = sphi 0, %s206
    %s209 = sphi 0, %s208
    %s223 = sphi 0, %s209
    %s227 = sphi 0, %s227
    %s229 = sphi 0, %s227
    %s230 = sphi 0, %s229
    %s244 = sphi 0, %s230
    %s248 = sphi 0, %s248
    %s250 = sphi 0, %s248
    %s251 = sphi 0, %s250
    %s265 = sphi 0, %s251
    %s269 = sphi 0, %s269
    %s271 = sphi 0, %s269
    %s272 = sphi 0, %s271
    %s286 = sphi 0, %s272
    %s290 = sphi 0, %s290
    %s292 = sphi 0, %s290
    %s293 = sphi 0, %s292
    %s307 = sphi 0, %s293
    %s311 = sphi 0, %s311
    %s313 = sphi 0, %s311
    %s314 = sphi 0, %s313
    %s328 = sphi 0, %s314
    %s334 = sphi 0, %s336
    %s337 = sphi 0, %s334
    %s338 = sphi 0, %s337
    %s354 = sphi 0, %s338
  $region4: #{my_tf_forward.7} parent=0 // loop_header_branch
    %23 = sbr.rel (%p21) target = $region8
  $region5: #{my_tf_forward.7} parent=0 // loop_body
    %s25 = ssub.s32 %s20, 1
    %s26 = ssub.s32 %s20, 2
    %s27 = sadd.s32 %s20, 1
    %s28 = ssub.s32 %s20, %s27
    %p29 = scmp.eq.s32.totalorder %s28, 0
    %s31 = sadd.s32 %s30, 1
    %s32 = scalar_select %p29, %s30, %s31
    %p35 = pneg %p29
    %p36 = scmp.eq.s32.totalorder %s20, 1
    %p37 = por %p35, %p36
    %p38 = scmp.ne.s32.totalorder %s30, %s33
    %p39 = scmp.eq.s32.totalorder %s20, 0
    %p40 = por %p38, %p39
    %p41 = scmp.ne.s32.totalorder %s30, %s33
    %p42 = scmp.eq.s32.totalorder %s25, 1
    %p43 = por %p41, %p42
    %p44 = scmp.ne.s32.totalorder %s33, %s34
    %p45 = scmp.eq.s32.totalorder %s25, 0
    %p46 = por %p44, %p45
    %p47 = scmp.ne.s32.totalorder %s33, %s34
    %p48 = scmp.eq.s32.totalorder %s26, 1
    %p49 = por %p47, %p48
    %p51 = scmp.ne.s32.totalorder %s34, %s50
    %p52 = scmp.eq.s32.totalorder %s26, 0
    %p53 = por %p51, %p52
    %s54 = ssub.s32 %s20, %s27
    %p55 = scmp.eq.s32.totalorder %s54, 0
    %s57 = sadd.s32 %s56, 1
    %s58 = scalar_select %p55, %s56, %s57
    %p61 = pneg %p55
    %p62 = scmp.eq.s32.totalorder %s20, 1
    %p63 = por %p61, %p62
    %p64 = scmp.ne.s32.totalorder %s56, %s59
    %p65 = scmp.eq.s32.totalorder %s20, 0
    %p66 = por %p64, %p65
    %p67 = scmp.ne.s32.totalorder %s56, %s59
    %p68 = scmp.eq.s32.totalorder %s25, 1
    %p69 = por %p67, %p68
    %p70 = scmp.ne.s32.totalorder %s59, %s60
    %p71 = scmp.eq.s32.totalorder %s25, 0
    %p72 = por %p70, %p71
    %p73 = scmp.ne.s32.totalorder %s59, %s60
    %p74 = scmp.eq.s32.totalorder %s26, 1
    %p75 = por %p73, %p74
    %p77 = scmp.ne.s32.totalorder %s60, %s76
    %p78 = scmp.eq.s32.totalorder %s26, 0
    %p79 = por %p77, %p78
    %s81 = sadd.s32 %s80, 1
    %p84 = scmp.eq.s32.totalorder %s20, 1
    %p85 = scmp.ne.s32.totalorder %s80, %s82
    %p86 = scmp.eq.s32.totalorder %s20, 0
    %p87 = por %p85, %p86
    %p88 = scmp.ne.s32.totalorder %s80, %s82
    %p89 = scmp.eq.s32.totalorder %s25, 1
    %p90 = por %p88, %p89
    %p91 = scmp.ne.s32.totalorder %s82, %s83
    %p92 = scmp.eq.s32.totalorder %s25, 0
    %p93 = por %p91, %p92
    %p94 = scmp.ne.s32.totalorder %s82, %s83
    %p95 = scmp.eq.s32.totalorder %s26, 1
    %p96 = por %p94, %p95
    %p98 = scmp.ne.s32.totalorder %s83, %s97
    %p99 = scmp.eq.s32.totalorder %s26, 0
    %p100 = por %p98, %p99
    %s102 = sadd.s32 %s101, 1
    %p105 = scmp.eq.s32.totalorder %s20, 1
    %p106 = scmp.ne.s32.totalorder %s101, %s103
    %p107 = scmp.eq.s32.totalorder %s20, 0
    %p108 = por %p106, %p107
    %p109 = scmp.ne.s32.totalorder %s101, %s103
    %p110 = scmp.eq.s32.totalorder %s25, 1
    %p111 = por %p109, %p110
    %p112 = scmp.ne.s32.totalorder %s103, %s104
    %p113 = scmp.eq.s32.totalorder %s25, 0
    %p114 = por %p112, %p113
    %p115 = scmp.ne.s32.totalorder %s103, %s104
    %p116 = scmp.eq.s32.totalorder %s26, 1
    %p117 = por %p115, %p116
    %p119 = scmp.ne.s32.totalorder %s104, %s118
    %p120 = scmp.eq.s32.totalorder %s26, 0
    %p121 = por %p119, %p120
    %s123 = sadd.s32 %s122, 1
    %p126 = scmp.eq.s32.totalorder %s20, 1
    %p127 = scmp.ne.s32.totalorder %s122, %s124
    %p128 = scmp.eq.s32.totalorder %s20, 0
    %p129 = por %p127, %p128
    %p130 = scmp.ne.s32.totalorder %s122, %s124
    %p131 = scmp.eq.s32.totalorder %s25, 1
    %p132 = por %p130, %p131
    %p133 = scmp.ne.s32.totalorder %s124, %s125
    %p134 = scmp.eq.s32.totalorder %s25, 0
    %p135 = por %p133, %p134
    %p136 = scmp.ne.s32.totalorder %s124, %s125
    %p137 = scmp.eq.s32.totalorder %s26, 1
    %p138 = por %p136, %p137
    %p140 = scmp.ne.s32.totalorder %s125, %s139
    %p141 = scmp.eq.s32.totalorder %s26, 0
    %p142 = por %p140, %p141
    %s144 = sadd.s32 %s143, 1
    %p147 = scmp.eq.s32.totalorder %s20, 1
    %p148 = scmp.ne.s32.totalorder %s143, %s145
    %p149 = scmp.eq.s32.totalorder %s20, 0
    %p150 = por %p148, %p149
    %p151 = scmp.ne.s32.totalorder %s143, %s145
    %p152 = scmp.eq.s32.totalorder %s25, 1
    %p153 = por %p151, %p152
    %p154 = scmp.ne.s32.totalorder %s145, %s146
    %p155 = scmp.eq.s32.totalorder %s25, 0
    %p156 = por %p154, %p155
    %p157 = scmp.ne.s32.totalorder %s145, %s146
    %p158 = scmp.eq.s32.totalorder %s26, 1
    %p159 = por %p157, %p158
    %p161 = scmp.ne.s32.totalorder %s146, %s160
    %p162 = scmp.eq.s32.totalorder %s26, 0
    %p163 = por %p161, %p162
    %s165 = sadd.s32 %s164, 1
    %p168 = scmp.eq.s32.totalorder %s20, 1
    %p169 = scmp.ne.s32.totalorder %s164, %s166
    %p170 = scmp.eq.s32.totalorder %s20, 0
    %p171 = por %p169, %p170
    %p172 = scmp.ne.s32.totalorder %s164, %s166
    %p173 = scmp.eq.s32.totalorder %s25, 1
    %p174 = por %p172, %p173
    %p175 = scmp.ne.s32.totalorder %s166, %s167
    %p176 = scmp.eq.s32.totalorder %s25, 0
    %p177 = por %p175, %p176
    %p178 = scmp.ne.s32.totalorder %s166, %s167
    %p179 = scmp.eq.s32.totalorder %s26, 1
    %p180 = por %p178, %p179
    %p182 = scmp.ne.s32.totalorder %s167, %s181
    %p183 = scmp.eq.s32.totalorder %s26, 0
    %p184 = por %p182, %p183
    %s186 = sadd.s32 %s185, 1
    %p189 = scmp.eq.s32.totalorder %s20, 1
    %p190 = scmp.ne.s32.totalorder %s185, %s187
    %p191 = scmp.eq.s32.totalorder %s20, 0
    %p192 = por %p190, %p191
    %p193 = scmp.ne.s32.totalorder %s185, %s187
    %p194 = scmp.eq.s32.totalorder %s25, 1
    %p195 = por %p193, %p194
    %p196 = scmp.ne.s32.totalorder %s187, %s188
    %p197 = scmp.eq.s32.totalorder %s25, 0
    %p198 = por %p196, %p197
    %p199 = scmp.ne.s32.totalorder %s187, %s188
    %p200 = scmp.eq.s32.totalorder %s26, 1
    %p201 = por %p199, %p200
    %p203 = scmp.ne.s32.totalorder %s188, %s202
    %p204 = scmp.eq.s32.totalorder %s26, 0
    %p205 = por %p203, %p204
    %s207 = sadd.s32 %s206, 1
    %p210 = scmp.eq.s32.totalorder %s20, 1
    %p211 = scmp.ne.s32.totalorder %s206, %s208
    %p212 = scmp.eq.s32.totalorder %s20, 0
    %p213 = por %p211, %p212
    %p214 = scmp.ne.s32.totalorder %s206, %s208
    %p215 = scmp.eq.s32.totalorder %s25, 1
    %p216 = por %p214, %p215
    %p217 = scmp.ne.s32.totalorder %s208, %s209
    %p218 = scmp.eq.s32.totalorder %s25, 0
    %p219 = por %p217, %p218
    %p220 = scmp.ne.s32.totalorder %s208, %s209
    %p221 = scmp.eq.s32.totalorder %s26, 1
    %p222 = por %p220, %p221
    %p224 = scmp.ne.s32.totalorder %s209, %s223
    %p225 = scmp.eq.s32.totalorder %s26, 0
    %p226 = por %p224, %p225
    %s228 = sadd.s32 %s227, 1
    %p231 = scmp.eq.s32.totalorder %s20, 1
    %p232 = scmp.ne.s32.totalorder %s227, %s229
    %p233 = scmp.eq.s32.totalorder %s20, 0
    %p234 = por %p232, %p233
    %p235 = scmp.ne.s32.totalorder %s227, %s229
    %p236 = scmp.eq.s32.totalorder %s25, 1
    %p237 = por %p235, %p236
    %p238 = scmp.ne.s32.totalorder %s229, %s230
    %p239 = scmp.eq.s32.totalorder %s25, 0
    %p240 = por %p238, %p239
    %p241 = scmp.ne.s32.totalorder %s229, %s230
    %p242 = scmp.eq.s32.totalorder %s26, 1
    %p243 = por %p241, %p242
    %p245 = scmp.ne.s32.totalorder %s230, %s244
    %p246 = scmp.eq.s32.totalorder %s26, 0
    %p247 = por %p245, %p246
    %s249 = sadd.s32 %s248, 1
    %p252 = scmp.eq.s32.totalorder %s20, 1
    %p253 = scmp.ne.s32.totalorder %s248, %s250
    %p254 = scmp.eq.s32.totalorder %s20, 0
    %p255 = por %p253, %p254
    %p256 = scmp.ne.s32.totalorder %s248, %s250
    %p257 = scmp.eq.s32.totalorder %s25, 1
    %p258 = por %p256, %p257
    %p259 = scmp.ne.s32.totalorder %s250, %s251
    %p260 = scmp.eq.s32.totalorder %s25, 0
    %p261 = por %p259, %p260
    %p262 = scmp.ne.s32.totalorder %s250, %s251
    %p263 = scmp.eq.s32.totalorder %s26, 1
    %p264 = por %p262, %p263
    %p266 = scmp.ne.s32.totalorder %s251, %s265
    %p267 = scmp.eq.s32.totalorder %s26, 0
    %p268 = por %p266, %p267
    %s270 = sadd.s32 %s269, 1
    %p273 = scmp.eq.s32.totalorder %s20, 1
    %p274 = scmp.ne.s32.totalorder %s269, %s271
    %p275 = scmp.eq.s32.totalorder %s20, 0
    %p276 = por %p274, %p275
    %p277 = scmp.ne.s32.totalorder %s269, %s271
    %p278 = scmp.eq.s32.totalorder %s25, 1
    %p279 = por %p277, %p278
    %p280 = scmp.ne.s32.totalorder %s271, %s272
    %p281 = scmp.eq.s32.totalorder %s25, 0
    %p282 = por %p280, %p281
    %p283 = scmp.ne.s32.totalorder %s271, %s272
    %p284 = scmp.eq.s32.totalorder %s26, 1
    %p285 = por %p283, %p284
    %p287 = scmp.ne.s32.totalorder %s272, %s286
    %p288 = scmp.eq.s32.totalorder %s26, 0
    %p289 = por %p287, %p288
    %s291 = sadd.s32 %s290, 1
    %p294 = scmp.eq.s32.totalorder %s20, 1
    %p295 = scmp.ne.s32.totalorder %s290, %s292
    %p296 = scmp.eq.s32.totalorder %s20, 0
    %p297 = por %p295, %p296
    %p298 = scmp.ne.s32.totalorder %s290, %s292
    %p299 = scmp.eq.s32.totalorder %s25, 1
    %p300 = por %p298, %p299
    %p301 = scmp.ne.s32.totalorder %s292, %s293
    %p302 = scmp.eq.s32.totalorder %s25, 0
    %p303 = por %p301, %p302
    %p304 = scmp.ne.s32.totalorder %s292, %s293
    %p305 = scmp.eq.s32.totalorder %s26, 1
    %p306 = por %p304, %p305
    %p308 = scmp.ne.s32.totalorder %s293, %s307
    %p309 = scmp.eq.s32.totalorder %s26, 0
    %p310 = por %p308, %p309
    %s312 = sadd.s32 %s311, 1
    %p315 = scmp.eq.s32.totalorder %s20, 1
    %p316 = scmp.ne.s32.totalorder %s311, %s313
    %p317 = scmp.eq.s32.totalorder %s20, 0
    %p318 = por %p316, %p317
    %p319 = scmp.ne.s32.totalorder %s311, %s313
    %p320 = scmp.eq.s32.totalorder %s25, 1
    %p321 = por %p319, %p320
    %p322 = scmp.ne.s32.totalorder %s313, %s314
    %p323 = scmp.eq.s32.totalorder %s25, 0
    %p324 = por %p322, %p323
    %p325 = scmp.ne.s32.totalorder %s313, %s314
    %p326 = scmp.eq.s32.totalorder %s26, 1
    %p327 = por %p325, %p326
    %p329 = scmp.ne.s32.totalorder %s314, %s328
    %p330 = scmp.eq.s32.totalorder %s26, 0
    %p331 = por %p329, %p330
    %s332 = ssub.s32 %s20, %s27
    %p333 = scmp.eq.s32.totalorder %s332, 0
    %s335 = sadd.s32 %s334, 1
    %s336 = scalar_select %p333, %s334, %s335
    %p339 = pneg %p333
    %p340 = scmp.eq.s32.totalorder %s20, 1
    %p341 = por %p339, %p340
    %p342 = scmp.ne.s32.totalorder %s334, %s337
    %p343 = scmp.eq.s32.totalorder %s20, 0
    %p344 = por %p342, %p343
    %p345 = scmp.ne.s32.totalorder %s334, %s337
    %p346 = scmp.eq.s32.totalorder %s25, 1
    %p347 = por %p345, %p346
    %p348 = scmp.ne.s32.totalorder %s337, %s338
    %p349 = scmp.eq.s32.totalorder %s25, 0
    %p350 = por %p348, %p349
    %p351 = scmp.ne.s32.totalorder %s337, %s338
    %p352 = scmp.eq.s32.totalorder %s26, 1
    %p353 = por %p351, %p352
    %p355 = scmp.ne.s32.totalorder %s338, %s354
    %p356 = scmp.eq.s32.totalorder %s26, 0
    %p357 = por %p355, %p356
    %p358 = scmp.le.s32.totalorder 1, %s20
    %p359 = scmp.lt.s32.totalorder %s20, 3
    %p360 = pnand %p358, %p359
    %p361 = pneg %p360
    // Predicated region
    $region9: #{my_tf_forward.7} parent=5 // pred_check
      _
    $region10: #{my_tf_forward.7} parent=5 // pred_check_branch
      %363 = sbr.rel (%p360) target = $region12
    $region11: #{my_tf_forward.7} parent=5 // pred_region
      %s364 = ssub.s32 %s20, 1
      // Predicated region
      $region13: #{my_tf_forward.7} parent=11 // pred_check
        %p365 = pneg %p93
      $region14: #{my_tf_forward.7} parent=11 // pred_check_branch
        %367 = sbr.rel (%p365) target = $region16
      $region15: #{my_tf_forward.7} parent=11 // pred_region
        _
      $region16: #{my_tf_forward.7} parent=11 // pred_fallthru
        _
      // Predicated region
      $region17: #{my_tf_forward.7} parent=11 // pred_check
        %p368 = pneg %p114
      $region18: #{my_tf_forward.7} parent=11 // pred_check_branch
        %370 = sbr.rel (%p368) target = $region20
      $region19: #{my_tf_forward.7} parent=11 // pred_region
        _
      $region20: #{my_tf_forward.7} parent=11 // pred_fallthru
        _
      // Predicated region
      $region21: #{my_tf_forward.7} parent=11 // pred_check
        %p371 = pneg %p135
      $region22: #{my_tf_forward.7} parent=11 // pred_check_branch
        %373 = sbr.rel (%p371) target = $region24
      $region23: #{my_tf_forward.7} parent=11 // pred_region
        _
      $region24: #{my_tf_forward.7} parent=11 // pred_fallthru
        _
      // Predicated region
      $region25: #{my_tf_forward.7} parent=11 // pred_check
        %p374 = pneg %p156
      $region26: #{my_tf_forward.7} parent=11 // pred_check_branch
        %376 = sbr.rel (%p374) target = $region28
      $region27: #{my_tf_forward.7} parent=11 // pred_region
        _
      $region28: #{my_tf_forward.7} parent=11 // pred_fallthru
        _
      // Predicated region
      $region29: #{my_tf_forward.7} parent=11 // pred_check
        %p377 = pneg %p177
      $region30: #{my_tf_forward.7} parent=11 // pred_check_branch
        %379 = sbr.rel (%p377) target = $region32
      $region31: #{my_tf_forward.7} parent=11 // pred_region
        _
      $region32: #{my_tf_forward.7} parent=11 // pred_fallthru
        _
      // Predicated region
      $region33: #{my_tf_forward.7} parent=11 // pred_check
        %p380 = pneg %p198
      $region34: #{my_tf_forward.7} parent=11 // pred_check_branch
        %382 = sbr.rel (%p380) target = $region36
      $region35: #{my_tf_forward.7} parent=11 // pred_region
        _
      $region36: #{my_tf_forward.7} parent=11 // pred_fallthru
        _
      // Predicated region
      $region37: #{my_tf_forward.7} parent=11 // pred_check
        %p383 = pneg %p219
      $region38: #{my_tf_forward.7} parent=11 // pred_check_branch
        %385 = sbr.rel (%p383) target = $region40
      $region39: #{my_tf_forward.7} parent=11 // pred_region
        _
      $region40: #{my_tf_forward.7} parent=11 // pred_fallthru
        _
      // Predicated region
      $region41: #{my_tf_forward.7} parent=11 // pred_check
        %p386 = pneg %p240
      $region42: #{my_tf_forward.7} parent=11 // pred_check_branch
        %388 = sbr.rel (%p386) target = $region44
      $region43: #{my_tf_forward.7} parent=11 // pred_region
        _
      $region44: #{my_tf_forward.7} parent=11 // pred_fallthru
        _
      // Predicated region
      $region45: #{my_tf_forward.7} parent=11 // pred_check
        %p389 = pneg %p261
      $region46: #{my_tf_forward.7} parent=11 // pred_check_branch
        %391 = sbr.rel (%p389) target = $region48
      $region47: #{my_tf_forward.7} parent=11 // pred_region
        _
      $region48: #{my_tf_forward.7} parent=11 // pred_fallthru
        _
      // Predicated region
      $region49: #{my_tf_forward.7} parent=11 // pred_check
        %p392 = pneg %p282
      $region50: #{my_tf_forward.7} parent=11 // pred_check_branch
        %394 = sbr.rel (%p392) target = $region52
      $region51: #{my_tf_forward.7} parent=11 // pred_region
        _
      $region52: #{my_tf_forward.7} parent=11 // pred_fallthru
        _
      // Predicated region
      $region53: #{my_tf_forward.7} parent=11 // pred_check
        %p395 = pneg %p303
      $region54: #{my_tf_forward.7} parent=11 // pred_check_branch
        %397 = sbr.rel (%p395) target = $region56
      $region55: #{my_tf_forward.7} parent=11 // pred_region
        _
      $region56: #{my_tf_forward.7} parent=11 // pred_fallthru
        _
      // Predicated region
      $region57: #{my_tf_forward.7} parent=11 // pred_check
        %p398 = pneg %p324
      $region58: #{my_tf_forward.7} parent=11 // pred_check_branch
        %400 = sbr.rel (%p398) target = $region60
      $region59: #{my_tf_forward.7} parent=11 // pred_region
        _
      $region60: #{my_tf_forward.7} parent=11 // pred_fallthru
        _
    $region12: #{my_tf_forward.7} parent=5 // pred_fallthru
      _
    %p401 = scmp.lt.s32.totalorder %s20, 2
    // Predicated region
    $region61: #{my_tf_forward.7} parent=5 // pred_check
      %p402 = pneg %p401
    $region62: #{my_tf_forward.7} parent=5 // pred_check_branch
      %404 = sbr.rel (%p402) target = $region64
    $region63: #{my_tf_forward.7} parent=5 // pred_region
      // Predicated region
      $region65: #{my_tf_forward.7} parent=63 // pred_check
        %p405 = pneg %p40
      $region66: #{my_tf_forward.7} parent=63 // pred_check_branch
        %407 = sbr.rel (%p405) target = $region68
      $region67: #{my_tf_forward.7} parent=63 // pred_region
        %p408 = scmp.lt.s32.totalorder %s20, 1
        %s409 = scalar_select %p408, %s20, 1
        %s410 = smul.addr %s409, 8
        %s411 = scalar_lea.vmem %s0, %s410
      $region68: #{my_tf_forward.7} parent=63 // pred_fallthru
        _
      // Predicated region
      $region69: #{my_tf_forward.7} parent=63 // pred_check
        %p412 = pneg %p66
      $region70: #{my_tf_forward.7} parent=63 // pred_check_branch
        %414 = sbr.rel (%p412) target = $region72
      $region71: #{my_tf_forward.7} parent=63 // pred_region
        %p415 = scmp.lt.s32.totalorder %s20, 1
        %s416 = scalar_select %p415, %s20, 1
        %s417 = scalar_lea.vmem %s1, %s416
      $region72: #{my_tf_forward.7} parent=63 // pred_fallthru
        _
    $region64: #{my_tf_forward.7} parent=5 // pred_fallthru
      _
    %p418 = scmp.le.s32.totalorder 1, %s20
    %p419 = scmp.lt.s32.totalorder %s20, 3
    %p420 = pnand %p418, %p419
    %p421 = pneg %p420
    // Predicated region
    $region73: #{my_tf_forward.7} parent=5 // pred_check
      _
    $region74: #{my_tf_forward.7} parent=5 // pred_check_branch
      %423 = sbr.rel (%p420) target = $region76
    $region75: #{my_tf_forward.7} parent=5 // pred_region
      %s424 = ssub.s32 %s20, 1
      %p425 = scmp.lt.s32.totalorder %s25, 1
      %s426 = scalar_select %p425, %s25, 1
      %s427 = smul.addr %s426, 8
      %s428 = scalar_lea.vmem %s0, %s427
      %p429 = pneg %p46
      %p430 = pneg %p43
      %p431 = scmp.lt.s32.totalorder %s25, 1
      %s432 = scalar_select %p431, %s25, 1
      %s433 = scalar_lea.vmem %s1, %s432
      %p434 = pneg %p72
      %p435 = pneg %p69
      %p436 = pneg %p93
      %p437 = pneg %p90
      %p438 = pneg %p114
      %p439 = pneg %p111
      %p440 = pneg %p135
      %p441 = pneg %p132
      %p442 = pneg %p156
      %p443 = pneg %p153
      %p444 = pneg %p177
      %p445 = pneg %p174
      %p446 = pneg %p198
      %p447 = pneg %p195
      %p448 = pneg %p219
      %p449 = pneg %p216
      %p450 = pneg %p240
      %p451 = pneg %p237
      %p452 = pneg %p261
      %p453 = pneg %p258
      %p454 = pneg %p282
      %p455 = pneg %p279
      %p456 = pneg %p303
      %p457 = pneg %p300
      %p458 = pneg %p324
      %p459 = pneg %p321
      %p460 = pneg %p350
      %p461 = pneg %p347
      %p462 = scmp.lt.s32.totalorder %s25, 1
      %s463 = scalar_select %p462, %s25, 1
      %s464 = smul.addr %s463, 8
      %s465 = scalar_lea.vmem %s14, %s464
      %p466 = scmp.lt.s32.totalorder %s25, 1
      %s467 = scalar_select %p466, %s25, 1
      %s468 = smul.addr %s467, 8
      %s469 = scalar_lea.vmem %s0, %s468
      %p470 = scmp.lt.s32.totalorder %s25, 1
      %s471 = scalar_select %p470, %s25, 1
      %s472 = scalar_lea.vmem %s1, %s471
      %p473 = scmp.lt.s32.totalorder %s25, 1
      %s474 = scalar_select %p473, %s25, 1
      %s475 = smul.addr %s474, 8
      %s476 = scalar_lea.vmem %s14, %s475
      %v477 = vld [vmem:[%s469] sm:$0xff]
      %v478 = vld [vmem:[%s472] sm:$0x1]
      %v479 = vld [vmem:[%s2] sm:$0xff]
      %v480 = vld [vmem:[%s2 + $0x8] sm:$0xff]
      %v481 = vld [vmem:[%s2 + $0x10] sm:$0xff]
      %v482 = vld [vmem:[%s2 + $0x18] sm:$0xff]
      %v483 = vld [vmem:[%s3] sm:$0x1]
      %v484 = vld [vmem:[%s4] sm:$0xff]
      %v485 = vld [vmem:[%s4 + $0x8] sm:$0xff]
      %v486 = vld [vmem:[%s4 + $0x10] sm:$0xff]
      %v487 = vld [vmem:[%s4 + $0x18] sm:$0xff]
      %v488 = vld [vmem:[%s5] sm:$0x1]
      %v490 = vlaneseq
      %v491 = vshrl.u32 %v490, 7
      %v492 = vsub.s32 0, %v491
      %v493 = vrot.slane %v483, %v492
      %vm495 = vcmask 261120
      %v497 = vsel %vm495, %v477, 0
      %499 = vmatprep.subr.mxu0 0.0
      %500 = vmatpush1.msra.mxu0 %v479
      %501 = vmatprep.subr.mxu0 0.0
      %502 = vmatpush1.msra.mxu0 %v480
      %503 = vmatprep.subr.mxu0 0.0
      %504 = vmatpush1.msra.mxu0 %v481
      %505 = vmatprep.subr.mxu0 0.0
      %506 = vmatpush1.msra.mxu0 %v482
      %507 = vmatprep.subr.mxu0 0.0
      %508 = vmatpush1.msra.mxu0 0.0
      %509 = vmatprep.subr.mxu0 0.0
      %510 = vmatpush1.msra.mxu0 0.0
      %511 = vmatprep.subr.mxu0 0.0
      %512 = vmatpush1.msra.mxu0 0.0
      %513 = vmatprep.subr.mxu0 0.0
      %514 = vmatpush1.msra.mxu0 0.0
      %515 = vmatprep.subr.mxu0 0.0
      %516 = vmatpush1.msra.mxu0 0.0
      %517 = vmatprep.subr.mxu0 0.0
      %518 = vmatpush1.msra.mxu0 0.0
      %519 = vmatprep.subr.mxu0 0.0
      %520 = vmatpush1.msra.mxu0 0.0
      %521 = vmatprep.subr.mxu0 0.0
      %522 = vmatpush1.msra.mxu0 0.0
      %523 = vmatprep.subr.mxu0 0.0
      %524 = vmatpush1.msra.mxu0 0.0
      %525 = vmatprep.subr.mxu0 0.0
      %526 = vmatpush1.msra.mxu0 0.0
      %527 = vmatprep.subr.mxu0 0.0
      %528 = vmatpush1.msra.mxu0 0.0
      %529 = vmatprep.subr.mxu0 0.0
      %530 = vmatpush1.msra.mxu0 0.0
      %531 = vmatprep.subr.mxu0 0.0
      %532 = vmatpush1.msra.mxu0 0.0
      %533 = vmatprep.subr.mxu0 0.0
      %534 = vmatpush1.msra.mxu0 0.0
      %535 = vmatprep.subr.mxu0 0.0
      %536 = vmatpush1.msra.mxu0 0.0
      %537 = vmatprep.subr.mxu0 0.0
      %538 = vmatpush1.msra.mxu0 0.0
      %539 = vmatprep.subr.mxu0 0.0
      %540 = vmatpush1.msra.mxu0 0.0
      %541 = vmatprep.subr.mxu0 0.0
      %542 = vmatpush1.msra.mxu0 0.0
      %543 = vmatprep.subr.mxu0 0.0
      %544 = vmatpush1.msra.mxu0 0.0
      %545 = vmatprep.subr.mxu0 0.0
      %546 = vmatpush1.msra.mxu0 0.0
      %547 = vmatprep.subr.mxu0 0.0
      %548 = vmatpush1.msra.mxu0 0.0
      %549 = vmatprep.subr.mxu0 0.0
      %550 = vmatpush1.msra.mxu0 0.0
      %551 = vmatprep.subr.mxu0 0.0
      %552 = vmatpush1.msra.mxu0 0.0
      %553 = vmatprep.subr.mxu0 0.0
      %554 = vmatpush1.msra.mxu0 0.0
      %555 = vmatprep.subr.mxu0 0.0
      %556 = vmatpush1.msra.mxu0 0.0
      %557 = vmatprep.subr.mxu0 0.0
      %558 = vmatpush1.msra.mxu0 0.0
      %559 = vmatprep.subr.mxu0 0.0
      %560 = vmatpush1.msra.mxu0 0.0
      %561 = vmatprep.subr.mxu0 0.0
      %562 = vmatpush1.msra.mxu0 0.0
      %563 = vmatprep.mubr.f32.mxu0 0.0
      %564 = vmatmul.mubr.f32.gmra.mrb[0].mxu0 %v497
      %v565 = vpop.f32.mrb[0].mxu0
      %v566 = vadd.f32 %v493, %v565
      %v567 = vpop.f32.mrb[0].mxu0
      %568 = vdwg.mxu0
      %v569 = vmul.f32 %v566, 0.35355338
      %v571 = vlaneseq
      %v572 = vshrl.u32 %v571, 7
      %v573 = vsub.s32 0, %v572
      %v574 = vrot.slane %v478, %v573
      %577 = vrot.lane.b32.xlu0 %v566, 96
      %v578 = vpop.permute.xlu0 %577
      %vm579 = vcmask 64512
      %v581 = vsel %vm579, %v569, 0
      %v583 = vsel %vm579, %v578, 0
      %585 = vmatprep.subr.mxu0 0.0
      %586 = vmatpush1.xpose.msra.mxu0 %v583
      %587 = vmatprep.subr.mxu0 0.0
      %588 = vmatpush1.xpose.msra.mxu0 0.0
      %589 = vmatprep.subr.mxu0 0.0
      %590 = vmatpush1.xpose.msra.mxu0 0.0
      %591 = vmatprep.subr.mxu0 0.0
      %592 = vmatpush1.xpose.msra.mxu0 0.0
      %593 = vmatprep.subr.mxu0 0.0
      %594 = vmatpush1.xpose.msra.mxu0 0.0
      %595 = vmatprep.subr.mxu0 0.0
      %596 = vmatpush1.xpose.msra.mxu0 0.0
      %597 = vmatprep.subr.mxu0 0.0
      %598 = vmatpush1.xpose.msra.mxu0 0.0
      %599 = vmatprep.subr.mxu0 0.0
      %600 = vmatpush1.xpose.msra.mxu0 0.0
      %601 = vmatprep.subr.mxu0 0.0
      %602 = vmatpush1.xpose.msra.mxu0 0.0
      %603 = vmatprep.subr.mxu0 0.0
      %604 = vmatpush1.xpose.msra.mxu0 0.0
      %605 = vmatprep.subr.mxu0 0.0
      %606 = vmatpush1.xpose.msra.mxu0 0.0
      %607 = vmatprep.subr.mxu0 0.0
      %608 = vmatpush1.xpose.msra.mxu0 0.0
      %609 = vmatprep.subr.mxu0 0.0
      %610 = vmatpush1.xpose.msra.mxu0 0.0
      %611 = vmatprep.subr.mxu0 0.0
      %612 = vmatpush1.xpose.msra.mxu0 0.0
      %613 = vmatprep.subr.mxu0 0.0
      %614 = vmatpush1.xpose.msra.mxu0 0.0
      %615 = vmatprep.subr.mxu0 0.0
      %616 = vmatpush1.xpose.msra.mxu0 0.0
      %617 = vmatprep.subr.mxu0 0.0
      %618 = vmatpush1.xpose.msra.mxu0 0.0
      %619 = vmatprep.subr.mxu0 0.0
      %620 = vmatpush1.xpose.msra.mxu0 0.0
      %621 = vmatprep.subr.mxu0 0.0
      %622 = vmatpush1.xpose.msra.mxu0 0.0
      %623 = vmatprep.subr.mxu0 0.0
      %624 = vmatpush1.xpose.msra.mxu0 0.0
      %625 = vmatprep.subr.mxu0 0.0
      %626 = vmatpush1.xpose.msra.mxu0 0.0
      %627 = vmatprep.subr.mxu0 0.0
      %628 = vmatpush1.xpose.msra.mxu0 0.0
      %629 = vmatprep.subr.mxu0 0.0
      %630 = vmatpush1.xpose.msra.mxu0 0.0
      %631 = vmatprep.subr.mxu0 0.0
      %632 = vmatpush1.xpose.msra.mxu0 0.0
      %633 = vmatprep.subr.mxu0 0.0
      %634 = vmatpush1.xpose.msra.mxu0 0.0
      %635 = vmatprep.subr.mxu0 0.0
      %636 = vmatpush1.xpose.msra.mxu0 0.0
      %637 = vmatprep.subr.mxu0 0.0
      %638 = vmatpush1.xpose.msra.mxu0 0.0
      %639 = vmatprep.subr.mxu0 0.0
      %640 = vmatpush1.xpose.msra.mxu0 0.0
      %641 = vmatprep.subr.mxu0 0.0
      %642 = vmatpush1.xpose.msra.mxu0 0.0
      %643 = vmatprep.subr.mxu0 0.0
      %644 = vmatpush1.xpose.msra.mxu0 0.0
      %645 = vmatprep.subr.mxu0 0.0
      %646 = vmatpush1.xpose.msra.mxu0 0.0
      %647 = vmatprep.subr.mxu0 0.0
      %648 = vmatpush1.xpose.msra.mxu0 0.0
      %649 = vmatprep.mubr.f32.mxu0 0.0
      %650 = vmatmul.mubr.f32.gmra.mrb[0].mxu0 %v581
      %v651 = vpop.f32.mrb[0].mxu0
      %v652 = vadd.f32 %v574, %v651
      %v653 = vpop.f32.mrb[0].mxu0
      %654 = vdwg.mxu0
      %v655 = vsel %vm579, %v652, -inf
      %656 = vmax.xlane.f32.xlu0 %v655
      %v657 = vpop.xlane.xlu0 %656
      %v658 = vsub.f32 %v652, %v657
      %v659 = vmul.f32 %v658, 1.442695
      %v660 = vpow.pop %v659
      %v661 = vsel %vm579, %v660, 0.0
      %662 = vadd.xlane.f32.xlu0 %v661
      %v663 = vpop.xlane.xlu0 %662
      %v664 = vrcp.pop %v663
      %v665 = vmul.f32 %v660, %v664
      %666 = vrot.lane.b32.xlu0 %v566, 64
      %v667 = vpop.permute.xlu0 %666
      %v670 = vsel %vm579, %v665, 0
      %672 = vmatprep.subr.mxu0 0.0
      %673 = vmatpush1.msra.mxu0 %v667
      %674 = vmatprep.subr.mxu0 0.0
      %675 = vmatpush1.msra.mxu0 0.0
      %676 = vmatprep.subr.mxu0 0.0
      %677 = vmatpush1.msra.mxu0 0.0
      %678 = vmatprep.subr.mxu0 0.0
      %679 = vmatpush1.msra.mxu0 0.0
      %680 = vmatprep.subr.mxu0 0.0
      %681 = vmatpush1.msra.mxu0 0.0
      %682 = vmatprep.subr.mxu0 0.0
      %683 = vmatpush1.msra.mxu0 0.0
      %684 = vmatprep.subr.mxu0 0.0
      %685 = vmatpush1.msra.mxu0 0.0
      %686 = vmatprep.subr.mxu0 0.0
      %687 = vmatpush1.msra.mxu0 0.0
      %688 = vmatprep.subr.mxu0 0.0
      %689 = vmatpush1.msra.mxu0 0.0
      %690 = vmatprep.subr.mxu0 0.0
      %691 = vmatpush1.msra.mxu0 0.0
      %692 = vmatprep.subr.mxu0 0.0
      %693 = vmatpush1.msra.mxu0 0.0
      %694 = vmatprep.subr.mxu0 0.0
      %695 = vmatpush1.msra.mxu0 0.0
      %696 = vmatprep.subr.mxu0 0.0
      %697 = vmatpush1.msra.mxu0 0.0
      %698 = vmatprep.subr.mxu0 0.0
      %699 = vmatpush1.msra.mxu0 0.0
      %700 = vmatprep.subr.mxu0 0.0
      %701 = vmatpush1.msra.mxu0 0.0
      %702 = vmatprep.subr.mxu0 0.0
      %703 = vmatpush1.msra.mxu0 0.0
      %704 = vmatprep.subr.mxu0 0.0
      %705 = vmatpush1.msra.mxu0 0.0
      %706 = vmatprep.subr.mxu0 0.0
      %707 = vmatpush1.msra.mxu0 0.0
      %708 = vmatprep.subr.mxu0 0.0
      %709 = vmatpush1.msra.mxu0 0.0
      %710 = vmatprep.subr.mxu0 0.0
      %711 = vmatpush1.msra.mxu0 0.0
      %712 = vmatprep.subr.mxu0 0.0
      %713 = vmatpush1.msra.mxu0 0.0
      %714 = vmatprep.subr.mxu0 0.0
      %715 = vmatpush1.msra.mxu0 0.0
      %716 = vmatprep.subr.mxu0 0.0
      %717 = vmatpush1.msra.mxu0 0.0
      %718 = vmatprep.subr.mxu0 0.0
      %719 = vmatpush1.msra.mxu0 0.0
      %720 = vmatprep.subr.mxu0 0.0
      %721 = vmatpush1.msra.mxu0 0.0
      %722 = vmatprep.subr.mxu0 0.0
      %723 = vmatpush1.msra.mxu0 0.0
      %724 = vmatprep.subr.mxu0 0.0
      %725 = vmatpush1.msra.mxu0 0.0
      %726 = vmatprep.subr.mxu0 0.0
      %727 = vmatpush1.msra.mxu0 0.0
      %728 = vmatprep.subr.mxu0 0.0
      %729 = vmatpush1.msra.mxu0 0.0
      %730 = vmatprep.subr.mxu0 0.0
      %731 = vmatpush1.msra.mxu0 0.0
      %732 = vmatprep.subr.mxu0 0.0
      %733 = vmatpush1.msra.mxu0 0.0
      %734 = vmatprep.subr.mxu0 0.0
      %735 = vmatpush1.msra.mxu0 0.0
      %736 = vmatprep.mubr.f32.mxu0 0.0
      %737 = vmatmul.mubr.f32.gmra.mrb[0].mxu0 %v670
      %v738 = vpop.f32.mrb[0].mxu0
      %v739 = vadd.f32 0.0, %v738
      %v740 = vpop.f32.mrb[0].mxu0
      %741 = vdwg.mxu0
      %742 = vrot.lane.b32.xlu0 %v569, 120
      %v743 = vpop.permute.xlu0 %742
      %744 = vrot.lane.b32.xlu0 %v566, 88
      %v745 = vpop.permute.xlu0 %744
      %v746 = vsel %vm579, %v743, 0
      %v748 = vsel %vm579, %v745, 0
      %750 = vmatprep.subr.mxu0 0.0
      %751 = vmatpush1.xpose.msra.mxu0 %v748
      %752 = vmatprep.subr.mxu0 0.0
      %753 = vmatpush1.xpose.msra.mxu0 0.0
      %754 = vmatprep.subr.mxu0 0.0
      %755 = vmatpush1.xpose.msra.mxu0 0.0
      %756 = vmatprep.subr.mxu0 0.0
      %757 = vmatpush1.xpose.msra.mxu0 0.0
      %758 = vmatprep.subr.mxu0 0.0
      %759 = vmatpush1.xpose.msra.mxu0 0.0
      %760 = vmatprep.subr.mxu0 0.0
      %761 = vmatpush1.xpose.msra.mxu0 0.0
      %762 = vmatprep.subr.mxu0 0.0
      %763 = vmatpush1.xpose.msra.mxu0 0.0
      %764 = vmatprep.subr.mxu0 0.0
      %765 = vmatpush1.xpose.msra.mxu0 0.0
      %766 = vmatprep.subr.mxu0 0.0
      %767 = vmatpush1.xpose.msra.mxu0 0.0
      %768 = vmatprep.subr.mxu0 0.0
      %769 = vmatpush1.xpose.msra.mxu0 0.0
      %770 = vmatprep.subr.mxu0 0.0
      %771 = vmatpush1.xpose.msra.mxu0 0.0
      %772 = vmatprep.subr.mxu0 0.0
      %773 = vmatpush1.xpose.msra.mxu0 0.0
      %774 = vmatprep.subr.mxu0 0.0
      %775 = vmatpush1.xpose.msra.mxu0 0.0
      %776 = vmatprep.subr.mxu0 0.0
      %777 = vmatpush1.xpose.msra.mxu0 0.0
      %778 = vmatprep.subr.mxu0 0.0
      %779 = vmatpush1.xpose.msra.mxu0 0.0
      %780 = vmatprep.subr.mxu0 0.0
      %781 = vmatpush1.xpose.msra.mxu0 0.0
      %782 = vmatprep.subr.mxu0 0.0
      %783 = vmatpush1.xpose.msra.mxu0 0.0
      %784 = vmatprep.subr.mxu0 0.0
      %785 = vmatpush1.xpose.msra.mxu0 0.0
      %786 = vmatprep.subr.mxu0 0.0
      %787 = vmatpush1.xpose.msra.mxu0 0.0
      %788 = vmatprep.subr.mxu0 0.0
      %789 = vmatpush1.xpose.msra.mxu0 0.0
      %790 = vmatprep.subr.mxu0 0.0
      %791 = vmatpush1.xpose.msra.mxu0 0.0
      %792 = vmatprep.subr.mxu0 0.0
      %793 = vmatpush1.xpose.msra.mxu0 0.0
      %794 = vmatprep.subr.mxu0 0.0
      %795 = vmatpush1.xpose.msra.mxu0 0.0
      %796 = vmatprep.subr.mxu0 0.0
      %797 = vmatpush1.xpose.msra.mxu0 0.0
      %798 = vmatprep.subr.mxu0 0.0
      %799 = vmatpush1.xpose.msra.mxu0 0.0
      %800 = vmatprep.subr.mxu0 0.0
      %801 = vmatpush1.xpose.msra.mxu0 0.0
      %802 = vmatprep.subr.mxu0 0.0
      %803 = vmatpush1.xpose.msra.mxu0 0.0
      %804 = vmatprep.subr.mxu0 0.0
      %805 = vmatpush1.xpose.msra.mxu0 0.0
      %806 = vmatprep.subr.mxu0 0.0
      %807 = vmatpush1.xpose.msra.mxu0 0.0
      %808 = vmatprep.subr.mxu0 0.0
      %809 = vmatpush1.xpose.msra.mxu0 0.0
      %810 = vmatprep.subr.mxu0 0.0
      %811 = vmatpush1.xpose.msra.mxu0 0.0
      %812 = vmatprep.subr.mxu0 0.0
      %813 = vmatpush1.xpose.msra.mxu0 0.0
      %814 = vmatprep.mubr.f32.mxu0 0.0
      %815 = vmatmul.mubr.f32.gmra.mrb[0].mxu0 %v746
      %v816 = vpop.f32.mrb[0].mxu0
      %v817 = vadd.f32 %v574, %v816
      %v818 = vpop.f32.mrb[0].mxu0
      %819 = vdwg.mxu0
      %v820 = vsel %vm579, %v817, -inf
      %821 = vmax.xlane.f32.xlu0 %v820
      %v822 = vpop.xlane.xlu0 %821
      %v823 = vsub.f32 %v817, %v822
      %v824 = vmul.f32 %v823, 1.442695
      %v825 = vpow.pop %v824
      %v826 = vsel %vm579, %v825, 0.0
      %827 = vadd.xlane.f32.xlu0 %v826
      %v828 = vpop.xlane.xlu0 %827
      %v829 = vrcp.pop %v828
      %v830 = vmul.f32 %v825, %v829
      %831 = vrot.lane.b32.xlu0 %v566, 56
      %v832 = vpop.permute.xlu0 %831
      %v835 = vsel %vm579, %v830, 0
      %837 = vmatprep.subr.mxu0 0.0
      %838 = vmatpush1.msra.mxu0 %v832
      %839 = vmatprep.subr.mxu0 0.0
      %840 = vmatpush1.msra.mxu0 0.0
      %841 = vmatprep.subr.mxu0 0.0
      %842 = vmatpush1.msra.mxu0 0.0
      %843 = vmatprep.subr.mxu0 0.0
      %844 = vmatpush1.msra.mxu0 0.0
      %845 = vmatprep.subr.mxu0 0.0
      %846 = vmatpush1.msra.mxu0 0.0
      %847 = vmatprep.subr.mxu0 0.0
      %848 = vmatpush1.msra.mxu0 0.0
      %849 = vmatprep.subr.mxu0 0.0
      %850 = vmatpush1.msra.mxu0 0.0
      %851 = vmatprep.subr.mxu0 0.0
      %852 = vmatpush1.msra.mxu0 0.0
      %853 = vmatprep.subr.mxu0 0.0
      %854 = vmatpush1.msra.mxu0 0.0
      %855 = vmatprep.subr.mxu0 0.0
      %856 = vmatpush1.msra.mxu0 0.0
      %857 = vmatprep.subr.mxu0 0.0
      %858 = vmatpush1.msra.mxu0 0.0
      %859 = vmatprep.subr.mxu0 0.0
      %860 = vmatpush1.msra.mxu0 0.0
      %861 = vmatprep.subr.mxu0 0.0
      %862 = vmatpush1.msra.mxu0 0.0
      %863 = vmatprep.subr.mxu0 0.0
      %864 = vmatpush1.msra.mxu0 0.0
      %865 = vmatprep.subr.mxu0 0.0
      %866 = vmatpush1.msra.mxu0 0.0
      %867 = vmatprep.subr.mxu0 0.0
      %868 = vmatpush1.msra.mxu0 0.0
      %869 = vmatprep.subr.mxu0 0.0
      %870 = vmatpush1.msra.mxu0 0.0
      %871 = vmatprep.subr.mxu0 0.0
      %872 = vmatpush1.msra.mxu0 0.0
      %873 = vmatprep.subr.mxu0 0.0
      %874 = vmatpush1.msra.mxu0 0.0
      %875 = vmatprep.subr.mxu0 0.0
      %876 = vmatpush1.msra.mxu0 0.0
      %877 = vmatprep.subr.mxu0 0.0
      %878 = vmatpush1.msra.mxu0 0.0
      %879 = vmatprep.subr.mxu0 0.0
      %880 = vmatpush1.msra.mxu0 0.0
      %881 = vmatprep.subr.mxu0 0.0
      %882 = vmatpush1.msra.mxu0 0.0
      %883 = vmatprep.subr.mxu0 0.0
      %884 = vmatpush1.msra.mxu0 0.0
      %885 = vmatprep.subr.mxu0 0.0
      %886 = vmatpush1.msra.mxu0 0.0
      %887 = vmatprep.subr.mxu0 0.0
      %888 = vmatpush1.msra.mxu0 0.0
      %889 = vmatprep.subr.mxu0 0.0
      %890 = vmatpush1.msra.mxu0 0.0
      %891 = vmatprep.subr.mxu0 0.0
      %892 = vmatpush1.msra.mxu0 0.0
      %893 = vmatprep.subr.mxu0 0.0
      %894 = vmatpush1.msra.mxu0 0.0
      %895 = vmatprep.subr.mxu0 0.0
      %896 = vmatpush1.msra.mxu0 0.0
      %897 = vmatprep.subr.mxu0 0.0
      %898 = vmatpush1.msra.mxu0 0.0
      %899 = vmatprep.subr.mxu0 0.0
      %900 = vmatpush1.msra.mxu0 0.0
      %901 = vmatprep.mubr.f32.mxu0 0.0
      %902 = vmatmul.mubr.f32.gmra.mrb[0].mxu0 %v835
      %v903 = vpop.f32.mrb[0].mxu0
      %v904 = vadd.f32 0.0, %v903
      %v905 = vpop.f32.mrb[0].mxu0
      %906 = vdwg.mxu0
      %v908 = vsel %vm579, %v904, 0
      %910 = vmatprep.subr.mxu0 0.0
      %911 = vmatpush1.msra.mxu0 %v485
      %912 = vmatprep.subr.mxu0 0.0
      %913 = vmatpush1.msra.mxu0 0.0
      %914 = vmatprep.subr.mxu0 0.0
      %915 = vmatpush1.msra.mxu0 0.0
      %916 = vmatprep.subr.mxu0 0.0
      %917 = vmatpush1.msra.mxu0 0.0
      %918 = vmatprep.subr.mxu0 0.0
      %919 = vmatpush1.msra.mxu0 0.0
      %920 = vmatprep.subr.mxu0 0.0
      %921 = vmatpush1.msra.mxu0 0.0
      %922 = vmatprep.subr.mxu0 0.0
      %923 = vmatpush1.msra.mxu0 0.0
      %924 = vmatprep.subr.mxu0 0.0
      %925 = vmatpush1.msra.mxu0 0.0
      %926 = vmatprep.subr.mxu0 0.0
      %927 = vmatpush1.msra.mxu0 0.0
      %928 = vmatprep.subr.mxu0 0.0
      %929 = vmatpush1.msra.mxu0 0.0
      %930 = vmatprep.subr.mxu0 0.0
      %931 = vmatpush1.msra.mxu0 0.0
      %932 = vmatprep.subr.mxu0 0.0
      %933 = vmatpush1.msra.mxu0 0.0
      %934 = vmatprep.subr.mxu0 0.0
      %935 = vmatpush1.msra.mxu0 0.0
      %936 = vmatprep.subr.mxu0 0.0
      %937 = vmatpush1.msra.mxu0 0.0
      %938 = vmatprep.subr.mxu0 0.0
      %939 = vmatpush1.msra.mxu0 0.0
      %940 = vmatprep.subr.mxu0 0.0
      %941 = vmatpush1.msra.mxu0 0.0
      %942 = vmatprep.subr.mxu0 0.0
      %943 = vmatpush1.msra.mxu0 0.0
      %944 = vmatprep.subr.mxu0 0.0
      %945 = vmatpush1.msra.mxu0 0.0
      %946 = vmatprep.subr.mxu0 0.0
      %947 = vmatpush1.msra.mxu0 0.0
      %948 = vmatprep.subr.mxu0 0.0
      %949 = vmatpush1.msra.mxu0 0.0
      %950 = vmatprep.subr.mxu0 0.0
      %951 = vmatpush1.msra.mxu0 0.0
      %952 = vmatprep.subr.mxu0 0.0
      %953 = vmatpush1.msra.mxu0 0.0
      %954 = vmatprep.subr.mxu0 0.0
      %955 = vmatpush1.msra.mxu0 0.0
      %956 = vmatprep.subr.mxu0 0.0
      %957 = vmatpush1.msra.mxu0 0.0
      %958 = vmatprep.subr.mxu0 0.0
      %959 = vmatpush1.msra.mxu0 0.0
      %960 = vmatprep.subr.mxu0 0.0
      %961 = vmatpush1.msra.mxu0 0.0
      %962 = vmatprep.subr.mxu0 0.0
      %963 = vmatpush1.msra.mxu0 0.0
      %964 = vmatprep.subr.mxu0 0.0
      %965 = vmatpush1.msra.mxu0 0.0
      %966 = vmatprep.subr.mxu0 0.0
      %967 = vmatpush1.msra.mxu0 0.0
      %968 = vmatprep.subr.mxu0 0.0
      %969 = vmatpush1.msra.mxu0 0.0
      %970 = vmatprep.subr.mxu0 0.0
      %971 = vmatpush1.msra.mxu0 0.0
      %972 = vmatprep.subr.mxu0 0.0
      %973 = vmatpush1.msra.mxu0 0.0
      %974 = vmatprep.mubr.f32.mxu0 0.0
      %975 = vmatmul.mubr.f32.gmra.mrb[0].mxu0 %v908
      %v976 = vpop.f32.mrb[0].mxu0
      %v977 = vadd.f32 0.0, %v976
      %v978 = vpop.f32.mrb[0].mxu0
      %979 = vdwg.mxu0
      %v981 = vsel %vm579, %v739, 0
      %983 = vmatprep.subr.mxu0 0.0
      %984 = vmatpush1.msra.mxu0 %v484
      %985 = vmatprep.subr.mxu0 0.0
      %986 = vmatpush1.msra.mxu0 0.0
      %987 = vmatprep.subr.mxu0 0.0
      %988 = vmatpush1.msra.mxu0 0.0
      %989 = vmatprep.subr.mxu0 0.0
      %990 = vmatpush1.msra.mxu0 0.0
      %991 = vmatprep.subr.mxu0 0.0
      %992 = vmatpush1.msra.mxu0 0.0
      %993 = vmatprep.subr.mxu0 0.0
      %994 = vmatpush1.msra.mxu0 0.0
      %995 = vmatprep.subr.mxu0 0.0
      %996 = vmatpush1.msra.mxu0 0.0
      %997 = vmatprep.subr.mxu0 0.0
      %998 = vmatpush1.msra.mxu0 0.0
      %999 = vmatprep.subr.mxu0 0.0
      %1000 = vmatpush1.msra.mxu0 0.0
      %1001 = vmatprep.subr.mxu0 0.0
      %1002 = vmatpush1.msra.mxu0 0.0
      %1003 = vmatprep.subr.mxu0 0.0
      %1004 = vmatpush1.msra.mxu0 0.0
      %1005 = vmatprep.subr.mxu0 0.0
      %1006 = vmatpush1.msra.mxu0 0.0
      %1007 = vmatprep.subr.mxu0 0.0
      %1008 = vmatpush1.msra.mxu0 0.0
      %1009 = vmatprep.subr.mxu0 0.0
      %1010 = vmatpush1.msra.mxu0 0.0
      %1011 = vmatprep.subr.mxu0 0.0
      %1012 = vmatpush1.msra.mxu0 0.0
      %1013 = vmatprep.subr.mxu0 0.0
      %1014 = vmatpush1.msra.mxu0 0.0
      %1015 = vmatprep.subr.mxu0 0.0
      %1016 = vmatpush1.msra.mxu0 0.0
      %1017 = vmatprep.subr.mxu0 0.0
      %1018 = vmatpush1.msra.mxu0 0.0
      %1019 = vmatprep.subr.mxu0 0.0
      %1020 = vmatpush1.msra.mxu0 0.0
      %1021 = vmatprep.subr.mxu0 0.0
      %1022 = vmatpush1.msra.mxu0 0.0
      %1023 = vmatprep.subr.mxu0 0.0
      %1024 = vmatpush1.msra.mxu0 0.0
      %1025 = vmatprep.subr.mxu0 0.0
      %1026 = vmatpush1.msra.mxu0 0.0
      %1027 = vmatprep.subr.mxu0 0.0
      %1028 = vmatpush1.msra.mxu0 0.0
      %1029 = vmatprep.subr.mxu0 0.0
      %1030 = vmatpush1.msra.mxu0 0.0
      %1031 = vmatprep.subr.mxu0 0.0
      %1032 = vmatpush1.msra.mxu0 0.0
      %1033 = vmatprep.subr.mxu0 0.0
      %1034 = vmatpush1.msra.mxu0 0.0
      %1035 = vmatprep.subr.mxu0 0.0
      %1036 = vmatpush1.msra.mxu0 0.0
      %1037 = vmatprep.subr.mxu0 0.0
      %1038 = vmatpush1.msra.mxu0 0.0
      %1039 = vmatprep.subr.mxu0 0.0
      %1040 = vmatpush1.msra.mxu0 0.0
      %1041 = vmatprep.subr.mxu0 0.0
      %1042 = vmatpush1.msra.mxu0 0.0
      %1043 = vmatprep.subr.mxu0 0.0
      %1044 = vmatpush1.msra.mxu0 0.0
      %1045 = vmatprep.subr.mxu0 0.0
      %1046 = vmatpush1.msra.mxu0 0.0
      %1047 = vmatprep.mubr.f32.mxu0 0.0
      %1048 = vmatmul.mubr.f32.gmra.mrb[0].mxu0 %v981
      %v1049 = vpop.f32.mrb[0].mxu0
      %v1050 = vadd.f32 %v977, %v1049
      %v1051 = vpop.f32.mrb[0].mxu0
      %1052 = vdwg.mxu0
      %1053 = vrot.lane.b32.xlu0 %v569, 112
      %v1054 = vpop.permute.xlu0 %1053
      %1055 = vrot.lane.b32.xlu0 %v566, 80
      %v1056 = vpop.permute.xlu0 %1055
      %v1057 = vsel %vm579, %v1054, 0
      %v1059 = vsel %vm579, %v1056, 0
      %1061 = vmatprep.subr.mxu0 0.0
      %1062 = vmatpush1.xpose.msra.mxu0 %v1059
      %1063 = vmatprep.subr.mxu0 0.0
      %1064 = vmatpush1.xpose.msra.mxu0 0.0
      %1065 = vmatprep.subr.mxu0 0.0
      %1066 = vmatpush1.xpose.msra.mxu0 0.0
      %1067 = vmatprep.subr.mxu0 0.0
      %1068 = vmatpush1.xpose.msra.mxu0 0.0
      %1069 = vmatprep.subr.mxu0 0.0
      %1070 = vmatpush1.xpose.msra.mxu0 0.0
      %1071 = vmatprep.subr.mxu0 0.0
      %1072 = vmatpush1.xpose.msra.mxu0 0.0
      %1073 = vmatprep.subr.mxu0 0.0
      %1074 = vmatpush1.xpose.msra.mxu0 0.0
      %1075 = vmatprep.subr.mxu0 0.0
      %1076 = vmatpush1.xpose.msra.mxu0 0.0
      %1077 = vmatprep.subr.mxu0 0.0
      %1078 = vmatpush1.xpose.msra.mxu0 0.0
      %1079 = vmatprep.subr.mxu0 0.0
      %1080 = vmatpush1.xpose.msra.mxu0 0.0
      %1081 = vmatprep.subr.mxu0 0.0
      %1082 = vmatpush1.xpose.msra.mxu0 0.0
      %1083 = vmatprep.subr.mxu0 0.0
      %1084 = vmatpush1.xpose.msra.mxu0 0.0
      %1085 = vmatprep.subr.mxu0 0.0
      %1086 = vmatpush1.xpose.msra.mxu0 0.0
      %1087 = vmatprep.subr.mxu0 0.0
      %1088 = vmatpush1.xpose.msra.mxu0 0.0
      %1089 = vmatprep.subr.mxu0 0.0
      %1090 = vmatpush1.xpose.msra.mxu0 0.0
      %1091 = vmatprep.subr.mxu0 0.0
      %1092 = vmatpush1.xpose.msra.mxu0 0.0
      %1093 = vmatprep.subr.mxu0 0.0
      %1094 = vmatpush1.xpose.msra.mxu0 0.0
      %1095 = vmatprep.subr.mxu0 0.0
      %1096 = vmatpush1.xpose.msra.mxu0 0.0
      %1097 = vmatprep.subr.mxu0 0.0
      %1098 = vmatpush1.xpose.msra.mxu0 0.0
      %1099 = vmatprep.subr.mxu0 0.0
      %1100 = vmatpush1.xpose.msra.mxu0 0.0
      %1101 = vmatprep.subr.mxu0 0.0
      %1102 = vmatpush1.xpose.msra.mxu0 0.0
      %1103 = vmatprep.subr.mxu0 0.0
      %1104 = vmatpush1.xpose.msra.mxu0 0.0
      %1105 = vmatprep.subr.mxu0 0.0
      %1106 = vmatpush1.xpose.msra.mxu0 0.0
      %1107 = vmatprep.subr.mxu0 0.0
      %1108 = vmatpush1.xpose.msra.mxu0 0.0
      %1109 = vmatprep.subr.mxu0 0.0
      %1110 = vmatpush1.xpose.msra.mxu0 0.0
      %1111 = vmatprep.subr.mxu0 0.0
      %1112 = vmatpush1.xpose.msra.mxu0 0.0
      %1113 = vmatprep.subr.mxu0 0.0
      %1114 = vmatpush1.xpose.msra.mxu0 0.0
      %1115 = vmatprep.subr.mxu0 0.0
      %1116 = vmatpush1.xpose.msra.mxu0 0.0
      %1117 = vmatprep.subr.mxu0 0.0
      %1118 = vmatpush1.xpose.msra.mxu0 0.0
      %1119 = vmatprep.subr.mxu0 0.0
      %1120 = vmatpush1.xpose.msra.mxu0 0.0
      %1121 = vmatprep.subr.mxu0 0.0
      %1122 = vmatpush1.xpose.msra.mxu0 0.0
      %1123 = vmatprep.subr.mxu0 0.0
      %1124 = vmatpush1.xpose.msra.mxu0 0.0
      %1125 = vmatprep.mubr.f32.mxu0 0.0
      %1126 = vmatmul.mubr.f32.gmra.mrb[0].mxu0 %v1057
      %v1127 = vpop.f32.mrb[0].mxu0
      %v1128 = vadd.f32 %v574, %v1127
      %v1129 = vpop.f32.mrb[0].mxu0
      %1130 = vdwg.mxu0
      %v1131 = vsel %vm579, %v1128, -inf
      %1132 = vmax.xlane.f32.xlu0 %v1131
      %v1133 = vpop.xlane.xlu0 %1132
      %v1134 = vsub.f32 %v1128, %v1133
      %v1135 = vmul.f32 %v1134, 1.442695
      %v1136 = vpow.pop %v1135
      %v1137 = vsel %vm579, %v1136, 0.0
      %1138 = vadd.xlane.f32.xlu0 %v1137
      %v1139 = vpop.xlane.xlu0 %1138
      %v1140 = vrcp.pop %v1139
      %v1141 = vmul.f32 %v1136, %v1140
      %1142 = vrot.lane.b32.xlu0 %v566, 48
      %v1143 = vpop.permute.xlu0 %1142
      %v1146 = vsel %vm579, %v1141, 0
      %1148 = vmatprep.subr.mxu0 0.0
      %1149 = vmatpush1.msra.mxu0 %v1143
      %1150 = vmatprep.subr.mxu0 0.0
      %1151 = vmatpush1.msra.mxu0 0.0
      %1152 = vmatprep.subr.mxu0 0.0
      %1153 = vmatpush1.msra.mxu0 0.0
      %1154 = vmatprep.subr.mxu0 0.0
      %1155 = vmatpush1.msra.mxu0 0.0
      %1156 = vmatprep.subr.mxu0 0.0
      %1157 = vmatpush1.msra.mxu0 0.0
      %1158 = vmatprep.subr.mxu0 0.0
      %1159 = vmatpush1.msra.mxu0 0.0
      %1160 = vmatprep.subr.mxu0 0.0
      %1161 = vmatpush1.msra.mxu0 0.0
      %1162 = vmatprep.subr.mxu0 0.0
      %1163 = vmatpush1.msra.mxu0 0.0
      %1164 = vmatprep.subr.mxu0 0.0
      %1165 = vmatpush1.msra.mxu0 0.0
      %1166 = vmatprep.subr.mxu0 0.0
      %1167 = vmatpush1.msra.mxu0 0.0
      %1168 = vmatprep.subr.mxu0 0.0
      %1169 = vmatpush1.msra.mxu0 0.0
      %1170 = vmatprep.subr.mxu0 0.0
      %1171 = vmatpush1.msra.mxu0 0.0
      %1172 = vmatprep.subr.mxu0 0.0
      %1173 = vmatpush1.msra.mxu0 0.0
      %1174 = vmatprep.subr.mxu0 0.0
      %1175 = vmatpush1.msra.mxu0 0.0
      %1176 = vmatprep.subr.mxu0 0.0
      %1177 = vmatpush1.msra.mxu0 0.0
      %1178 = vmatprep.subr.mxu0 0.0
      %1179 = vmatpush1.msra.mxu0 0.0
      %1180 = vmatprep.subr.mxu0 0.0
      %1181 = vmatpush1.msra.mxu0 0.0
      %1182 = vmatprep.subr.mxu0 0.0
      %1183 = vmatpush1.msra.mxu0 0.0
      %1184 = vmatprep.subr.mxu0 0.0
      %1185 = vmatpush1.msra.mxu0 0.0
      %1186 = vmatprep.subr.mxu0 0.0
      %1187 = vmatpush1.msra.mxu0 0.0
      %1188 = vmatprep.subr.mxu0 0.0
      %1189 = vmatpush1.msra.mxu0 0.0
      %1190 = vmatprep.subr.mxu0 0.0
      %1191 = vmatpush1.msra.mxu0 0.0
      %1192 = vmatprep.subr.mxu0 0.0
      %1193 = vmatpush1.msra.mxu0 0.0
      %1194 = vmatprep.subr.mxu0 0.0
      %1195 = vmatpush1.msra.mxu0 0.0
      %1196 = vmatprep.subr.mxu0 0.0
      %1197 = vmatpush1.msra.mxu0 0.0
      %1198 = vmatprep.subr.mxu0 0.0
      %1199 = vmatpush1.msra.mxu0 0.0
      %1200 = vmatprep.subr.mxu0 0.0
      %1201 = vmatpush1.msra.mxu0 0.0
      %1202 = vmatprep.subr.mxu0 0.0
      %1203 = vmatpush1.msra.mxu0 0.0
      %1204 = vmatprep.subr.mxu0 0.0
      %1205 = vmatpush1.msra.mxu0 0.0
      %1206 = vmatprep.subr.mxu0 0.0
      %1207 = vmatpush1.msra.mxu0 0.0
      %1208 = vmatprep.subr.mxu0 0.0
      %1209 = vmatpush1.msra.mxu0 0.0
      %1210 = vmatprep.subr.mxu0 0.0
      %1211 = vmatpush1.msra.mxu0 0.0
      %1212 = vmatprep.mubr.f32.mxu0 0.0
      %1213 = vmatmul.mubr.f32.gmra.mrb[0].mxu0 %v1146
      %v1214 = vpop.f32.mrb[0].mxu0
      %v1215 = vadd.f32 0.0, %v1214
      %v1216 = vpop.f32.mrb[0].mxu0
      %1217 = vdwg.mxu0
      %v1219 = vsel %vm579, %v1215, 0
      %1221 = vmatprep.subr.mxu0 0.0
      %1222 = vmatpush1.msra.mxu0 %v486
      %1223 = vmatprep.subr.mxu0 0.0
      %1224 = vmatpush1.msra.mxu0 0.0
      %1225 = vmatprep.subr.mxu0 0.0
      %1226 = vmatpush1.msra.mxu0 0.0
      %1227 = vmatprep.subr.mxu0 0.0
      %1228 = vmatpush1.msra.mxu0 0.0
      %1229 = vmatprep.subr.mxu0 0.0
      %1230 = vmatpush1.msra.mxu0 0.0
      %1231 = vmatprep.subr.mxu0 0.0
      %1232 = vmatpush1.msra.mxu0 0.0
      %1233 = vmatprep.subr.mxu0 0.0
      %1234 = vmatpush1.msra.mxu0 0.0
      %1235 = vmatprep.subr.mxu0 0.0
      %1236 = vmatpush1.msra.mxu0 0.0
      %1237 = vmatprep.subr.mxu0 0.0
      %1238 = vmatpush1.msra.mxu0 0.0
      %1239 = vmatprep.subr.mxu0 0.0
      %1240 = vmatpush1.msra.mxu0 0.0
      %1241 = vmatprep.subr.mxu0 0.0
      %1242 = vmatpush1.msra.mxu0 0.0
      %1243 = vmatprep.subr.mxu0 0.0
      %1244 = vmatpush1.msra.mxu0 0.0
      %1245 = vmatprep.subr.mxu0 0.0
      %1246 = vmatpush1.msra.mxu0 0.0
      %1247 = vmatprep.subr.mxu0 0.0
      %1248 = vmatpush1.msra.mxu0 0.0
      %1249 = vmatprep.subr.mxu0 0.0
      %1250 = vmatpush1.msra.mxu0 0.0
      %1251 = vmatprep.subr.mxu0 0.0
      %1252 = vmatpush1.msra.mxu0 0.0
      %1253 = vmatprep.subr.mxu0 0.0
      %1254 = vmatpush1.msra.mxu0 0.0
      %1255 = vmatprep.subr.mxu0 0.0
      %1256 = vmatpush1.msra.mxu0 0.0
      %1257 = vmatprep.subr.mxu0 0.0
      %1258 = vmatpush1.msra.mxu0 0.0
      %1259 = vmatprep.subr.mxu0 0.0
      %1260 = vmatpush1.msra.mxu0 0.0
      %1261 = vmatprep.subr.mxu0 0.0
      %1262 = vmatpush1.msra.mxu0 0.0
      %1263 = vmatprep.subr.mxu0 0.0
      %1264 = vmatpush1.msra.mxu0 0.0
      %1265 = vmatprep.subr.mxu0 0.0
      %1266 = vmatpush1.msra.mxu0 0.0
      %1267 = vmatprep.subr.mxu0 0.0
      %1268 = vmatpush1.msra.mxu0 0.0
      %1269 = vmatprep.subr.mxu0 0.0
      %1270 = vmatpush1.msra.mxu0 0.0
      %1271 = vmatprep.subr.mxu0 0.0
      %1272 = vmatpush1.msra.mxu0 0.0
      %1273 = vmatprep.subr.mxu0 0.0
      %1274 = vmatpush1.msra.mxu0 0.0
      %1275 = vmatprep.subr.mxu0 0.0
      %1276 = vmatpush1.msra.mxu0 0.0
      %1277 = vmatprep.subr.mxu0 0.0
      %1278 = vmatpush1.msra.mxu0 0.0
      %1279 = vmatprep.subr.mxu0 0.0
      %1280 = vmatpush1.msra.mxu0 0.0
      %1281 = vmatprep.subr.mxu0 0.0
      %1282 = vmatpush1.msra.mxu0 0.0
      %1283 = vmatprep.subr.mxu0 0.0
      %1284 = vmatpush1.msra.mxu0 0.0
      %1285 = vmatprep.mubr.f32.mxu0 0.0
      %1286 = vmatmul.mubr.f32.gmra.mrb[0].mxu0 %v1219
      %v1287 = vpop.f32.mrb[0].mxu0
      %v1288 = vadd.f32 0.0, %v1287
      %v1289 = vpop.f32.mrb[0].mxu0
      %1290 = vdwg.mxu0
      %v1291 = vadd.f32 %v1050, %v1288
      %1292 = vrot.lane.b32.xlu0 %v569, 104
      %v1293 = vpop.permute.xlu0 %1292
      %1294 = vrot.lane.b32.xlu0 %v566, 72
      %v1295 = vpop.permute.xlu0 %1294
      %v1296 = vsel %vm579, %v1293, 0
      %v1298 = vsel %vm579, %v1295, 0
      %1300 = vmatprep.subr.mxu0 0.0
      %1301 = vmatpush1.xpose.msra.mxu0 %v1298
      %1302 = vmatprep.subr.mxu0 0.0
      %1303 = vmatpush1.xpose.msra.mxu0 0.0
      %1304 = vmatprep.subr.mxu0 0.0
      %1305 = vmatpush1.xpose.msra.mxu0 0.0
      %1306 = vmatprep.subr.mxu0 0.0
      %1307 = vmatpush1.xpose.msra.mxu0 0.0
      %1308 = vmatprep.subr.mxu0 0.0
      %1309 = vmatpush1.xpose.msra.mxu0 0.0
      %1310 = vmatprep.subr.mxu0 0.0
      %1311 = vmatpush1.xpose.msra.mxu0 0.0
      %1312 = vmatprep.subr.mxu0 0.0
      %1313 = vmatpush1.xpose.msra.mxu0 0.0
      %1314 = vmatprep.subr.mxu0 0.0
      %1315 = vmatpush1.xpose.msra.mxu0 0.0
      %1316 = vmatprep.subr.mxu0 0.0
      %1317 = vmatpush1.xpose.msra.mxu0 0.0
      %1318 = vmatprep.subr.mxu0 0.0
      %1319 = vmatpush1.xpose.msra.mxu0 0.0
      %1320 = vmatprep.subr.mxu0 0.0
      %1321 = vmatpush1.xpose.msra.mxu0 0.0
      %1322 = vmatprep.subr.mxu0 0.0
      %1323 = vmatpush1.xpose.msra.mxu0 0.0
      %1324 = vmatprep.subr.mxu0 0.0
      %1325 = vmatpush1.xpose.msra.mxu0 0.0
      %1326 = vmatprep.subr.mxu0 0.0
      %1327 = vmatpush1.xpose.msra.mxu0 0.0
      %1328 = vmatprep.subr.mxu0 0.0
      %1329 = vmatpush1.xpose.msra.mxu0 0.0
      %1330 = vmatprep.subr.mxu0 0.0
      %1331 = vmatpush1.xpose.msra.mxu0 0.0
      %1332 = vmatprep.subr.mxu0 0.0
      %1333 = vmatpush1.xpose.msra.mxu0 0.0
      %1334 = vmatprep.subr.mxu0 0.0
      %1335 = vmatpush1.xpose.msra.mxu0 0.0
      %1336 = vmatprep.subr.mxu0 0.0
      %1337 = vmatpush1.xpose.msra.mxu0 0.0
      %1338 = vmatprep.subr.mxu0 0.0
      %1339 = vmatpush1.xpose.msra.mxu0 0.0
      %1340 = vmatprep.subr.mxu0 0.0
      %1341 = vmatpush1.xpose.msra.mxu0 0.0
      %1342 = vmatprep.subr.mxu0 0.0
      %1343 = vmatpush1.xpose.msra.mxu0 0.0
      %1344 = vmatprep.subr.mxu0 0.0
      %1345 = vmatpush1.xpose.msra.mxu0 0.0
      %1346 = vmatprep.subr.mxu0 0.0
      %1347 = vmatpush1.xpose.msra.mxu0 0.0
      %1348 = vmatprep.subr.mxu0 0.0
      %1349 = vmatpush1.xpose.msra.mxu0 0.0
      %1350 = vmatprep.subr.mxu0 0.0
      %1351 = vmatpush1.xpose.msra.mxu0 0.0
      %1352 = vmatprep.subr.mxu0 0.0
      %1353 = vmatpush1.xpose.msra.mxu0 0.0
      %1354 = vmatprep.subr.mxu0 0.0
      %1355 = vmatpush1.xpose.msra.mxu0 0.0
      %1356 = vmatprep.subr.mxu0 0.0
      %1357 = vmatpush1.xpose.msra.mxu0 0.0
      %1358 = vmatprep.subr.mxu0 0.0
      %1359 = vmatpush1.xpose.msra.mxu0 0.0
      %1360 = vmatprep.subr.mxu0 0.0
      %1361 = vmatpush1.xpose.msra.mxu0 0.0
      %1362 = vmatprep.subr.mxu0 0.0
      %1363 = vmatpush1.xpose.msra.mxu0 0.0
      %1364 = vmatprep.mubr.f32.mxu0 0.0
      %1365 = vmatmul.mubr.f32.gmra.mrb[0].mxu0 %v1296
      %v1366 = vpop.f32.mrb[0].mxu0
      %v1367 = vadd.f32 %v574, %v1366
      %v1368 = vpop.f32.mrb[0].mxu0
      %1369 = vdwg.mxu0
      %v1370 = vsel %vm579, %v1367, -inf
      %1371 = vmax.xlane.f32.xlu0 %v1370
      %v1372 = vpop.xlane.xlu0 %1371
      %v1373 = vsub.f32 %v1367, %v1372
      %v1374 = vmul.f32 %v1373, 1.442695
      %v1375 = vpow.pop %v1374
      %v1376 = vsel %vm579, %v1375, 0.0
      %1377 = vadd.xlane.f32.xlu0 %v1376
      %v1378 = vpop.xlane.xlu0 %1377
      %v1379 = vrcp.pop %v1378
      %v1380 = vmul.f32 %v1375, %v1379
      %1381 = vrot.lane.b32.xlu0 %v566, 40
      %v1382 = vpop.permute.xlu0 %1381
      %v1385 = vsel %vm579, %v1380, 0
      %1387 = vmatprep.subr.mxu0 0.0
      %1388 = vmatpush1.msra.mxu0 %v1382
      %1389 = vmatprep.subr.mxu0 0.0
      %1390 = vmatpush1.msra.mxu0 0.0
      %1391 = vmatprep.subr.mxu0 0.0
      %1392 = vmatpush1.msra.mxu0 0.0
      %1393 = vmatprep.subr.mxu0 0.0
      %1394 = vmatpush1.msra.mxu0 0.0
      %1395 = vmatprep.subr.mxu0 0.0
      %1396 = vmatpush1.msra.mxu0 0.0
      %1397 = vmatprep.subr.mxu0 0.0
      %1398 = vmatpush1.msra.mxu0 0.0
      %1399 = vmatprep.subr.mxu0 0.0
      %1400 = vmatpush1.msra.mxu0 0.0
      %1401 = vmatprep.subr.mxu0 0.0
      %1402 = vmatpush1.msra.mxu0 0.0
      %1403 = vmatprep.subr.mxu0 0.0
      %1404 = vmatpush1.msra.mxu0 0.0
      %1405 = vmatprep.subr.mxu0 0.0
      %1406 = vmatpush1.msra.mxu0 0.0
      %1407 = vmatprep.subr.mxu0 0.0
      %1408 = vmatpush1.msra.mxu0 0.0
      %1409 = vmatprep.subr.mxu0 0.0
      %1410 = vmatpush1.msra.mxu0 0.0
      %1411 = vmatprep.subr.mxu0 0.0
      %1412 = vmatpush1.msra.mxu0 0.0
      %1413 = vmatprep.subr.mxu0 0.0
      %1414 = vmatpush1.msra.mxu0 0.0
      %1415 = vmatprep.subr.mxu0 0.0
      %1416 = vmatpush1.msra.mxu0 0.0
      %1417 = vmatprep.subr.mxu0 0.0
      %1418 = vmatpush1.msra.mxu0 0.0
      %1419 = vmatprep.subr.mxu0 0.0
      %1420 = vmatpush1.msra.mxu0 0.0
      %1421 = vmatprep.subr.mxu0 0.0
      %1422 = vmatpush1.msra.mxu0 0.0
      %1423 = vmatprep.subr.mxu0 0.0
      %1424 = vmatpush1.msra.mxu0 0.0
      %1425 = vmatprep.subr.mxu0 0.0
      %1426 = vmatpush1.msra.mxu0 0.0
      %1427 = vmatprep.subr.mxu0 0.0
      %1428 = vmatpush1.msra.mxu0 0.0
      %1429 = vmatprep.subr.mxu0 0.0
      %1430 = vmatpush1.msra.mxu0 0.0
      %1431 = vmatprep.subr.mxu0 0.0
      %1432 = vmatpush1.msra.mxu0 0.0
      %1433 = vmatprep.subr.mxu0 0.0
      %1434 = vmatpush1.msra.mxu0 0.0
      %1435 = vmatprep.subr.mxu0 0.0
      %1436 = vmatpush1.msra.mxu0 0.0
      %1437 = vmatprep.subr.mxu0 0.0
      %1438 = vmatpush1.msra.mxu0 0.0
      %1439 = vmatprep.subr.mxu0 0.0
      %1440 = vmatpush1.msra.mxu0 0.0
      %1441 = vmatprep.subr.mxu0 0.0
      %1442 = vmatpush1.msra.mxu0 0.0
      %1443 = vmatprep.subr.mxu0 0.0
      %1444 = vmatpush1.msra.mxu0 0.0
      %1445 = vmatprep.subr.mxu0 0.0
      %1446 = vmatpush1.msra.mxu0 0.0
      %1447 = vmatprep.subr.mxu0 0.0
      %1448 = vmatpush1.msra.mxu0 0.0
      %1449 = vmatprep.subr.mxu0 0.0
      %1450 = vmatpush1.msra.mxu0 0.0
      %1451 = vmatprep.mubr.f32.mxu0 0.0
      %1452 = vmatmul.mubr.f32.gmra.mrb[0].mxu0 %v1385
      %v1453 = vpop.f32.mrb[0].mxu0
      %v1454 = vadd.f32 0.0, %v1453
      %v1455 = vpop.f32.mrb[0].mxu0
      %1456 = vdwg.mxu0
      %v1458 = vsel %vm579, %v1454, 0
      %1460 = vmatprep.subr.mxu0 0.0
      %1461 = vmatpush1.msra.mxu0 %v487
      %1462 = vmatprep.subr.mxu0 0.0
      %1463 = vmatpush1.msra.mxu0 0.0
      %1464 = vmatprep.subr.mxu0 0.0
      %1465 = vmatpush1.msra.mxu0 0.0
      %1466 = vmatprep.subr.mxu0 0.0
      %1467 = vmatpush1.msra.mxu0 0.0
      %1468 = vmatprep.subr.mxu0 0.0
      %1469 = vmatpush1.msra.mxu0 0.0
      %1470 = vmatprep.subr.mxu0 0.0
      %1471 = vmatpush1.msra.mxu0 0.0
      %1472 = vmatprep.subr.mxu0 0.0
      %1473 = vmatpush1.msra.mxu0 0.0
      %1474 = vmatprep.subr.mxu0 0.0
      %1475 = vmatpush1.msra.mxu0 0.0
      %1476 = vmatprep.subr.mxu0 0.0
      %1477 = vmatpush1.msra.mxu0 0.0
      %1478 = vmatprep.subr.mxu0 0.0
      %1479 = vmatpush1.msra.mxu0 0.0
      %1480 = vmatprep.subr.mxu0 0.0
      %1481 = vmatpush1.msra.mxu0 0.0
      %1482 = vmatprep.subr.mxu0 0.0
      %1483 = vmatpush1.msra.mxu0 0.0
      %1484 = vmatprep.subr.mxu0 0.0
      %1485 = vmatpush1.msra.mxu0 0.0
      %1486 = vmatprep.subr.mxu0 0.0
      %1487 = vmatpush1.msra.mxu0 0.0
      %1488 = vmatprep.subr.mxu0 0.0
      %1489 = vmatpush1.msra.mxu0 0.0
      %1490 = vmatprep.subr.mxu0 0.0
      %1491 = vmatpush1.msra.mxu0 0.0
      %1492 = vmatprep.subr.mxu0 0.0
      %1493 = vmatpush1.msra.mxu0 0.0
      %1494 = vmatprep.subr.mxu0 0.0
      %1495 = vmatpush1.msra.mxu0 0.0
      %1496 = vmatprep.subr.mxu0 0.0
      %1497 = vmatpush1.msra.mxu0 0.0
      %1498 = vmatprep.subr.mxu0 0.0
      %1499 = vmatpush1.msra.mxu0 0.0
      %1500 = vmatprep.subr.mxu0 0.0
      %1501 = vmatpush1.msra.mxu0 0.0
      %1502 = vmatprep.subr.mxu0 0.0
      %1503 = vmatpush1.msra.mxu0 0.0
      %1504 = vmatprep.subr.mxu0 0.0
      %1505 = vmatpush1.msra.mxu0 0.0
      %1506 = vmatprep.subr.mxu0 0.0
      %1507 = vmatpush1.msra.mxu0 0.0
      %1508 = vmatprep.subr.mxu0 0.0
      %1509 = vmatpush1.msra.mxu0 0.0
      %1510 = vmatprep.subr.mxu0 0.0
      %1511 = vmatpush1.msra.mxu0 0.0
      %1512 = vmatprep.subr.mxu0 0.0
      %1513 = vmatpush1.msra.mxu0 0.0
      %1514 = vmatprep.subr.mxu0 0.0
      %1515 = vmatpush1.msra.mxu0 0.0
      %1516 = vmatprep.subr.mxu0 0.0
      %1517 = vmatpush1.msra.mxu0 0.0
      %1518 = vmatprep.subr.mxu0 0.0
      %1519 = vmatpush1.msra.mxu0 0.0
      %1520 = vmatprep.subr.mxu0 0.0
      %1521 = vmatpush1.msra.mxu0 0.0
      %1522 = vmatprep.subr.mxu0 0.0
      %1523 = vmatpush1.msra.mxu0 0.0
      %1524 = vmatprep.mubr.f32.mxu0 0.0
      %1525 = vmatmul.mubr.f32.gmra.mrb[0].mxu0 %v1458
      %v1526 = vpop.f32.mrb[0].mxu0
      %v1527 = vadd.f32 0.0, %v1526
      %v1528 = vpop.f32.mrb[0].mxu0
      %1529 = vdwg.mxu0
      %v1530 = vadd.f32 %v1291, %v1527
      %v1532 = vlaneseq
      %v1533 = vshrl.u32 %v1532, 7
      %v1534 = vsub.s32 0, %v1533
      %v1535 = vrot.slane %v488, %v1534
      %v1537 = vadd.f32 %v1530, %v1535
      %v1538 = vld [vmem:[%s10] sm:$0x1]
      %v1539 = vld [vmem:[%s11] sm:$0x1]
      %v1540 = vadd.f32 %v477, %v1537
      %v1541 = vsel %vm495, %v1540, 0.0
      %1542 = vadd.xlane.f32.xlu0 %v1541
      %v1543 = vpop.xlane.xlu0 %1542
      %v1544 = vrcp.pop 32.0
      %v1545 = vmul.f32 %v1543, %v1544
      %v1546 = vsub.f32 %v1540, %v1545
      %v1547 = vmul.f32 %v1546, %v1546
      %v1548 = vsel %vm495, %v1547, 0.0
      %1549 = vadd.xlane.f32.xlu0 %v1548
      %v1550 = vpop.xlane.xlu0 %1549
      %v1551 = vmul.f32 %v1550, %v1544
      %v1552 = vadd.f32 %v1551, 1e-05
      %v1553 = vrsqrt.pop %v1552
      %v1554 = vmul.f32 %v1546, %v1553
      %v1556 = vlaneseq
      %v1557 = vshrl.u32 %v1556, 7
      %v1558 = vsub.s32 0, %v1557
      %v1559 = vrot.slane %v1538, %v1558
      %v1561 = vmul.f32 %v1554, %v1559
      %v1563 = vlaneseq
      %v1564 = vshrl.u32 %v1563, 7
      %v1565 = vsub.s32 0, %v1564
      %v1566 = vrot.slane %v1539, %v1565
      %v1568 = vadd.f32 %v1561, %v1566
      %v1569 = vld [vmem:[%s6] sm:$0xff]
      %v1570 = vld [vmem:[%s6 + $0x8] sm:$0xff]
      %v1571 = vld [vmem:[%s6 + $0x10] sm:$0xff]
      %v1572 = vld [vmem:[%s6 + $0x18] sm:$0xff]
      %v1573 = vld [vmem:[%s7] sm:$0x1]
      %v1575 = vlaneseq
      %v1576 = vshrl.u32 %v1575, 7
      %v1577 = vsub.s32 0, %v1576
      %v1578 = vrot.slane %v1573, %v1577
      %v1581 = vsel %vm495, %v1568, 0
      %1583 = vmatprep.subr.mxu0 0.0
      %1584 = vmatpush1.msra.mxu0 %v1569
      %1585 = vmatprep.subr.mxu0 0.0
      %1586 = vmatpush1.msra.mxu0 %v1570
      %1587 = vmatprep.subr.mxu0 0.0
      %1588 = vmatpush1.msra.mxu0 %v1571
      %1589 = vmatprep.subr.mxu0 0.0
      %1590 = vmatpush1.msra.mxu0 %v1572
      %1591 = vmatprep.subr.mxu0 0.0
      %1592 = vmatpush1.msra.mxu0 0.0
      %1593 = vmatprep.subr.mxu0 0.0
      %1594 = vmatpush1.msra.mxu0 0.0
      %1595 = vmatprep.subr.mxu0 0.0
      %1596 = vmatpush1.msra.mxu0 0.0
      %1597 = vmatprep.subr.mxu0 0.0
      %1598 = vmatpush1.msra.mxu0 0.0
      %1599 = vmatprep.subr.mxu0 0.0
      %1600 = vmatpush1.msra.mxu0 0.0
      %1601 = vmatprep.subr.mxu0 0.0
      %1602 = vmatpush1.msra.mxu0 0.0
      %1603 = vmatprep.subr.mxu0 0.0
      %1604 = vmatpush1.msra.mxu0 0.0
      %1605 = vmatprep.subr.mxu0 0.0
      %1606 = vmatpush1.msra.mxu0 0.0
      %1607 = vmatprep.subr.mxu0 0.0
      %1608 = vmatpush1.msra.mxu0 0.0
      %1609 = vmatprep.subr.mxu0 0.0
      %1610 = vmatpush1.msra.mxu0 0.0
      %1611 = vmatprep.subr.mxu0 0.0
      %1612 = vmatpush1.msra.mxu0 0.0
      %1613 = vmatprep.subr.mxu0 0.0
      %1614 = vmatpush1.msra.mxu0 0.0
      %1615 = vmatprep.subr.mxu0 0.0
      %1616 = vmatpush1.msra.mxu0 0.0
      %1617 = vmatprep.subr.mxu0 0.0
      %1618 = vmatpush1.msra.mxu0 0.0
      %1619 = vmatprep.subr.mxu0 0.0
      %1620 = vmatpush1.msra.mxu0 0.0
      %1621 = vmatprep.subr.mxu0 0.0
      %1622 = vmatpush1.msra.mxu0 0.0
      %1623 = vmatprep.subr.mxu0 0.0
      %1624 = vmatpush1.msra.mxu0 0.0
      %1625 = vmatprep.subr.mxu0 0.0
      %1626 = vmatpush1.msra.mxu0 0.0
      %1627 = vmatprep.subr.mxu0 0.0
      %1628 = vmatpush1.msra.mxu0 0.0
      %1629 = vmatprep.subr.mxu0 0.0
      %1630 = vmatpush1.msra.mxu0 0.0
      %1631 = vmatprep.subr.mxu0 0.0
      %1632 = vmatpush1.msra.mxu0 0.0
      %1633 = vmatprep.subr.mxu0 0.0
      %1634 = vmatpush1.msra.mxu0 0.0
      %1635 = vmatprep.subr.mxu0 0.0
      %1636 = vmatpush1.msra.mxu0 0.0
      %1637 = vmatprep.subr.mxu0 0.0
      %1638 = vmatpush1.msra.mxu0 0.0
      %1639 = vmatprep.subr.mxu0 0.0
      %1640 = vmatpush1.msra.mxu0 0.0
      %1641 = vmatprep.subr.mxu0 0.0
      %1642 = vmatpush1.msra.mxu0 0.0
      %1643 = vmatprep.subr.mxu0 0.0
      %1644 = vmatpush1.msra.mxu0 0.0
      %1645 = vmatprep.subr.mxu0 0.0
      %1646 = vmatpush1.msra.mxu0 0.0
      %1647 = vmatprep.mubr.f32.mxu0 0.0
      %1648 = vmatmul.mubr.f32.gmra.mrb[0].mxu0 %v1581
      %v1649 = vpop.f32.mrb[0].mxu0
      %v1650 = vadd.f32 %v1578, %v1649
      %v1651 = vpop.f32.mrb[0].mxu0
      %1652 = vdwg.mxu0
      %v1653 = vmax.f32 %v1650, 0.0
      %v1654 = vld [vmem:[%s8] sm:$0xff]
      %v1655 = vld [vmem:[%s8 + $0x8] sm:$0xff]
      %v1656 = vld [vmem:[%s8 + $0x10] sm:$0xff]
      %v1657 = vld [vmem:[%s8 + $0x18] sm:$0xff]
      %v1658 = vld [vmem:[%s8 + $0x20] sm:$0xff]
      %v1659 = vld [vmem:[%s8 + $0x28] sm:$0xff]
      %v1660 = vld [vmem:[%s8 + $0x30] sm:$0xff]
      %v1661 = vld [vmem:[%s8 + $0x38] sm:$0xff]
      %v1662 = vld [vmem:[%s9] sm:$0x1]
      %v1664 = vlaneseq
      %v1665 = vshrl.u32 %v1664, 7
      %v1666 = vsub.s32 0, %v1665
      %v1667 = vrot.slane %v1662, %v1666
      %vm1669 = vcmask 523264
      %v1671 = vsel %vm1669, %v1653, 0
      %1673 = vmatprep.subr.mxu0 0.0
      %1674 = vmatpush1.msra.mxu0 %v1654
      %1675 = vmatprep.subr.mxu0 0.0
      %1676 = vmatpush1.msra.mxu0 %v1655
      %1677 = vmatprep.subr.mxu0 0.0
      %1678 = vmatpush1.msra.mxu0 %v1656
      %1679 = vmatprep.subr.mxu0 0.0
      %1680 = vmatpush1.msra.mxu0 %v1657
      %1681 = vmatprep.subr.mxu0 0.0
      %1682 = vmatpush1.msra.mxu0 %v1658
      %1683 = vmatprep.subr.mxu0 0.0
      %1684 = vmatpush1.msra.mxu0 %v1659
      %1685 = vmatprep.subr.mxu0 0.0
      %1686 = vmatpush1.msra.mxu0 %v1660
      %1687 = vmatprep.subr.mxu0 0.0
      %1688 = vmatpush1.msra.mxu0 %v1661
      %1689 = vmatprep.subr.mxu0 0.0
      %1690 = vmatpush1.msra.mxu0 0.0
      %1691 = vmatprep.subr.mxu0 0.0
      %1692 = vmatpush1.msra.mxu0 0.0
      %1693 = vmatprep.subr.mxu0 0.0
      %1694 = vmatpush1.msra.mxu0 0.0
      %1695 = vmatprep.subr.mxu0 0.0
      %1696 = vmatpush1.msra.mxu0 0.0
      %1697 = vmatprep.subr.mxu0 0.0
      %1698 = vmatpush1.msra.mxu0 0.0
      %1699 = vmatprep.subr.mxu0 0.0
      %1700 = vmatpush1.msra.mxu0 0.0
      %1701 = vmatprep.subr.mxu0 0.0
      %1702 = vmatpush1.msra.mxu0 0.0
      %1703 = vmatprep.subr.mxu0 0.0
      %1704 = vmatpush1.msra.mxu0 0.0
      %1705 = vmatprep.subr.mxu0 0.0
      %1706 = vmatpush1.msra.mxu0 0.0
      %1707 = vmatprep.subr.mxu0 0.0
      %1708 = vmatpush1.msra.mxu0 0.0
      %1709 = vmatprep.subr.mxu0 0.0
      %1710 = vmatpush1.msra.mxu0 0.0
      %1711 = vmatprep.subr.mxu0 0.0
      %1712 = vmatpush1.msra.mxu0 0.0
      %1713 = vmatprep.subr.mxu0 0.0
      %1714 = vmatpush1.msra.mxu0 0.0
      %1715 = vmatprep.subr.mxu0 0.0
      %1716 = vmatpush1.msra.mxu0 0.0
      %1717 = vmatprep.subr.mxu0 0.0
      %1718 = vmatpush1.msra.mxu0 0.0
      %1719 = vmatprep.subr.mxu0 0.0
      %1720 = vmatpush1.msra.mxu0 0.0
      %1721 = vmatprep.subr.mxu0 0.0
      %1722 = vmatpush1.msra.mxu0 0.0
      %1723 = vmatprep.subr.mxu0 0.0
      %1724 = vmatpush1.msra.mxu0 0.0
      %1725 = vmatprep.subr.mxu0 0.0
      %1726 = vmatpush1.msra.mxu0 0.0
      %1727 = vmatprep.subr.mxu0 0.0
      %1728 = vmatpush1.msra.mxu0 0.0
      %1729 = vmatprep.subr.mxu0 0.0
      %1730 = vmatpush1.msra.mxu0 0.0
      %1731 = vmatprep.subr.mxu0 0.0
      %1732 = vmatpush1.msra.mxu0 0.0
      %1733 = vmatprep.subr.mxu0 0.0
      %1734 = vmatpush1.msra.mxu0 0.0
      %1735 = vmatprep.subr.mxu0 0.0
      %1736 = vmatpush1.msra.mxu0 0.0
      %1737 = vmatprep.mubr.f32.mxu0 0.0
      %1738 = vmatmul.mubr.f32.gmra.mrb[0].mxu0 %v1671
      %v1739 = vpop.f32.mrb[0].mxu0
      %v1740 = vadd.f32 %v1667, %v1739
      %v1741 = vpop.f32.mrb[0].mxu0
      %1742 = vdwg.mxu0
      %v1743 = vld [vmem:[%s12] sm:$0x1]
      %v1744 = vld [vmem:[%s13] sm:$0x1]
      %v1745 = vadd.f32 %v1568, %v1740
      %v1746 = vsel %vm495, %v1745, 0.0
      %1747 = vadd.xlane.f32.xlu0 %v1746
      %v1748 = vpop.xlane.xlu0 %1747
      %v1749 = vmul.f32 %v1748, %v1544
      %v1750 = vsub.f32 %v1745, %v1749
      %v1751 = vmul.f32 %v1750, %v1750
      %v1752 = vsel %vm495, %v1751, 0.0
      %1753 = vadd.xlane.f32.xlu0 %v1752
      %v1754 = vpop.xlane.xlu0 %1753
      %v1755 = vmul.f32 %v1754, %v1544
      %v1756 = vadd.f32 %v1755, 1e-05
      %v1757 = vrsqrt.pop %v1756
      %v1758 = vmul.f32 %v1750, %v1757
      %v1760 = vlaneseq
      %v1761 = vshrl.u32 %v1760, 7
      %v1762 = vsub.s32 0, %v1761
      %v1763 = vrot.slane %v1743, %v1762
      %v1765 = vmul.f32 %v1758, %v1763
      %v1767 = vlaneseq
      %v1768 = vshrl.u32 %v1767, 7
      %v1769 = vsub.s32 0, %v1768
      %v1770 = vrot.slane %v1744, %v1769
      %v1772 = vadd.f32 %v1765, %v1770
      %1773 = vst.msk [vmem:[%s476] sm:$0xff] %vm495, %v1772
      %p1774 = scmp.lt.s32.totalorder %s25, 1
      %s1775 = scalar_select %p1774, %s25, 1
      %s1776 = smul.addr %s1775, 8
      %s1777 = scalar_lea.vmem %s14, %s1776
      // Predicated region
      $region77: #{my_tf_forward.7} parent=75 // pred_check
        %p1778 = pneg %p347
      $region78: #{my_tf_forward.7} parent=75 // pred_check_branch
        %1780 = sbr.rel (%p1778) target = $region80
      $region79: #{my_tf_forward.7} parent=75 // pred_region
        _
      $region80: #{my_tf_forward.7} parent=75 // pred_fallthru
        _
    $region76: #{my_tf_forward.7} parent=5 // pred_fallthru
      _
    %p1781 = scmp.le.s32.totalorder 2, %s20
    // Predicated region
    $region81: #{my_tf_forward.7} parent=5 // pred_check
      %p1782 = pneg %p1781
    $region82: #{my_tf_forward.7} parent=5 // pred_check_branch
      %1784 = sbr.rel (%p1782) target = $region84
    $region83: #{my_tf_forward.7} parent=5 // pred_region
      %s1785 = ssub.s32 %s20, 2
      // Predicated region
      $region85: #{my_tf_forward.7} parent=83 // pred_check
        %p1786 = pneg %p353
      $region86: #{my_tf_forward.7} parent=83 // pred_check_branch
        %1788 = sbr.rel (%p1786) target = $region88
      $region87: #{my_tf_forward.7} parent=83 // pred_region
        %p1789 = scmp.lt.s32.totalorder %s26, 1
        %s1790 = scalar_select %p1789, %s26, 1
        %s1791 = smul.addr %s1790, 8
        %s1792 = scalar_lea.vmem %s14, %s1791
      $region88: #{my_tf_forward.7} parent=83 // pred_fallthru
        _
    $region84: #{my_tf_forward.7} parent=5 // pred_fallthru
      _
  $region6: #{my_tf_forward.7} parent=0 // loop_footer
    %s24 = sadd.s32 1, %s20
  $region7: #{my_tf_forward.7} parent=0 // loop_footer_branch
    %19 = sbr.rel target = $region3
  $region8: #{my_tf_forward.7} parent=0 // loop_exit
    _

// kernel: my_tf_forward.10
$region0: #{my_tf_forward.10}
  #allocation0 [shape = 'u32[]', space=smem, size = 0x4, offset = 0x4, fixed_abs, tag = 'smem constant byte address 0x4 - core index']
  #allocation1 [shape = 'u32[144,128]{1,0:T(1,128)}', space=vmem, size = 0x12000, scoped, tag = 'internal scratch']
  %s0 = inlined_call_operand.vmem [shape: f32[2,8,32], index: 0, kind: input, shape index: {}]
  %s1 = inlined_call_operand.vmem [shape: f32[2,8,32], index: 1, kind: input, shape index: {}]
  %s2 = inlined_call_operand.vmem [shape: f32[2,1,8], index: 2, kind: input, shape index: {}]
  %s3 = inlined_call_operand.vmem [shape: f32[2,1,8], index: 3, kind: input, shape index: {}]
  %s4 = inlined_call_operand.vmem [shape: f32[32,96], index: 4, kind: input, shape index: {}]
  %s5 = inlined_call_operand.vmem [shape: f32[1,96], index: 5, kind: input, shape index: {}]
  %s6 = inlined_call_operand.vmem [shape: f32[32,32], index: 6, kind: input, shape index: {}]
  %s7 = inlined_call_operand.vmem [shape: f32[1,32], index: 7, kind: input, shape index: {}]
  %s8 = inlined_call_operand.vmem [shape: f32[32,96], index: 8, kind: input, shape index: {}]
  %s9 = inlined_call_operand.vmem [shape: f32[1,96], index: 9, kind: input, shape index: {}]
  %s10 = inlined_call_operand.vmem [shape: f32[32,32], index: 10, kind: input, shape index: {}]
  %s11 = inlined_call_operand.vmem [shape: f32[1,32], index: 11, kind: input, shape index: {}]
  %s12 = inlined_call_operand.vmem [shape: f32[32,64], index: 12, kind: input, shape index: {}]
  %s13 = inlined_call_operand.vmem [shape: f32[1,64], index: 13, kind: input, shape index: {}]
  %s14 = inlined_call_operand.vmem [shape: f32[64,32], index: 14, kind: input, shape index: {}]
  %s15 = inlined_call_operand.vmem [shape: f32[1,32], index: 15, kind: input, shape index: {}]
  %s16 = inlined_call_operand.vmem [shape: f32[1,32], index: 16, kind: input, shape index: {}]
  %s17 = inlined_call_operand.vmem [shape: f32[1,32], index: 17, kind: input, shape index: {}]
  %s18 = inlined_call_operand.vmem [shape: f32[1,32], index: 18, kind: input, shape index: {}]
  %s19 = inlined_call_operand.vmem [shape: f32[1,32], index: 19, kind: input, shape index: {}]
  %s20 = inlined_call_operand.vmem [shape: f32[1,32], index: 20, kind: input, shape index: {}]
  %s21 = inlined_call_operand.vmem [shape: f32[1,32], index: 21, kind: input, shape index: {}]
  %s22 = inlined_call_operand.vmem [shape: f32[2,8,32], index: 22, kind: output, shape index: {}]
  %s23 = sld [smem:[#allocation0]]
  $region121: #{my_tf_forward.10} parent=0
    _
  %s25 = ssub.s32 1, %s23
  %s26 = scalar_select 0, %s25, %s23
  loop: start=0, step=1, limit=4
  $region2: #{my_tf_forward.10} parent=0 // loop_pre_header
    _
  $region3: #{my_tf_forward.10} parent=0 // loop_header
    %s28 = sphi 0, %s32
    %p29 = scmp.ge.s32.totalorder %s28, 4
    %s38 = sphi 0, %s40
    %s41 = sphi 0, %s38
    %s42 = sphi 0, %s41
    %s58 = sphi 0, %s42
    %s64 = sphi 0, %s66
    %s67 = sphi 0, %s64
    %s68 = sphi 0, %s67
    %s84 = sphi 0, %s68
    %s90 = sphi 0, %s92
    %s93 = sphi 0, %s90
    %s94 = sphi 0, %s93
    %s110 = sphi 0, %s94
    %s116 = sphi 0, %s118
    %s119 = sphi 0, %s116
    %s120 = sphi 0, %s119
    %s136 = sphi 0, %s120
    %s140 = sphi 0, %s140
    %s142 = sphi 0, %s140
    %s143 = sphi 0, %s142
    %s157 = sphi 0, %s143
    %s161 = sphi 0, %s161
    %s163 = sphi 0, %s161
    %s164 = sphi 0, %s163
    %s178 = sphi 0, %s164
    %s182 = sphi 0, %s182
    %s184 = sphi 0, %s182
    %s185 = sphi 0, %s184
    %s199 = sphi 0, %s185
    %s203 = sphi 0, %s203
    %s205 = sphi 0, %s203
    %s206 = sphi 0, %s205
    %s220 = sphi 0, %s206
    %s224 = sphi 0, %s224
    %s226 = sphi 0, %s224
    %s227 = sphi 0, %s226
    %s241 = sphi 0, %s227
    %s245 = sphi 0, %s245
    %s247 = sphi 0, %s245
    %s248 = sphi 0, %s247
    %s262 = sphi 0, %s248
    %s266 = sphi 0, %s266
    %s268 = sphi 0, %s266
    %s269 = sphi 0, %s268
    %s283 = sphi 0, %s269
    %s287 = sphi 0, %s287
    %s289 = sphi 0, %s287
    %s290 = sphi 0, %s289
    %s304 = sphi 0, %s290
    %s308 = sphi 0, %s308
    %s310 = sphi 0, %s308
    %s311 = sphi 0, %s310
    %s325 = sphi 0, %s311
    %s329 = sphi 0, %s329
    %s331 = sphi 0, %s329
    %s332 = sphi 0, %s331
    %s346 = sphi 0, %s332
    %s350 = sphi 0, %s350
    %s352 = sphi 0, %s350
    %s353 = sphi 0, %s352
    %s367 = sphi 0, %s353
    %s371 = sphi 0, %s371
    %s373 = sphi 0, %s371
    %s374 = sphi 0, %s373
    %s388 = sphi 0, %s374
    %s392 = sphi 0, %s392
    %s394 = sphi 0, %s392
    %s395 = sphi 0, %s394
    %s409 = sphi 0, %s395
    %s413 = sphi 0, %s413
    %s415 = sphi 0, %s413
    %s416 = sphi 0, %s415
    %s430 = sphi 0, %s416
    %s434 = sphi 0, %s434
    %s436 = sphi 0, %s434
    %s437 = sphi 0, %s436
    %s451 = sphi 0, %s437
    %s455 = sphi 0, %s455
    %s457 = sphi 0, %s455
    %s458 = sphi 0, %s457
    %s472 = sphi 0, %s458
    %s476 = sphi 0, %s476
    %s478 = sphi 0, %s476
    %s479 = sphi 0, %s478
    %s493 = sphi 0, %s479
    %s497 = sphi 0, %s497
    %s499 = sphi 0, %s497
    %s500 = sphi 0, %s499
    %s514 = sphi 0, %s500
    %s520 = sphi 0, %s522
    %s523 = sphi 0, %s520
    %s524 = sphi 0, %s523
    %s540 = sphi 0, %s524
  $region4: #{my_tf_forward.10} parent=0 // loop_header_branch
    %31 = sbr.rel (%p29) target = $region8
  $region5: #{my_tf_forward.10} parent=0 // loop_body
    %s33 = ssub.s32 %s28, 1
    %s34 = ssub.s32 %s28, 2
    %s35 = sadd.s32 %s28, 1
    %s36 = ssub.s32 %s28, %s35
    %p37 = scmp.eq.s32.totalorder %s36, 0
    %s39 = sadd.s32 %s38, 1
    %s40 = scalar_select %p37, %s38, %s39
    %p43 = pneg %p37
    %p44 = scmp.eq.s32.totalorder %s28, 1
    %p45 = por %p43, %p44
    %p46 = scmp.ne.s32.totalorder %s38, %s41
    %p47 = scmp.eq.s32.totalorder %s28, 0
    %p48 = por %p46, %p47
    %p49 = scmp.ne.s32.totalorder %s38, %s41
    %p50 = scmp.eq.s32.totalorder %s33, 1
    %p51 = por %p49, %p50
    %p52 = scmp.ne.s32.totalorder %s41, %s42
    %p53 = scmp.eq.s32.totalorder %s33, 0
    %p54 = por %p52, %p53
    %p55 = scmp.ne.s32.totalorder %s41, %s42
    %p56 = scmp.eq.s32.totalorder %s34, 1
    %p57 = por %p55, %p56
    %p59 = scmp.ne.s32.totalorder %s42, %s58
    %p60 = scmp.eq.s32.totalorder %s34, 0
    %p61 = por %p59, %p60
    %s62 = ssub.s32 %s28, %s35
    %p63 = scmp.eq.s32.totalorder %s62, 0
    %s65 = sadd.s32 %s64, 1
    %s66 = scalar_select %p63, %s64, %s65
    %p69 = pneg %p63
    %p70 = scmp.eq.s32.totalorder %s28, 1
    %p71 = por %p69, %p70
    %p72 = scmp.ne.s32.totalorder %s64, %s67
    %p73 = scmp.eq.s32.totalorder %s28, 0
    %p74 = por %p72, %p73
    %p75 = scmp.ne.s32.totalorder %s64, %s67
    %p76 = scmp.eq.s32.totalorder %s33, 1
    %p77 = por %p75, %p76
    %p78 = scmp.ne.s32.totalorder %s67, %s68
    %p79 = scmp.eq.s32.totalorder %s33, 0
    %p80 = por %p78, %p79
    %p81 = scmp.ne.s32.totalorder %s67, %s68
    %p82 = scmp.eq.s32.totalorder %s34, 1
    %p83 = por %p81, %p82
    %p85 = scmp.ne.s32.totalorder %s68, %s84
    %p86 = scmp.eq.s32.totalorder %s34, 0
    %p87 = por %p85, %p86
    %s88 = ssub.s32 %s28, %s35
    %p89 = scmp.eq.s32.totalorder %s88, 0
    %s91 = sadd.s32 %s90, 1
    %s92 = scalar_select %p89, %s90, %s91
    %p95 = pneg %p89
    %p96 = scmp.eq.s32.totalorder %s28, 1
    %p97 = por %p95, %p96
    %p98 = scmp.ne.s32.totalorder %s90, %s93
    %p99 = scmp.eq.s32.totalorder %s28, 0
    %p100 = por %p98, %p99
    %p101 = scmp.ne.s32.totalorder %s90, %s93
    %p102 = scmp.eq.s32.totalorder %s33, 1
    %p103 = por %p101, %p102
    %p104 = scmp.ne.s32.totalorder %s93, %s94
    %p105 = scmp.eq.s32.totalorder %s33, 0
    %p106 = por %p104, %p105
    %p107 = scmp.ne.s32.totalorder %s93, %s94
    %p108 = scmp.eq.s32.totalorder %s34, 1
    %p109 = por %p107, %p108
    %p111 = scmp.ne.s32.totalorder %s94, %s110
    %p112 = scmp.eq.s32.totalorder %s34, 0
    %p113 = por %p111, %p112
    %s114 = ssub.s32 %s28, %s35
    %p115 = scmp.eq.s32.totalorder %s114, 0
    %s117 = sadd.s32 %s116, 1
    %s118 = scalar_select %p115, %s116, %s117
    %p121 = pneg %p115
    %p122 = scmp.eq.s32.totalorder %s28, 1
    %p123 = por %p121, %p122
    %p124 = scmp.ne.s32.totalorder %s116, %s119
    %p125 = scmp.eq.s32.totalorder %s28, 0
    %p126 = por %p124, %p125
    %p127 = scmp.ne.s32.totalorder %s116, %s119
    %p128 = scmp.eq.s32.totalorder %s33, 1
    %p129 = por %p127, %p128
    %p130 = scmp.ne.s32.totalorder %s119, %s120
    %p131 = scmp.eq.s32.totalorder %s33, 0
    %p132 = por %p130, %p131
    %p133 = scmp.ne.s32.totalorder %s119, %s120
    %p134 = scmp.eq.s32.totalorder %s34, 1
    %p135 = por %p133, %p134
    %p137 = scmp.ne.s32.totalorder %s120, %s136
    %p138 = scmp.eq.s32.totalorder %s34, 0
    %p139 = por %p137, %p138
    %s141 = sadd.s32 %s140, 1
    %p144 = scmp.eq.s32.totalorder %s28, 1
    %p145 = scmp.ne.s32.totalorder %s140, %s142
    %p146 = scmp.eq.s32.totalorder %s28, 0
    %p147 = por %p145, %p146
    %p148 = scmp.ne.s32.totalorder %s140, %s142
    %p149 = scmp.eq.s32.totalorder %s33, 1
    %p150 = por %p148, %p149
    %p151 = scmp.ne.s32.totalorder %s142, %s143
    %p152 = scmp.eq.s32.totalorder %s33, 0
    %p153 = por %p151, %p152
    %p154 = scmp.ne.s32.totalorder %s142, %s143
    %p155 = scmp.eq.s32.totalorder %s34, 1
    %p156 = por %p154, %p155
    %p158 = scmp.ne.s32.totalorder %s143, %s157
    %p159 = scmp.eq.s32.totalorder %s34, 0
    %p160 = por %p158, %p159
    %s162 = sadd.s32 %s161, 1
    %p165 = scmp.eq.s32.totalorder %s28, 1
    %p166 = scmp.ne.s32.totalorder %s161, %s163
    %p167 = scmp.eq.s32.totalorder %s28, 0
    %p168 = por %p166, %p167
    %p169 = scmp.ne.s32.totalorder %s161, %s163
    %p170 = scmp.eq.s32.totalorder %s33, 1
    %p171 = por %p169, %p170
    %p172 = scmp.ne.s32.totalorder %s163, %s164
    %p173 = scmp.eq.s32.totalorder %s33, 0
    %p174 = por %p172, %p173
    %p175 = scmp.ne.s32.totalorder %s163, %s164
    %p176 = scmp.eq.s32.totalorder %s34, 1
    %p177 = por %p175, %p176
    %p179 = scmp.ne.s32.totalorder %s164, %s178
    %p180 = scmp.eq.s32.totalorder %s34, 0
    %p181 = por %p179, %p180
    %s183 = sadd.s32 %s182, 1
    %p186 = scmp.eq.s32.totalorder %s28, 1
    %p187 = scmp.ne.s32.totalorder %s182, %s184
    %p188 = scmp.eq.s32.totalorder %s28, 0
    %p189 = por %p187, %p188
    %p190 = scmp.ne.s32.totalorder %s182, %s184
    %p191 = scmp.eq.s32.totalorder %s33, 1
    %p192 = por %p190, %p191
    %p193 = scmp.ne.s32.totalorder %s184, %s185
    %p194 = scmp.eq.s32.totalorder %s33, 0
    %p195 = por %p193, %p194
    %p196 = scmp.ne.s32.totalorder %s184, %s185
    %p197 = scmp.eq.s32.totalorder %s34, 1
    %p198 = por %p196, %p197
    %p200 = scmp.ne.s32.totalorder %s185, %s199
    %p201 = scmp.eq.s32.totalorder %s34, 0
    %p202 = por %p200, %p201
    %s204 = sadd.s32 %s203, 1
    %p207 = scmp.eq.s32.totalorder %s28, 1
    %p208 = scmp.ne.s32.totalorder %s203, %s205
    %p209 = scmp.eq.s32.totalorder %s28, 0
    %p210 = por %p208, %p209
    %p211 = scmp.ne.s32.totalorder %s203, %s205
    %p212 = scmp.eq.s32.totalorder %s33, 1
    %p213 = por %p211, %p212
    %p214 = scmp.ne.s32.totalorder %s205, %s206
    %p215 = scmp.eq.s32.totalorder %s33, 0
    %p216 = por %p214, %p215
    %p217 = scmp.ne.s32.totalorder %s205, %s206
    %p218 = scmp.eq.s32.totalorder %s34, 1
    %p219 = por %p217, %p218
    %p221 = scmp.ne.s32.totalorder %s206, %s220
    %p222 = scmp.eq.s32.totalorder %s34, 0
    %p223 = por %p221, %p222
    %s225 = sadd.s32 %s224, 1
    %p228 = scmp.eq.s32.totalorder %s28, 1
    %p229 = scmp.ne.s32.totalorder %s224, %s226
    %p230 = scmp.eq.s32.totalorder %s28, 0
    %p231 = por %p229, %p230
    %p232 = scmp.ne.s32.totalorder %s224, %s226
    %p233 = scmp.eq.s32.totalorder %s33, 1
    %p234 = por %p232, %p233
    %p235 = scmp.ne.s32.totalorder %s226, %s227
    %p236 = scmp.eq.s32.totalorder %s33, 0
    %p237 = por %p235, %p236
    %p238 = scmp.ne.s32.totalorder %s226, %s227
    %p239 = scmp.eq.s32.totalorder %s34, 1
    %p240 = por %p238, %p239
    %p242 = scmp.ne.s32.totalorder %s227, %s241
    %p243 = scmp.eq.s32.totalorder %s34, 0
    %p244 = por %p242, %p243
    %s246 = sadd.s32 %s245, 1
    %p249 = scmp.eq.s32.totalorder %s28, 1
    %p250 = scmp.ne.s32.totalorder %s245, %s247
    %p251 = scmp.eq.s32.totalorder %s28, 0
    %p252 = por %p250, %p251
    %p253 = scmp.ne.s32.totalorder %s245, %s247
    %p254 = scmp.eq.s32.totalorder %s33, 1
    %p255 = por %p253, %p254
    %p256 = scmp.ne.s32.totalorder %s247, %s248
    %p257 = scmp.eq.s32.totalorder %s33, 0
    %p258 = por %p256, %p257
    %p259 = scmp.ne.s32.totalorder %s247, %s248
    %p260 = scmp.eq.s32.totalorder %s34, 1
    %p261 = por %p259, %p260
    %p263 = scmp.ne.s32.totalorder %s248, %s262
    %p264 = scmp.eq.s32.totalorder %s34, 0
    %p265 = por %p263, %p264
    %s267 = sadd.s32 %s266, 1
    %p270 = scmp.eq.s32.totalorder %s28, 1
    %p271 = scmp.ne.s32.totalorder %s266, %s268
    %p272 = scmp.eq.s32.totalorder %s28, 0
    %p273 = por %p271, %p272
    %p274 = scmp.ne.s32.totalorder %s266, %s268
    %p275 = scmp.eq.s32.totalorder %s33, 1
    %p276 = por %p274, %p275
    %p277 = scmp.ne.s32.totalorder %s268, %s269
    %p278 = scmp.eq.s32.totalorder %s33, 0
    %p279 = por %p277, %p278
    %p280 = scmp.ne.s32.totalorder %s268, %s269
    %p281 = scmp.eq.s32.totalorder %s34, 1
    %p282 = por %p280, %p281
    %p284 = scmp.ne.s32.totalorder %s269, %s283
    %p285 = scmp.eq.s32.totalorder %s34, 0
    %p286 = por %p284, %p285
    %s288 = sadd.s32 %s287, 1
    %p291 = scmp.eq.s32.totalorder %s28, 1
    %p292 = scmp.ne.s32.totalorder %s287, %s289
    %p293 = scmp.eq.s32.totalorder %s28, 0
    %p294 = por %p292, %p293
    %p295 = scmp.ne.s32.totalorder %s287, %s289
    %p296 = scmp.eq.s32.totalorder %s33, 1
    %p297 = por %p295, %p296
    %p298 = scmp.ne.s32.totalorder %s289, %s290
    %p299 = scmp.eq.s32.totalorder %s33, 0
    %p300 = por %p298, %p299
    %p301 = scmp.ne.s32.totalorder %s289, %s290
    %p302 = scmp.eq.s32.totalorder %s34, 1
    %p303 = por %p301, %p302
    %p305 = scmp.ne.s32.totalorder %s290, %s304
    %p306 = scmp.eq.s32.totalorder %s34, 0
    %p307 = por %p305, %p306
    %s309 = sadd.s32 %s308, 1
    %p312 = scmp.eq.s32.totalorder %s28, 1
    %p313 = scmp.ne.s32.totalorder %s308, %s310
    %p314 = scmp.eq.s32.totalorder %s28, 0
    %p315 = por %p313, %p314
    %p316 = scmp.ne.s32.totalorder %s308, %s310
    %p317 = scmp.eq.s32.totalorder %s33, 1
    %p318 = por %p316, %p317
    %p319 = scmp.ne.s32.totalorder %s310, %s311
    %p320 = scmp.eq.s32.totalorder %s33, 0
    %p321 = por %p319, %p320
    %p322 = scmp.ne.s32.totalorder %s310, %s311
    %p323 = scmp.eq.s32.totalorder %s34, 1
    %p324 = por %p322, %p323
    %p326 = scmp.ne.s32.totalorder %s311, %s325
    %p327 = scmp.eq.s32.totalorder %s34, 0
    %p328 = por %p326, %p327
    %s330 = sadd.s32 %s329, 1
    %p333 = scmp.eq.s32.totalorder %s28, 1
    %p334 = scmp.ne.s32.totalorder %s329, %s331
    %p335 = scmp.eq.s32.totalorder %s28, 0
    %p336 = por %p334, %p335
    %p337 = scmp.ne.s32.totalorder %s329, %s331
    %p338 = scmp.eq.s32.totalorder %s33, 1
    %p339 = por %p337, %p338
    %p340 = scmp.ne.s32.totalorder %s331, %s332
    %p341 = scmp.eq.s32.totalorder %s33, 0
    %p342 = por %p340, %p341
    %p343 = scmp.ne.s32.totalorder %s331, %s332
    %p344 = scmp.eq.s32.totalorder %s34, 1
    %p345 = por %p343, %p344
    %p347 = scmp.ne.s32.totalorder %s332, %s346
    %p348 = scmp.eq.s32.totalorder %s34, 0
    %p349 = por %p347, %p348
    %s351 = sadd.s32 %s350, 1
    %p354 = scmp.eq.s32.totalorder %s28, 1
    %p355 = scmp.ne.s32.totalorder %s350, %s352
    %p356 = scmp.eq.s32.totalorder %s28, 0
    %p357 = por %p355, %p356
    %p358 = scmp.ne.s32.totalorder %s350, %s352
    %p359 = scmp.eq.s32.totalorder %s33, 1
    %p360 = por %p358, %p359
    %p361 = scmp.ne.s32.totalorder %s352, %s353
    %p362 = scmp.eq.s32.totalorder %s33, 0
    %p363 = por %p361, %p362
    %p364 = scmp.ne.s32.totalorder %s352, %s353
    %p365 = scmp.eq.s32.totalorder %s34, 1
    %p366 = por %p364, %p365
    %p368 = scmp.ne.s32.totalorder %s353, %s367
    %p369 = scmp.eq.s32.totalorder %s34, 0
    %p370 = por %p368, %p369
    %s372 = sadd.s32 %s371, 1
    %p375 = scmp.eq.s32.totalorder %s28, 1
    %p376 = scmp.ne.s32.totalorder %s371, %s373
    %p377 = scmp.eq.s32.totalorder %s28, 0
    %p378 = por %p376, %p377
    %p379 = scmp.ne.s32.totalorder %s371, %s373
    %p380 = scmp.eq.s32.totalorder %s33, 1
    %p381 = por %p379, %p380
    %p382 = scmp.ne.s32.totalorder %s373, %s374
    %p383 = scmp.eq.s32.totalorder %s33, 0
    %p384 = por %p382, %p383
    %p385 = scmp.ne.s32.totalorder %s373, %s374
    %p386 = scmp.eq.s32.totalorder %s34, 1
    %p387 = por %p385, %p386
    %p389 = scmp.ne.s32.totalorder %s374, %s388
    %p390 = scmp.eq.s32.totalorder %s34, 0
    %p391 = por %p389, %p390
    %s393 = sadd.s32 %s392, 1
    %p396 = scmp.eq.s32.totalorder %s28, 1
    %p397 = scmp.ne.s32.totalorder %s392, %s394
    %p398 = scmp.eq.s32.totalorder %s28, 0
    %p399 = por %p397, %p398
    %p400 = scmp.ne.s32.totalorder %s392, %s394
    %p401 = scmp.eq.s32.totalorder %s33, 1
    %p402 = por %p400, %p401
    %p403 = scmp.ne.s32.totalorder %s394, %s395
    %p404 = scmp.eq.s32.totalorder %s33, 0
    %p405 = por %p403, %p404
    %p406 = scmp.ne.s32.totalorder %s394, %s395
    %p407 = scmp.eq.s32.totalorder %s34, 1
    %p408 = por %p406, %p407
    %p410 = scmp.ne.s32.totalorder %s395, %s409
    %p411 = scmp.eq.s32.totalorder %s34, 0
    %p412 = por %p410, %p411
    %s414 = sadd.s32 %s413, 1
    %p417 = scmp.eq.s32.totalorder %s28, 1
    %p418 = scmp.ne.s32.totalorder %s413, %s415
    %p419 = scmp.eq.s32.totalorder %s28, 0
    %p420 = por %p418, %p419
    %p421 = scmp.ne.s32.totalorder %s413, %s415
    %p422 = scmp.eq.s32.totalorder %s33, 1
    %p423 = por %p421, %p422
    %p424 = scmp.ne.s32.totalorder %s415, %s416
    %p425 = scmp.eq.s32.totalorder %s33, 0
    %p426 = por %p424, %p425
    %p427 = scmp.ne.s32.totalorder %s415, %s416
    %p428 = scmp.eq.s32.totalorder %s34, 1
    %p429 = por %p427, %p428
    %p431 = scmp.ne.s32.totalorder %s416, %s430
    %p432 = scmp.eq.s32.totalorder %s34, 0
    %p433 = por %p431, %p432
    %s435 = sadd.s32 %s434, 1
    %p438 = scmp.eq.s32.totalorder %s28, 1
    %p439 = scmp.ne.s32.totalorder %s434, %s436
    %p440 = scmp.eq.s32.totalorder %s28, 0
    %p441 = por %p439, %p440
    %p442 = scmp.ne.s32.totalorder %s434, %s436
    %p443 = scmp.eq.s32.totalorder %s33, 1
    %p444 = por %p442, %p443
    %p445 = scmp.ne.s32.totalorder %s436, %s437
    %p446 = scmp.eq.s32.totalorder %s33, 0
    %p447 = por %p445, %p446
    %p448 = scmp.ne.s32.totalorder %s436, %s437
    %p449 = scmp.eq.s32.totalorder %s34, 1
    %p450 = por %p448, %p449
    %p452 = scmp.ne.s32.totalorder %s437, %s451
    %p453 = scmp.eq.s32.totalorder %s34, 0
    %p454 = por %p452, %p453
    %s456 = sadd.s32 %s455, 1
    %p459 = scmp.eq.s32.totalorder %s28, 1
    %p460 = scmp.ne.s32.totalorder %s455, %s457
    %p461 = scmp.eq.s32.totalorder %s28, 0
    %p462 = por %p460, %p461
    %p463 = scmp.ne.s32.totalorder %s455, %s457
    %p464 = scmp.eq.s32.totalorder %s33, 1
    %p465 = por %p463, %p464
    %p466 = scmp.ne.s32.totalorder %s457, %s458
    %p467 = scmp.eq.s32.totalorder %s33, 0
    %p468 = por %p466, %p467
    %p469 = scmp.ne.s32.totalorder %s457, %s458
    %p470 = scmp.eq.s32.totalorder %s34, 1
    %p471 = por %p469, %p470
    %p473 = scmp.ne.s32.totalorder %s458, %s472
    %p474 = scmp.eq.s32.totalorder %s34, 0
    %p475 = por %p473, %p474
    %s477 = sadd.s32 %s476, 1
    %p480 = scmp.eq.s32.totalorder %s28, 1
    %p481 = scmp.ne.s32.totalorder %s476, %s478
    %p482 = scmp.eq.s32.totalorder %s28, 0
    %p483 = por %p481, %p482
    %p484 = scmp.ne.s32.totalorder %s476, %s478
    %p485 = scmp.eq.s32.totalorder %s33, 1
    %p486 = por %p484, %p485
    %p487 = scmp.ne.s32.totalorder %s478, %s479
    %p488 = scmp.eq.s32.totalorder %s33, 0
    %p489 = por %p487, %p488
    %p490 = scmp.ne.s32.totalorder %s478, %s479
    %p491 = scmp.eq.s32.totalorder %s34, 1
    %p492 = por %p490, %p491
    %p494 = scmp.ne.s32.totalorder %s479, %s493
    %p495 = scmp.eq.s32.totalorder %s34, 0
    %p496 = por %p494, %p495
    %s498 = sadd.s32 %s497, 1
    %p501 = scmp.eq.s32.totalorder %s28, 1
    %p502 = scmp.ne.s32.totalorder %s497, %s499
    %p503 = scmp.eq.s32.totalorder %s28, 0
    %p504 = por %p502, %p503
    %p505 = scmp.ne.s32.totalorder %s497, %s499
    %p506 = scmp.eq.s32.totalorder %s33, 1
    %p507 = por %p505, %p506
    %p508 = scmp.ne.s32.totalorder %s499, %s500
    %p509 = scmp.eq.s32.totalorder %s33, 0
    %p510 = por %p508, %p509
    %p511 = scmp.ne.s32.totalorder %s499, %s500
    %p512 = scmp.eq.s32.totalorder %s34, 1
    %p513 = por %p511, %p512
    %p515 = scmp.ne.s32.totalorder %s500, %s514
    %p516 = scmp.eq.s32.totalorder %s34, 0
    %p517 = por %p515, %p516
    %s518 = ssub.s32 %s28, %s35
    %p519 = scmp.eq.s32.totalorder %s518, 0
    %s521 = sadd.s32 %s520, 1
    %s522 = scalar_select %p519, %s520, %s521
    %p525 = pneg %p519
    %p526 = scmp.eq.s32.totalorder %s28, 1
    %p527 = por %p525, %p526
    %p528 = scmp.ne.s32.totalorder %s520, %s523
    %p529 = scmp.eq.s32.totalorder %s28, 0
    %p530 = por %p528, %p529
    %p531 = scmp.ne.s32.totalorder %s520, %s523
    %p532 = scmp.eq.s32.totalorder %s33, 1
    %p533 = por %p531, %p532
    %p534 = scmp.ne.s32.totalorder %s523, %s524
    %p535 = scmp.eq.s32.totalorder %s33, 0
    %p536 = por %p534, %p535
    %p537 = scmp.ne.s32.totalorder %s523, %s524
    %p538 = scmp.eq.s32.totalorder %s34, 1
    %p539 = por %p537, %p538
    %p541 = scmp.ne.s32.totalorder %s524, %s540
    %p542 = scmp.eq.s32.totalorder %s34, 0
    %p543 = por %p541, %p542
    %p544 = scmp.le.s32.totalorder 1, %s28
    %p545 = scmp.lt.s32.totalorder %s28, 3
    %p546 = pnand %p544, %p545
    %p547 = pneg %p546
    // Predicated region
    $region9: #{my_tf_forward.10} parent=5 // pred_check
      _
    $region10: #{my_tf_forward.10} parent=5 // pred_check_branch
      %549 = sbr.rel (%p546) target = $region12
    $region11: #{my_tf_forward.10} parent=5 // pred_region
      %s550 = ssub.s32 %s28, 1
      // Predicated region
      $region13: #{my_tf_forward.10} parent=11 // pred_check
        %p551 = pneg %p153
      $region14: #{my_tf_forward.10} parent=11 // pred_check_branch
        %553 = sbr.rel (%p551) target = $region16
      $region15: #{my_tf_forward.10} parent=11 // pred_region
        _
      $region16: #{my_tf_forward.10} parent=11 // pred_fallthru
        _
      // Predicated region
      $region17: #{my_tf_forward.10} parent=11 // pred_check
        %p554 = pneg %p174
      $region18: #{my_tf_forward.10} parent=11 // pred_check_branch
        %556 = sbr.rel (%p554) target = $region20
      $region19: #{my_tf_forward.10} parent=11 // pred_region
        _
      $region20: #{my_tf_forward.10} parent=11 // pred_fallthru
        _
      // Predicated region
      $region21: #{my_tf_forward.10} parent=11 // pred_check
        %p557 = pneg %p195
      $region22: #{my_tf_forward.10} parent=11 // pred_check_branch
        %559 = sbr.rel (%p557) target = $region24
      $region23: #{my_tf_forward.10} parent=11 // pred_region
        _
      $region24: #{my_tf_forward.10} parent=11 // pred_fallthru
        _
      // Predicated region
      $region25: #{my_tf_forward.10} parent=11 // pred_check
        %p560 = pneg %p216
      $region26: #{my_tf_forward.10} parent=11 // pred_check_branch
        %562 = sbr.rel (%p560) target = $region28
      $region27: #{my_tf_forward.10} parent=11 // pred_region
        _
      $region28: #{my_tf_forward.10} parent=11 // pred_fallthru
        _
      // Predicated region
      $region29: #{my_tf_forward.10} parent=11 // pred_check
        %p563 = pneg %p237
      $region30: #{my_tf_forward.10} parent=11 // pred_check_branch
        %565 = sbr.rel (%p563) target = $region32
      $region31: #{my_tf_forward.10} parent=11 // pred_region
        _
      $region32: #{my_tf_forward.10} parent=11 // pred_fallthru
        _
      // Predicated region
      $region33: #{my_tf_forward.10} parent=11 // pred_check
        %p566 = pneg %p258
      $region34: #{my_tf_forward.10} parent=11 // pred_check_branch
        %568 = sbr.rel (%p566) target = $region36
      $region35: #{my_tf_forward.10} parent=11 // pred_region
        _
      $region36: #{my_tf_forward.10} parent=11 // pred_fallthru
        _
      // Predicated region
      $region37: #{my_tf_forward.10} parent=11 // pred_check
        %p569 = pneg %p279
      $region38: #{my_tf_forward.10} parent=11 // pred_check_branch
        %571 = sbr.rel (%p569) target = $region40
      $region39: #{my_tf_forward.10} parent=11 // pred_region
        _
      $region40: #{my_tf_forward.10} parent=11 // pred_fallthru
        _
      // Predicated region
      $region41: #{my_tf_forward.10} parent=11 // pred_check
        %p572 = pneg %p300
      $region42: #{my_tf_forward.10} parent=11 // pred_check_branch
        %574 = sbr.rel (%p572) target = $region44
      $region43: #{my_tf_forward.10} parent=11 // pred_region
        _
      $region44: #{my_tf_forward.10} parent=11 // pred_fallthru
        _
      // Predicated region
      $region45: #{my_tf_forward.10} parent=11 // pred_check
        %p575 = pneg %p321
      $region46: #{my_tf_forward.10} parent=11 // pred_check_branch
        %577 = sbr.rel (%p575) target = $region48
      $region47: #{my_tf_forward.10} parent=11 // pred_region
        _
      $region48: #{my_tf_forward.10} parent=11 // pred_fallthru
        _
      // Predicated region
      $region49: #{my_tf_forward.10} parent=11 // pred_check
        %p578 = pneg %p342
      $region50: #{my_tf_forward.10} parent=11 // pred_check_branch
        %580 = sbr.rel (%p578) target = $region52
      $region51: #{my_tf_forward.10} parent=11 // pred_region
        _
      $region52: #{my_tf_forward.10} parent=11 // pred_fallthru
        _
      // Predicated region
      $region53: #{my_tf_forward.10} parent=11 // pred_check
        %p581 = pneg %p363
      $region54: #{my_tf_forward.10} parent=11 // pred_check_branch
        %583 = sbr.rel (%p581) target = $region56
      $region55: #{my_tf_forward.10} parent=11 // pred_region
        _
      $region56: #{my_tf_forward.10} parent=11 // pred_fallthru
        _
      // Predicated region
      $region57: #{my_tf_forward.10} parent=11 // pred_check
        %p584 = pneg %p384
      $region58: #{my_tf_forward.10} parent=11 // pred_check_branch
        %586 = sbr.rel (%p584) target = $region60
      $region59: #{my_tf_forward.10} parent=11 // pred_region
        _
      $region60: #{my_tf_forward.10} parent=11 // pred_fallthru
        _
      // Predicated region
      $region61: #{my_tf_forward.10} parent=11 // pred_check
        %p587 = pneg %p405
      $region62: #{my_tf_forward.10} parent=11 // pred_check_branch
        %589 = sbr.rel (%p587) target = $region64
      $region63: #{my_tf_forward.10} parent=11 // pred_region
        _
      $region64: #{my_tf_forward.10} parent=11 // pred_fallthru
        _
      // Predicated region
      $region65: #{my_tf_forward.10} parent=11 // pred_check
        %p590 = pneg %p426
      $region66: #{my_tf_forward.10} parent=11 // pred_check_branch
        %592 = sbr.rel (%p590) target = $region68
      $region67: #{my_tf_forward.10} parent=11 // pred_region
        _
      $region68: #{my_tf_forward.10} parent=11 // pred_fallthru
        _
      // Predicated region
      $region69: #{my_tf_forward.10} parent=11 // pred_check
        %p593 = pneg %p447
      $region70: #{my_tf_forward.10} parent=11 // pred_check_branch
        %595 = sbr.rel (%p593) target = $region72
      $region71: #{my_tf_forward.10} parent=11 // pred_region
        _
      $region72: #{my_tf_forward.10} parent=11 // pred_fallthru
        _
      // Predicated region
      $region73: #{my_tf_forward.10} parent=11 // pred_check
        %p596 = pneg %p468
      $region74: #{my_tf_forward.10} parent=11 // pred_check_branch
        %598 = sbr.rel (%p596) target = $region76
      $region75: #{my_tf_forward.10} parent=11 // pred_region
        _
      $region76: #{my_tf_forward.10} parent=11 // pred_fallthru
        _
      // Predicated region
      $region77: #{my_tf_forward.10} parent=11 // pred_check
        %p599 = pneg %p489
      $region78: #{my_tf_forward.10} parent=11 // pred_check_branch
        %601 = sbr.rel (%p599) target = $region80
      $region79: #{my_tf_forward.10} parent=11 // pred_region
        _
      $region80: #{my_tf_forward.10} parent=11 // pred_fallthru
        _
      // Predicated region
      $region81: #{my_tf_forward.10} parent=11 // pred_check
        %p602 = pneg %p510
      $region82: #{my_tf_forward.10} parent=11 // pred_check_branch
        %604 = sbr.rel (%p602) target = $region84
      $region83: #{my_tf_forward.10} parent=11 // pred_region
        _
      $region84: #{my_tf_forward.10} parent=11 // pred_fallthru
        _
    $region12: #{my_tf_forward.10} parent=5 // pred_fallthru
      _
    %p605 = scmp.lt.s32.totalorder %s28, 2
    // Predicated region
    $region85: #{my_tf_forward.10} parent=5 // pred_check
      %p606 = pneg %p605
    $region86: #{my_tf_forward.10} parent=5 // pred_check_branch
      %608 = sbr.rel (%p606) target = $region88
    $region87: #{my_tf_forward.10} parent=5 // pred_region
      // Predicated region
      $region89: #{my_tf_forward.10} parent=87 // pred_check
        %p609 = pneg %p48
      $region90: #{my_tf_forward.10} parent=87 // pred_check_branch
        %611 = sbr.rel (%p609) target = $region92
      $region91: #{my_tf_forward.10} parent=87 // pred_region
        %p612 = scmp.lt.s32.totalorder %s28, 1
        %s613 = scalar_select %p612, %s28, 1
        %s614 = smul.addr %s613, 8
        %s615 = scalar_lea.vmem %s0, %s614
      $region92: #{my_tf_forward.10} parent=87 // pred_fallthru
        _
      // Predicated region
      $region93: #{my_tf_forward.10} parent=87 // pred_check
        %p616 = pneg %p74
      $region94: #{my_tf_forward.10} parent=87 // pred_check_branch
        %618 = sbr.rel (%p616) target = $region96
      $region95: #{my_tf_forward.10} parent=87 // pred_region
        %p619 = scmp.lt.s32.totalorder %s28, 1
        %s620 = scalar_select %p619, %s28, 1
        %s621 = smul.addr %s620, 8
        %s622 = scalar_lea.vmem %s1, %s621
      $region96: #{my_tf_forward.10} parent=87 // pred_fallthru
        _
      // Predicated region
      $region97: #{my_tf_forward.10} parent=87 // pred_check
        %p623 = pneg %p100
      $region98: #{my_tf_forward.10} parent=87 // pred_check_branch
        %625 = sbr.rel (%p623) target = $region100
      $region99: #{my_tf_forward.10} parent=87 // pred_region
        %p626 = scmp.lt.s32.totalorder %s28, 1
        %s627 = scalar_select %p626, %s28, 1
        %s628 = scalar_lea.vmem %s2, %s627
      $region100: #{my_tf_forward.10} parent=87 // pred_fallthru
        _
      // Predicated region
      $region101: #{my_tf_forward.10} parent=87 // pred_check
        %p629 = pneg %p126
      $region102: #{my_tf_forward.10} parent=87 // pred_check_branch
        %631 = sbr.rel (%p629) target = $region104
      $region103: #{my_tf_forward.10} parent=87 // pred_region
        %p632 = scmp.lt.s32.totalorder %s28, 1
        %s633 = scalar_select %p632, %s28, 1
        %s634 = scalar_lea.vmem %s3, %s633
      $region104: #{my_tf_forward.10} parent=87 // pred_fallthru
        _
    $region88: #{my_tf_forward.10} parent=5 // pred_fallthru
      _
    %p635 = scmp.le.s32.totalorder 1, %s28
    %p636 = scmp.lt.s32.totalorder %s28, 3
    %p637 = pnand %p635, %p636
    %p638 = pneg %p637
    // Predicated region
    $region105: #{my_tf_forward.10} parent=5 // pred_check
      _
    $region106: #{my_tf_forward.10} parent=5 // pred_check_branch
      %640 = sbr.rel (%p637) target = $region108
    $region107: #{my_tf_forward.10} parent=5 // pred_region
      %s641 = ssub.s32 %s28, 1
      %p642 = scmp.lt.s32.totalorder %s33, 1
      %s643 = scalar_select %p642, %s33, 1
      %s644 = smul.addr %s643, 8
      %s645 = scalar_lea.vmem %s0, %s644
      %p646 = pneg %p54
      %p647 = pneg %p51
      %p648 = scmp.lt.s32.totalorder %s33, 1
      %s649 = scalar_select %p648, %s33, 1
      %s650 = smul.addr %s649, 8
      %s651 = scalar_lea.vmem %s1, %s650
      %p652 = pneg %p80
      %p653 = pneg %p77
      %p654 = scmp.lt.s32.totalorder %s33, 1
      %s655 = scalar_select %p654, %s33, 1
      %s656 = scalar_lea.vmem %s2, %s655
      %p657 = pneg %p106
      %p658 = pneg %p103
      %p659 = scmp.lt.s32.totalorder %s33, 1
      %s660 = scalar_select %p659, %s33, 1
      %s661 = scalar_lea.vmem %s3, %s660
      %p662 = pneg %p132
      %p663 = pneg %p129
      %p664 = pneg %p153
      %p665 = pneg %p150
      %p666 = pneg %p174
      %p667 = pneg %p171
      %p668 = pneg %p195
      %p669 = pneg %p192
      %p670 = pneg %p216
      %p671 = pneg %p213
      %p672 = pneg %p237
      %p673 = pneg %p234
      %p674 = pneg %p258
      %p675 = pneg %p255
      %p676 = pneg %p279
      %p677 = pneg %p276
      %p678 = pneg %p300
      %p679 = pneg %p297
      %p680 = pneg %p321
      %p681 = pneg %p318
      %p682 = pneg %p342
      %p683 = pneg %p339
      %p684 = pneg %p363
      %p685 = pneg %p360
      %p686 = pneg %p384
      %p687 = pneg %p381
      %p688 = pneg %p405
      %p689 = pneg %p402
      %p690 = pneg %p426
      %p691 = pneg %p423
      %p692 = pneg %p447
      %p693 = pneg %p444
      %p694 = pneg %p468
      %p695 = pneg %p465
      %p696 = pneg %p489
      %p697 = pneg %p486
      %p698 = pneg %p510
      %p699 = pneg %p507
      %p700 = pneg %p536
      %p701 = pneg %p533
      %p702 = scmp.lt.s32.totalorder %s33, 1
      %s703 = scalar_select %p702, %s33, 1
      %s704 = smul.addr %s703, 8
      %s705 = scalar_lea.vmem %s22, %s704
      %p706 = scmp.lt.s32.totalorder %s33, 1
      %s707 = scalar_select %p706, %s33, 1
      %s708 = smul.addr %s707, 8
      %s709 = scalar_lea.vmem %s0, %s708
      %p710 = scmp.lt.s32.totalorder %s33, 1
      %s711 = scalar_select %p710, %s33, 1
      %s712 = smul.addr %s711, 8
      %s713 = scalar_lea.vmem %s1, %s712
      %p714 = scmp.lt.s32.totalorder %s33, 1
      %s715 = scalar_select %p714, %s33, 1
      %s716 = scalar_lea.vmem %s2, %s715
      %p717 = scmp.lt.s32.totalorder %s33, 1
      %s718 = scalar_select %p717, %s33, 1
      %s719 = scalar_lea.vmem %s3, %s718
      %p720 = scmp.lt.s32.totalorder %s33, 1
      %s721 = scalar_select %p720, %s33, 1
      %s722 = smul.addr %s721, 8
      %s723 = scalar_lea.vmem %s22, %s722
      %v724 = vld [vmem:[%s709] sm:$0xff]
      %v725 = vld [vmem:[%s713] sm:$0xff]
      %v726 = vld [vmem:[%s4] sm:$0xff]
      %v727 = vld [vmem:[%s4 + $0x8] sm:$0xff]
      %v728 = vld [vmem:[%s4 + $0x10] sm:$0xff]
      %v729 = vld [vmem:[%s4 + $0x18] sm:$0xff]
      %v730 = vld [vmem:[%s5] sm:$0x1]
      %v731 = vld [vmem:[%s6] sm:$0xff]
      %v732 = vld [vmem:[%s6 + $0x8] sm:$0xff]
      %v733 = vld [vmem:[%s6 + $0x10] sm:$0xff]
      %v734 = vld [vmem:[%s6 + $0x18] sm:$0xff]
      %v735 = vld [vmem:[%s7] sm:$0x1]
      %v736 = vld [vmem:[%s716] sm:$0x1]
      %v738 = vlaneseq
      %v739 = vshrl.u32 %v738, 7
      %v740 = vsub.s32 0, %v739
      %v741 = vrot.slane %v730, %v740
      %vm743 = vcmask 261120
      %v745 = vsel %vm743, %v724, 0
      %747 = vmatprep.subr.mxu0 0.0
      %748 = vmatpush1.msra.mxu0 %v726
      %749 = vmatprep.subr.mxu0 0.0
      %750 = vmatpush1.msra.mxu0 %v727
      %751 = vmatprep.subr.mxu0 0.0
      %752 = vmatpush1.msra.mxu0 %v728
      %753 = vmatprep.subr.mxu0 0.0
      %754 = vmatpush1.msra.mxu0 %v729
      %755 = vmatprep.subr.mxu0 0.0
      %756 = vmatpush1.msra.mxu0 0.0
      %757 = vmatprep.subr.mxu0 0.0
      %758 = vmatpush1.msra.mxu0 0.0
      %759 = vmatprep.subr.mxu0 0.0
      %760 = vmatpush1.msra.mxu0 0.0
      %761 = vmatprep.subr.mxu0 0.0
      %762 = vmatpush1.msra.mxu0 0.0
      %763 = vmatprep.subr.mxu0 0.0
      %764 = vmatpush1.msra.mxu0 0.0
      %765 = vmatprep.subr.mxu0 0.0
      %766 = vmatpush1.msra.mxu0 0.0
      %767 = vmatprep.subr.mxu0 0.0
      %768 = vmatpush1.msra.mxu0 0.0
      %769 = vmatprep.subr.mxu0 0.0
      %770 = vmatpush1.msra.mxu0 0.0
      %771 = vmatprep.subr.mxu0 0.0
      %772 = vmatpush1.msra.mxu0 0.0
      %773 = vmatprep.subr.mxu0 0.0
      %774 = vmatpush1.msra.mxu0 0.0
      %775 = vmatprep.subr.mxu0 0.0
      %776 = vmatpush1.msra.mxu0 0.0
      %777 = vmatprep.subr.mxu0 0.0
      %778 = vmatpush1.msra.mxu0 0.0
      %779 = vmatprep.subr.mxu0 0.0
      %780 = vmatpush1.msra.mxu0 0.0
      %781 = vmatprep.subr.mxu0 0.0
      %782 = vmatpush1.msra.mxu0 0.0
      %783 = vmatprep.subr.mxu0 0.0
      %784 = vmatpush1.msra.mxu0 0.0
      %785 = vmatprep.subr.mxu0 0.0
      %786 = vmatpush1.msra.mxu0 0.0
      %787 = vmatprep.subr.mxu0 0.0
      %788 = vmatpush1.msra.mxu0 0.0
      %789 = vmatprep.subr.mxu0 0.0
      %790 = vmatpush1.msra.mxu0 0.0
      %791 = vmatprep.subr.mxu0 0.0
      %792 = vmatpush1.msra.mxu0 0.0
      %793 = vmatprep.subr.mxu0 0.0
      %794 = vmatpush1.msra.mxu0 0.0
      %795 = vmatprep.subr.mxu0 0.0
      %796 = vmatpush1.msra.mxu0 0.0
      %797 = vmatprep.subr.mxu0 0.0
      %798 = vmatpush1.msra.mxu0 0.0
      %799 = vmatprep.subr.mxu0 0.0
      %800 = vmatpush1.msra.mxu0 0.0
      %801 = vmatprep.subr.mxu0 0.0
      %802 = vmatpush1.msra.mxu0 0.0
      %803 = vmatprep.subr.mxu0 0.0
      %804 = vmatpush1.msra.mxu0 0.0
      %805 = vmatprep.subr.mxu0 0.0
      %806 = vmatpush1.msra.mxu0 0.0
      %807 = vmatprep.subr.mxu0 0.0
      %808 = vmatpush1.msra.mxu0 0.0
      %809 = vmatprep.subr.mxu0 0.0
      %810 = vmatpush1.msra.mxu0 0.0
      %811 = vmatprep.mubr.f32.mxu0 0.0
      %812 = vmatmul.mubr.f32.gmra.mrb[0].mxu0 %v745
      %v813 = vpop.f32.mrb[0].mxu0
      %v814 = vadd.f32 %v741, %v813
      %v815 = vpop.f32.mrb[0].mxu0
      %816 = vdwg.mxu0
      %v817 = vlaneseq
      %v818 = vshrl.u32 %v817, 7
      %v819 = vlaneseq
      %v820 = vand.u32 %v819, 127
      %vm821 = vcmp.ge.s32.totalorder %v818, %v820
      %v822 = vsel %vm821, 0.0, -1e+09
      %v824 = vlaneseq
      %v825 = vshrl.u32 %v824, 7
      %v826 = vsub.s32 0, %v825
      %v827 = vrot.slane %v736, %v826
      %v829 = vadd.f32 %v822, %v827
      %v830 = vmul.f32 %v814, 0.35355338
      %832 = vrot.lane.b32.xlu0 %v814, 96
      %v833 = vpop.permute.xlu0 %832
      %vm834 = vcmask 64512
      %v836 = vsel %vm834, %v830, 0
      %v838 = vsel %vm834, %v833, 0
      %840 = vmatprep.subr.mxu0 0.0
      %841 = vmatpush1.xpose.msra.mxu0 %v838
      %842 = vmatprep.subr.mxu0 0.0
      %843 = vmatpush1.xpose.msra.mxu0 0.0
      %844 = vmatprep.subr.mxu0 0.0
      %845 = vmatpush1.xpose.msra.mxu0 0.0
      %846 = vmatprep.subr.mxu0 0.0
      %847 = vmatpush1.xpose.msra.mxu0 0.0
      %848 = vmatprep.subr.mxu0 0.0
      %849 = vmatpush1.xpose.msra.mxu0 0.0
      %850 = vmatprep.subr.mxu0 0.0
      %851 = vmatpush1.xpose.msra.mxu0 0.0
      %852 = vmatprep.subr.mxu0 0.0
      %853 = vmatpush1.xpose.msra.mxu0 0.0
      %854 = vmatprep.subr.mxu0 0.0
      %855 = vmatpush1.xpose.msra.mxu0 0.0
      %856 = vmatprep.subr.mxu0 0.0
      %857 = vmatpush1.xpose.msra.mxu0 0.0
      %858 = vmatprep.subr.mxu0 0.0
      %859 = vmatpush1.xpose.msra.mxu0 0.0
      %860 = vmatprep.subr.mxu0 0.0
      %861 = vmatpush1.xpose.msra.mxu0 0.0
      %862 = vmatprep.subr.mxu0 0.0
      %863 = vmatpush1.xpose.msra.mxu0 0.0
      %864 = vmatprep.subr.mxu0 0.0
      %865 = vmatpush1.xpose.msra.mxu0 0.0
      %866 = vmatprep.subr.mxu0 0.0
      %867 = vmatpush1.xpose.msra.mxu0 0.0
      %868 = vmatprep.subr.mxu0 0.0
      %869 = vmatpush1.xpose.msra.mxu0 0.0
      %870 = vmatprep.subr.mxu0 0.0
      %871 = vmatpush1.xpose.msra.mxu0 0.0
      %872 = vmatprep.subr.mxu0 0.0
      %873 = vmatpush1.xpose.msra.mxu0 0.0
      %874 = vmatprep.subr.mxu0 0.0
      %875 = vmatpush1.xpose.msra.mxu0 0.0
      %876 = vmatprep.subr.mxu0 0.0
      %877 = vmatpush1.xpose.msra.mxu0 0.0
      %878 = vmatprep.subr.mxu0 0.0
      %879 = vmatpush1.xpose.msra.mxu0 0.0
      %880 = vmatprep.subr.mxu0 0.0
      %881 = vmatpush1.xpose.msra.mxu0 0.0
      %882 = vmatprep.subr.mxu0 0.0
      %883 = vmatpush1.xpose.msra.mxu0 0.0
      %884 = vmatprep.subr.mxu0 0.0
      %885 = vmatpush1.xpose.msra.mxu0 0.0
      %886 = vmatprep.subr.mxu0 0.0
      %887 = vmatpush1.xpose.msra.mxu0 0.0
      %888 = vmatprep.subr.mxu0 0.0
      %889 = vmatpush1.xpose.msra.mxu0 0.0
      %890 = vmatprep.subr.mxu0 0.0
      %891 = vmatpush1.xpose.msra.mxu0 0.0
      %892 = vmatprep.subr.mxu0 0.0
      %893 = vmatpush1.xpose.msra.mxu0 0.0
      %894 = vmatprep.subr.mxu0 0.0
      %895 = vmatpush1.xpose.msra.mxu0 0.0
      %896 = vmatprep.subr.mxu0 0.0
      %897 = vmatpush1.xpose.msra.mxu0 0.0
      %898 = vmatprep.subr.mxu0 0.0
      %899 = vmatpush1.xpose.msra.mxu0 0.0
      %900 = vmatprep.subr.mxu0 0.0
      %901 = vmatpush1.xpose.msra.mxu0 0.0
      %902 = vmatprep.subr.mxu0 0.0
      %903 = vmatpush1.xpose.msra.mxu0 0.0
      %904 = vmatprep.mubr.f32.mxu0 0.0
      %905 = vmatmul.mubr.f32.gmra.mrb[0].mxu0 %v836
      %v906 = vpop.f32.mrb[0].mxu0
      %v907 = vadd.f32 %v829, %v906
      %v908 = vpop.f32.mrb[0].mxu0
      %909 = vdwg.mxu0
      %v910 = vsel %vm834, %v907, -inf
      %911 = vmax.xlane.f32.xlu0 %v910
      %v912 = vpop.xlane.xlu0 %911
      %v913 = vsub.f32 %v907, %v912
      %v914 = vmul.f32 %v913, 1.442695
      %v915 = vpow.pop %v914
      %v916 = vsel %vm834, %v915, 0.0
      %917 = vadd.xlane.f32.xlu0 %v916
      %v918 = vpop.xlane.xlu0 %917
      %v919 = vrcp.pop %v918
      %v920 = vmul.f32 %v915, %v919
      %921 = vrot.lane.b32.xlu0 %v814, 64
      %v922 = vpop.permute.xlu0 %921
      %v925 = vsel %vm834, %v920, 0
      %927 = vmatprep.subr.mxu0 0.0
      %928 = vmatpush1.msra.mxu0 %v922
      %929 = vmatprep.subr.mxu0 0.0
      %930 = vmatpush1.msra.mxu0 0.0
      %931 = vmatprep.subr.mxu0 0.0
      %932 = vmatpush1.msra.mxu0 0.0
      %933 = vmatprep.subr.mxu0 0.0
      %934 = vmatpush1.msra.mxu0 0.0
      %935 = vmatprep.subr.mxu0 0.0
      %936 = vmatpush1.msra.mxu0 0.0
      %937 = vmatprep.subr.mxu0 0.0
      %938 = vmatpush1.msra.mxu0 0.0
      %939 = vmatprep.subr.mxu0 0.0
      %940 = vmatpush1.msra.mxu0 0.0
      %941 = vmatprep.subr.mxu0 0.0
      %942 = vmatpush1.msra.mxu0 0.0
      %943 = vmatprep.subr.mxu0 0.0
      %944 = vmatpush1.msra.mxu0 0.0
      %945 = vmatprep.subr.mxu0 0.0
      %946 = vmatpush1.msra.mxu0 0.0
      %947 = vmatprep.subr.mxu0 0.0
      %948 = vmatpush1.msra.mxu0 0.0
      %949 = vmatprep.subr.mxu0 0.0
      %950 = vmatpush1.msra.mxu0 0.0
      %951 = vmatprep.subr.mxu0 0.0
      %952 = vmatpush1.msra.mxu0 0.0
      %953 = vmatprep.subr.mxu0 0.0
      %954 = vmatpush1.msra.mxu0 0.0
      %955 = vmatprep.subr.mxu0 0.0
      %956 = vmatpush1.msra.mxu0 0.0
      %957 = vmatprep.subr.mxu0 0.0
      %958 = vmatpush1.msra.mxu0 0.0
      %959 = vmatprep.subr.mxu0 0.0
      %960 = vmatpush1.msra.mxu0 0.0
      %961 = vmatprep.subr.mxu0 0.0
      %962 = vmatpush1.msra.mxu0 0.0
      %963 = vmatprep.subr.mxu0 0.0
      %964 = vmatpush1.msra.mxu0 0.0
      %965 = vmatprep.subr.mxu0 0.0
      %966 = vmatpush1.msra.mxu0 0.0
      %967 = vmatprep.subr.mxu0 0.0
      %968 = vmatpush1.msra.mxu0 0.0
      %969 = vmatprep.subr.mxu0 0.0
      %970 = vmatpush1.msra.mxu0 0.0
      %971 = vmatprep.subr.mxu0 0.0
      %972 = vmatpush1.msra.mxu0 0.0
      %973 = vmatprep.subr.mxu0 0.0
      %974 = vmatpush1.msra.mxu0 0.0
      %975 = vmatprep.subr.mxu0 0.0
      %976 = vmatpush1.msra.mxu0 0.0
      %977 = vmatprep.subr.mxu0 0.0
      %978 = vmatpush1.msra.mxu0 0.0
      %979 = vmatprep.subr.mxu0 0.0
      %980 = vmatpush1.msra.mxu0 0.0
      %981 = vmatprep.subr.mxu0 0.0
      %982 = vmatpush1.msra.mxu0 0.0
      %983 = vmatprep.subr.mxu0 0.0
      %984 = vmatpush1.msra.mxu0 0.0
      %985 = vmatprep.subr.mxu0 0.0
      %986 = vmatpush1.msra.mxu0 0.0
      %987 = vmatprep.subr.mxu0 0.0
      %988 = vmatpush1.msra.mxu0 0.0
      %989 = vmatprep.subr.mxu0 0.0
      %990 = vmatpush1.msra.mxu0 0.0
      %991 = vmatprep.mubr.f32.mxu0 0.0
      %992 = vmatmul.mubr.f32.gmra.mrb[0].mxu0 %v925
      %v993 = vpop.f32.mrb[0].mxu0
      %v994 = vadd.f32 0.0, %v993
      %v995 = vpop.f32.mrb[0].mxu0
      %996 = vdwg.mxu0
      %997 = vrot.lane.b32.xlu0 %v830, 120
      %v998 = vpop.permute.xlu0 %997
      %999 = vrot.lane.b32.xlu0 %v814, 88
      %v1000 = vpop.permute.xlu0 %999
      %v1001 = vsel %vm834, %v998, 0
      %v1003 = vsel %vm834, %v1000, 0
      %1005 = vmatprep.subr.mxu0 0.0
      %1006 = vmatpush1.xpose.msra.mxu0 %v1003
      %1007 = vmatprep.subr.mxu0 0.0
      %1008 = vmatpush1.xpose.msra.mxu0 0.0
      %1009 = vmatprep.subr.mxu0 0.0
      %1010 = vmatpush1.xpose.msra.mxu0 0.0
      %1011 = vmatprep.subr.mxu0 0.0
      %1012 = vmatpush1.xpose.msra.mxu0 0.0
      %1013 = vmatprep.subr.mxu0 0.0
      %1014 = vmatpush1.xpose.msra.mxu0 0.0
      %1015 = vmatprep.subr.mxu0 0.0
      %1016 = vmatpush1.xpose.msra.mxu0 0.0
      %1017 = vmatprep.subr.mxu0 0.0
      %1018 = vmatpush1.xpose.msra.mxu0 0.0
      %1019 = vmatprep.subr.mxu0 0.0
      %1020 = vmatpush1.xpose.msra.mxu0 0.0
      %1021 = vmatprep.subr.mxu0 0.0
      %1022 = vmatpush1.xpose.msra.mxu0 0.0
      %1023 = vmatprep.subr.mxu0 0.0
      %1024 = vmatpush1.xpose.msra.mxu0 0.0
      %1025 = vmatprep.subr.mxu0 0.0
      %1026 = vmatpush1.xpose.msra.mxu0 0.0
      %1027 = vmatprep.subr.mxu0 0.0
      %1028 = vmatpush1.xpose.msra.mxu0 0.0
      %1029 = vmatprep.subr.mxu0 0.0
      %1030 = vmatpush1.xpose.msra.mxu0 0.0
      %1031 = vmatprep.subr.mxu0 0.0
      %1032 = vmatpush1.xpose.msra.mxu0 0.0
      %1033 = vmatprep.subr.mxu0 0.0
      %1034 = vmatpush1.xpose.msra.mxu0 0.0
      %1035 = vmatprep.subr.mxu0 0.0
      %1036 = vmatpush1.xpose.msra.mxu0 0.0
      %1037 = vmatprep.subr.mxu0 0.0
      %1038 = vmatpush1.xpose.msra.mxu0 0.0
      %1039 = vmatprep.subr.mxu0 0.0
      %1040 = vmatpush1.xpose.msra.mxu0 0.0
      %1041 = vmatprep.subr.mxu0 0.0
      %1042 = vmatpush1.xpose.msra.mxu0 0.0
      %1043 = vmatprep.subr.mxu0 0.0
      %1044 = vmatpush1.xpose.msra.mxu0 0.0
      %1045 = vmatprep.subr.mxu0 0.0
      %1046 = vmatpush1.xpose.msra.mxu0 0.0
      %1047 = vmatprep.subr.mxu0 0.0
      %1048 = vmatpush1.xpose.msra.mxu0 0.0
      %1049 = vmatprep.subr.mxu0 0.0
      %1050 = vmatpush1.xpose.msra.mxu0 0.0
      %1051 = vmatprep.subr.mxu0 0.0
      %1052 = vmatpush1.xpose.msra.mxu0 0.0
      %1053 = vmatprep.subr.mxu0 0.0
      %1054 = vmatpush1.xpose.msra.mxu0 0.0
      %1055 = vmatprep.subr.mxu0 0.0
      %1056 = vmatpush1.xpose.msra.mxu0 0.0
      %1057 = vmatprep.subr.mxu0 0.0
      %1058 = vmatpush1.xpose.msra.mxu0 0.0
      %1059 = vmatprep.subr.mxu0 0.0
      %1060 = vmatpush1.xpose.msra.mxu0 0.0
      %1061 = vmatprep.subr.mxu0 0.0
      %1062 = vmatpush1.xpose.msra.mxu0 0.0
      %1063 = vmatprep.subr.mxu0 0.0
      %1064 = vmatpush1.xpose.msra.mxu0 0.0
      %1065 = vmatprep.subr.mxu0 0.0
      %1066 = vmatpush1.xpose.msra.mxu0 0.0
      %1067 = vmatprep.subr.mxu0 0.0
      %1068 = vmatpush1.xpose.msra.mxu0 0.0
      %1069 = vmatprep.mubr.f32.mxu0 0.0
      %1070 = vmatmul.mubr.f32.gmra.mrb[0].mxu0 %v1001
      %v1071 = vpop.f32.mrb[0].mxu0
      %v1072 = vadd.f32 %v829, %v1071
      %v1073 = vpop.f32.mrb[0].mxu0
      %1074 = vdwg.mxu0
      %v1075 = vsel %vm834, %v1072, -inf
      %1076 = vmax.xlane.f32.xlu0 %v1075
      %v1077 = vpop.xlane.xlu0 %1076
      %v1078 = vsub.f32 %v1072, %v1077
      %v1079 = vmul.f32 %v1078, 1.442695
      %v1080 = vpow.pop %v1079
      %v1081 = vsel %vm834, %v1080, 0.0
      %1082 = vadd.xlane.f32.xlu0 %v1081
      %v1083 = vpop.xlane.xlu0 %1082
      %v1084 = vrcp.pop %v1083
      %v1085 = vmul.f32 %v1080, %v1084
      %1086 = vrot.lane.b32.xlu0 %v814, 56
      %v1087 = vpop.permute.xlu0 %1086
      %v1090 = vsel %vm834, %v1085, 0
      %1092 = vmatprep.subr.mxu0 0.0
      %1093 = vmatpush1.msra.mxu0 %v1087
      %1094 = vmatprep.subr.mxu0 0.0
      %1095 = vmatpush1.msra.mxu0 0.0
      %1096 = vmatprep.subr.mxu0 0.0
      %1097 = vmatpush1.msra.mxu0 0.0
      %1098 = vmatprep.subr.mxu0 0.0
      %1099 = vmatpush1.msra.mxu0 0.0
      %1100 = vmatprep.subr.mxu0 0.0
      %1101 = vmatpush1.msra.mxu0 0.0
      %1102 = vmatprep.subr.mxu0 0.0
      %1103 = vmatpush1.msra.mxu0 0.0
      %1104 = vmatprep.subr.mxu0 0.0
      %1105 = vmatpush1.msra.mxu0 0.0
      %1106 = vmatprep.subr.mxu0 0.0
      %1107 = vmatpush1.msra.mxu0 0.0
      %1108 = vmatprep.subr.mxu0 0.0
      %1109 = vmatpush1.msra.mxu0 0.0
      %1110 = vmatprep.subr.mxu0 0.0
      %1111 = vmatpush1.msra.mxu0 0.0
      %1112 = vmatprep.subr.mxu0 0.0
      %1113 = vmatpush1.msra.mxu0 0.0
      %1114 = vmatprep.subr.mxu0 0.0
      %1115 = vmatpush1.msra.mxu0 0.0
      %1116 = vmatprep.subr.mxu0 0.0
      %1117 = vmatpush1.msra.mxu0 0.0
      %1118 = vmatprep.subr.mxu0 0.0
      %1119 = vmatpush1.msra.mxu0 0.0
      %1120 = vmatprep.subr.mxu0 0.0
      %1121 = vmatpush1.msra.mxu0 0.0
      %1122 = vmatprep.subr.mxu0 0.0
      %1123 = vmatpush1.msra.mxu0 0.0
      %1124 = vmatprep.subr.mxu0 0.0
      %1125 = vmatpush1.msra.mxu0 0.0
      %1126 = vmatprep.subr.mxu0 0.0
      %1127 = vmatpush1.msra.mxu0 0.0
      %1128 = vmatprep.subr.mxu0 0.0
      %1129 = vmatpush1.msra.mxu0 0.0
      %1130 = vmatprep.subr.mxu0 0.0
      %1131 = vmatpush1.msra.mxu0 0.0
      %1132 = vmatprep.subr.mxu0 0.0
      %1133 = vmatpush1.msra.mxu0 0.0
      %1134 = vmatprep.subr.mxu0 0.0
      %1135 = vmatpush1.msra.mxu0 0.0
      %1136 = vmatprep.subr.mxu0 0.0
      %1137 = vmatpush1.msra.mxu0 0.0
      %1138 = vmatprep.subr.mxu0 0.0
      %1139 = vmatpush1.msra.mxu0 0.0
      %1140 = vmatprep.subr.mxu0 0.0
      %1141 = vmatpush1.msra.mxu0 0.0
      %1142 = vmatprep.subr.mxu0 0.0
      %1143 = vmatpush1.msra.mxu0 0.0
      %1144 = vmatprep.subr.mxu0 0.0
      %1145 = vmatpush1.msra.mxu0 0.0
      %1146 = vmatprep.subr.mxu0 0.0
      %1147 = vmatpush1.msra.mxu0 0.0
      %1148 = vmatprep.subr.mxu0 0.0
      %1149 = vmatpush1.msra.mxu0 0.0
      %1150 = vmatprep.subr.mxu0 0.0
      %1151 = vmatpush1.msra.mxu0 0.0
      %1152 = vmatprep.subr.mxu0 0.0
      %1153 = vmatpush1.msra.mxu0 0.0
      %1154 = vmatprep.subr.mxu0 0.0
      %1155 = vmatpush1.msra.mxu0 0.0
      %1156 = vmatprep.mubr.f32.mxu0 0.0
      %1157 = vmatmul.mubr.f32.gmra.mrb[0].mxu0 %v1090
      %v1158 = vpop.f32.mrb[0].mxu0
      %v1159 = vadd.f32 0.0, %v1158
      %v1160 = vpop.f32.mrb[0].mxu0
      %1161 = vdwg.mxu0
      %v1163 = vsel %vm834, %v1159, 0
      %1165 = vmatprep.subr.mxu0 0.0
      %1166 = vmatpush1.msra.mxu0 %v732
      %1167 = vmatprep.subr.mxu0 0.0
      %1168 = vmatpush1.msra.mxu0 0.0
      %1169 = vmatprep.subr.mxu0 0.0
      %1170 = vmatpush1.msra.mxu0 0.0
      %1171 = vmatprep.subr.mxu0 0.0
      %1172 = vmatpush1.msra.mxu0 0.0
      %1173 = vmatprep.subr.mxu0 0.0
      %1174 = vmatpush1.msra.mxu0 0.0
      %1175 = vmatprep.subr.mxu0 0.0
      %1176 = vmatpush1.msra.mxu0 0.0
      %1177 = vmatprep.subr.mxu0 0.0
      %1178 = vmatpush1.msra.mxu0 0.0
      %1179 = vmatprep.subr.mxu0 0.0
      %1180 = vmatpush1.msra.mxu0 0.0
      %1181 = vmatprep.subr.mxu0 0.0
      %1182 = vmatpush1.msra.mxu0 0.0
      %1183 = vmatprep.subr.mxu0 0.0
      %1184 = vmatpush1.msra.mxu0 0.0
      %1185 = vmatprep.subr.mxu0 0.0
      %1186 = vmatpush1.msra.mxu0 0.0
      %1187 = vmatprep.subr.mxu0 0.0
      %1188 = vmatpush1.msra.mxu0 0.0
      %1189 = vmatprep.subr.mxu0 0.0
      %1190 = vmatpush1.msra.mxu0 0.0
      %1191 = vmatprep.subr.mxu0 0.0
      %1192 = vmatpush1.msra.mxu0 0.0
      %1193 = vmatprep.subr.mxu0 0.0
      %1194 = vmatpush1.msra.mxu0 0.0
      %1195 = vmatprep.subr.mxu0 0.0
      %1196 = vmatpush1.msra.mxu0 0.0
      %1197 = vmatprep.subr.mxu0 0.0
      %1198 = vmatpush1.msra.mxu0 0.0
      %1199 = vmatprep.subr.mxu0 0.0
      %1200 = vmatpush1.msra.mxu0 0.0
      %1201 = vmatprep.subr.mxu0 0.0
      %1202 = vmatpush1.msra.mxu0 0.0
      %1203 = vmatprep.subr.mxu0 0.0
      %1204 = vmatpush1.msra.mxu0 0.0
      %1205 = vmatprep.subr.mxu0 0.0
      %1206 = vmatpush1.msra.mxu0 0.0
      %1207 = vmatprep.subr.mxu0 0.0
      %1208 = vmatpush1.msra.mxu0 0.0
      %1209 = vmatprep.subr.mxu0 0.0
      %1210 = vmatpush1.msra.mxu0 0.0
      %1211 = vmatprep.subr.mxu0 0.0
      %1212 = vmatpush1.msra.mxu0 0.0
      %1213 = vmatprep.subr.mxu0 0.0
      %1214 = vmatpush1.msra.mxu0 0.0
      %1215 = vmatprep.subr.mxu0 0.0
      %1216 = vmatpush1.msra.mxu0 0.0
      %1217 = vmatprep.subr.mxu0 0.0
      %1218 = vmatpush1.msra.mxu0 0.0
      %1219 = vmatprep.subr.mxu0 0.0
      %1220 = vmatpush1.msra.mxu0 0.0
      %1221 = vmatprep.subr.mxu0 0.0
      %1222 = vmatpush1.msra.mxu0 0.0
      %1223 = vmatprep.subr.mxu0 0.0
      %1224 = vmatpush1.msra.mxu0 0.0
      %1225 = vmatprep.subr.mxu0 0.0
      %1226 = vmatpush1.msra.mxu0 0.0
      %1227 = vmatprep.subr.mxu0 0.0
      %1228 = vmatpush1.msra.mxu0 0.0
      %1229 = vmatprep.mubr.f32.mxu0 0.0
      %1230 = vmatmul.mubr.f32.gmra.mrb[0].mxu0 %v1163
      %v1231 = vpop.f32.mrb[0].mxu0
      %v1232 = vadd.f32 0.0, %v1231
      %v1233 = vpop.f32.mrb[0].mxu0
      %1234 = vdwg.mxu0
      %v1236 = vsel %vm834, %v994, 0
      %1238 = vmatprep.subr.mxu0 0.0
      %1239 = vmatpush1.msra.mxu0 %v731
      %1240 = vmatprep.subr.mxu0 0.0
      %1241 = vmatpush1.msra.mxu0 0.0
      %1242 = vmatprep.subr.mxu0 0.0
      %1243 = vmatpush1.msra.mxu0 0.0
      %1244 = vmatprep.subr.mxu0 0.0
      %1245 = vmatpush1.msra.mxu0 0.0
      %1246 = vmatprep.subr.mxu0 0.0
      %1247 = vmatpush1.msra.mxu0 0.0
      %1248 = vmatprep.subr.mxu0 0.0
      %1249 = vmatpush1.msra.mxu0 0.0
      %1250 = vmatprep.subr.mxu0 0.0
      %1251 = vmatpush1.msra.mxu0 0.0
      %1252 = vmatprep.subr.mxu0 0.0
      %1253 = vmatpush1.msra.mxu0 0.0
      %1254 = vmatprep.subr.mxu0 0.0
      %1255 = vmatpush1.msra.mxu0 0.0
      %1256 = vmatprep.subr.mxu0 0.0
      %1257 = vmatpush1.msra.mxu0 0.0
      %1258 = vmatprep.subr.mxu0 0.0
      %1259 = vmatpush1.msra.mxu0 0.0
      %1260 = vmatprep.subr.mxu0 0.0
      %1261 = vmatpush1.msra.mxu0 0.0
      %1262 = vmatprep.subr.mxu0 0.0
      %1263 = vmatpush1.msra.mxu0 0.0
      %1264 = vmatprep.subr.mxu0 0.0
      %1265 = vmatpush1.msra.mxu0 0.0
      %1266 = vmatprep.subr.mxu0 0.0
      %1267 = vmatpush1.msra.mxu0 0.0
      %1268 = vmatprep.subr.mxu0 0.0
      %1269 = vmatpush1.msra.mxu0 0.0
      %1270 = vmatprep.subr.mxu0 0.0
      %1271 = vmatpush1.msra.mxu0 0.0
      %1272 = vmatprep.subr.mxu0 0.0
      %1273 = vmatpush1.msra.mxu0 0.0
      %1274 = vmatprep.subr.mxu0 0.0
      %1275 = vmatpush1.msra.mxu0 0.0
      %1276 = vmatprep.subr.mxu0 0.0
      %1277 = vmatpush1.msra.mxu0 0.0
      %1278 = vmatprep.subr.mxu0 0.0
      %1279 = vmatpush1.msra.mxu0 0.0
      %1280 = vmatprep.subr.mxu0 0.0
      %1281 = vmatpush1.msra.mxu0 0.0
      %1282 = vmatprep.subr.mxu0 0.0
      %1283 = vmatpush1.msra.mxu0 0.0
      %1284 = vmatprep.subr.mxu0 0.0
      %1285 = vmatpush1.msra.mxu0 0.0
      %1286 = vmatprep.subr.mxu0 0.0
      %1287 = vmatpush1.msra.mxu0 0.0
      %1288 = vmatprep.subr.mxu0 0.0
      %1289 = vmatpush1.msra.mxu0 0.0
      %1290 = vmatprep.subr.mxu0 0.0
      %1291 = vmatpush1.msra.mxu0 0.0
      %1292 = vmatprep.subr.mxu0 0.0
      %1293 = vmatpush1.msra.mxu0 0.0
      %1294 = vmatprep.subr.mxu0 0.0
      %1295 = vmatpush1.msra.mxu0 0.0
      %1296 = vmatprep.subr.mxu0 0.0
      %1297 = vmatpush1.msra.mxu0 0.0
      %1298 = vmatprep.subr.mxu0 0.0
      %1299 = vmatpush1.msra.mxu0 0.0
      %1300 = vmatprep.subr.mxu0 0.0
      %1301 = vmatpush1.msra.mxu0 0.0
      %1302 = vmatprep.mubr.f32.mxu0 0.0
      %1303 = vmatmul.mubr.f32.gmra.mrb[0].mxu0 %v1236
      %v1304 = vpop.f32.mrb[0].mxu0
      %v1305 = vadd.f32 %v1232, %v1304
      %v1306 = vpop.f32.mrb[0].mxu0
      %1307 = vdwg.mxu0
      %1308 = vrot.lane.b32.xlu0 %v830, 112
      %v1309 = vpop.permute.xlu0 %1308
      %1310 = vrot.lane.b32.xlu0 %v814, 80
      %v1311 = vpop.permute.xlu0 %1310
      %v1312 = vsel %vm834, %v1309, 0
      %v1314 = vsel %vm834, %v1311, 0
      %1316 = vmatprep.subr.mxu0 0.0
      %1317 = vmatpush1.xpose.msra.mxu0 %v1314
      %1318 = vmatprep.subr.mxu0 0.0
      %1319 = vmatpush1.xpose.msra.mxu0 0.0
      %1320 = vmatprep.subr.mxu0 0.0
      %1321 = vmatpush1.xpose.msra.mxu0 0.0
      %1322 = vmatprep.subr.mxu0 0.0
      %1323 = vmatpush1.xpose.msra.mxu0 0.0
      %1324 = vmatprep.subr.mxu0 0.0
      %1325 = vmatpush1.xpose.msra.mxu0 0.0
      %1326 = vmatprep.subr.mxu0 0.0
      %1327 = vmatpush1.xpose.msra.mxu0 0.0
      %1328 = vmatprep.subr.mxu0 0.0
      %1329 = vmatpush1.xpose.msra.mxu0 0.0
      %1330 = vmatprep.subr.mxu0 0.0
      %1331 = vmatpush1.xpose.msra.mxu0 0.0
      %1332 = vmatprep.subr.mxu0 0.0
      %1333 = vmatpush1.xpose.msra.mxu0 0.0
      %1334 = vmatprep.subr.mxu0 0.0
      %1335 = vmatpush1.xpose.msra.mxu0 0.0
      %1336 = vmatprep.subr.mxu0 0.0
      %1337 = vmatpush1.xpose.msra.mxu0 0.0
      %1338 = vmatprep.subr.mxu0 0.0
      %1339 = vmatpush1.xpose.msra.mxu0 0.0
      %1340 = vmatprep.subr.mxu0 0.0
      %1341 = vmatpush1.xpose.msra.mxu0 0.0
      %1342 = vmatprep.subr.mxu0 0.0
      %1343 = vmatpush1.xpose.msra.mxu0 0.0
      %1344 = vmatprep.subr.mxu0 0.0
      %1345 = vmatpush1.xpose.msra.mxu0 0.0
      %1346 = vmatprep.subr.mxu0 0.0
      %1347 = vmatpush1.xpose.msra.mxu0 0.0
      %1348 = vmatprep.subr.mxu0 0.0
      %1349 = vmatpush1.xpose.msra.mxu0 0.0
      %1350 = vmatprep.subr.mxu0 0.0
      %1351 = vmatpush1.xpose.msra.mxu0 0.0
      %1352 = vmatprep.subr.mxu0 0.0
      %1353 = vmatpush1.xpose.msra.mxu0 0.0
      %1354 = vmatprep.subr.mxu0 0.0
      %1355 = vmatpush1.xpose.msra.mxu0 0.0
      %1356 = vmatprep.subr.mxu0 0.0
      %1357 = vmatpush1.xpose.msra.mxu0 0.0
      %1358 = vmatprep.subr.mxu0 0.0
      %1359 = vmatpush1.xpose.msra.mxu0 0.0
      %1360 = vmatprep.subr.mxu0 0.0
      %1361 = vmatpush1.xpose.msra.mxu0 0.0
      %1362 = vmatprep.subr.mxu0 0.0
      %1363 = vmatpush1.xpose.msra.mxu0 0.0
      %1364 = vmatprep.subr.mxu0 0.0
      %1365 = vmatpush1.xpose.msra.mxu0 0.0
      %1366 = vmatprep.subr.mxu0 0.0
      %1367 = vmatpush1.xpose.msra.mxu0 0.0
      %1368 = vmatprep.subr.mxu0 0.0
      %1369 = vmatpush1.xpose.msra.mxu0 0.0
      %1370 = vmatprep.subr.mxu0 0.0
      %1371 = vmatpush1.xpose.msra.mxu0 0.0
      %1372 = vmatprep.subr.mxu0 0.0
      %1373 = vmatpush1.xpose.msra.mxu0 0.0
      %1374 = vmatprep.subr.mxu0 0.0
      %1375 = vmatpush1.xpose.msra.mxu0 0.0
      %1376 = vmatprep.subr.mxu0 0.0
      %1377 = vmatpush1.xpose.msra.mxu0 0.0
      %1378 = vmatprep.subr.mxu0 0.0
      %1379 = vmatpush1.xpose.msra.mxu0 0.0
      %1380 = vmatprep.mubr.f32.mxu0 0.0
      %1381 = vmatmul.mubr.f32.gmra.mrb[0].mxu0 %v1312
      %v1382 = vpop.f32.mrb[0].mxu0
      %v1383 = vadd.f32 %v829, %v1382
      %v1384 = vpop.f32.mrb[0].mxu0
      %1385 = vdwg.mxu0
      %v1386 = vsel %vm834, %v1383, -inf
      %1387 = vmax.xlane.f32.xlu0 %v1386
      %v1388 = vpop.xlane.xlu0 %1387
      %v1389 = vsub.f32 %v1383, %v1388
      %v1390 = vmul.f32 %v1389, 1.442695
      %v1391 = vpow.pop %v1390
      %v1392 = vsel %vm834, %v1391, 0.0
      %1393 = vadd.xlane.f32.xlu0 %v1392
      %v1394 = vpop.xlane.xlu0 %1393
      %v1395 = vrcp.pop %v1394
      %v1396 = vmul.f32 %v1391, %v1395
      %1397 = vrot.lane.b32.xlu0 %v814, 48
      %v1398 = vpop.permute.xlu0 %1397
      %v1401 = vsel %vm834, %v1396, 0
      %1403 = vmatprep.subr.mxu0 0.0
      %1404 = vmatpush1.msra.mxu0 %v1398
      %1405 = vmatprep.subr.mxu0 0.0
      %1406 = vmatpush1.msra.mxu0 0.0
      %1407 = vmatprep.subr.mxu0 0.0
      %1408 = vmatpush1.msra.mxu0 0.0
      %1409 = vmatprep.subr.mxu0 0.0
      %1410 = vmatpush1.msra.mxu0 0.0
      %1411 = vmatprep.subr.mxu0 0.0
      %1412 = vmatpush1.msra.mxu0 0.0
      %1413 = vmatprep.subr.mxu0 0.0
      %1414 = vmatpush1.msra.mxu0 0.0
      %1415 = vmatprep.subr.mxu0 0.0
      %1416 = vmatpush1.msra.mxu0 0.0
      %1417 = vmatprep.subr.mxu0 0.0
      %1418 = vmatpush1.msra.mxu0 0.0
      %1419 = vmatprep.subr.mxu0 0.0
      %1420 = vmatpush1.msra.mxu0 0.0
      %1421 = vmatprep.subr.mxu0 0.0
      %1422 = vmatpush1.msra.mxu0 0.0
      %1423 = vmatprep.subr.mxu0 0.0
      %1424 = vmatpush1.msra.mxu0 0.0
      %1425 = vmatprep.subr.mxu0 0.0
      %1426 = vmatpush1.msra.mxu0 0.0
      %1427 = vmatprep.subr.mxu0 0.0
      %1428 = vmatpush1.msra.mxu0 0.0
      %1429 = vmatprep.subr.mxu0 0.0
      %1430 = vmatpush1.msra.mxu0 0.0
      %1431 = vmatprep.subr.mxu0 0.0
      %1432 = vmatpush1.msra.mxu0 0.0
      %1433 = vmatprep.subr.mxu0 0.0
      %1434 = vmatpush1.msra.mxu0 0.0
      %1435 = vmatprep.subr.mxu0 0.0
      %1436 = vmatpush1.msra.mxu0 0.0
      %1437 = vmatprep.subr.mxu0 0.0
      %1438 = vmatpush1.msra.mxu0 0.0
      %1439 = vmatprep.subr.mxu0 0.0
      %1440 = vmatpush1.msra.mxu0 0.0
      %1441 = vmatprep.subr.mxu0 0.0
      %1442 = vmatpush1.msra.mxu0 0.0
      %1443 = vmatprep.subr.mxu0 0.0
      %1444 = vmatpush1.msra.mxu0 0.0
      %1445 = vmatprep.subr.mxu0 0.0
      %1446 = vmatpush1.msra.mxu0 0.0
      %1447 = vmatprep.subr.mxu0 0.0
      %1448 = vmatpush1.msra.mxu0 0.0
      %1449 = vmatprep.subr.mxu0 0.0
      %1450 = vmatpush1.msra.mxu0 0.0
      %1451 = vmatprep.subr.mxu0 0.0
      %1452 = vmatpush1.msra.mxu0 0.0
      %1453 = vmatprep.subr.mxu0 0.0
      %1454 = vmatpush1.msra.mxu0 0.0
      %1455 = vmatprep.subr.mxu0 0.0
      %1456 = vmatpush1.msra.mxu0 0.0
      %1457 = vmatprep.subr.mxu0 0.0
      %1458 = vmatpush1.msra.mxu0 0.0
      %1459 = vmatprep.subr.mxu0 0.0
      %1460 = vmatpush1.msra.mxu0 0.0
      %1461 = vmatprep.subr.mxu0 0.0
      %1462 = vmatpush1.msra.mxu0 0.0
      %1463 = vmatprep.subr.mxu0 0.0
      %1464 = vmatpush1.msra.mxu0 0.0
      %1465 = vmatprep.subr.mxu0 0.0
      %1466 = vmatpush1.msra.mxu0 0.0
      %1467 = vmatprep.mubr.f32.mxu0 0.0
      %1468 = vmatmul.mubr.f32.gmra.mrb[0].mxu0 %v1401
      %v1469 = vpop.f32.mrb[0].mxu0
      %v1470 = vadd.f32 0.0, %v1469
      %v1471 = vpop.f32.mrb[0].mxu0
      %1472 = vdwg.mxu0
      %v1474 = vsel %vm834, %v1470, 0
      %1476 = vmatprep.subr.mxu0 0.0
      %1477 = vmatpush1.msra.mxu0 %v733
      %1478 = vmatprep.subr.mxu0 0.0
      %1479 = vmatpush1.msra.mxu0 0.0
      %1480 = vmatprep.subr.mxu0 0.0
      %1481 = vmatpush1.msra.mxu0 0.0
      %1482 = vmatprep.subr.mxu0 0.0
      %1483 = vmatpush1.msra.mxu0 0.0
      %1484 = vmatprep.subr.mxu0 0.0
      %1485 = vmatpush1.msra.mxu0 0.0
      %1486 = vmatprep.subr.mxu0 0.0
      %1487 = vmatpush1.msra.mxu0 0.0
      %1488 = vmatprep.subr.mxu0 0.0
      %1489 = vmatpush1.msra.mxu0 0.0
      %1490 = vmatprep.subr.mxu0 0.0
      %1491 = vmatpush1.msra.mxu0 0.0
      %1492 = vmatprep.subr.mxu0 0.0
      %1493 = vmatpush1.msra.mxu0 0.0
      %1494 = vmatprep.subr.mxu0 0.0
      %1495 = vmatpush1.msra.mxu0 0.0
      %1496 = vmatprep.subr.mxu0 0.0
      %1497 = vmatpush1.msra.mxu0 0.0
      %1498 = vmatprep.subr.mxu0 0.0
      %1499 = vmatpush1.msra.mxu0 0.0
      %1500 = vmatprep.subr.mxu0 0.0
      %1501 = vmatpush1.msra.mxu0 0.0
      %1502 = vmatprep.subr.mxu0 0.0
      %1503 = vmatpush1.msra.mxu0 0.0
      %1504 = vmatprep.subr.mxu0 0.0
      %1505 = vmatpush1.msra.mxu0 0.0
      %1506 = vmatprep.subr.mxu0 0.0
      %1507 = vmatpush1.msra.mxu0 0.0
      %1508 = vmatprep.subr.mxu0 0.0
      %1509 = vmatpush1.msra.mxu0 0.0
      %1510 = vmatprep.subr.mxu0 0.0
      %1511 = vmatpush1.msra.mxu0 0.0
      %1512 = vmatprep.subr.mxu0 0.0
      %1513 = vmatpush1.msra.mxu0 0.0
      %1514 = vmatprep.subr.mxu0 0.0
      %1515 = vmatpush1.msra.mxu0 0.0
      %1516 = vmatprep.subr.mxu0 0.0
      %1517 = vmatpush1.msra.mxu0 0.0
      %1518 = vmatprep.subr.mxu0 0.0
      %1519 = vmatpush1.msra.mxu0 0.0
      %1520 = vmatprep.subr.mxu0 0.0
      %1521 = vmatpush1.msra.mxu0 0.0
      %1522 = vmatprep.subr.mxu0 0.0
      %1523 = vmatpush1.msra.mxu0 0.0
      %1524 = vmatprep.subr.mxu0 0.0
      %1525 = vmatpush1.msra.mxu0 0.0
      %1526 = vmatprep.subr.mxu0 0.0
      %1527 = vmatpush1.msra.mxu0 0.0
      %1528 = vmatprep.subr.mxu0 0.0
      %1529 = vmatpush1.msra.mxu0 0.0
      %1530 = vmatprep.subr.mxu0 0.0
      %1531 = vmatpush1.msra.mxu0 0.0
      %1532 = vmatprep.subr.mxu0 0.0
      %1533 = vmatpush1.msra.mxu0 0.0
      %1534 = vmatprep.subr.mxu0 0.0
      %1535 = vmatpush1.msra.mxu0 0.0
      %1536 = vmatprep.subr.mxu0 0.0
      %1537 = vmatpush1.msra.mxu0 0.0
      %1538 = vmatprep.subr.mxu0 0.0
      %1539 = vmatpush1.msra.mxu0 0.0
      %1540 = vmatprep.mubr.f32.mxu0 0.0
      %1541 = vmatmul.mubr.f32.gmra.mrb[0].mxu0 %v1474
      %v1542 = vpop.f32.mrb[0].mxu0
      %v1543 = vadd.f32 0.0, %v1542
      %v1544 = vpop.f32.mrb[0].mxu0
      %1545 = vdwg.mxu0
      %v1546 = vadd.f32 %v1305, %v1543
      %1547 = vrot.lane.b32.xlu0 %v830, 104
      %v1548 = vpop.permute.xlu0 %1547
      %1549 = vrot.lane.b32.xlu0 %v814, 72
      %v1550 = vpop.permute.xlu0 %1549
      %v1551 = vsel %vm834, %v1548, 0
      %v1553 = vsel %vm834, %v1550, 0
      %1555 = vmatprep.subr.mxu0 0.0
      %1556 = vmatpush1.xpose.msra.mxu0 %v1553
      %1557 = vmatprep.subr.mxu0 0.0
      %1558 = vmatpush1.xpose.msra.mxu0 0.0
      %1559 = vmatprep.subr.mxu0 0.0
      %1560 = vmatpush1.xpose.msra.mxu0 0.0
      %1561 = vmatprep.subr.mxu0 0.0
      %1562 = vmatpush1.xpose.msra.mxu0 0.0
      %1563 = vmatprep.subr.mxu0 0.0
      %1564 = vmatpush1.xpose.msra.mxu0 0.0
      %1565 = vmatprep.subr.mxu0 0.0
      %1566 = vmatpush1.xpose.msra.mxu0 0.0
      %1567 = vmatprep.subr.mxu0 0.0
      %1568 = vmatpush1.xpose.msra.mxu0 0.0
      %1569 = vmatprep.subr.mxu0 0.0
      %1570 = vmatpush1.xpose.msra.mxu0 0.0
      %1571 = vmatprep.subr.mxu0 0.0
      %1572 = vmatpush1.xpose.msra.mxu0 0.0
      %1573 = vmatprep.subr.mxu0 0.0
      %1574 = vmatpush1.xpose.msra.mxu0 0.0
      %1575 = vmatprep.subr.mxu0 0.0
      %1576 = vmatpush1.xpose.msra.mxu0 0.0
      %1577 = vmatprep.subr.mxu0 0.0
      %1578 = vmatpush1.xpose.msra.mxu0 0.0
      %1579 = vmatprep.subr.mxu0 0.0
      %1580 = vmatpush1.xpose.msra.mxu0 0.0
      %1581 = vmatprep.subr.mxu0 0.0
      %1582 = vmatpush1.xpose.msra.mxu0 0.0
      %1583 = vmatprep.subr.mxu0 0.0
      %1584 = vmatpush1.xpose.msra.mxu0 0.0
      %1585 = vmatprep.subr.mxu0 0.0
      %1586 = vmatpush1.xpose.msra.mxu0 0.0
      %1587 = vmatprep.subr.mxu0 0.0
      %1588 = vmatpush1.xpose.msra.mxu0 0.0
      %1589 = vmatprep.subr.mxu0 0.0
      %1590 = vmatpush1.xpose.msra.mxu0 0.0
      %1591 = vmatprep.subr.mxu0 0.0
      %1592 = vmatpush1.xpose.msra.mxu0 0.0
      %1593 = vmatprep.subr.mxu0 0.0
      %1594 = vmatpush1.xpose.msra.mxu0 0.0
      %1595 = vmatprep.subr.mxu0 0.0
      %1596 = vmatpush1.xpose.msra.mxu0 0.0
      %1597 = vmatprep.subr.mxu0 0.0
      %1598 = vmatpush1.xpose.msra.mxu0 0.0
      %1599 = vmatprep.subr.mxu0 0.0
      %1600 = vmatpush1.xpose.msra.mxu0 0.0
      %1601 = vmatprep.subr.mxu0 0.0
      %1602 = vmatpush1.xpose.msra.mxu0 0.0
      %1603 = vmatprep.subr.mxu0 0.0
      %1604 = vmatpush1.xpose.msra.mxu0 0.0
      %1605 = vmatprep.subr.mxu0 0.0
      %1606 = vmatpush1.xpose.msra.mxu0 0.0
      %1607 = vmatprep.subr.mxu0 0.0
      %1608 = vmatpush1.xpose.msra.mxu0 0.0
      %1609 = vmatprep.subr.mxu0 0.0
      %1610 = vmatpush1.xpose.msra.mxu0 0.0
      %1611 = vmatprep.subr.mxu0 0.0
      %1612 = vmatpush1.xpose.msra.mxu0 0.0
      %1613 = vmatprep.subr.mxu0 0.0
      %1614 = vmatpush1.xpose.msra.mxu0 0.0
      %1615 = vmatprep.subr.mxu0 0.0
      %1616 = vmatpush1.xpose.msra.mxu0 0.0
      %1617 = vmatprep.subr.mxu0 0.0
      %1618 = vmatpush1.xpose.msra.mxu0 0.0
      %1619 = vmatprep.mubr.f32.mxu0 0.0
      %1620 = vmatmul.mubr.f32.gmra.mrb[0].mxu0 %v1551
      %v1621 = vpop.f32.mrb[0].mxu0
      %v1622 = vadd.f32 %v829, %v1621
      %v1623 = vpop.f32.mrb[0].mxu0
      %1624 = vdwg.mxu0
      %v1625 = vsel %vm834, %v1622, -inf
      %1626 = vmax.xlane.f32.xlu0 %v1625
      %v1627 = vpop.xlane.xlu0 %1626
      %v1628 = vsub.f32 %v1622, %v1627
      %v1629 = vmul.f32 %v1628, 1.442695
      %v1630 = vpow.pop %v1629
      %v1631 = vsel %vm834, %v1630, 0.0
      %1632 = vadd.xlane.f32.xlu0 %v1631
      %v1633 = vpop.xlane.xlu0 %1632
      %v1634 = vrcp.pop %v1633
      %v1635 = vmul.f32 %v1630, %v1634
      %1636 = vrot.lane.b32.xlu0 %v814, 40
      %v1637 = vpop.permute.xlu0 %1636
      %v1640 = vsel %vm834, %v1635, 0
      %1642 = vmatprep.subr.mxu0 0.0
      %1643 = vmatpush1.msra.mxu0 %v1637
      %1644 = vmatprep.subr.mxu0 0.0
      %1645 = vmatpush1.msra.mxu0 0.0
      %1646 = vmatprep.subr.mxu0 0.0
      %1647 = vmatpush1.msra.mxu0 0.0
      %1648 = vmatprep.subr.mxu0 0.0
      %1649 = vmatpush1.msra.mxu0 0.0
      %1650 = vmatprep.subr.mxu0 0.0
      %1651 = vmatpush1.msra.mxu0 0.0
      %1652 = vmatprep.subr.mxu0 0.0
      %1653 = vmatpush1.msra.mxu0 0.0
      %1654 = vmatprep.subr.mxu0 0.0
      %1655 = vmatpush1.msra.mxu0 0.0
      %1656 = vmatprep.subr.mxu0 0.0
      %1657 = vmatpush1.msra.mxu0 0.0
      %1658 = vmatprep.subr.mxu0 0.0
      %1659 = vmatpush1.msra.mxu0 0.0
      %1660 = vmatprep.subr.mxu0 0.0
      %1661 = vmatpush1.msra.mxu0 0.0
      %1662 = vmatprep.subr.mxu0 0.0
      %1663 = vmatpush1.msra.mxu0 0.0
      %1664 = vmatprep.subr.mxu0 0.0
      %1665 = vmatpush1.msra.mxu0 0.0
      %1666 = vmatprep.subr.mxu0 0.0
      %1667 = vmatpush1.msra.mxu0 0.0
      %1668 = vmatprep.subr.mxu0 0.0
      %1669 = vmatpush1.msra.mxu0 0.0
      %1670 = vmatprep.subr.mxu0 0.0
      %1671 = vmatpush1.msra.mxu0 0.0
      %1672 = vmatprep.subr.mxu0 0.0
      %1673 = vmatpush1.msra.mxu0 0.0
      %1674 = vmatprep.subr.mxu0 0.0
      %1675 = vmatpush1.msra.mxu0 0.0
      %1676 = vmatprep.subr.mxu0 0.0
      %1677 = vmatpush1.msra.mxu0 0.0
      %1678 = vmatprep.subr.mxu0 0.0
      %1679 = vmatpush1.msra.mxu0 0.0
      %1680 = vmatprep.subr.mxu0 0.0
      %1681 = vmatpush1.msra.mxu0 0.0
      %1682 = vmatprep.subr.mxu0 0.0
      %1683 = vmatpush1.msra.mxu0 0.0
      %1684 = vmatprep.subr.mxu0 0.0
      %1685 = vmatpush1.msra.mxu0 0.0
      %1686 = vmatprep.subr.mxu0 0.0
      %1687 = vmatpush1.msra.mxu0 0.0
      %1688 = vmatprep.subr.mxu0 0.0
      %1689 = vmatpush1.msra.mxu0 0.0
      %1690 = vmatprep.subr.mxu0 0.0
      %1691 = vmatpush1.msra.mxu0 0.0
      %1692 = vmatprep.subr.mxu0 0.0
      %1693 = vmatpush1.msra.mxu0 0.0
      %1694 = vmatprep.subr.mxu0 0.0
      %1695 = vmatpush1.msra.mxu0 0.0
      %1696 = vmatprep.subr.mxu0 0.0
      %1697 = vmatpush1.msra.mxu0 0.0
      %1698 = vmatprep.subr.mxu0 0.0
      %1699 = vmatpush1.msra.mxu0 0.0
      %1700 = vmatprep.subr.mxu0 0.0
      %1701 = vmatpush1.msra.mxu0 0.0
      %1702 = vmatprep.subr.mxu0 0.0
      %1703 = vmatpush1.msra.mxu0 0.0
      %1704 = vmatprep.subr.mxu0 0.0
      %1705 = vmatpush1.msra.mxu0 0.0
      %1706 = vmatprep.mubr.f32.mxu0 0.0
      %1707 = vmatmul.mubr.f32.gmra.mrb[0].mxu0 %v1640
      %v1708 = vpop.f32.mrb[0].mxu0
      %v1709 = vadd.f32 0.0, %v1708
      %v1710 = vpop.f32.mrb[0].mxu0
      %1711 = vdwg.mxu0
      %v1713 = vsel %vm834, %v1709, 0
      %1715 = vmatprep.subr.mxu0 0.0
      %1716 = vmatpush1.msra.mxu0 %v734
      %1717 = vmatprep.subr.mxu0 0.0
      %1718 = vmatpush1.msra.mxu0 0.0
      %1719 = vmatprep.subr.mxu0 0.0
      %1720 = vmatpush1.msra.mxu0 0.0
      %1721 = vmatprep.subr.mxu0 0.0
      %1722 = vmatpush1.msra.mxu0 0.0
      %1723 = vmatprep.subr.mxu0 0.0
      %1724 = vmatpush1.msra.mxu0 0.0
      %1725 = vmatprep.subr.mxu0 0.0
      %1726 = vmatpush1.msra.mxu0 0.0
      %1727 = vmatprep.subr.mxu0 0.0
      %1728 = vmatpush1.msra.mxu0 0.0
      %1729 = vmatprep.subr.mxu0 0.0
      %1730 = vmatpush1.msra.mxu0 0.0
      %1731 = vmatprep.subr.mxu0 0.0
      %1732 = vmatpush1.msra.mxu0 0.0
      %1733 = vmatprep.subr.mxu0 0.0
      %1734 = vmatpush1.msra.mxu0 0.0
      %1735 = vmatprep.subr.mxu0 0.0
      %1736 = vmatpush1.msra.mxu0 0.0
      %1737 = vmatprep.subr.mxu0 0.0
      %1738 = vmatpush1.msra.mxu0 0.0
      %1739 = vmatprep.subr.mxu0 0.0
      %1740 = vmatpush1.msra.mxu0 0.0
      %1741 = vmatprep.subr.mxu0 0.0
      %1742 = vmatpush1.msra.mxu0 0.0
      %1743 = vmatprep.subr.mxu0 0.0
      %1744 = vmatpush1.msra.mxu0 0.0
      %1745 = vmatprep.subr.mxu0 0.0
      %1746 = vmatpush1.msra.mxu0 0.0
      %1747 = vmatprep.subr.mxu0 0.0
      %1748 = vmatpush1.msra.mxu0 0.0
      %1749 = vmatprep.subr.mxu0 0.0
      %1750 = vmatpush1.msra.mxu0 0.0
      %1751 = vmatprep.subr.mxu0 0.0
      %1752 = vmatpush1.msra.mxu0 0.0
      %1753 = vmatprep.subr.mxu0 0.0
      %1754 = vmatpush1.msra.mxu0 0.0
      %1755 = vmatprep.subr.mxu0 0.0
      %1756 = vmatpush1.msra.mxu0 0.0
      %1757 = vmatprep.subr.mxu0 0.0
      %1758 = vmatpush1.msra.mxu0 0.0
      %1759 = vmatprep.subr.mxu0 0.0
      %1760 = vmatpush1.msra.mxu0 0.0
      %1761 = vmatprep.subr.mxu0 0.0
      %1762 = vmatpush1.msra.mxu0 0.0
      %1763 = vmatprep.subr.mxu0 0.0
      %1764 = vmatpush1.msra.mxu0 0.0
      %1765 = vmatprep.subr.mxu0 0.0
      %1766 = vmatpush1.msra.mxu0 0.0
      %1767 = vmatprep.subr.mxu0 0.0
      %1768 = vmatpush1.msra.mxu0 0.0
      %1769 = vmatprep.subr.mxu0 0.0
      %1770 = vmatpush1.msra.mxu0 0.0
      %1771 = vmatprep.subr.mxu0 0.0
      %1772 = vmatpush1.msra.mxu0 0.0
      %1773 = vmatprep.subr.mxu0 0.0
      %1774 = vmatpush1.msra.mxu0 0.0
      %1775 = vmatprep.subr.mxu0 0.0
      %1776 = vmatpush1.msra.mxu0 0.0
      %1777 = vmatprep.subr.mxu0 0.0
      %1778 = vmatpush1.msra.mxu0 0.0
      %1779 = vmatprep.mubr.f32.mxu0 0.0
      %1780 = vmatmul.mubr.f32.gmra.mrb[0].mxu0 %v1713
      %v1781 = vpop.f32.mrb[0].mxu0
      %v1782 = vadd.f32 0.0, %v1781
      %v1783 = vpop.f32.mrb[0].mxu0
      %1784 = vdwg.mxu0
      %v1785 = vadd.f32 %v1546, %v1782
      %v1787 = vlaneseq
      %v1788 = vshrl.u32 %v1787, 7
      %v1789 = vsub.s32 0, %v1788
      %v1790 = vrot.slane %v735, %v1789
      %v1792 = vadd.f32 %v1785, %v1790
      %v1793 = vld [vmem:[%s16] sm:$0x1]
      %v1794 = vld [vmem:[%s17] sm:$0x1]
      %v1795 = vadd.f32 %v724, %v1792
      %v1796 = vsel %vm743, %v1795, 0.0
      %1797 = vadd.xlane.f32.xlu0 %v1796
      %v1798 = vpop.xlane.xlu0 %1797
      %v1799 = vrcp.pop 32.0
      %v1800 = vmul.f32 %v1798, %v1799
      %v1801 = vsub.f32 %v1795, %v1800
      %v1802 = vmul.f32 %v1801, %v1801
      %v1803 = vsel %vm743, %v1802, 0.0
      %1804 = vadd.xlane.f32.xlu0 %v1803
      %v1805 = vpop.xlane.xlu0 %1804
      %v1806 = vmul.f32 %v1805, %v1799
      %v1807 = vadd.f32 %v1806, 1e-05
      %v1808 = vrsqrt.pop %v1807
      %v1809 = vmul.f32 %v1801, %v1808
      %v1811 = vlaneseq
      %v1812 = vshrl.u32 %v1811, 7
      %v1813 = vsub.s32 0, %v1812
      %v1814 = vrot.slane %v1793, %v1813
      %v1816 = vmul.f32 %v1809, %v1814
      %v1818 = vlaneseq
      %v1819 = vshrl.u32 %v1818, 7
      %v1820 = vsub.s32 0, %v1819
      %v1821 = vrot.slane %v1794, %v1820
      %v1823 = vadd.f32 %v1816, %v1821
      %v1824 = vld [vmem:[%s8] sm:$0xff]
      %v1825 = vld [vmem:[%s8 + $0x8] sm:$0xff]
      %v1826 = vld [vmem:[%s8 + $0x10] sm:$0xff]
      %v1827 = vld [vmem:[%s8 + $0x18] sm:$0xff]
      %v1828 = vld [vmem:[%s9] sm:$0x1]
      %v1829 = vld [vmem:[%s10] sm:$0xff]
      %v1830 = vld [vmem:[%s10 + $0x8] sm:$0xff]
      %v1831 = vld [vmem:[%s10 + $0x10] sm:$0xff]
      %v1832 = vld [vmem:[%s10 + $0x18] sm:$0xff]
      %v1833 = vld [vmem:[%s11] sm:$0x1]
      %v1834 = vld [vmem:[%s719] sm:$0x1]
      %v1836 = vlaneseq
      %v1837 = vshrl.u32 %v1836, 7
      %v1838 = vsub.s32 0, %v1837
      %v1839 = vrot.slane %v1828, %v1838
      %v1842 = vsel %vm743, %v1823, 0
      %1844 = vmatprep.subr.mxu0 0.0
      %1845 = vmatpush1.msra.mxu0 %v1824
      %1846 = vmatprep.subr.mxu0 0.0
      %1847 = vmatpush1.msra.mxu0 %v1825
      %1848 = vmatprep.subr.mxu0 0.0
      %1849 = vmatpush1.msra.mxu0 %v1826
      %1850 = vmatprep.subr.mxu0 0.0
      %1851 = vmatpush1.msra.mxu0 %v1827
      %1852 = vmatprep.subr.mxu0 0.0
      %1853 = vmatpush1.msra.mxu0 0.0
      %1854 = vmatprep.subr.mxu0 0.0
      %1855 = vmatpush1.msra.mxu0 0.0
      %1856 = vmatprep.subr.mxu0 0.0
      %1857 = vmatpush1.msra.mxu0 0.0
      %1858 = vmatprep.subr.mxu0 0.0
      %1859 = vmatpush1.msra.mxu0 0.0
      %1860 = vmatprep.subr.mxu0 0.0
      %1861 = vmatpush1.msra.mxu0 0.0
      %1862 = vmatprep.subr.mxu0 0.0
      %1863 = vmatpush1.msra.mxu0 0.0
      %1864 = vmatprep.subr.mxu0 0.0
      %1865 = vmatpush1.msra.mxu0 0.0
      %1866 = vmatprep.subr.mxu0 0.0
      %1867 = vmatpush1.msra.mxu0 0.0
      %1868 = vmatprep.subr.mxu0 0.0
      %1869 = vmatpush1.msra.mxu0 0.0
      %1870 = vmatprep.subr.mxu0 0.0
      %1871 = vmatpush1.msra.mxu0 0.0
      %1872 = vmatprep.subr.mxu0 0.0
      %1873 = vmatpush1.msra.mxu0 0.0
      %1874 = vmatprep.subr.mxu0 0.0
      %1875 = vmatpush1.msra.mxu0 0.0
      %1876 = vmatprep.subr.mxu0 0.0
      %1877 = vmatpush1.msra.mxu0 0.0
      %1878 = vmatprep.subr.mxu0 0.0
      %1879 = vmatpush1.msra.mxu0 0.0
      %1880 = vmatprep.subr.mxu0 0.0
      %1881 = vmatpush1.msra.mxu0 0.0
      %1882 = vmatprep.subr.mxu0 0.0
      %1883 = vmatpush1.msra.mxu0 0.0
      %1884 = vmatprep.subr.mxu0 0.0
      %1885 = vmatpush1.msra.mxu0 0.0
      %1886 = vmatprep.subr.mxu0 0.0
      %1887 = vmatpush1.msra.mxu0 0.0
      %1888 = vmatprep.subr.mxu0 0.0
      %1889 = vmatpush1.msra.mxu0 0.0
      %1890 = vmatprep.subr.mxu0 0.0
      %1891 = vmatpush1.msra.mxu0 0.0
      %1892 = vmatprep.subr.mxu0 0.0
      %1893 = vmatpush1.msra.mxu0 0.0
      %1894 = vmatprep.subr.mxu0 0.0
      %1895 = vmatpush1.msra.mxu0 0.0
      %1896 = vmatprep.subr.mxu0 0.0
      %1897 = vmatpush1.msra.mxu0 0.0
      %1898 = vmatprep.subr.mxu0 0.0
      %1899 = vmatpush1.msra.mxu0 0.0
      %1900 = vmatprep.subr.mxu0 0.0
      %1901 = vmatpush1.msra.mxu0 0.0
      %1902 = vmatprep.subr.mxu0 0.0
      %1903 = vmatpush1.msra.mxu0 0.0
      %1904 = vmatprep.subr.mxu0 0.0
      %1905 = vmatpush1.msra.mxu0 0.0
      %1906 = vmatprep.subr.mxu0 0.0
      %1907 = vmatpush1.msra.mxu0 0.0
      %1908 = vmatprep.mubr.f32.mxu0 0.0
      %1909 = vmatmul.mubr.f32.gmra.mrb[0].mxu0 %v1842
      %v1910 = vpop.f32.mrb[0].mxu0
      %v1911 = vadd.f32 %v1839, %v1910
      %v1912 = vpop.f32.mrb[0].mxu0
      %1913 = vdwg.mxu0
      %1918 = vrot.lane.b32.xlu0 %v1824, 96
      %v1919 = vpop.permute.xlu0 %1918
      %1920 = vrot.lane.b32.xlu0 %v1825, 96
      %v1921 = vpop.permute.xlu0 %1920
      %1922 = vrot.lane.b32.xlu0 %v1826, 96
      %v1923 = vpop.permute.xlu0 %1922
      %1924 = vrot.lane.b32.xlu0 %v1827, 96
      %v1925 = vpop.permute.xlu0 %1924
      %1930 = vrot.lane.b32.xlu0 %v1839, 96
      %v1931 = vpop.permute.xlu0 %1930
      %v1934 = vsel %vm743, %v725, 0
      %1936 = vmatprep.subr.mxu0 0.0
      %1937 = vmatpush1.msra.mxu0 %v1919
      %1938 = vmatprep.subr.mxu0 0.0
      %1939 = vmatpush1.msra.mxu0 %v1921
      %1940 = vmatprep.subr.mxu0 0.0
      %1941 = vmatpush1.msra.mxu0 %v1923
      %1942 = vmatprep.subr.mxu0 0.0
      %1943 = vmatpush1.msra.mxu0 %v1925
      %1944 = vmatprep.subr.mxu0 0.0
      %1945 = vmatpush1.msra.mxu0 0.0
      %1946 = vmatprep.subr.mxu0 0.0
      %1947 = vmatpush1.msra.mxu0 0.0
      %1948 = vmatprep.subr.mxu0 0.0
      %1949 = vmatpush1.msra.mxu0 0.0
      %1950 = vmatprep.subr.mxu0 0.0
      %1951 = vmatpush1.msra.mxu0 0.0
      %1952 = vmatprep.subr.mxu0 0.0
      %1953 = vmatpush1.msra.mxu0 0.0
      %1954 = vmatprep.subr.mxu0 0.0
      %1955 = vmatpush1.msra.mxu0 0.0
      %1956 = vmatprep.subr.mxu0 0.0
      %1957 = vmatpush1.msra.mxu0 0.0
      %1958 = vmatprep.subr.mxu0 0.0
      %1959 = vmatpush1.msra.mxu0 0.0
      %1960 = vmatprep.subr.mxu0 0.0
      %1961 = vmatpush1.msra.mxu0 0.0
      %1962 = vmatprep.subr.mxu0 0.0
      %1963 = vmatpush1.msra.mxu0 0.0
      %1964 = vmatprep.subr.mxu0 0.0
      %1965 = vmatpush1.msra.mxu0 0.0
      %1966 = vmatprep.subr.mxu0 0.0
      %1967 = vmatpush1.msra.mxu0 0.0
      %1968 = vmatprep.subr.mxu0 0.0
      %1969 = vmatpush1.msra.mxu0 0.0
      %1970 = vmatprep.subr.mxu0 0.0
      %1971 = vmatpush1.msra.mxu0 0.0
      %1972 = vmatprep.subr.mxu0 0.0
      %1973 = vmatpush1.msra.mxu0 0.0
      %1974 = vmatprep.subr.mxu0 0.0
      %1975 = vmatpush1.msra.mxu0 0.0
      %1976 = vmatprep.subr.mxu0 0.0
      %1977 = vmatpush1.msra.mxu0 0.0
      %1978 = vmatprep.subr.mxu0 0.0
      %1979 = vmatpush1.msra.mxu0 0.0
      %1980 = vmatprep.subr.mxu0 0.0
      %1981 = vmatpush1.msra.mxu0 0.0
      %1982 = vmatprep.subr.mxu0 0.0
      %1983 = vmatpush1.msra.mxu0 0.0
      %1984 = vmatprep.subr.mxu0 0.0
      %1985 = vmatpush1.msra.mxu0 0.0
      %1986 = vmatprep.subr.mxu0 0.0
      %1987 = vmatpush1.msra.mxu0 0.0
      %1988 = vmatprep.subr.mxu0 0.0
      %1989 = vmatpush1.msra.mxu0 0.0
      %1990 = vmatprep.subr.mxu0 0.0
      %1991 = vmatpush1.msra.mxu0 0.0
      %1992 = vmatprep.subr.mxu0 0.0
      %1993 = vmatpush1.msra.mxu0 0.0
      %1994 = vmatprep.subr.mxu0 0.0
      %1995 = vmatpush1.msra.mxu0 0.0
      %1996 = vmatprep.subr.mxu0 0.0
      %1997 = vmatpush1.msra.mxu0 0.0
      %1998 = vmatprep.subr.mxu0 0.0
      %1999 = vmatpush1.msra.mxu0 0.0
      %2000 = vmatprep.mubr.f32.mxu0 0.0
      %2001 = vmatmul.mubr.f32.gmra.mrb[0].mxu0 %v1934
      %v2002 = vpop.f32.mrb[0].mxu0
      %v2003 = vadd.f32 %v1931, %v2002
      %v2004 = vpop.f32.mrb[0].mxu0
      %2005 = vdwg.mxu0
      %v2006 = vmul.f32 %v1911, 0.35355338
      %v2008 = vlaneseq
      %v2009 = vshrl.u32 %v2008, 7
      %v2010 = vsub.s32 0, %v2009
      %v2011 = vrot.slane %v1834, %v2010
      %v2014 = vsel %vm834, %v2006, 0
      %v2017 = vsel %vm834, %v2003, 0
      %2019 = vmatprep.subr.mxu0 0.0
      %2020 = vmatpush1.xpose.msra.mxu0 %v2017
      %2021 = vmatprep.subr.mxu0 0.0
      %2022 = vmatpush1.xpose.msra.mxu0 0.0
      %2023 = vmatprep.subr.mxu0 0.0
      %2024 = vmatpush1.xpose.msra.mxu0 0.0
      %2025 = vmatprep.subr.mxu0 0.0
      %2026 = vmatpush1.xpose.msra.mxu0 0.0
      %2027 = vmatprep.subr.mxu0 0.0
      %2028 = vmatpush1.xpose.msra.mxu0 0.0
      %2029 = vmatprep.subr.mxu0 0.0
      %2030 = vmatpush1.xpose.msra.mxu0 0.0
      %2031 = vmatprep.subr.mxu0 0.0
      %2032 = vmatpush1.xpose.msra.mxu0 0.0
      %2033 = vmatprep.subr.mxu0 0.0
      %2034 = vmatpush1.xpose.msra.mxu0 0.0
      %2035 = vmatprep.subr.mxu0 0.0
      %2036 = vmatpush1.xpose.msra.mxu0 0.0
      %2037 = vmatprep.subr.mxu0 0.0
      %2038 = vmatpush1.xpose.msra.mxu0 0.0
      %2039 = vmatprep.subr.mxu0 0.0
      %2040 = vmatpush1.xpose.msra.mxu0 0.0
      %2041 = vmatprep.subr.mxu0 0.0
      %2042 = vmatpush1.xpose.msra.mxu0 0.0
      %2043 = vmatprep.subr.mxu0 0.0
      %2044 = vmatpush1.xpose.msra.mxu0 0.0
      %2045 = vmatprep.subr.mxu0 0.0
      %2046 = vmatpush1.xpose.msra.mxu0 0.0
      %2047 = vmatprep.subr.mxu0 0.0
      %2048 = vmatpush1.xpose.msra.mxu0 0.0
      %2049 = vmatprep.subr.mxu0 0.0
      %2050 = vmatpush1.xpose.msra.mxu0 0.0
      %2051 = vmatprep.subr.mxu0 0.0
      %2052 = vmatpush1.xpose.msra.mxu0 0.0
      %2053 = vmatprep.subr.mxu0 0.0
      %2054 = vmatpush1.xpose.msra.mxu0 0.0
      %2055 = vmatprep.subr.mxu0 0.0
      %2056 = vmatpush1.xpose.msra.mxu0 0.0
      %2057 = vmatprep.subr.mxu0 0.0
      %2058 = vmatpush1.xpose.msra.mxu0 0.0
      %2059 = vmatprep.subr.mxu0 0.0
      %2060 = vmatpush1.xpose.msra.mxu0 0.0
      %2061 = vmatprep.subr.mxu0 0.0
      %2062 = vmatpush1.xpose.msra.mxu0 0.0
      %2063 = vmatprep.subr.mxu0 0.0
      %2064 = vmatpush1.xpose.msra.mxu0 0.0
      %2065 = vmatprep.subr.mxu0 0.0
      %2066 = vmatpush1.xpose.msra.mxu0 0.0
      %2067 = vmatprep.subr.mxu0 0.0
      %2068 = vmatpush1.xpose.msra.mxu0 0.0
      %2069 = vmatprep.subr.mxu0 0.0
      %2070 = vmatpush1.xpose.msra.mxu0 0.0
      %2071 = vmatprep.subr.mxu0 0.0
      %2072 = vmatpush1.xpose.msra.mxu0 0.0
      %2073 = vmatprep.subr.mxu0 0.0
      %2074 = vmatpush1.xpose.msra.mxu0 0.0
      %2075 = vmatprep.subr.mxu0 0.0
      %2076 = vmatpush1.xpose.msra.mxu0 0.0
      %2077 = vmatprep.subr.mxu0 0.0
      %2078 = vmatpush1.xpose.msra.mxu0 0.0
      %2079 = vmatprep.subr.mxu0 0.0
      %2080 = vmatpush1.xpose.msra.mxu0 0.0
      %2081 = vmatprep.subr.mxu0 0.0
      %2082 = vmatpush1.xpose.msra.mxu0 0.0
      %2083 = vmatprep.mubr.f32.mxu0 0.0
      %2084 = vmatmul.mubr.f32.gmra.mrb[0].mxu0 %v2014
      %v2085 = vpop.f32.mrb[0].mxu0
      %v2086 = vadd.f32 %v2011, %v2085
      %v2087 = vpop.f32.mrb[0].mxu0
      %2088 = vdwg.mxu0
      %v2089 = vsel %vm834, %v2086, -inf
      %2090 = vmax.xlane.f32.xlu0 %v2089
      %v2091 = vpop.xlane.xlu0 %2090
      %v2092 = vsub.f32 %v2086, %v2091
      %v2093 = vmul.f32 %v2092, 1.442695
      %v2094 = vpow.pop %v2093
      %v2095 = vsel %vm834, %v2094, 0.0
      %2096 = vadd.xlane.f32.xlu0 %v2095
      %v2097 = vpop.xlane.xlu0 %2096
      %v2098 = vrcp.pop %v2097
      %v2099 = vmul.f32 %v2094, %v2098
      %2100 = vrot.lane.b32.xlu0 %v2003, 96
      %v2101 = vpop.permute.xlu0 %2100
      %v2104 = vsel %vm834, %v2099, 0
      %2106 = vmatprep.subr.mxu0 0.0
      %2107 = vmatpush1.msra.mxu0 %v2101
      %2108 = vmatprep.subr.mxu0 0.0
      %2109 = vmatpush1.msra.mxu0 0.0
      %2110 = vmatprep.subr.mxu0 0.0
      %2111 = vmatpush1.msra.mxu0 0.0
      %2112 = vmatprep.subr.mxu0 0.0
      %2113 = vmatpush1.msra.mxu0 0.0
      %2114 = vmatprep.subr.mxu0 0.0
      %2115 = vmatpush1.msra.mxu0 0.0
      %2116 = vmatprep.subr.mxu0 0.0
      %2117 = vmatpush1.msra.mxu0 0.0
      %2118 = vmatprep.subr.mxu0 0.0
      %2119 = vmatpush1.msra.mxu0 0.0
      %2120 = vmatprep.subr.mxu0 0.0
      %2121 = vmatpush1.msra.mxu0 0.0
      %2122 = vmatprep.subr.mxu0 0.0
      %2123 = vmatpush1.msra.mxu0 0.0
      %2124 = vmatprep.subr.mxu0 0.0
      %2125 = vmatpush1.msra.mxu0 0.0
      %2126 = vmatprep.subr.mxu0 0.0
      %2127 = vmatpush1.msra.mxu0 0.0
      %2128 = vmatprep.subr.mxu0 0.0
      %2129 = vmatpush1.msra.mxu0 0.0
      %2130 = vmatprep.subr.mxu0 0.0
      %2131 = vmatpush1.msra.mxu0 0.0
      %2132 = vmatprep.subr.mxu0 0.0
      %2133 = vmatpush1.msra.mxu0 0.0
      %2134 = vmatprep.subr.mxu0 0.0
      %2135 = vmatpush1.msra.mxu0 0.0
      %2136 = vmatprep.subr.mxu0 0.0
      %2137 = vmatpush1.msra.mxu0 0.0
      %2138 = vmatprep.subr.mxu0 0.0
      %2139 = vmatpush1.msra.mxu0 0.0
      %2140 = vmatprep.subr.mxu0 0.0
      %2141 = vmatpush1.msra.mxu0 0.0
      %2142 = vmatprep.subr.mxu0 0.0
      %2143 = vmatpush1.msra.mxu0 0.0
      %2144 = vmatprep.subr.mxu0 0.0
      %2145 = vmatpush1.msra.mxu0 0.0
      %2146 = vmatprep.subr.mxu0 0.0
      %2147 = vmatpush1.msra.mxu0 0.0
      %2148 = vmatprep.subr.mxu0 0.0
      %2149 = vmatpush1.msra.mxu0 0.0
      %2150 = vmatprep.subr.mxu0 0.0
      %2151 = vmatpush1.msra.mxu0 0.0
      %2152 = vmatprep.subr.mxu0 0.0
      %2153 = vmatpush1.msra.mxu0 0.0
      %2154 = vmatprep.subr.mxu0 0.0
      %2155 = vmatpush1.msra.mxu0 0.0
      %2156 = vmatprep.subr.mxu0 0.0
      %2157 = vmatpush1.msra.mxu0 0.0
      %2158 = vmatprep.subr.mxu0 0.0
      %2159 = vmatpush1.msra.mxu0 0.0
      %2160 = vmatprep.subr.mxu0 0.0
      %2161 = vmatpush1.msra.mxu0 0.0
      %2162 = vmatprep.subr.mxu0 0.0
      %2163 = vmatpush1.msra.mxu0 0.0
      %2164 = vmatprep.subr.mxu0 0.0
      %2165 = vmatpush1.msra.mxu0 0.0
      %2166 = vmatprep.subr.mxu0 0.0
      %2167 = vmatpush1.msra.mxu0 0.0
      %2168 = vmatprep.subr.mxu0 0.0
      %2169 = vmatpush1.msra.mxu0 0.0
      %2170 = vmatprep.mubr.f32.mxu0 0.0
      %2171 = vmatmul.mubr.f32.gmra.mrb[0].mxu0 %v2104
      %v2172 = vpop.f32.mrb[0].mxu0
      %v2173 = vadd.f32 0.0, %v2172
      %v2174 = vpop.f32.mrb[0].mxu0
      %2175 = vdwg.mxu0
      %2176 = vrot.lane.b32.xlu0 %v2006, 120
      %v2177 = vpop.permute.xlu0 %2176
      %2178 = vrot.lane.b32.xlu0 %v2003, 120
      %v2179 = vpop.permute.xlu0 %2178
      %v2180 = vsel %vm834, %v2177, 0
      %v2182 = vsel %vm834, %v2179, 0
      %2184 = vmatprep.subr.mxu0 0.0
      %2185 = vmatpush1.xpose.msra.mxu0 %v2182
      %2186 = vmatprep.subr.mxu0 0.0
      %2187 = vmatpush1.xpose.msra.mxu0 0.0
      %2188 = vmatprep.subr.mxu0 0.0
      %2189 = vmatpush1.xpose.msra.mxu0 0.0
      %2190 = vmatprep.subr.mxu0 0.0
      %2191 = vmatpush1.xpose.msra.mxu0 0.0
      %2192 = vmatprep.subr.mxu0 0.0
      %2193 = vmatpush1.xpose.msra.mxu0 0.0
      %2194 = vmatprep.subr.mxu0 0.0
      %2195 = vmatpush1.xpose.msra.mxu0 0.0
      %2196 = vmatprep.subr.mxu0 0.0
      %2197 = vmatpush1.xpose.msra.mxu0 0.0
      %2198 = vmatprep.subr.mxu0 0.0
      %2199 = vmatpush1.xpose.msra.mxu0 0.0
      %2200 = vmatprep.subr.mxu0 0.0
      %2201 = vmatpush1.xpose.msra.mxu0 0.0
      %2202 = vmatprep.subr.mxu0 0.0
      %2203 = vmatpush1.xpose.msra.mxu0 0.0
      %2204 = vmatprep.subr.mxu0 0.0
      %2205 = vmatpush1.xpose.msra.mxu0 0.0
      %2206 = vmatprep.subr.mxu0 0.0
      %2207 = vmatpush1.xpose.msra.mxu0 0.0
      %2208 = vmatprep.subr.mxu0 0.0
      %2209 = vmatpush1.xpose.msra.mxu0 0.0
      %2210 = vmatprep.subr.mxu0 0.0
      %2211 = vmatpush1.xpose.msra.mxu0 0.0
      %2212 = vmatprep.subr.mxu0 0.0
      %2213 = vmatpush1.xpose.msra.mxu0 0.0
      %2214 = vmatprep.subr.mxu0 0.0
      %2215 = vmatpush1.xpose.msra.mxu0 0.0
      %2216 = vmatprep.subr.mxu0 0.0
      %2217 = vmatpush1.xpose.msra.mxu0 0.0
      %2218 = vmatprep.subr.mxu0 0.0
      %2219 = vmatpush1.xpose.msra.mxu0 0.0
      %2220 = vmatprep.subr.mxu0 0.0
      %2221 = vmatpush1.xpose.msra.mxu0 0.0
      %2222 = vmatprep.subr.mxu0 0.0
      %2223 = vmatpush1.xpose.msra.mxu0 0.0
      %2224 = vmatprep.subr.mxu0 0.0
      %2225 = vmatpush1.xpose.msra.mxu0 0.0
      %2226 = vmatprep.subr.mxu0 0.0
      %2227 = vmatpush1.xpose.msra.mxu0 0.0
      %2228 = vmatprep.subr.mxu0 0.0
      %2229 = vmatpush1.xpose.msra.mxu0 0.0
      %2230 = vmatprep.subr.mxu0 0.0
      %2231 = vmatpush1.xpose.msra.mxu0 0.0
      %2232 = vmatprep.subr.mxu0 0.0
      %2233 = vmatpush1.xpose.msra.mxu0 0.0
      %2234 = vmatprep.subr.mxu0 0.0
      %2235 = vmatpush1.xpose.msra.mxu0 0.0
      %2236 = vmatprep.subr.mxu0 0.0
      %2237 = vmatpush1.xpose.msra.mxu0 0.0
      %2238 = vmatprep.subr.mxu0 0.0
      %2239 = vmatpush1.xpose.msra.mxu0 0.0
      %2240 = vmatprep.subr.mxu0 0.0
      %2241 = vmatpush1.xpose.msra.mxu0 0.0
      %2242 = vmatprep.subr.mxu0 0.0
      %2243 = vmatpush1.xpose.msra.mxu0 0.0
      %2244 = vmatprep.subr.mxu0 0.0
      %2245 = vmatpush1.xpose.msra.mxu0 0.0
      %2246 = vmatprep.subr.mxu0 0.0
      %2247 = vmatpush1.xpose.msra.mxu0 0.0
      %2248 = vmatprep.mubr.f32.mxu0 0.0
      %2249 = vmatmul.mubr.f32.gmra.mrb[0].mxu0 %v2180
      %v2250 = vpop.f32.mrb[0].mxu0
      %v2251 = vadd.f32 %v2011, %v2250
      %v2252 = vpop.f32.mrb[0].mxu0
      %2253 = vdwg.mxu0
      %v2254 = vsel %vm834, %v2251, -inf
      %2255 = vmax.xlane.f32.xlu0 %v2254
      %v2256 = vpop.xlane.xlu0 %2255
      %v2257 = vsub.f32 %v2251, %v2256
      %v2258 = vmul.f32 %v2257, 1.442695
      %v2259 = vpow.pop %v2258
      %v2260 = vsel %vm834, %v2259, 0.0
      %2261 = vadd.xlane.f32.xlu0 %v2260
      %v2262 = vpop.xlane.xlu0 %2261
      %v2263 = vrcp.pop %v2262
      %v2264 = vmul.f32 %v2259, %v2263
      %2265 = vrot.lane.b32.xlu0 %v2003, 88
      %v2266 = vpop.permute.xlu0 %2265
      %v2269 = vsel %vm834, %v2264, 0
      %2271 = vmatprep.subr.mxu0 0.0
      %2272 = vmatpush1.msra.mxu0 %v2266
      %2273 = vmatprep.subr.mxu0 0.0
      %2274 = vmatpush1.msra.mxu0 0.0
      %2275 = vmatprep.subr.mxu0 0.0
      %2276 = vmatpush1.msra.mxu0 0.0
      %2277 = vmatprep.subr.mxu0 0.0
      %2278 = vmatpush1.msra.mxu0 0.0
      %2279 = vmatprep.subr.mxu0 0.0
      %2280 = vmatpush1.msra.mxu0 0.0
      %2281 = vmatprep.subr.mxu0 0.0
      %2282 = vmatpush1.msra.mxu0 0.0
      %2283 = vmatprep.subr.mxu0 0.0
      %2284 = vmatpush1.msra.mxu0 0.0
      %2285 = vmatprep.subr.mxu0 0.0
      %2286 = vmatpush1.msra.mxu0 0.0
      %2287 = vmatprep.subr.mxu0 0.0
      %2288 = vmatpush1.msra.mxu0 0.0
      %2289 = vmatprep.subr.mxu0 0.0
      %2290 = vmatpush1.msra.mxu0 0.0
      %2291 = vmatprep.subr.mxu0 0.0
      %2292 = vmatpush1.msra.mxu0 0.0
      %2293 = vmatprep.subr.mxu0 0.0
      %2294 = vmatpush1.msra.mxu0 0.0
      %2295 = vmatprep.subr.mxu0 0.0
      %2296 = vmatpush1.msra.mxu0 0.0
      %2297 = vmatprep.subr.mxu0 0.0
      %2298 = vmatpush1.msra.mxu0 0.0
      %2299 = vmatprep.subr.mxu0 0.0
      %2300 = vmatpush1.msra.mxu0 0.0
      %2301 = vmatprep.subr.mxu0 0.0
      %2302 = vmatpush1.msra.mxu0 0.0
      %2303 = vmatprep.subr.mxu0 0.0
      %2304 = vmatpush1.msra.mxu0 0.0
      %2305 = vmatprep.subr.mxu0 0.0
      %2306 = vmatpush1.msra.mxu0 0.0
      %2307 = vmatprep.subr.mxu0 0.0
      %2308 = vmatpush1.msra.mxu0 0.0
      %2309 = vmatprep.subr.mxu0 0.0
      %2310 = vmatpush1.msra.mxu0 0.0
      %2311 = vmatprep.subr.mxu0 0.0
      %2312 = vmatpush1.msra.mxu0 0.0
      %2313 = vmatprep.subr.mxu0 0.0
      %2314 = vmatpush1.msra.mxu0 0.0
      %2315 = vmatprep.subr.mxu0 0.0
      %2316 = vmatpush1.msra.mxu0 0.0
      %2317 = vmatprep.subr.mxu0 0.0
      %2318 = vmatpush1.msra.mxu0 0.0
      %2319 = vmatprep.subr.mxu0 0.0
      %2320 = vmatpush1.msra.mxu0 0.0
      %2321 = vmatprep.subr.mxu0 0.0
      %2322 = vmatpush1.msra.mxu0 0.0
      %2323 = vmatprep.subr.mxu0 0.0
      %2324 = vmatpush1.msra.mxu0 0.0
      %2325 = vmatprep.subr.mxu0 0.0
      %2326 = vmatpush1.msra.mxu0 0.0
      %2327 = vmatprep.subr.mxu0 0.0
      %2328 = vmatpush1.msra.mxu0 0.0
      %2329 = vmatprep.subr.mxu0 0.0
      %2330 = vmatpush1.msra.mxu0 0.0
      %2331 = vmatprep.subr.mxu0 0.0
      %2332 = vmatpush1.msra.mxu0 0.0
      %2333 = vmatprep.subr.mxu0 0.0
      %2334 = vmatpush1.msra.mxu0 0.0
      %2335 = vmatprep.mubr.f32.mxu0 0.0
      %2336 = vmatmul.mubr.f32.gmra.mrb[0].mxu0 %v2269
      %v2337 = vpop.f32.mrb[0].mxu0
      %v2338 = vadd.f32 0.0, %v2337
      %v2339 = vpop.f32.mrb[0].mxu0
      %2340 = vdwg.mxu0
      %v2342 = vsel %vm834, %v2338, 0
      %2344 = vmatprep.subr.mxu0 0.0
      %2345 = vmatpush1.msra.mxu0 %v1830
      %2346 = vmatprep.subr.mxu0 0.0
      %2347 = vmatpush1.msra.mxu0 0.0
      %2348 = vmatprep.subr.mxu0 0.0
      %2349 = vmatpush1.msra.mxu0 0.0
      %2350 = vmatprep.subr.mxu0 0.0
      %2351 = vmatpush1.msra.mxu0 0.0
      %2352 = vmatprep.subr.mxu0 0.0
      %2353 = vmatpush1.msra.mxu0 0.0
      %2354 = vmatprep.subr.mxu0 0.0
      %2355 = vmatpush1.msra.mxu0 0.0
      %2356 = vmatprep.subr.mxu0 0.0
      %2357 = vmatpush1.msra.mxu0 0.0
      %2358 = vmatprep.subr.mxu0 0.0
      %2359 = vmatpush1.msra.mxu0 0.0
      %2360 = vmatprep.subr.mxu0 0.0
      %2361 = vmatpush1.msra.mxu0 0.0
      %2362 = vmatprep.subr.mxu0 0.0
      %2363 = vmatpush1.msra.mxu0 0.0
      %2364 = vmatprep.subr.mxu0 0.0
      %2365 = vmatpush1.msra.mxu0 0.0
      %2366 = vmatprep.subr.mxu0 0.0
      %2367 = vmatpush1.msra.mxu0 0.0
      %2368 = vmatprep.subr.mxu0 0.0
      %2369 = vmatpush1.msra.mxu0 0.0
      %2370 = vmatprep.subr.mxu0 0.0
      %2371 = vmatpush1.msra.mxu0 0.0
      %2372 = vmatprep.subr.mxu0 0.0
      %2373 = vmatpush1.msra.mxu0 0.0
      %2374 = vmatprep.subr.mxu0 0.0
      %2375 = vmatpush1.msra.mxu0 0.0
      %2376 = vmatprep.subr.mxu0 0.0
      %2377 = vmatpush1.msra.mxu0 0.0
      %2378 = vmatprep.subr.mxu0 0.0
      %2379 = vmatpush1.msra.mxu0 0.0
      %2380 = vmatprep.subr.mxu0 0.0
      %2381 = vmatpush1.msra.mxu0 0.0
      %2382 = vmatprep.subr.mxu0 0.0
      %2383 = vmatpush1.msra.mxu0 0.0
      %2384 = vmatprep.subr.mxu0 0.0
      %2385 = vmatpush1.msra.mxu0 0.0
      %2386 = vmatprep.subr.mxu0 0.0
      %2387 = vmatpush1.msra.mxu0 0.0
      %2388 = vmatprep.subr.mxu0 0.0
      %2389 = vmatpush1.msra.mxu0 0.0
      %2390 = vmatprep.subr.mxu0 0.0
      %2391 = vmatpush1.msra.mxu0 0.0
      %2392 = vmatprep.subr.mxu0 0.0
      %2393 = vmatpush1.msra.mxu0 0.0
      %2394 = vmatprep.subr.mxu0 0.0
      %2395 = vmatpush1.msra.mxu0 0.0
      %2396 = vmatprep.subr.mxu0 0.0
      %2397 = vmatpush1.msra.mxu0 0.0
      %2398 = vmatprep.subr.mxu0 0.0
      %2399 = vmatpush1.msra.mxu0 0.0
      %2400 = vmatprep.subr.mxu0 0.0
      %2401 = vmatpush1.msra.mxu0 0.0
      %2402 = vmatprep.subr.mxu0 0.0
      %2403 = vmatpush1.msra.mxu0 0.0
      %2404 = vmatprep.subr.mxu0 0.0
      %2405 = vmatpush1.msra.mxu0 0.0
      %2406 = vmatprep.subr.mxu0 0.0
      %2407 = vmatpush1.msra.mxu0 0.0
      %2408 = vmatprep.mubr.f32.mxu0 0.0
      %2409 = vmatmul.mubr.f32.gmra.mrb[0].mxu0 %v2342
      %v2410 = vpop.f32.mrb[0].mxu0
      %v2411 = vadd.f32 0.0, %v2410
      %v2412 = vpop.f32.mrb[0].mxu0
      %2413 = vdwg.mxu0
      %v2415 = vsel %vm834, %v2173, 0
      %2417 = vmatprep.subr.mxu0 0.0
      %2418 = vmatpush1.msra.mxu0 %v1829
      %2419 = vmatprep.subr.mxu0 0.0
      %2420 = vmatpush1.msra.mxu0 0.0
      %2421 = vmatprep.subr.mxu0 0.0
      %2422 = vmatpush1.msra.mxu0 0.0
      %2423 = vmatprep.subr.mxu0 0.0
      %2424 = vmatpush1.msra.mxu0 0.0
      %2425 = vmatprep.subr.mxu0 0.0
      %2426 = vmatpush1.msra.mxu0 0.0
      %2427 = vmatprep.subr.mxu0 0.0
      %2428 = vmatpush1.msra.mxu0 0.0
      %2429 = vmatprep.subr.mxu0 0.0
      %2430 = vmatpush1.msra.mxu0 0.0
      %2431 = vmatprep.subr.mxu0 0.0
      %2432 = vmatpush1.msra.mxu0 0.0
      %2433 = vmatprep.subr.mxu0 0.0
      %2434 = vmatpush1.msra.mxu0 0.0
      %2435 = vmatprep.subr.mxu0 0.0
      %2436 = vmatpush1.msra.mxu0 0.0
      %2437 = vmatprep.subr.mxu0 0.0
      %2438 = vmatpush1.msra.mxu0 0.0
      %2439 = vmatprep.subr.mxu0 0.0
      %2440 = vmatpush1.msra.mxu0 0.0
      %2441 = vmatprep.subr.mxu0 0.0
      %2442 = vmatpush1.msra.mxu0 0.0
      %2443 = vmatprep.subr.mxu0 0.0
      %2444 = vmatpush1.msra.mxu0 0.0
      %2445 = vmatprep.subr.mxu0 0.0
      %2446 = vmatpush1.msra.mxu0 0.0
      %2447 = vmatprep.subr.mxu0 0.0
      %2448 = vmatpush1.msra.mxu0 0.0
      %2449 = vmatprep.subr.mxu0 0.0
      %2450 = vmatpush1.msra.mxu0 0.0
      %2451 = vmatprep.subr.mxu0 0.0
      %2452 = vmatpush1.msra.mxu0 0.0
      %2453 = vmatprep.subr.mxu0 0.0
      %2454 = vmatpush1.msra.mxu0 0.0
      %2455 = vmatprep.subr.mxu0 0.0
      %2456 = vmatpush1.msra.mxu0 0.0
      %2457 = vmatprep.subr.mxu0 0.0
      %2458 = vmatpush1.msra.mxu0 0.0
      %2459 = vmatprep.subr.mxu0 0.0
      %2460 = vmatpush1.msra.mxu0 0.0
      %2461 = vmatprep.subr.mxu0 0.0
      %2462 = vmatpush1.msra.mxu0 0.0
      %2463 = vmatprep.subr.mxu0 0.0
      %2464 = vmatpush1.msra.mxu0 0.0
      %2465 = vmatprep.subr.mxu0 0.0
      %2466 = vmatpush1.msra.mxu0 0.0
      %2467 = vmatprep.subr.mxu0 0.0
      %2468 = vmatpush1.msra.mxu0 0.0
      %2469 = vmatprep.subr.mxu0 0.0
      %2470 = vmatpush1.msra.mxu0 0.0
      %2471 = vmatprep.subr.mxu0 0.0
      %2472 = vmatpush1.msra.mxu0 0.0
      %2473 = vmatprep.subr.mxu0 0.0
      %2474 = vmatpush1.msra.mxu0 0.0
      %2475 = vmatprep.subr.mxu0 0.0
      %2476 = vmatpush1.msra.mxu0 0.0
      %2477 = vmatprep.subr.mxu0 0.0
      %2478 = vmatpush1.msra.mxu0 0.0
      %2479 = vmatprep.subr.mxu0 0.0
      %2480 = vmatpush1.msra.mxu0 0.0
      %2481 = vmatprep.mubr.f32.mxu0 0.0
      %2482 = vmatmul.mubr.f32.gmra.mrb[0].mxu0 %v2415
      %v2483 = vpop.f32.mrb[0].mxu0
      %v2484 = vadd.f32 %v2411, %v2483
      %v2485 = vpop.f32.mrb[0].mxu0
      %2486 = vdwg.mxu0
      %2487 = vrot.lane.b32.xlu0 %v2006, 112
      %v2488 = vpop.permute.xlu0 %2487
      %2489 = vrot.lane.b32.xlu0 %v2003, 112
      %v2490 = vpop.permute.xlu0 %2489
      %v2491 = vsel %vm834, %v2488, 0
      %v2493 = vsel %vm834, %v2490, 0
      %2495 = vmatprep.subr.mxu0 0.0
      %2496 = vmatpush1.xpose.msra.mxu0 %v2493
      %2497 = vmatprep.subr.mxu0 0.0
      %2498 = vmatpush1.xpose.msra.mxu0 0.0
      %2499 = vmatprep.subr.mxu0 0.0
      %2500 = vmatpush1.xpose.msra.mxu0 0.0
      %2501 = vmatprep.subr.mxu0 0.0
      %2502 = vmatpush1.xpose.msra.mxu0 0.0
      %2503 = vmatprep.subr.mxu0 0.0
      %2504 = vmatpush1.xpose.msra.mxu0 0.0
      %2505 = vmatprep.subr.mxu0 0.0
      %2506 = vmatpush1.xpose.msra.mxu0 0.0
      %2507 = vmatprep.subr.mxu0 0.0
      %2508 = vmatpush1.xpose.msra.mxu0 0.0
      %2509 = vmatprep.subr.mxu0 0.0
      %2510 = vmatpush1.xpose.msra.mxu0 0.0
      %2511 = vmatprep.subr.mxu0 0.0
      %2512 = vmatpush1.xpose.msra.mxu0 0.0
      %2513 = vmatprep.subr.mxu0 0.0
      %2514 = vmatpush1.xpose.msra.mxu0 0.0
      %2515 = vmatprep.subr.mxu0 0.0
      %2516 = vmatpush1.xpose.msra.mxu0 0.0
      %2517 = vmatprep.subr.mxu0 0.0
      %2518 = vmatpush1.xpose.msra.mxu0 0.0
      %2519 = vmatprep.subr.mxu0 0.0
      %2520 = vmatpush1.xpose.msra.mxu0 0.0
      %2521 = vmatprep.subr.mxu0 0.0
      %2522 = vmatpush1.xpose.msra.mxu0 0.0
      %2523 = vmatprep.subr.mxu0 0.0
      %2524 = vmatpush1.xpose.msra.mxu0 0.0
      %2525 = vmatprep.subr.mxu0 0.0
      %2526 = vmatpush1.xpose.msra.mxu0 0.0
      %2527 = vmatprep.subr.mxu0 0.0
      %2528 = vmatpush1.xpose.msra.mxu0 0.0
      %2529 = vmatprep.subr.mxu0 0.0
      %2530 = vmatpush1.xpose.msra.mxu0 0.0
      %2531 = vmatprep.subr.mxu0 0.0
      %2532 = vmatpush1.xpose.msra.mxu0 0.0
      %2533 = vmatprep.subr.mxu0 0.0
      %2534 = vmatpush1.xpose.msra.mxu0 0.0
      %2535 = vmatprep.subr.mxu0 0.0
      %2536 = vmatpush1.xpose.msra.mxu0 0.0
      %2537 = vmatprep.subr.mxu0 0.0
      %2538 = vmatpush1.xpose.msra.mxu0 0.0
      %2539 = vmatprep.subr.mxu0 0.0
      %2540 = vmatpush1.xpose.msra.mxu0 0.0
      %2541 = vmatprep.subr.mxu0 0.0
      %2542 = vmatpush1.xpose.msra.mxu0 0.0
      %2543 = vmatprep.subr.mxu0 0.0
      %2544 = vmatpush1.xpose.msra.mxu0 0.0
      %2545 = vmatprep.subr.mxu0 0.0
      %2546 = vmatpush1.xpose.msra.mxu0 0.0
      %2547 = vmatprep.subr.mxu0 0.0
      %2548 = vmatpush1.xpose.msra.mxu0 0.0
      %2549 = vmatprep.subr.mxu0 0.0
      %2550 = vmatpush1.xpose.msra.mxu0 0.0
      %2551 = vmatprep.subr.mxu0 0.0
      %2552 = vmatpush1.xpose.msra.mxu0 0.0
      %2553 = vmatprep.subr.mxu0 0.0
      %2554 = vmatpush1.xpose.msra.mxu0 0.0
      %2555 = vmatprep.subr.mxu0 0.0
      %2556 = vmatpush1.xpose.msra.mxu0 0.0
      %2557 = vmatprep.subr.mxu0 0.0
      %2558 = vmatpush1.xpose.msra.mxu0 0.0
      %2559 = vmatprep.mubr.f32.mxu0 0.0
      %2560 = vmatmul.mubr.f32.gmra.mrb[0].mxu0 %v2491
      %v2561 = vpop.f32.mrb[0].mxu0
      %v2562 = vadd.f32 %v2011, %v2561
      %v2563 = vpop.f32.mrb[0].mxu0
      %2564 = vdwg.mxu0
      %v2565 = vsel %vm834, %v2562, -inf
      %2566 = vmax.xlane.f32.xlu0 %v2565
      %v2567 = vpop.xlane.xlu0 %2566
      %v2568 = vsub.f32 %v2562, %v2567
      %v2569 = vmul.f32 %v2568, 1.442695
      %v2570 = vpow.pop %v2569
      %v2571 = vsel %vm834, %v2570, 0.0
      %2572 = vadd.xlane.f32.xlu0 %v2571
      %v2573 = vpop.xlane.xlu0 %2572
      %v2574 = vrcp.pop %v2573
      %v2575 = vmul.f32 %v2570, %v2574
      %2576 = vrot.lane.b32.xlu0 %v2003, 80
      %v2577 = vpop.permute.xlu0 %2576
      %v2580 = vsel %vm834, %v2575, 0
      %2582 = vmatprep.subr.mxu0 0.0
      %2583 = vmatpush1.msra.mxu0 %v2577
      %2584 = vmatprep.subr.mxu0 0.0
      %2585 = vmatpush1.msra.mxu0 0.0
      %2586 = vmatprep.subr.mxu0 0.0
      %2587 = vmatpush1.msra.mxu0 0.0
      %2588 = vmatprep.subr.mxu0 0.0
      %2589 = vmatpush1.msra.mxu0 0.0
      %2590 = vmatprep.subr.mxu0 0.0
      %2591 = vmatpush1.msra.mxu0 0.0
      %2592 = vmatprep.subr.mxu0 0.0
      %2593 = vmatpush1.msra.mxu0 0.0
      %2594 = vmatprep.subr.mxu0 0.0
      %2595 = vmatpush1.msra.mxu0 0.0
      %2596 = vmatprep.subr.mxu0 0.0
      %2597 = vmatpush1.msra.mxu0 0.0
      %2598 = vmatprep.subr.mxu0 0.0
      %2599 = vmatpush1.msra.mxu0 0.0
      %2600 = vmatprep.subr.mxu0 0.0
      %2601 = vmatpush1.msra.mxu0 0.0
      %2602 = vmatprep.subr.mxu0 0.0
      %2603 = vmatpush1.msra.mxu0 0.0
      %2604 = vmatprep.subr.mxu0 0.0
      %2605 = vmatpush1.msra.mxu0 0.0
      %2606 = vmatprep.subr.mxu0 0.0
      %2607 = vmatpush1.msra.mxu0 0.0
      %2608 = vmatprep.subr.mxu0 0.0
      %2609 = vmatpush1.msra.mxu0 0.0
      %2610 = vmatprep.subr.mxu0 0.0
      %2611 = vmatpush1.msra.mxu0 0.0
      %2612 = vmatprep.subr.mxu0 0.0
      %2613 = vmatpush1.msra.mxu0 0.0
      %2614 = vmatprep.subr.mxu0 0.0
      %2615 = vmatpush1.msra.mxu0 0.0
      %2616 = vmatprep.subr.mxu0 0.0
      %2617 = vmatpush1.msra.mxu0 0.0
      %2618 = vmatprep.subr.mxu0 0.0
      %2619 = vmatpush1.msra.mxu0 0.0
      %2620 = vmatprep.subr.mxu0 0.0
      %2621 = vmatpush1.msra.mxu0 0.0
      %2622 = vmatprep.subr.mxu0 0.0
      %2623 = vmatpush1.msra.mxu0 0.0
      %2624 = vmatprep.subr.mxu0 0.0
      %2625 = vmatpush1.msra.mxu0 0.0
      %2626 = vmatprep.subr.mxu0 0.0
      %2627 = vmatpush1.msra.mxu0 0.0
      %2628 = vmatprep.subr.mxu0 0.0
      %2629 = vmatpush1.msra.mxu0 0.0
      %2630 = vmatprep.subr.mxu0 0.0
      %2631 = vmatpush1.msra.mxu0 0.0
      %2632 = vmatprep.subr.mxu0 0.0
      %2633 = vmatpush1.msra.mxu0 0.0
      %2634 = vmatprep.subr.mxu0 0.0
      %2635 = vmatpush1.msra.mxu0 0.0
      %2636 = vmatprep.subr.mxu0 0.0
      %2637 = vmatpush1.msra.mxu0 0.0
      %2638 = vmatprep.subr.mxu0 0.0
      %2639 = vmatpush1.msra.mxu0 0.0
      %2640 = vmatprep.subr.mxu0 0.0
      %2641 = vmatpush1.msra.mxu0 0.0
      %2642 = vmatprep.subr.mxu0 0.0
      %2643 = vmatpush1.msra.mxu0 0.0
      %2644 = vmatprep.subr.mxu0 0.0
      %2645 = vmatpush1.msra.mxu0 0.0
      %2646 = vmatprep.mubr.f32.mxu0 0.0
      %2647 = vmatmul.mubr.f32.gmra.mrb[0].mxu0 %v2580
      %v2648 = vpop.f32.mrb[0].mxu0
      %v2649 = vadd.f32 0.0, %v2648
      %v2650 = vpop.f32.mrb[0].mxu0
      %2651 = vdwg.mxu0
      %v2653 = vsel %vm834, %v2649, 0
      %2655 = vmatprep.subr.mxu0 0.0
      %2656 = vmatpush1.msra.mxu0 %v1831
      %2657 = vmatprep.subr.mxu0 0.0
      %2658 = vmatpush1.msra.mxu0 0.0
      %2659 = vmatprep.subr.mxu0 0.0
      %2660 = vmatpush1.msra.mxu0 0.0
      %2661 = vmatprep.subr.mxu0 0.0
      %2662 = vmatpush1.msra.mxu0 0.0
      %2663 = vmatprep.subr.mxu0 0.0
      %2664 = vmatpush1.msra.mxu0 0.0
      %2665 = vmatprep.subr.mxu0 0.0
      %2666 = vmatpush1.msra.mxu0 0.0
      %2667 = vmatprep.subr.mxu0 0.0
      %2668 = vmatpush1.msra.mxu0 0.0
      %2669 = vmatprep.subr.mxu0 0.0
      %2670 = vmatpush1.msra.mxu0 0.0
      %2671 = vmatprep.subr.mxu0 0.0
      %2672 = vmatpush1.msra.mxu0 0.0
      %2673 = vmatprep.subr.mxu0 0.0
      %2674 = vmatpush1.msra.mxu0 0.0
      %2675 = vmatprep.subr.mxu0 0.0
      %2676 = vmatpush1.msra.mxu0 0.0
      %2677 = vmatprep.subr.mxu0 0.0
      %2678 = vmatpush1.msra.mxu0 0.0
      %2679 = vmatprep.subr.mxu0 0.0
      %2680 = vmatpush1.msra.mxu0 0.0
      %2681 = vmatprep.subr.mxu0 0.0
      %2682 = vmatpush1.msra.mxu0 0.0
      %2683 = vmatprep.subr.mxu0 0.0
      %2684 = vmatpush1.msra.mxu0 0.0
      %2685 = vmatprep.subr.mxu0 0.0
      %2686 = vmatpush1.msra.mxu0 0.0
      %2687 = vmatprep.subr.mxu0 0.0
      %2688 = vmatpush1.msra.mxu0 0.0
      %2689 = vmatprep.subr.mxu0 0.0
      %2690 = vmatpush1.msra.mxu0 0.0
      %2691 = vmatprep.subr.mxu0 0.0
      %2692 = vmatpush1.msra.mxu0 0.0
      %2693 = vmatprep.subr.mxu0 0.0
      %2694 = vmatpush1.msra.mxu0 0.0
      %2695 = vmatprep.subr.mxu0 0.0
      %2696 = vmatpush1.msra.mxu0 0.0
      %2697 = vmatprep.subr.mxu0 0.0
      %2698 = vmatpush1.msra.mxu0 0.0
      %2699 = vmatprep.subr.mxu0 0.0
      %2700 = vmatpush1.msra.mxu0 0.0
      %2701 = vmatprep.subr.mxu0 0.0
      %2702 = vmatpush1.msra.mxu0 0.0
      %2703 = vmatprep.subr.mxu0 0.0
      %2704 = vmatpush1.msra.mxu0 0.0
      %2705 = vmatprep.subr.mxu0 0.0
      %2706 = vmatpush1.msra.mxu0 0.0
      %2707 = vmatprep.subr.mxu0 0.0
      %2708 = vmatpush1.msra.mxu0 0.0
      %2709 = vmatprep.subr.mxu0 0.0
      %2710 = vmatpush1.msra.mxu0 0.0
      %2711 = vmatprep.subr.mxu0 0.0
      %2712 = vmatpush1.msra.mxu0 0.0
      %2713 = vmatprep.subr.mxu0 0.0
      %2714 = vmatpush1.msra.mxu0 0.0
      %2715 = vmatprep.subr.mxu0 0.0
      %2716 = vmatpush1.msra.mxu0 0.0
      %2717 = vmatprep.subr.mxu0 0.0
      %2718 = vmatpush1.msra.mxu0 0.0
      %2719 = vmatprep.mubr.f32.mxu0 0.0
      %2720 = vmatmul.mubr.f32.gmra.mrb[0].mxu0 %v2653
      %v2721 = vpop.f32.mrb[0].mxu0
      %v2722 = vadd.f32 0.0, %v2721
      %v2723 = vpop.f32.mrb[0].mxu0
      %2724 = vdwg.mxu0
      %v2725 = vadd.f32 %v2484, %v2722
      %2726 = vrot.lane.b32.xlu0 %v2006, 104
      %v2727 = vpop.permute.xlu0 %2726
      %2728 = vrot.lane.b32.xlu0 %v2003, 104
      %v2729 = vpop.permute.xlu0 %2728
      %v2730 = vsel %vm834, %v2727, 0
      %v2732 = vsel %vm834, %v2729, 0
      %2734 = vmatprep.subr.mxu0 0.0
      %2735 = vmatpush1.xpose.msra.mxu0 %v2732
      %2736 = vmatprep.subr.mxu0 0.0
      %2737 = vmatpush1.xpose.msra.mxu0 0.0
      %2738 = vmatprep.subr.mxu0 0.0
      %2739 = vmatpush1.xpose.msra.mxu0 0.0
      %2740 = vmatprep.subr.mxu0 0.0
      %2741 = vmatpush1.xpose.msra.mxu0 0.0
      %2742 = vmatprep.subr.mxu0 0.0
      %2743 = vmatpush1.xpose.msra.mxu0 0.0
      %2744 = vmatprep.subr.mxu0 0.0
      %2745 = vmatpush1.xpose.msra.mxu0 0.0
      %2746 = vmatprep.subr.mxu0 0.0
      %2747 = vmatpush1.xpose.msra.mxu0 0.0
      %2748 = vmatprep.subr.mxu0 0.0
      %2749 = vmatpush1.xpose.msra.mxu0 0.0
      %2750 = vmatprep.subr.mxu0 0.0
      %2751 = vmatpush1.xpose.msra.mxu0 0.0
      %2752 = vmatprep.subr.mxu0 0.0
      %2753 = vmatpush1.xpose.msra.mxu0 0.0
      %2754 = vmatprep.subr.mxu0 0.0
      %2755 = vmatpush1.xpose.msra.mxu0 0.0
      %2756 = vmatprep.subr.mxu0 0.0
      %2757 = vmatpush1.xpose.msra.mxu0 0.0
      %2758 = vmatprep.subr.mxu0 0.0
      %2759 = vmatpush1.xpose.msra.mxu0 0.0
      %2760 = vmatprep.subr.mxu0 0.0
      %2761 = vmatpush1.xpose.msra.mxu0 0.0
      %2762 = vmatprep.subr.mxu0 0.0
      %2763 = vmatpush1.xpose.msra.mxu0 0.0
      %2764 = vmatprep.subr.mxu0 0.0
      %2765 = vmatpush1.xpose.msra.mxu0 0.0
      %2766 = vmatprep.subr.mxu0 0.0
      %2767 = vmatpush1.xpose.msra.mxu0 0.0
      %2768 = vmatprep.subr.mxu0 0.0
      %2769 = vmatpush1.xpose.msra.mxu0 0.0
      %2770 = vmatprep.subr.mxu0 0.0
      %2771 = vmatpush1.xpose.msra.mxu0 0.0
      %2772 = vmatprep.subr.mxu0 0.0
      %2773 = vmatpush1.xpose.msra.mxu0 0.0
      %2774 = vmatprep.subr.mxu0 0.0
      %2775 = vmatpush1.xpose.msra.mxu0 0.0
      %2776 = vmatprep.subr.mxu0 0.0
      %2777 = vmatpush1.xpose.msra.mxu0 0.0
      %2778 = vmatprep.subr.mxu0 0.0
      %2779 = vmatpush1.xpose.msra.mxu0 0.0
      %2780 = vmatprep.subr.mxu0 0.0
      %2781 = vmatpush1.xpose.msra.mxu0 0.0
      %2782 = vmatprep.subr.mxu0 0.0
      %2783 = vmatpush1.xpose.msra.mxu0 0.0
      %2784 = vmatprep.subr.mxu0 0.0
      %2785 = vmatpush1.xpose.msra.mxu0 0.0
      %2786 = vmatprep.subr.mxu0 0.0
      %2787 = vmatpush1.xpose.msra.mxu0 0.0
      %2788 = vmatprep.subr.mxu0 0.0
      %2789 = vmatpush1.xpose.msra.mxu0 0.0
      %2790 = vmatprep.subr.mxu0 0.0
      %2791 = vmatpush1.xpose.msra.mxu0 0.0
      %2792 = vmatprep.subr.mxu0 0.0
      %2793 = vmatpush1.xpose.msra.mxu0 0.0
      %2794 = vmatprep.subr.mxu0 0.0
      %2795 = vmatpush1.xpose.msra.mxu0 0.0
      %2796 = vmatprep.subr.mxu0 0.0
      %2797 = vmatpush1.xpose.msra.mxu0 0.0
      %2798 = vmatprep.mubr.f32.mxu0 0.0
      %2799 = vmatmul.mubr.f32.gmra.mrb[0].mxu0 %v2730
      %v2800 = vpop.f32.mrb[0].mxu0
      %v2801 = vadd.f32 %v2011, %v2800
      %v2802 = vpop.f32.mrb[0].mxu0
      %2803 = vdwg.mxu0
      %v2804 = vsel %vm834, %v2801, -inf
      %2805 = vmax.xlane.f32.xlu0 %v2804
      %v2806 = vpop.xlane.xlu0 %2805
      %v2807 = vsub.f32 %v2801, %v2806
      %v2808 = vmul.f32 %v2807, 1.442695
      %v2809 = vpow.pop %v2808
      %v2810 = vsel %vm834, %v2809, 0.0
      %2811 = vadd.xlane.f32.xlu0 %v2810
      %v2812 = vpop.xlane.xlu0 %2811
      %v2813 = vrcp.pop %v2812
      %v2814 = vmul.f32 %v2809, %v2813
      %2815 = vrot.lane.b32.xlu0 %v2003, 72
      %v2816 = vpop.permute.xlu0 %2815
      %v2819 = vsel %vm834, %v2814, 0
      %2821 = vmatprep.subr.mxu0 0.0
      %2822 = vmatpush1.msra.mxu0 %v2816
      %2823 = vmatprep.subr.mxu0 0.0
      %2824 = vmatpush1.msra.mxu0 0.0
      %2825 = vmatprep.subr.mxu0 0.0
      %2826 = vmatpush1.msra.mxu0 0.0
      %2827 = vmatprep.subr.mxu0 0.0
      %2828 = vmatpush1.msra.mxu0 0.0
      %2829 = vmatprep.subr.mxu0 0.0
      %2830 = vmatpush1.msra.mxu0 0.0
      %2831 = vmatprep.subr.mxu0 0.0
      %2832 = vmatpush1.msra.mxu0 0.0
      %2833 = vmatprep.subr.mxu0 0.0
      %2834 = vmatpush1.msra.mxu0 0.0
      %2835 = vmatprep.subr.mxu0 0.0
      %2836 = vmatpush1.msra.mxu0 0.0
      %2837 = vmatprep.subr.mxu0 0.0
      %2838 = vmatpush1.msra.mxu0 0.0
      %2839 = vmatprep.subr.mxu0 0.0
      %2840 = vmatpush1.msra.mxu0 0.0
      %2841 = vmatprep.subr.mxu0 0.0
      %2842 = vmatpush1.msra.mxu0 0.0
      %2843 = vmatprep.subr.mxu0 0.0
      %2844 = vmatpush1.msra.mxu0 0.0
      %2845 = vmatprep.subr.mxu0 0.0
      %2846 = vmatpush1.msra.mxu0 0.0
      %2847 = vmatprep.subr.mxu0 0.0
      %2848 = vmatpush1.msra.mxu0 0.0
      %2849 = vmatprep.subr.mxu0 0.0
      %2850 = vmatpush1.msra.mxu0 0.0
      %2851 = vmatprep.subr.mxu0 0.0
      %2852 = vmatpush1.msra.mxu0 0.0
      %2853 = vmatprep.subr.mxu0 0.0
      %2854 = vmatpush1.msra.mxu0 0.0
      %2855 = vmatprep.subr.mxu0 0.0
      %2856 = vmatpush1.msra.mxu0 0.0
      %2857 = vmatprep.subr.mxu0 0.0
      %2858 = vmatpush1.msra.mxu0 0.0
      %2859 = vmatprep.subr.mxu0 0.0
      %2860 = vmatpush1.msra.mxu0 0.0
      %2861 = vmatprep.subr.mxu0 0.0
      %2862 = vmatpush1.msra.mxu0 0.0
      %2863 = vmatprep.subr.mxu0 0.0
      %2864 = vmatpush1.msra.mxu0 0.0
      %2865 = vmatprep.subr.mxu0 0.0
      %2866 = vmatpush1.msra.mxu0 0.0
      %2867 = vmatprep.subr.mxu0 0.0
      %2868 = vmatpush1.msra.mxu0 0.0
      %2869 = vmatprep.subr.mxu0 0.0
      %2870 = vmatpush1.msra.mxu0 0.0
      %2871 = vmatprep.subr.mxu0 0.0
      %2872 = vmatpush1.msra.mxu0 0.0
      %2873 = vmatprep.subr.mxu0 0.0
      %2874 = vmatpush1.msra.mxu0 0.0
      %2875 = vmatprep.subr.mxu0 0.0
      %2876 = vmatpush1.msra.mxu0 0.0
      %2877 = vmatprep.subr.mxu0 0.0
      %2878 = vmatpush1.msra.mxu0 0.0
      %2879 = vmatprep.subr.mxu0 0.0
      %2880 = vmatpush1.msra.mxu0 0.0
      %2881 = vmatprep.subr.mxu0 0.0
      %2882 = vmatpush1.msra.mxu0 0.0
      %2883 = vmatprep.subr.mxu0 0.0
      %2884 = vmatpush1.msra.mxu0 0.0
      %2885 = vmatprep.mubr.f32.mxu0 0.0
      %2886 = vmatmul.mubr.f32.gmra.mrb[0].mxu0 %v2819
      %v2887 = vpop.f32.mrb[0].mxu0
      %v2888 = vadd.f32 0.0, %v2887
      %v2889 = vpop.f32.mrb[0].mxu0
      %2890 = vdwg.mxu0
      %v2892 = vsel %vm834, %v2888, 0
      %2894 = vmatprep.subr.mxu0 0.0
      %2895 = vmatpush1.msra.mxu0 %v1832
      %2896 = vmatprep.subr.mxu0 0.0
      %2897 = vmatpush1.msra.mxu0 0.0
      %2898 = vmatprep.subr.mxu0 0.0
      %2899 = vmatpush1.msra.mxu0 0.0
      %2900 = vmatprep.subr.mxu0 0.0
      %2901 = vmatpush1.msra.mxu0 0.0
      %2902 = vmatprep.subr.mxu0 0.0
      %2903 = vmatpush1.msra.mxu0 0.0
      %2904 = vmatprep.subr.mxu0 0.0
      %2905 = vmatpush1.msra.mxu0 0.0
      %2906 = vmatprep.subr.mxu0 0.0
      %2907 = vmatpush1.msra.mxu0 0.0
      %2908 = vmatprep.subr.mxu0 0.0
      %2909 = vmatpush1.msra.mxu0 0.0
      %2910 = vmatprep.subr.mxu0 0.0
      %2911 = vmatpush1.msra.mxu0 0.0
      %2912 = vmatprep.subr.mxu0 0.0
      %2913 = vmatpush1.msra.mxu0 0.0
      %2914 = vmatprep.subr.mxu0 0.0
      %2915 = vmatpush1.msra.mxu0 0.0
      %2916 = vmatprep.subr.mxu0 0.0
      %2917 = vmatpush1.msra.mxu0 0.0
      %2918 = vmatprep.subr.mxu0 0.0
      %2919 = vmatpush1.msra.mxu0 0.0
      %2920 = vmatprep.subr.mxu0 0.0
      %2921 = vmatpush1.msra.mxu0 0.0
      %2922 = vmatprep.subr.mxu0 0.0
      %2923 = vmatpush1.msra.mxu0 0.0
      %2924 = vmatprep.subr.mxu0 0.0
      %2925 = vmatpush1.msra.mxu0 0.0
      %2926 = vmatprep.subr.mxu0 0.0
      %2927 = vmatpush1.msra.mxu0 0.0
      %2928 = vmatprep.subr.mxu0 0.0
      %2929 = vmatpush1.msra.mxu0 0.0
      %2930 = vmatprep.subr.mxu0 0.0
      %2931 = vmatpush1.msra.mxu0 0.0
      %2932 = vmatprep.subr.mxu0 0.0
      %2933 = vmatpush1.msra.mxu0 0.0
      %2934 = vmatprep.subr.mxu0 0.0
      %2935 = vmatpush1.msra.mxu0 0.0
      %2936 = vmatprep.subr.mxu0 0.0
      %2937 = vmatpush1.msra.mxu0 0.0
      %2938 = vmatprep.subr.mxu0 0.0
      %2939 = vmatpush1.msra.mxu0 0.0
      %2940 = vmatprep.subr.mxu0 0.0
      %2941 = vmatpush1.msra.mxu0 0.0
      %2942 = vmatprep.subr.mxu0 0.0
      %2943 = vmatpush1.msra.mxu0 0.0
      %2944 = vmatprep.subr.mxu0 0.0
      %2945 = vmatpush1.msra.mxu0 0.0
      %2946 = vmatprep.subr.mxu0 0.0
      %2947 = vmatpush1.msra.mxu0 0.0
      %2948 = vmatprep.subr.mxu0 0.0
      %2949 = vmatpush1.msra.mxu0 0.0
      %2950 = vmatprep.subr.mxu0 0.0
      %2951 = vmatpush1.msra.mxu0 0.0
      %2952 = vmatprep.subr.mxu0 0.0
      %2953 = vmatpush1.msra.mxu0 0.0
      %2954 = vmatprep.subr.mxu0 0.0
      %2955 = vmatpush1.msra.mxu0 0.0
      %2956 = vmatprep.subr.mxu0 0.0
      %2957 = vmatpush1.msra.mxu0 0.0
      %2958 = vmatprep.mubr.f32.mxu0 0.0
      %2959 = vmatmul.mubr.f32.gmra.mrb[0].mxu0 %v2892
      %v2960 = vpop.f32.mrb[0].mxu0
      %v2961 = vadd.f32 0.0, %v2960
      %v2962 = vpop.f32.mrb[0].mxu0
      %2963 = vdwg.mxu0
      %v2964 = vadd.f32 %v2725, %v2961
      %v2966 = vlaneseq
      %v2967 = vshrl.u32 %v2966, 7
      %v2968 = vsub.s32 0, %v2967
      %v2969 = vrot.slane %v1833, %v2968
      %v2971 = vadd.f32 %v2964, %v2969
      %v2972 = vld [vmem:[%s18] sm:$0x1]
      %v2973 = vld [vmem:[%s19] sm:$0x1]
      %v2974 = vadd.f32 %v1823, %v2971
      %v2975 = vsel %vm743, %v2974, 0.0
      %2976 = vadd.xlane.f32.xlu0 %v2975
      %v2977 = vpop.xlane.xlu0 %2976
      %v2978 = vmul.f32 %v2977, %v1799
      %v2979 = vsub.f32 %v2974, %v2978
      %v2980 = vmul.f32 %v2979, %v2979
      %v2981 = vsel %vm743, %v2980, 0.0
      %2982 = vadd.xlane.f32.xlu0 %v2981
      %v2983 = vpop.xlane.xlu0 %2982
      %v2984 = vmul.f32 %v2983, %v1799
      %v2985 = vadd.f32 %v2984, 1e-05
      %v2986 = vrsqrt.pop %v2985
      %v2987 = vmul.f32 %v2979, %v2986
      %v2989 = vlaneseq
      %v2990 = vshrl.u32 %v2989, 7
      %v2991 = vsub.s32 0, %v2990
      %v2992 = vrot.slane %v2972, %v2991
      %v2994 = vmul.f32 %v2987, %v2992
      %v2996 = vlaneseq
      %v2997 = vshrl.u32 %v2996, 7
      %v2998 = vsub.s32 0, %v2997
      %v2999 = vrot.slane %v2973, %v2998
      %v3001 = vadd.f32 %v2994, %v2999
      %v3002 = vld [vmem:[%s12] sm:$0xff]
      %v3003 = vld [vmem:[%s12 + $0x8] sm:$0xff]
      %v3004 = vld [vmem:[%s12 + $0x10] sm:$0xff]
      %v3005 = vld [vmem:[%s12 + $0x18] sm:$0xff]
      %v3006 = vld [vmem:[%s13] sm:$0x1]
      %v3008 = vlaneseq
      %v3009 = vshrl.u32 %v3008, 7
      %v3010 = vsub.s32 0, %v3009
      %v3011 = vrot.slane %v3006, %v3010
      %v3014 = vsel %vm743, %v3001, 0
      %3016 = vmatprep.subr.mxu0 0.0
      %3017 = vmatpush1.msra.mxu0 %v3002
      %3018 = vmatprep.subr.mxu0 0.0
      %3019 = vmatpush1.msra.mxu0 %v3003
      %3020 = vmatprep.subr.mxu0 0.0
      %3021 = vmatpush1.msra.mxu0 %v3004
      %3022 = vmatprep.subr.mxu0 0.0
      %3023 = vmatpush1.msra.mxu0 %v3005
      %3024 = vmatprep.subr.mxu0 0.0
      %3025 = vmatpush1.msra.mxu0 0.0
      %3026 = vmatprep.subr.mxu0 0.0
      %3027 = vmatpush1.msra.mxu0 0.0
      %3028 = vmatprep.subr.mxu0 0.0
      %3029 = vmatpush1.msra.mxu0 0.0
      %3030 = vmatprep.subr.mxu0 0.0
      %3031 = vmatpush1.msra.mxu0 0.0
      %3032 = vmatprep.subr.mxu0 0.0
      %3033 = vmatpush1.msra.mxu0 0.0
      %3034 = vmatprep.subr.mxu0 0.0
      %3035 = vmatpush1.msra.mxu0 0.0
      %3036 = vmatprep.subr.mxu0 0.0
      %3037 = vmatpush1.msra.mxu0 0.0
      %3038 = vmatprep.subr.mxu0 0.0
      %3039 = vmatpush1.msra.mxu0 0.0
      %3040 = vmatprep.subr.mxu0 0.0
      %3041 = vmatpush1.msra.mxu0 0.0
      %3042 = vmatprep.subr.mxu0 0.0
      %3043 = vmatpush1.msra.mxu0 0.0
      %3044 = vmatprep.subr.mxu0 0.0
      %3045 = vmatpush1.msra.mxu0 0.0
      %3046 = vmatprep.subr.mxu0 0.0
      %3047 = vmatpush1.msra.mxu0 0.0
      %3048 = vmatprep.subr.mxu0 0.0
      %3049 = vmatpush1.msra.mxu0 0.0
      %3050 = vmatprep.subr.mxu0 0.0
      %3051 = vmatpush1.msra.mxu0 0.0
      %3052 = vmatprep.subr.mxu0 0.0
      %3053 = vmatpush1.msra.mxu0 0.0
      %3054 = vmatprep.subr.mxu0 0.0
      %3055 = vmatpush1.msra.mxu0 0.0
      %3056 = vmatprep.subr.mxu0 0.0
      %3057 = vmatpush1.msra.mxu0 0.0
      %3058 = vmatprep.subr.mxu0 0.0
      %3059 = vmatpush1.msra.mxu0 0.0
      %3060 = vmatprep.subr.mxu0 0.0
      %3061 = vmatpush1.msra.mxu0 0.0
      %3062 = vmatprep.subr.mxu0 0.0
      %3063 = vmatpush1.msra.mxu0 0.0
      %3064 = vmatprep.subr.mxu0 0.0
      %3065 = vmatpush1.msra.mxu0 0.0
      %3066 = vmatprep.subr.mxu0 0.0
      %3067 = vmatpush1.msra.mxu0 0.0
      %3068 = vmatprep.subr.mxu0 0.0
      %3069 = vmatpush1.msra.mxu0 0.0
      %3070 = vmatprep.subr.mxu0 0.0
      %3071 = vmatpush1.msra.mxu0 0.0
      %3072 = vmatprep.subr.mxu0 0.0
      %3073 = vmatpush1.msra.mxu0 0.0
      %3074 = vmatprep.subr.mxu0 0.0
      %3075 = vmatpush1.msra.mxu0 0.0
      %3076 = vmatprep.subr.mxu0 0.0
      %3077 = vmatpush1.msra.mxu0 0.0
      %3078 = vmatprep.subr.mxu0 0.0
      %3079 = vmatpush1.msra.mxu0 0.0
      %3080 = vmatprep.mubr.f32.mxu0 0.0
      %3081 = vmatmul.mubr.f32.gmra.mrb[0].mxu0 %v3014
      %v3082 = vpop.f32.mrb[0].mxu0
      %v3083 = vadd.f32 %v3011, %v3082
      %v3084 = vpop.f32.mrb[0].mxu0
      %3085 = vdwg.mxu0
      %v3086 = vmax.f32 %v3083, 0.0
      %v3087 = vld [vmem:[%s14] sm:$0xff]
      %v3088 = vld [vmem:[%s14 + $0x8] sm:$0xff]
      %v3089 = vld [vmem:[%s14 + $0x10] sm:$0xff]
      %v3090 = vld [vmem:[%s14 + $0x18] sm:$0xff]
      %v3091 = vld [vmem:[%s14 + $0x20] sm:$0xff]
      %v3092 = vld [vmem:[%s14 + $0x28] sm:$0xff]
      %v3093 = vld [vmem:[%s14 + $0x30] sm:$0xff]
      %v3094 = vld [vmem:[%s14 + $0x38] sm:$0xff]
      %v3095 = vld [vmem:[%s15] sm:$0x1]
      %v3097 = vlaneseq
      %v3098 = vshrl.u32 %v3097, 7
      %v3099 = vsub.s32 0, %v3098
      %v3100 = vrot.slane %v3095, %v3099
      %vm3102 = vcmask 523264
      %v3104 = vsel %vm3102, %v3086, 0
      %3106 = vmatprep.subr.mxu0 0.0
      %3107 = vmatpush1.msra.mxu0 %v3087
      %3108 = vmatprep.subr.mxu0 0.0
      %3109 = vmatpush1.msra.mxu0 %v3088
      %3110 = vmatprep.subr.mxu0 0.0
      %3111 = vmatpush1.msra.mxu0 %v3089
      %3112 = vmatprep.subr.mxu0 0.0
      %3113 = vmatpush1.msra.mxu0 %v3090
      %3114 = vmatprep.subr.mxu0 0.0
      %3115 = vmatpush1.msra.mxu0 %v3091
      %3116 = vmatprep.subr.mxu0 0.0
      %3117 = vmatpush1.msra.mxu0 %v3092
      %3118 = vmatprep.subr.mxu0 0.0
      %3119 = vmatpush1.msra.mxu0 %v3093
      %3120 = vmatprep.subr.mxu0 0.0
      %3121 = vmatpush1.msra.mxu0 %v3094
      %3122 = vmatprep.subr.mxu0 0.0
      %3123 = vmatpush1.msra.mxu0 0.0
      %3124 = vmatprep.subr.mxu0 0.0
      %3125 = vmatpush1.msra.mxu0 0.0
      %3126 = vmatprep.subr.mxu0 0.0
      %3127 = vmatpush1.msra.mxu0 0.0
      %3128 = vmatprep.subr.mxu0 0.0
      %3129 = vmatpush1.msra.mxu0 0.0
      %3130 = vmatprep.subr.mxu0 0.0
      %3131 = vmatpush1.msra.mxu0 0.0
      %3132 = vmatprep.subr.mxu0 0.0
      %3133 = vmatpush1.msra.mxu0 0.0
      %3134 = vmatprep.subr.mxu0 0.0
      %3135 = vmatpush1.msra.mxu0 0.0
      %3136 = vmatprep.subr.mxu0 0.0
      %3137 = vmatpush1.msra.mxu0 0.0
      %3138 = vmatprep.subr.mxu0 0.0
      %3139 = vmatpush1.msra.mxu0 0.0
      %3140 = vmatprep.subr.mxu0 0.0
      %3141 = vmatpush1.msra.mxu0 0.0
      %3142 = vmatprep.subr.mxu0 0.0
      %3143 = vmatpush1.msra.mxu0 0.0
      %3144 = vmatprep.subr.mxu0 0.0
      %3145 = vmatpush1.msra.mxu0 0.0
      %3146 = vmatprep.subr.mxu0 0.0
      %3147 = vmatpush1.msra.mxu0 0.0
      %3148 = vmatprep.subr.mxu0 0.0
      %3149 = vmatpush1.msra.mxu0 0.0
      %3150 = vmatprep.subr.mxu0 0.0
      %3151 = vmatpush1.msra.mxu0 0.0
      %3152 = vmatprep.subr.mxu0 0.0
      %3153 = vmatpush1.msra.mxu0 0.0
      %3154 = vmatprep.subr.mxu0 0.0
      %3155 = vmatpush1.msra.mxu0 0.0
      %3156 = vmatprep.subr.mxu0 0.0
      %3157 = vmatpush1.msra.mxu0 0.0
      %3158 = vmatprep.subr.mxu0 0.0
      %3159 = vmatpush1.msra.mxu0 0.0
      %3160 = vmatprep.subr.mxu0 0.0
      %3161 = vmatpush1.msra.mxu0 0.0
      %3162 = vmatprep.subr.mxu0 0.0
      %3163 = vmatpush1.msra.mxu0 0.0
      %3164 = vmatprep.subr.mxu0 0.0
      %3165 = vmatpush1.msra.mxu0 0.0
      %3166 = vmatprep.subr.mxu0 0.0
      %3167 = vmatpush1.msra.mxu0 0.0
      %3168 = vmatprep.subr.mxu0 0.0
      %3169 = vmatpush1.msra.mxu0 0.0
      %3170 = vmatprep.mubr.f32.mxu0 0.0
      %3171 = vmatmul.mubr.f32.gmra.mrb[0].mxu0 %v3104
      %v3172 = vpop.f32.mrb[0].mxu0
      %v3173 = vadd.f32 %v3100, %v3172
      %v3174 = vpop.f32.mrb[0].mxu0
      %3175 = vdwg.mxu0
      %v3176 = vld [vmem:[%s20] sm:$0x1]
      %v3177 = vld [vmem:[%s21] sm:$0x1]
      %v3178 = vadd.f32 %v3001, %v3173
      %v3179 = vsel %vm743, %v3178, 0.0
      %3180 = vadd.xlane.f32.xlu0 %v3179
      %v3181 = vpop.xlane.xlu0 %3180
      %v3182 = vmul.f32 %v3181, %v1799
      %v3183 = vsub.f32 %v3178, %v3182
      %v3184 = vmul.f32 %v3183, %v3183
      %v3185 = vsel %vm743, %v3184, 0.0
      %3186 = vadd.xlane.f32.xlu0 %v3185
      %v3187 = vpop.xlane.xlu0 %3186
      %v3188 = vmul.f32 %v3187, %v1799
      %v3189 = vadd.f32 %v3188, 1e-05
      %v3190 = vrsqrt.pop %v3189
      %v3191 = vmul.f32 %v3183, %v3190
      %v3193 = vlaneseq
      %v3194 = vshrl.u32 %v3193, 7
      %v3195 = vsub.s32 0, %v3194
      %v3196 = vrot.slane %v3176, %v3195
      %v3198 = vmul.f32 %v3191, %v3196
      %v3200 = vlaneseq
      %v3201 = vshrl.u32 %v3200, 7
      %v3202 = vsub.s32 0, %v3201
      %v3203 = vrot.slane %v3177, %v3202
      %v3205 = vadd.f32 %v3198, %v3203
      %3206 = vst.msk [vmem:[%s723] sm:$0xff] %vm743, %v3205
      %p3207 = scmp.lt.s32.totalorder %s33, 1
      %s3208 = scalar_select %p3207, %s33, 1
      %s3209 = smul.addr %s3208, 8
      %s3210 = scalar_lea.vmem %s22, %s3209
      // Predicated region
      $region109: #{my_tf_forward.10} parent=107 // pred_check
        %p3211 = pneg %p533
      $region110: #{my_tf_forward.10} parent=107 // pred_check_branch
        %3213 = sbr.rel (%p3211) target = $region112
      $region111: #{my_tf_forward.10} parent=107 // pred_region
        _
      $region112: #{my_tf_forward.10} parent=107 // pred_fallthru
        _
    $region108: #{my_tf_forward.10} parent=5 // pred_fallthru
      _
    %p3214 = scmp.le.s32.totalorder 2, %s28
    // Predicated region
    $region113: #{my_tf_forward.10} parent=5 // pred_check
      %p3215 = pneg %p3214
    $region114: #{my_tf_forward.10} parent=5 // pred_check_branch
      %3217 = sbr.rel (%p3215) target = $region116
    $region115: #{my_tf_forward.10} parent=5 // pred_region
      %s3218 = ssub.s32 %s28, 2
      // Predicated region
      $region117: #{my_tf_forward.10} parent=115 // pred_check
        %p3219 = pneg %p539
      $region118: #{my_tf_forward.10} parent=115 // pred_check_branch
        %3221 = sbr.rel (%p3219) target = $region120
      $region119: #{my_tf_forward.10} parent=115 // pred_region
        %p3222 = scmp.lt.s32.totalorder %s34, 1
        %s3223 = scalar_select %p3222, %s34, 1
        %s3224 = smul.addr %s3223, 8
        %s3225 = scalar_lea.vmem %s22, %s3224
      $region120: #{my_tf_forward.10} parent=115 // pred_fallthru
        _
    $region116: #{my_tf_forward.10} parent=5 // pred_fallthru
      _
  $region6: #{my_tf_forward.10} parent=0 // loop_footer
    %s32 = sadd.s32 1, %s28
  $region7: #{my_tf_forward.10} parent=0 // loop_footer_branch
    %27 = sbr.rel target = $region3
  $region8: #{my_tf_forward.10} parent=0 // loop_exit
    _

</llo_original>
